<compile_context>
chip_gen: v5e
topology: v5e:2x2
jax: 0.10.0
libtpu: 0.0.40
codegen_flags: <defaults>
</compile_context>

<pallas_src>
import functools

import jax
import jax.numpy as jnp
from jax import lax
from jax.experimental import pallas as pl
from jax.experimental.pallas import tpu as pltpu

# ---- module hyper-parameters (from modelLSTM.py) ----
EMBEDDING_DIM = 64
HIDDEN_DIM = 256
NO_LAYERS = 2
OUTPUT_DIM = 1
VOCAB_SIZE = 1000 + 1


# --------------------------------------------------------------------------
# Fused kernel: interleaved 2-layer LSTM recurrence + last-step FC + sigmoid.
# Everything (inputs, weights, scratch) is VMEM-resident; single invocation.
# Gate order follows PyTorch nn.LSTM: i, f, g, o.
# --------------------------------------------------------------------------
def _fused_kernel(T, B, H,
                  x_ref,                       # (T*B, E)  bf16 embedded inputs
                  wih0_ref, whh0_ref, b0_ref,  # (E,4H) bf16, (H,4H) bf16, (1,4H) f32
                  wcat1_ref, b1_ref,           # (2H,4H) bf16, (1,4H) f32
                  h0_ref, c0_ref,              # (2, B, H) f32 initial states
                  fcw_ref, fcb_ref,            # (1, H) f32, (1, 1) f32
                  sig_ref, hT_ref, cT_ref,     # (B,1), (2,B,H), (2,B,H) f32
                  gx_s):                       # scratch: (T*B, 4H) f32
    bf16 = jnp.bfloat16
    f32 = jnp.float32

    def sigmoid_fast(x):
        # Exact identity sigmoid(x) = 0.5 * tanh(0.5 * x) + 0.5: one EUP tanh +
        # one VPU FMA, no exp + f32 divide.
        return 0.5 * jnp.tanh(0.5 * x) + 0.5

    def gate_math(gates, c_prev):
        i_g = sigmoid_fast(gates[:, 0:H])
        f_g = sigmoid_fast(gates[:, H:2 * H])
        g_g = jnp.tanh(gates[:, 2 * H:3 * H])
        o_g = sigmoid_fast(gates[:, 3 * H:4 * H])
        c_new = f_g * c_prev + i_g * g_g
        h_new = o_g * jnp.tanh(c_new)
        return h_new, c_new                               # both f32 (B, H)

    # ---- hoisted layer-0 input projection: one big (T*B, E) @ (E, 4H) matmul.
    gx_s[...] = (jnp.dot(x_ref[...], wih0_ref[...], preferred_element_type=f32)
                 + b0_ref[...])

    # Hoist weight loads / bias broadcast out of the loop (no per-iter broadcast).
    whh0 = whh0_ref[...]                                   # (H, 4H)  bf16
    wcat1 = wcat1_ref[...]                                 # (2H, 4H) bf16
    b1_bc = jnp.broadcast_to(b1_ref[...], (B, 4 * H))      # (B, 4H)  f32

    def l0_step(t, h_b, c):
        row = t * B
        if not isinstance(row, int):                       # hint only for dynamic t
            row = pl.multiple_of(row, 8)
        gates = (gx_s[pl.ds(row, B), :]
                 + jnp.dot(h_b, whh0, preferred_element_type=f32))
        return gate_math(gates, c)

    def l1_step(y_b, h_b, c):
        # Fused input+recurrent projection: [y0_t, h1_{t-1}] (B,2H) @ (2H,4H).
        lhs = jnp.concatenate([y_b, h_b], axis=1)
        gates = jnp.dot(lhs, wcat1, preferred_element_type=f32) + b1_bc
        return gate_math(gates, c)

    def interleaved(t, carry):
        # Layer-0 step t and layer-1 step t-1: independent chains per iteration.
        h0_b, c0_f, h1_b, c1_f, y_b = carry
        nh0, nc0 = l0_step(t, h0_b, c0_f)
        nh1, nc1 = l1_step(y_b, h1_b, c1_f)
        nh0_b = nh0.astype(bf16)                           # bf16 carry (cast once)
        return (nh0_b, nc0, nh1.astype(bf16), nc1, nh0_b)

    # ---- prologue: layer-0 step 0.
    h0_b0 = h0_ref[0].astype(bf16)
    h1_b0 = h0_ref[1].astype(bf16)
    nh0, nc0 = l0_step(0, h0_b0, c0_ref[0])
    y_b = nh0.astype(bf16)
    carry = (y_b, nc0, h1_b0, c0_ref[1], y_b)

    # ---- main interleaved loop over t = 1 .. T-1, body manually 2x unrolled.
    n_main = T - 1
    n_pairs = n_main // 2

    def double_body(i, carry):
        t = 1 + 2 * i
        carry = interleaved(t, carry)
        return interleaved(t + 1, carry)

    carry = lax.fori_loop(0, n_pairs, double_body, carry)
    if n_main % 2:                                         # static remainder peel
        carry = interleaved(T - 1, carry)

    h0_b, c0_f, h1_b, c1_f, y_b = carry

    # ---- epilogue: layer-1 step T-1 (keep f32 result for FC + state write).
    h1_f, c1_f = l1_step(y_b, h1_b, c1_f)

    # Final (h_T, c_T) written exactly once.
    hT_ref[0] = h0_b.astype(f32)
    cT_ref[0] = c0_f
    hT_ref[1] = h1_f
    cT_ref[1] = c1_f

    # Dropout(eval) = identity -> FC(H->1) -> sigmoid, LAST timestep only.
    # VPU multiply + lane reduction (no MXU matmul with N=1).
    logit = jnp.sum(h1_f * fcw_ref[...], axis=1, keepdims=True) + fcb_ref[...]
    sig_ref[...] = sigmoid_fast(logit)


def fused_sentiment_lstm(x_flat, wih0, whh0, b0, wcat1, b1,
                         h0, c0, fc_w, fc_b, *, T, B):
    H = HIDDEN_DIM
    kernel = functools.partial(_fused_kernel, T, B, H)
    return pl.pallas_call(
        kernel,
        out_shape=(jax.ShapeDtypeStruct((B, 1), jnp.float32),
                   jax.ShapeDtypeStruct((NO_LAYERS, B, H), jnp.float32),
                   jax.ShapeDtypeStruct((NO_LAYERS, B, H), jnp.float32)),
        # TODO(synk): chunk this over time windows for long sequences (v7x VMEM).
        scratch_shapes=[pltpu.VMEM((T * B, 4 * H), jnp.float32)],
        compiler_params=pltpu.CompilerParams(vmem_limit_bytes=32 * 1024 * 1024),
    )(x_flat, wih0, whh0, b0, wcat1, b1, h0, c0, fc_w, fc_b)


# --------------------------------------------------------------------------
# Parameter init (PyTorch-style uniform(-1/sqrt(H), 1/sqrt(H))).
# Weights stored pre-transposed in bf16; layer-1 input+recurrent weights are
# pre-concatenated along K; biases pre-summed (f32); embedding stored bf16.
# --------------------------------------------------------------------------
def init_params(key):
    k = 1.0 / jnp.sqrt(jnp.float32(HIDDEN_DIM))
    keys = jax.random.split(key, 1 + 4 * NO_LAYERS + 2)
    params = {"embedding": jax.random.normal(
        keys[0], (VOCAB_SIZE, EMBEDDING_DIM), jnp.float32).astype(jnp.bfloat16)}

    raw = []
    idx = 1
    for layer in range(NO_LAYERS):
        in_dim = EMBEDDING_DIM if layer == 0 else HIDDEN_DIM
        w_ih = jax.random.uniform(keys[idx], (4 * HIDDEN_DIM, in_dim),
                                  jnp.float32, -k, k); idx += 1
        w_hh = jax.random.uniform(keys[idx], (4 * HIDDEN_DIM, HIDDEN_DIM),
                                  jnp.float32, -k, k); idx += 1
        b_ih = jax.random.uniform(keys[idx], (4 * HIDDEN_DIM,),
                                  jnp.float32, -k, k); idx += 1
        b_hh = jax.random.uniform(keys[idx], (4 * HIDDEN_DIM,),
                                  jnp.float32, -k, k); idx += 1
        raw.append((w_ih, w_hh, b_ih, b_hh))

    w_ih0, w_hh0, b_ih0, b_hh0 = raw[0]
    w_ih1, w_hh1, b_ih1, b_hh1 = raw[1]
    params["lstm"] = [
        {   # layer 0: hoisted input projection, separate recurrent weight
            "w_ih_t": jnp.transpose(w_ih0).astype(jnp.bfloat16),   # (E, 4H)
            "w_hh_t": jnp.transpose(w_hh0).astype(jnp.bfloat16),   # (H, 4H)
            "b": (b_ih0 + b_hh0).reshape(1, 4 * HIDDEN_DIM),       # f32
        },
        {   # layer 1: fused [W_ih^T ; W_hh^T] for the concat matmul
            "w_cat_t": jnp.concatenate(
                [jnp.transpose(w_ih1), jnp.transpose(w_hh1)],
                axis=0).astype(jnp.bfloat16),                      # (2H, 4H)
            "b": (b_ih1 + b_hh1).reshape(1, 4 * HIDDEN_DIM),       # f32
        },
    ]

    params["fc_w"] = jax.random.uniform(keys[idx], (OUTPUT_DIM, HIDDEN_DIM),
                                        jnp.float32, -k, k); idx += 1
    params["fc_b"] = jax.random.uniform(keys[idx], (OUTPUT_DIM,),
                                        jnp.float32, -k, k).reshape(1, 1)
    return params


# --------------------------------------------------------------------------
# Forward pass (mirrors SentimentRNN.forward, eval mode)
# --------------------------------------------------------------------------
@jax.jit
def sentiment_rnn_forward(params, x_ids, h0, c0):
    B, T = x_ids.shape
    E = EMBEDDING_DIM

    # Time-major bf16 gather: transpose the tiny int32 id matrix, not the f32
    # activations; no separate cast/transpose passes over (B,T,E).
    # TODO(synk): for long sequences, move the gather into the kernel via
    # scalar prefetch + per-timestep DMA to overlap it with the recurrence.
    x_tm = jnp.take(params["embedding"], jnp.transpose(x_ids), axis=0)  # (T,B,E) bf16

    # Pad batch to a multiple of 8 (sublane width) for full vreg occupancy.
    B_pad = ((B + 7) // 8) * 8
    pad = B_pad - B
    if pad:
        x_tm = jnp.pad(x_tm, ((0, 0), (0, pad), (0, 0)))
        h0 = jnp.pad(h0, ((0, 0), (0, pad), (0, 0)))
        c0 = jnp.pad(c0, ((0, 0), (0, pad), (0, 0)))
    x_flat = x_tm.reshape(T * B_pad, E)                               # (T*B, E) bf16

    l0, l1 = params["lstm"]
    sig, h_n, c_n = fused_sentiment_lstm(
        x_flat, l0["w_ih_t"], l0["w_hh_t"], l0["b"],
        l1["w_cat_t"], l1["b"],
        h0, c0, params["fc_w"], params["fc_b"], T=T, B=B_pad)

    # Only sig_out[:, -1] is consumed in the reference; the kernel computes
    # exactly sigmoid(fc(h_T of top layer))  (Dropout is eval-mode identity).
    # TODO(synk): training-mode nn.Dropout(0.5) stochastic mask not applied.
    sig_out = sig[:B, 0]                                              # (B,)
    hidden_out = (h_n[:, :B, :], c_n[:, :B, :])
    return sig_out, hidden_out


if __name__ == "__main__":
    key = jax.random.PRNGKey(0)
    pkey, xkey = jax.random.split(key)

    params = init_params(pkey)

    B, T = 2, 8
    x_ids = jax.random.randint(xkey, (B, T), 0, VOCAB_SIZE, dtype=jnp.int32)
    h0 = jnp.zeros((NO_LAYERS, B, HIDDEN_DIM), jnp.float32)
    c0 = jnp.zeros((NO_LAYERS, B, HIDDEN_DIM), jnp.float32)

    sig_out, (h_n, c_n) = sentiment_rnn_forward(params, x_ids, h0, c0)
    jax.block_until_ready((sig_out, h_n, c_n))

    assert sig_out.shape == (B,)
    assert h_n.shape == (NO_LAYERS, B, HIDDEN_DIM)
    assert c_n.shape == (NO_LAYERS, B, HIDDEN_DIM)
    assert bool(jnp.all((sig_out >= 0.0) & (sig_out <= 1.0)))
    assert bool(jnp.all(jnp.isfinite(h_n))) and bool(jnp.all(jnp.isfinite(c_n)))
    print("KERNEL_OK")
</pallas_src>

<mosaic_0001>
module attributes {stable_mosaic.version = 11 : i64} {
  func.func @_fused_kernel(%arg0: memref<64x64xbf16, #tpu.memory_space<vmem>>, %arg1: memref<64x1024xbf16, #tpu.memory_space<vmem>>, %arg2: memref<256x1024xbf16, #tpu.memory_space<vmem>>, %arg3: memref<1x1024xf32, #tpu.memory_space<vmem>>, %arg4: memref<512x1024xbf16, #tpu.memory_space<vmem>>, %arg5: memref<1x1024xf32, #tpu.memory_space<vmem>>, %arg6: memref<2x8x256xf32, #tpu.memory_space<vmem>>, %arg7: memref<2x8x256xf32, #tpu.memory_space<vmem>>, %arg8: memref<1x256xf32, #tpu.memory_space<vmem>>, %arg9: memref<1x1xf32, #tpu.memory_space<vmem>>, %arg10: memref<8x1xf32, #tpu.memory_space<vmem>>, %arg11: memref<2x8x256xf32, #tpu.memory_space<vmem>>, %arg12: memref<2x8x256xf32, #tpu.memory_space<vmem>>, %arg13: memref<64x1024xf32, #tpu.memory_space<vmem>>) attributes {dimension_semantics = [], scalar_prefetch = 0 : i64, scratch_operands = 1 : i64, tpu.core_type = #tpu.core_type<tc>} {
    %c0 = arith.constant 0 : index
    %c0_0 = arith.constant 0 : index
    %0 = vector.load %arg0[%c0, %c0_0] : memref<64x64xbf16, #tpu.memory_space<vmem>>, vector<64x64xbf16>
    %c0_1 = arith.constant 0 : index
    %c0_2 = arith.constant 0 : index
    %1 = vector.load %arg1[%c0_1, %c0_2] : memref<64x1024xbf16, #tpu.memory_space<vmem>>, vector<64x1024xbf16>
    %cst = arith.constant dense<0.000000e+00> : vector<64x1024xf32>
    %2 = tpu.matmul %0, %1, %cst {dimension_numbers = #tpu.dot_dimension_numbers<[1], [0], [0], [1], [0, 0, 1, 1], [], []>} : vector<64x64xbf16>, vector<64x1024xbf16>, vector<64x1024xf32> -> vector<64x1024xf32>
    %c0_3 = arith.constant 0 : index
    %c0_4 = arith.constant 0 : index
    %3 = vector.load %arg3[%c0_3, %c0_4] : memref<1x1024xf32, #tpu.memory_space<vmem>>, vector<1x1024xf32>
    %4 = vector.broadcast %3 : vector<1x1024xf32> to vector<64x1024xf32>
    %5 = arith.addf %2, %4 : vector<64x1024xf32>
    %c0_5 = arith.constant 0 : index
    %c0_6 = arith.constant 0 : index
    %6 = vector.load %arg13[%c0_5, %c0_6] : memref<64x1024xf32, #tpu.memory_space<vmem>>, vector<64x1024xf32>
    tpu.vector_store %arg13[%c0_5, %c0_6], %5 {strides = array<i32>} : memref<64x1024xf32, #tpu.memory_space<vmem>>, vector<64x1024xf32>,
    %c0_7 = arith.constant 0 : index
    %c0_8 = arith.constant 0 : index
    %7 = vector.load %arg2[%c0_7, %c0_8] : memref<256x1024xbf16, #tpu.memory_space<vmem>>, vector<256x1024xbf16>
    %c0_9 = arith.constant 0 : index
    %c0_10 = arith.constant 0 : index
    %8 = vector.load %arg4[%c0_9, %c0_10] : memref<512x1024xbf16, #tpu.memory_space<vmem>>, vector<512x1024xbf16>
    %c0_11 = arith.constant 0 : index
    %c0_12 = arith.constant 0 : index
    %9 = vector.load %arg5[%c0_11, %c0_12] : memref<1x1024xf32, #tpu.memory_space<vmem>>, vector<1x1024xf32>
    %10 = vector.shape_cast %9 : vector<1x1024xf32> to vector<1x1024xf32>
    %11 = vector.broadcast %10 : vector<1x1024xf32> to vector<8x1024xf32>
    %c0_13 = arith.constant 0 : index
    %c0_14 = arith.constant 0 : index
    %c0_15 = arith.constant 0 : index
    %12 = vector.load %arg6[%c0_13, %c0_14, %c0_15] : memref<2x8x256xf32, #tpu.memory_space<vmem>>, vector<1x8x256xf32>
    %13 = vector.shape_cast %12 : vector<1x8x256xf32> to vector<8x256xf32>
    %14 = arith.truncf %13 : vector<8x256xf32> to vector<8x256xbf16>
    %c1 = arith.constant 1 : index
    %c0_16 = arith.constant 0 : index
    %c0_17 = arith.constant 0 : index
    %15 = vector.load %arg6[%c1, %c0_16, %c0_17] : memref<2x8x256xf32, #tpu.memory_space<vmem>>, vector<1x8x256xf32>
    %16 = vector.shape_cast %15 : vector<1x8x256xf32> to vector<8x256xf32>
    %17 = arith.truncf %16 : vector<8x256xf32> to vector<8x256xbf16>
    %c0_18 = arith.constant 0 : index
    %c0_19 = arith.constant 0 : index
    %c0_20 = arith.constant 0 : index
    %18 = vector.load %arg7[%c0_18, %c0_19, %c0_20] : memref<2x8x256xf32, #tpu.memory_space<vmem>>, vector<1x8x256xf32>
    %19 = vector.shape_cast %18 : vector<1x8x256xf32> to vector<8x256xf32>
    %c0_21 = arith.constant 0 : index
    %c0_22 = arith.constant 0 : index
    %20 = vector.load %arg13[%c0_21, %c0_22] : memref<64x1024xf32, #tpu.memory_space<vmem>>, vector<8x1024xf32>
    %cst_23 = arith.constant dense<0.000000e+00> : vector<8x1024xf32>
    %21 = tpu.matmul %14, %7, %cst_23 {dimension_numbers = #tpu.dot_dimension_numbers<[1], [0], [0], [1], [0, 0, 1, 1], [], []>} : vector<8x256xbf16>, vector<256x1024xbf16>, vector<8x1024xf32> -> vector<8x1024xf32>
    %22 = arith.addf %20, %21 : vector<8x1024xf32>
    %23 = vector.extract_strided_slice %22 {offsets = [0, 0], sizes = [8, 256], strides = [1, 1]} : vector<8x1024xf32> to vector<8x256xf32>
    %cst_24 = arith.constant 5.000000e-01 : f32
    %24 = vector.broadcast %cst_24 : f32 to vector<8x256xf32>
    %25 = arith.mulf %24, %23 : vector<8x256xf32>
    %26 = math.tanh %25 : vector<8x256xf32>
    %cst_25 = arith.constant 5.000000e-01 : f32
    %27 = vector.broadcast %cst_25 : f32 to vector<8x256xf32>
    %28 = arith.mulf %27, %26 : vector<8x256xf32>
    %cst_26 = arith.constant 5.000000e-01 : f32
    %29 = vector.broadcast %cst_26 : f32 to vector<8x256xf32>
    %30 = arith.addf %28, %29 : vector<8x256xf32>
    %31 = vector.extract_strided_slice %22 {offsets = [0, 256], sizes = [8, 256], strides = [1, 1]} : vector<8x1024xf32> to vector<8x256xf32>
    %cst_27 = arith.constant 5.000000e-01 : f32
    %32 = vector.broadcast %cst_27 : f32 to vector<8x256xf32>
    %33 = arith.mulf %32, %31 : vector<8x256xf32>
    %34 = math.tanh %33 : vector<8x256xf32>
    %cst_28 = arith.constant 5.000000e-01 : f32
    %35 = vector.broadcast %cst_28 : f32 to vector<8x256xf32>
    %36 = arith.mulf %35, %34 : vector<8x256xf32>
    %cst_29 = arith.constant 5.000000e-01 : f32
    %37 = vector.broadcast %cst_29 : f32 to vector<8x256xf32>
    %38 = arith.addf %36, %37 : vector<8x256xf32>
    %39 = vector.extract_strided_slice %22 {offsets = [0, 512], sizes = [8, 256], strides = [1, 1]} : vector<8x1024xf32> to vector<8x256xf32>
    %40 = math.tanh %39 : vector<8x256xf32>
    %41 = vector.extract_strided_slice %22 {offsets = [0, 768], sizes = [8, 256], strides = [1, 1]} : vector<8x1024xf32> to vector<8x256xf32>
    %cst_30 = arith.constant 5.000000e-01 : f32
    %42 = vector.broadcast %cst_30 : f32 to vector<8x256xf32>
    %43 = arith.mulf %42, %41 : vector<8x256xf32>
    %44 = math.tanh %43 : vector<8x256xf32>
    %cst_31 = arith.constant 5.000000e-01 : f32
    %45 = vector.broadcast %cst_31 : f32 to vector<8x256xf32>
    %46 = arith.mulf %45, %44 : vector<8x256xf32>
    %cst_32 = arith.constant 5.000000e-01 : f32
    %47 = vector.broadcast %cst_32 : f32 to vector<8x256xf32>
    %48 = arith.addf %46, %47 : vector<8x256xf32>
    %49 = arith.mulf %38, %19 : vector<8x256xf32>
    %50 = arith.mulf %30, %40 : vector<8x256xf32>
    %51 = arith.addf %49, %50 : vector<8x256xf32>
    %52 = math.tanh %51 : vector<8x256xf32>
    %53 = arith.mulf %48, %52 : vector<8x256xf32>
    %54 = arith.truncf %53 : vector<8x256xf32> to vector<8x256xbf16>
    %c1_33 = arith.constant 1 : index
    %c0_34 = arith.constant 0 : index
    %c0_35 = arith.constant 0 : index
    %55 = vector.load %arg7[%c1_33, %c0_34, %c0_35] : memref<2x8x256xf32, #tpu.memory_space<vmem>>, vector<1x8x256xf32>
    %56 = vector.shape_cast %55 : vector<1x8x256xf32> to vector<8x256xf32>
    %c0_i32 = arith.constant 0 : i32
    %c3_i32 = arith.constant 3 : i32
    %57 = arith.addi %c0_i32, %c3_i32 : i32
    %c1_i32 = arith.constant 1 : i32
    %58:5 = scf.for %arg14 = %c0_i32 to %57 step %c1_i32 iter_args(%arg15 = %54, %arg16 = %51, %arg17 = %17, %arg18 = %56, %arg19 = %54) -> (vector<8x256xbf16>, vector<8x256xf32>, vector<8x256xbf16>, vector<8x256xf32>, vector<8x256xbf16>)  : i32 {
      %c2_i32 = arith.constant 2 : i32
      %192 = arith.muli %c2_i32, %arg14 : i32
      %c1_i32_90 = arith.constant 1 : i32
      %193 = arith.addi %c1_i32_90, %192 : i32
      %c8_i32 = arith.constant 8 : i32
      %194 = arith.muli %193, %c8_i32 : i32
      %195 = tpu.assume_multiple %194, 8 : i32
      %196 = arith.index_cast %195 : i32 to index
      %c0_91 = arith.constant 0 : index
      %197 = vector.load %arg13[%196, %c0_91] : memref<64x1024xf32, #tpu.memory_space<vmem>>, vector<8x1024xf32>
      %cst_92 = arith.constant dense<0.000000e+00> : vector<8x1024xf32>
      %198 = tpu.matmul %arg15, %7, %cst_92 {dimension_numbers = #tpu.dot_dimension_numbers<[1], [0], [0], [1], [0, 0, 1, 1], [], []>} : vector<8x256xbf16>, vector<256x1024xbf16>, vector<8x1024xf32> -> vector<8x1024xf32>
      %199 = arith.addf %197, %198 : vector<8x1024xf32>
      %200 = vector.extract_strided_slice %199 {offsets = [0, 0], sizes = [8, 256], strides = [1, 1]} : vector<8x1024xf32> to vector<8x256xf32>
      %cst_93 = arith.constant 5.000000e-01 : f32
      %201 = vector.broadcast %cst_93 : f32 to vector<8x256xf32>
      %202 = arith.mulf %201, %200 : vector<8x256xf32>
      %203 = math.tanh %202 : vector<8x256xf32>
      %cst_94 = arith.constant 5.000000e-01 : f32
      %204 = vector.broadcast %cst_94 : f32 to vector<8x256xf32>
      %205 = arith.mulf %204, %203 : vector<8x256xf32>
      %cst_95 = arith.constant 5.000000e-01 : f32
      %206 = vector.broadcast %cst_95 : f32 to vector<8x256xf32>
      %207 = arith.addf %205, %206 : vector<8x256xf32>
      %208 = vector.extract_strided_slice %199 {offsets = [0, 256], sizes = [8, 256], strides = [1, 1]} : vector<8x1024xf32> to vector<8x256xf32>
      %cst_96 = arith.constant 5.000000e-01 : f32
      %209 = vector.broadcast %cst_96 : f32 to vector<8x256xf32>
      %210 = arith.mulf %209, %208 : vector<8x256xf32>
      %211 = math.tanh %210 : vector<8x256xf32>
      %cst_97 = arith.constant 5.000000e-01 : f32
      %212 = vector.broadcast %cst_97 : f32 to vector<8x256xf32>
      %213 = arith.mulf %212, %211 : vector<8x256xf32>
      %cst_98 = arith.constant 5.000000e-01 : f32
      %214 = vector.broadcast %cst_98 : f32 to vector<8x256xf32>
      %215 = arith.addf %213, %214 : vector<8x256xf32>
      %216 = vector.extract_strided_slice %199 {offsets = [0, 512], sizes = [8, 256], strides = [1, 1]} : vector<8x1024xf32> to vector<8x256xf32>
      %217 = math.tanh %216 : vector<8x256xf32>
      %218 = vector.extract_strided_slice %199 {offsets = [0, 768], sizes = [8, 256], strides = [1, 1]} : vector<8x1024xf32> to vector<8x256xf32>
      %cst_99 = arith.constant 5.000000e-01 : f32
      %219 = vector.broadcast %cst_99 : f32 to vector<8x256xf32>
      %220 = arith.mulf %219, %218 : vector<8x256xf32>
      %221 = math.tanh %220 : vector<8x256xf32>
      %cst_100 = arith.constant 5.000000e-01 : f32
      %222 = vector.broadcast %cst_100 : f32 to vector<8x256xf32>
      %223 = arith.mulf %222, %221 : vector<8x256xf32>
      %cst_101 = arith.constant 5.000000e-01 : f32
      %224 = vector.broadcast %cst_101 : f32 to vector<8x256xf32>
      %225 = arith.addf %223, %224 : vector<8x256xf32>
      %226 = arith.mulf %215, %arg16 : vector<8x256xf32>
      %227 = arith.mulf %207, %217 : vector<8x256xf32>
      %228 = arith.addf %226, %227 : vector<8x256xf32>
      %229 = math.tanh %228 : vector<8x256xf32>
      %230 = arith.mulf %225, %229 : vector<8x256xf32>
      %231 = tpu.concatenate %arg19, %arg17 in 1 : vector<8x256xbf16>, vector<8x256xbf16> -> vector<8x512xbf16>
      %cst_102 = arith.constant dense<0.000000e+00> : vector<8x1024xf32>
      %232 = tpu.matmul %231, %8, %cst_102 {dimension_numbers = #tpu.dot_dimension_numbers<[1], [0], [0], [1], [0, 0, 1, 1], [], []>} : vector<8x512xbf16>, vector<512x1024xbf16>, vector<8x1024xf32> -> vector<8x1024xf32>
      %233 = arith.addf %232, %11 : vector<8x1024xf32>
      %234 = vector.extract_strided_slice %233 {offsets = [0, 0], sizes = [8, 256], strides = [1, 1]} : vector<8x1024xf32> to vector<8x256xf32>
      %cst_103 = arith.constant 5.000000e-01 : f32
      %235 = vector.broadcast %cst_103 : f32 to vector<8x256xf32>
      %236 = arith.mulf %235, %234 : vector<8x256xf32>
      %237 = math.tanh %236 : vector<8x256xf32>
      %cst_104 = arith.constant 5.000000e-01 : f32
      %238 = vector.broadcast %cst_104 : f32 to vector<8x256xf32>
      %239 = arith.mulf %238, %237 : vector<8x256xf32>
      %cst_105 = arith.constant 5.000000e-01 : f32
      %240 = vector.broadcast %cst_105 : f32 to vector<8x256xf32>
      %241 = arith.addf %239, %240 : vector<8x256xf32>
      %242 = vector.extract_strided_slice %233 {offsets = [0, 256], sizes = [8, 256], strides = [1, 1]} : vector<8x1024xf32> to vector<8x256xf32>
      %cst_106 = arith.constant 5.000000e-01 : f32
      %243 = vector.broadcast %cst_106 : f32 to vector<8x256xf32>
      %244 = arith.mulf %243, %242 : vector<8x256xf32>
      %245 = math.tanh %244 : vector<8x256xf32>
      %cst_107 = arith.constant 5.000000e-01 : f32
      %246 = vector.broadcast %cst_107 : f32 to vector<8x256xf32>
      %247 = arith.mulf %246, %245 : vector<8x256xf32>
      %cst_108 = arith.constant 5.000000e-01 : f32
      %248 = vector.broadcast %cst_108 : f32 to vector<8x256xf32>
      %249 = arith.addf %247, %248 : vector<8x256xf32>
      %250 = vector.extract_strided_slice %233 {offsets = [0, 512], sizes = [8, 256], strides = [1, 1]} : vector<8x1024xf32> to vector<8x256xf32>
      %251 = math.tanh %250 : vector<8x256xf32>
      %252 = vector.extract_strided_slice %233 {offsets = [0, 768], sizes = [8, 256], strides = [1, 1]} : vector<8x1024xf32> to vector<8x256xf32>
      %cst_109 = arith.constant 5.000000e-01 : f32
      %253 = vector.broadcast %cst_109 : f32 to vector<8x256xf32>
      %254 = arith.mulf %253, %252 : vector<8x256xf32>
      %255 = math.tanh %254 : vector<8x256xf32>
      %cst_110 = arith.constant 5.000000e-01 : f32
      %256 = vector.broadcast %cst_110 : f32 to vector<8x256xf32>
      %257 = arith.mulf %256, %255 : vector<8x256xf32>
      %cst_111 = arith.constant 5.000000e-01 : f32
      %258 = vector.broadcast %cst_111 : f32 to vector<8x256xf32>
      %259 = arith.addf %257, %258 : vector<8x256xf32>
      %260 = arith.mulf %249, %arg18 : vector<8x256xf32>
      %261 = arith.mulf %241, %251 : vector<8x256xf32>
      %262 = arith.addf %260, %261 : vector<8x256xf32>
      %263 = math.tanh %262 : vector<8x256xf32>
      %264 = arith.mulf %259, %263 : vector<8x256xf32>
      %265 = arith.truncf %230 : vector<8x256xf32> to vector<8x256xbf16>
      %266 = arith.truncf %264 : vector<8x256xf32> to vector<8x256xbf16>
      %c1_i32_112 = arith.constant 1 : i32
      %267 = arith.addi %193, %c1_i32_112 : i32
      %c8_i32_113 = arith.constant 8 : i32
      %268 = arith.muli %267, %c8_i32_113 : i32
      %269 = tpu.assume_multiple %268, 8 : i32
      %270 = arith.index_cast %269 : i32 to index
      %c0_114 = arith.constant 0 : index
      %271 = vector.load %arg13[%270, %c0_114] : memref<64x1024xf32, #tpu.memory_space<vmem>>, vector<8x1024xf32>
      %cst_115 = arith.constant dense<0.000000e+00> : vector<8x1024xf32>
      %272 = tpu.matmul %265, %7, %cst_115 {dimension_numbers = #tpu.dot_dimension_numbers<[1], [0], [0], [1], [0, 0, 1, 1], [], []>} : vector<8x256xbf16>, vector<256x1024xbf16>, vector<8x1024xf32> -> vector<8x1024xf32>
      %273 = arith.addf %271, %272 : vector<8x1024xf32>
      %274 = vector.extract_strided_slice %273 {offsets = [0, 0], sizes = [8, 256], strides = [1, 1]} : vector<8x1024xf32> to vector<8x256xf32>
      %cst_116 = arith.constant 5.000000e-01 : f32
      %275 = vector.broadcast %cst_116 : f32 to vector<8x256xf32>
      %276 = arith.mulf %275, %274 : vector<8x256xf32>
      %277 = math.tanh %276 : vector<8x256xf32>
      %cst_117 = arith.constant 5.000000e-01 : f32
      %278 = vector.broadcast %cst_117 : f32 to vector<8x256xf32>
      %279 = arith.mulf %278, %277 : vector<8x256xf32>
      %cst_118 = arith.constant 5.000000e-01 : f32
      %280 = vector.broadcast %cst_118 : f32 to vector<8x256xf32>
      %281 = arith.addf %279, %280 : vector<8x256xf32>
      %282 = vector.extract_strided_slice %273 {offsets = [0, 256], sizes = [8, 256], strides = [1, 1]} : vector<8x1024xf32> to vector<8x256xf32>
      %cst_119 = arith.constant 5.000000e-01 : f32
      %283 = vector.broadcast %cst_119 : f32 to vector<8x256xf32>
      %284 = arith.mulf %283, %282 : vector<8x256xf32>
      %285 = math.tanh %284 : vector<8x256xf32>
      %cst_120 = arith.constant 5.000000e-01 : f32
      %286 = vector.broadcast %cst_120 : f32 to vector<8x256xf32>
      %287 = arith.mulf %286, %285 : vector<8x256xf32>
      %cst_121 = arith.constant 5.000000e-01 : f32
      %288 = vector.broadcast %cst_121 : f32 to vector<8x256xf32>
      %289 = arith.addf %287, %288 : vector<8x256xf32>
      %290 = vector.extract_strided_slice %273 {offsets = [0, 512], sizes = [8, 256], strides = [1, 1]} : vector<8x1024xf32> to vector<8x256xf32>
      %291 = math.tanh %290 : vector<8x256xf32>
      %292 = vector.extract_strided_slice %273 {offsets = [0, 768], sizes = [8, 256], strides = [1, 1]} : vector<8x1024xf32> to vector<8x256xf32>
      %cst_122 = arith.constant 5.000000e-01 : f32
      %293 = vector.broadcast %cst_122 : f32 to vector<8x256xf32>
      %294 = arith.mulf %293, %292 : vector<8x256xf32>
      %295 = math.tanh %294 : vector<8x256xf32>
      %cst_123 = arith.constant 5.000000e-01 : f32
      %296 = vector.broadcast %cst_123 : f32 to vector<8x256xf32>
      %297 = arith.mulf %296, %295 : vector<8x256xf32>
      %cst_124 = arith.constant 5.000000e-01 : f32
      %298 = vector.broadcast %cst_124 : f32 to vector<8x256xf32>
      %299 = arith.addf %297, %298 : vector<8x256xf32>
      %300 = arith.mulf %289, %228 : vector<8x256xf32>
      %301 = arith.mulf %281, %291 : vector<8x256xf32>
      %302 = arith.addf %300, %301 : vector<8x256xf32>
      %303 = math.tanh %302 : vector<8x256xf32>
      %304 = arith.mulf %299, %303 : vector<8x256xf32>
      %305 = tpu.concatenate %265, %266 in 1 : vector<8x256xbf16>, vector<8x256xbf16> -> vector<8x512xbf16>
      %cst_125 = arith.constant dense<0.000000e+00> : vector<8x1024xf32>
      %306 = tpu.matmul %305, %8, %cst_125 {dimension_numbers = #tpu.dot_dimension_numbers<[1], [0], [0], [1], [0, 0, 1, 1], [], []>} : vector<8x512xbf16>, vector<512x1024xbf16>, vector<8x1024xf32> -> vector<8x1024xf32>
      %307 = arith.addf %306, %11 : vector<8x1024xf32>
      %308 = vector.extract_strided_slice %307 {offsets = [0, 0], sizes = [8, 256], strides = [1, 1]} : vector<8x1024xf32> to vector<8x256xf32>
      %cst_126 = arith.constant 5.000000e-01 : f32
      %309 = vector.broadcast %cst_126 : f32 to vector<8x256xf32>
      %310 = arith.mulf %309, %308 : vector<8x256xf32>
      %311 = math.tanh %310 : vector<8x256xf32>
      %cst_127 = arith.constant 5.000000e-01 : f32
      %312 = vector.broadcast %cst_127 : f32 to vector<8x256xf32>
      %313 = arith.mulf %312, %311 : vector<8x256xf32>
      %cst_128 = arith.constant 5.000000e-01 : f32
      %314 = vector.broadcast %cst_128 : f32 to vector<8x256xf32>
      %315 = arith.addf %313, %314 : vector<8x256xf32>
      %316 = vector.extract_strided_slice %307 {offsets = [0, 256], sizes = [8, 256], strides = [1, 1]} : vector<8x1024xf32> to vector<8x256xf32>
      %cst_129 = arith.constant 5.000000e-01 : f32
      %317 = vector.broadcast %cst_129 : f32 to vector<8x256xf32>
      %318 = arith.mulf %317, %316 : vector<8x256xf32>
      %319 = math.tanh %318 : vector<8x256xf32>
      %cst_130 = arith.constant 5.000000e-01 : f32
      %320 = vector.broadcast %cst_130 : f32 to vector<8x256xf32>
      %321 = arith.mulf %320, %319 : vector<8x256xf32>
      %cst_131 = arith.constant 5.000000e-01 : f32
      %322 = vector.broadcast %cst_131 : f32 to vector<8x256xf32>
      %323 = arith.addf %321, %322 : vector<8x256xf32>
      %324 = vector.extract_strided_slice %307 {offsets = [0, 512], sizes = [8, 256], strides = [1, 1]} : vector<8x1024xf32> to vector<8x256xf32>
      %325 = math.tanh %324 : vector<8x256xf32>
      %326 = vector.extract_strided_slice %307 {offsets = [0, 768], sizes = [8, 256], strides = [1, 1]} : vector<8x1024xf32> to vector<8x256xf32>
      %cst_132 = arith.constant 5.000000e-01 : f32
      %327 = vector.broadcast %cst_132 : f32 to vector<8x256xf32>
      %328 = arith.mulf %327, %326 : vector<8x256xf32>
      %329 = math.tanh %328 : vector<8x256xf32>
      %cst_133 = arith.constant 5.000000e-01 : f32
      %330 = vector.broadcast %cst_133 : f32 to vector<8x256xf32>
      %331 = arith.mulf %330, %329 : vector<8x256xf32>
      %cst_134 = arith.constant 5.000000e-01 : f32
      %332 = vector.broadcast %cst_134 : f32 to vector<8x256xf32>
      %333 = arith.addf %331, %332 : vector<8x256xf32>
      %334 = arith.mulf %323, %262 : vector<8x256xf32>
      %335 = arith.mulf %315, %325 : vector<8x256xf32>
      %336 = arith.addf %334, %335 : vector<8x256xf32>
      %337 = math.tanh %336 : vector<8x256xf32>
      %338 = arith.mulf %333, %337 : vector<8x256xf32>
      %339 = arith.truncf %304 : vector<8x256xf32> to vector<8x256xbf16>
      %340 = arith.truncf %338 : vector<8x256xf32> to vector<8x256xbf16>
      scf.yield %339, %302, %340, %336, %339 : vector<8x256xbf16>, vector<8x256xf32>, vector<8x256xbf16>, vector<8x256xf32>, vector<8x256xbf16>
    }
    %c3_i32_36 = arith.constant 3 : i32
    %c56 = arith.constant 56 : index
    %c0_37 = arith.constant 0 : index
    %59 = vector.load %arg13[%c56, %c0_37] : memref<64x1024xf32, #tpu.memory_space<vmem>>, vector<8x1024xf32>
    %cst_38 = arith.constant dense<0.000000e+00> : vector<8x1024xf32>
    %60 = tpu.matmul %58#0, %7, %cst_38 {dimension_numbers = #tpu.dot_dimension_numbers<[1], [0], [0], [1], [0, 0, 1, 1], [], []>} : vector<8x256xbf16>, vector<256x1024xbf16>, vector<8x1024xf32> -> vector<8x1024xf32>
    %61 = arith.addf %59, %60 : vector<8x1024xf32>
    %62 = vector.extract_strided_slice %61 {offsets = [0, 0], sizes = [8, 256], strides = [1, 1]} : vector<8x1024xf32> to vector<8x256xf32>
    %cst_39 = arith.constant 5.000000e-01 : f32
    %63 = vector.broadcast %cst_39 : f32 to vector<8x256xf32>
    %64 = arith.mulf %63, %62 : vector<8x256xf32>
    %65 = math.tanh %64 : vector<8x256xf32>
    %cst_40 = arith.constant 5.000000e-01 : f32
    %66 = vector.broadcast %cst_40 : f32 to vector<8x256xf32>
    %67 = arith.mulf %66, %65 : vector<8x256xf32>
    %cst_41 = arith.constant 5.000000e-01 : f32
    %68 = vector.broadcast %cst_41 : f32 to vector<8x256xf32>
    %69 = arith.addf %67, %68 : vector<8x256xf32>
    %70 = vector.extract_strided_slice %61 {offsets = [0, 256], sizes = [8, 256], strides = [1, 1]} : vector<8x1024xf32> to vector<8x256xf32>
    %cst_42 = arith.constant 5.000000e-01 : f32
    %71 = vector.broadcast %cst_42 : f32 to vector<8x256xf32>
    %72 = arith.mulf %71, %70 : vector<8x256xf32>
    %73 = math.tanh %72 : vector<8x256xf32>
    %cst_43 = arith.constant 5.000000e-01 : f32
    %74 = vector.broadcast %cst_43 : f32 to vector<8x256xf32>
    %75 = arith.mulf %74, %73 : vector<8x256xf32>
    %cst_44 = arith.constant 5.000000e-01 : f32
    %76 = vector.broadcast %cst_44 : f32 to vector<8x256xf32>
    %77 = arith.addf %75, %76 : vector<8x256xf32>
    %78 = vector.extract_strided_slice %61 {offsets = [0, 512], sizes = [8, 256], strides = [1, 1]} : vector<8x1024xf32> to vector<8x256xf32>
    %79 = math.tanh %78 : vector<8x256xf32>
    %80 = vector.extract_strided_slice %61 {offsets = [0, 768], sizes = [8, 256], strides = [1, 1]} : vector<8x1024xf32> to vector<8x256xf32>
    %cst_45 = arith.constant 5.000000e-01 : f32
    %81 = vector.broadcast %cst_45 : f32 to vector<8x256xf32>
    %82 = arith.mulf %81, %80 : vector<8x256xf32>
    %83 = math.tanh %82 : vector<8x256xf32>
    %cst_46 = arith.constant 5.000000e-01 : f32
    %84 = vector.broadcast %cst_46 : f32 to vector<8x256xf32>
    %85 = arith.mulf %84, %83 : vector<8x256xf32>
    %cst_47 = arith.constant 5.000000e-01 : f32
    %86 = vector.broadcast %cst_47 : f32 to vector<8x256xf32>
    %87 = arith.addf %85, %86 : vector<8x256xf32>
    %88 = arith.mulf %77, %58#1 : vector<8x256xf32>
    %89 = arith.mulf %69, %79 : vector<8x256xf32>
    %90 = arith.addf %88, %89 : vector<8x256xf32>
    %91 = math.tanh %90 : vector<8x256xf32>
    %92 = arith.mulf %87, %91 : vector<8x256xf32>
    %93 = tpu.concatenate %58#4, %58#2 in 1 : vector<8x256xbf16>, vector<8x256xbf16> -> vector<8x512xbf16>
    %cst_48 = arith.constant dense<0.000000e+00> : vector<8x1024xf32>
    %94 = tpu.matmul %93, %8, %cst_48 {dimension_numbers = #tpu.dot_dimension_numbers<[1], [0], [0], [1], [0, 0, 1, 1], [], []>} : vector<8x512xbf16>, vector<512x1024xbf16>, vector<8x1024xf32> -> vector<8x1024xf32>
    %95 = arith.addf %94, %11 : vector<8x1024xf32>
    %96 = vector.extract_strided_slice %95 {offsets = [0, 0], sizes = [8, 256], strides = [1, 1]} : vector<8x1024xf32> to vector<8x256xf32>
    %cst_49 = arith.constant 5.000000e-01 : f32
    %97 = vector.broadcast %cst_49 : f32 to vector<8x256xf32>
    %98 = arith.mulf %97, %96 : vector<8x256xf32>
    %99 = math.tanh %98 : vector<8x256xf32>
    %cst_50 = arith.constant 5.000000e-01 : f32
    %100 = vector.broadcast %cst_50 : f32 to vector<8x256xf32>
    %101 = arith.mulf %100, %99 : vector<8x256xf32>
    %cst_51 = arith.constant 5.000000e-01 : f32
    %102 = vector.broadcast %cst_51 : f32 to vector<8x256xf32>
    %103 = arith.addf %101, %102 : vector<8x256xf32>
    %104 = vector.extract_strided_slice %95 {offsets = [0, 256], sizes = [8, 256], strides = [1, 1]} : vector<8x1024xf32> to vector<8x256xf32>
    %cst_52 = arith.constant 5.000000e-01 : f32
    %105 = vector.broadcast %cst_52 : f32 to vector<8x256xf32>
    %106 = arith.mulf %105, %104 : vector<8x256xf32>
    %107 = math.tanh %106 : vector<8x256xf32>
    %cst_53 = arith.constant 5.000000e-01 : f32
    %108 = vector.broadcast %cst_53 : f32 to vector<8x256xf32>
    %109 = arith.mulf %108, %107 : vector<8x256xf32>
    %cst_54 = arith.constant 5.000000e-01 : f32
    %110 = vector.broadcast %cst_54 : f32 to vector<8x256xf32>
    %111 = arith.addf %109, %110 : vector<8x256xf32>
    %112 = vector.extract_strided_slice %95 {offsets = [0, 512], sizes = [8, 256], strides = [1, 1]} : vector<8x1024xf32> to vector<8x256xf32>
    %113 = math.tanh %112 : vector<8x256xf32>
    %114 = vector.extract_strided_slice %95 {offsets = [0, 768], sizes = [8, 256], strides = [1, 1]} : vector<8x1024xf32> to vector<8x256xf32>
    %cst_55 = arith.constant 5.000000e-01 : f32
    %115 = vector.broadcast %cst_55 : f32 to vector<8x256xf32>
    %116 = arith.mulf %115, %114 : vector<8x256xf32>
    %117 = math.tanh %116 : vector<8x256xf32>
    %cst_56 = arith.constant 5.000000e-01 : f32
    %118 = vector.broadcast %cst_56 : f32 to vector<8x256xf32>
    %119 = arith.mulf %118, %117 : vector<8x256xf32>
    %cst_57 = arith.constant 5.000000e-01 : f32
    %120 = vector.broadcast %cst_57 : f32 to vector<8x256xf32>
    %121 = arith.addf %119, %120 : vector<8x256xf32>
    %122 = arith.mulf %111, %58#3 : vector<8x256xf32>
    %123 = arith.mulf %103, %113 : vector<8x256xf32>
    %124 = arith.addf %122, %123 : vector<8x256xf32>
    %125 = math.tanh %124 : vector<8x256xf32>
    %126 = arith.mulf %121, %125 : vector<8x256xf32>
    %127 = arith.truncf %92 : vector<8x256xf32> to vector<8x256xbf16>
    %128 = arith.truncf %126 : vector<8x256xf32> to vector<8x256xbf16>
    %129 = tpu.concatenate %127, %128 in 1 : vector<8x256xbf16>, vector<8x256xbf16> -> vector<8x512xbf16>
    %cst_58 = arith.constant dense<0.000000e+00> : vector<8x1024xf32>
    %130 = tpu.matmul %129, %8, %cst_58 {dimension_numbers = #tpu.dot_dimension_numbers<[1], [0], [0], [1], [0, 0, 1, 1], [], []>} : vector<8x512xbf16>, vector<512x1024xbf16>, vector<8x1024xf32> -> vector<8x1024xf32>
    %131 = arith.addf %130, %11 : vector<8x1024xf32>
    %132 = vector.extract_strided_slice %131 {offsets = [0, 0], sizes = [8, 256], strides = [1, 1]} : vector<8x1024xf32> to vector<8x256xf32>
    %cst_59 = arith.constant 5.000000e-01 : f32
    %133 = vector.broadcast %cst_59 : f32 to vector<8x256xf32>
    %134 = arith.mulf %133, %132 : vector<8x256xf32>
    %135 = math.tanh %134 : vector<8x256xf32>
    %cst_60 = arith.constant 5.000000e-01 : f32
    %136 = vector.broadcast %cst_60 : f32 to vector<8x256xf32>
    %137 = arith.mulf %136, %135 : vector<8x256xf32>
    %cst_61 = arith.constant 5.000000e-01 : f32
    %138 = vector.broadcast %cst_61 : f32 to vector<8x256xf32>
    %139 = arith.addf %137, %138 : vector<8x256xf32>
    %140 = vector.extract_strided_slice %131 {offsets = [0, 256], sizes = [8, 256], strides = [1, 1]} : vector<8x1024xf32> to vector<8x256xf32>
    %cst_62 = arith.constant 5.000000e-01 : f32
    %141 = vector.broadcast %cst_62 : f32 to vector<8x256xf32>
    %142 = arith.mulf %141, %140 : vector<8x256xf32>
    %143 = math.tanh %142 : vector<8x256xf32>
    %cst_63 = arith.constant 5.000000e-01 : f32
    %144 = vector.broadcast %cst_63 : f32 to vector<8x256xf32>
    %145 = arith.mulf %144, %143 : vector<8x256xf32>
    %cst_64 = arith.constant 5.000000e-01 : f32
    %146 = vector.broadcast %cst_64 : f32 to vector<8x256xf32>
    %147 = arith.addf %145, %146 : vector<8x256xf32>
    %148 = vector.extract_strided_slice %131 {offsets = [0, 512], sizes = [8, 256], strides = [1, 1]} : vector<8x1024xf32> to vector<8x256xf32>
    %149 = math.tanh %148 : vector<8x256xf32>
    %150 = vector.extract_strided_slice %131 {offsets = [0, 768], sizes = [8, 256], strides = [1, 1]} : vector<8x1024xf32> to vector<8x256xf32>
    %cst_65 = arith.constant 5.000000e-01 : f32
    %151 = vector.broadcast %cst_65 : f32 to vector<8x256xf32>
    %152 = arith.mulf %151, %150 : vector<8x256xf32>
    %153 = math.tanh %152 : vector<8x256xf32>
    %cst_66 = arith.constant 5.000000e-01 : f32
    %154 = vector.broadcast %cst_66 : f32 to vector<8x256xf32>
    %155 = arith.mulf %154, %153 : vector<8x256xf32>
    %cst_67 = arith.constant 5.000000e-01 : f32
    %156 = vector.broadcast %cst_67 : f32 to vector<8x256xf32>
    %157 = arith.addf %155, %156 : vector<8x256xf32>
    %158 = arith.mulf %147, %124 : vector<8x256xf32>
    %159 = arith.mulf %139, %149 : vector<8x256xf32>
    %160 = arith.addf %158, %159 : vector<8x256xf32>
    %161 = math.tanh %160 : vector<8x256xf32>
    %162 = arith.mulf %157, %161 : vector<8x256xf32>
    %163 = arith.extf %127 : vector<8x256xbf16> to vector<8x256xf32>
    %c0_68 = arith.constant 0 : index
    %c0_69 = arith.constant 0 : index
    %c0_70 = arith.constant 0 : index
    %164 = vector.load %arg11[%c0_68, %c0_69, %c0_70] : memref<2x8x256xf32, #tpu.memory_space<vmem>>, vector<1x8x256xf32>
    %165 = vector.shape_cast %164 : vector<1x8x256xf32> to vector<8x256xf32>
    %166 = vector.shape_cast %163 : vector<8x256xf32> to vector<1x8x256xf32>
    tpu.vector_store %arg11[%c0_68, %c0_69, %c0_70], %166 {strides = array<i32>} : memref<2x8x256xf32, #tpu.memory_space<vmem>>, vector<1x8x256xf32>,
    %c0_71 = arith.constant 0 : index
    %c0_72 = arith.constant 0 : index
    %c0_73 = arith.constant 0 : index
    %167 = vector.load %arg12[%c0_71, %c0_72, %c0_73] : memref<2x8x256xf32, #tpu.memory_space<vmem>>, vector<1x8x256xf32>
    %168 = vector.shape_cast %167 : vector<1x8x256xf32> to vector<8x256xf32>
    %169 = vector.shape_cast %90 : vector<8x256xf32> to vector<1x8x256xf32>
    tpu.vector_store %arg12[%c0_71, %c0_72, %c0_73], %169 {strides = array<i32>} : memref<2x8x256xf32, #tpu.memory_space<vmem>>, vector<1x8x256xf32>,
    %c1_74 = arith.constant 1 : index
    %c0_75 = arith.constant 0 : index
    %c0_76 = arith.constant 0 : index
    %170 = vector.load %arg11[%c1_74, %c0_75, %c0_76] : memref<2x8x256xf32, #tpu.memory_space<vmem>>, vector<1x8x256xf32>
    %171 = vector.shape_cast %170 : vector<1x8x256xf32> to vector<8x256xf32>
    %172 = vector.shape_cast %162 : vector<8x256xf32> to vector<1x8x256xf32>
    tpu.vector_store %arg11[%c1_74, %c0_75, %c0_76], %172 {strides = array<i32>} : memref<2x8x256xf32, #tpu.memory_space<vmem>>, vector<1x8x256xf32>,
    %c1_77 = arith.constant 1 : index
    %c0_78 = arith.constant 0 : index
    %c0_79 = arith.constant 0 : index
    %173 = vector.load %arg12[%c1_77, %c0_78, %c0_79] : memref<2x8x256xf32, #tpu.memory_space<vmem>>, vector<1x8x256xf32>
    %174 = vector.shape_cast %173 : vector<1x8x256xf32> to vector<8x256xf32>
    %175 = vector.shape_cast %160 : vector<8x256xf32> to vector<1x8x256xf32>
    tpu.vector_store %arg12[%c1_77, %c0_78, %c0_79], %175 {strides = array<i32>} : memref<2x8x256xf32, #tpu.memory_space<vmem>>, vector<1x8x256xf32>,
    %c0_80 = arith.constant 0 : index
    %c0_81 = arith.constant 0 : index
    %176 = vector.load %arg8[%c0_80, %c0_81] : memref<1x256xf32, #tpu.memory_space<vmem>>, vector<1x256xf32>
    %177 = vector.broadcast %176 : vector<1x256xf32> to vector<8x256xf32>
    %178 = arith.mulf %162, %177 : vector<8x256xf32>
    %cst_82 = arith.constant dense<0.000000e+00> : vector<8xf32>
    %179 = vector.multi_reduction <add>, %178, %cst_82 [1] : vector<8x256xf32> to vector<8xf32>
    %180 = vector.shape_cast %179 : vector<8xf32> to vector<8x1xf32>
    %c0_83 = arith.constant 0 : index
    %c0_84 = arith.constant 0 : index
    %181 = vector.load %arg9[%c0_83, %c0_84] : memref<1x1xf32, #tpu.memory_space<vmem>>, vector<1x1xf32>
    %182 = vector.broadcast %181 : vector<1x1xf32> to vector<8x1xf32>
    %183 = arith.addf %180, %182 : vector<8x1xf32>
    %cst_85 = arith.constant 5.000000e-01 : f32
    %184 = vector.broadcast %cst_85 : f32 to vector<8x1xf32>
    %185 = arith.mulf %184, %183 : vector<8x1xf32>
    %186 = math.tanh %185 : vector<8x1xf32>
    %cst_86 = arith.constant 5.000000e-01 : f32
    %187 = vector.broadcast %cst_86 : f32 to vector<8x1xf32>
    %188 = arith.mulf %187, %186 : vector<8x1xf32>
    %cst_87 = arith.constant 5.000000e-01 : f32
    %189 = vector.broadcast %cst_87 : f32 to vector<8x1xf32>
    %190 = arith.addf %188, %189 : vector<8x1xf32>
    %c0_88 = arith.constant 0 : index
    %c0_89 = arith.constant 0 : index
    %191 = vector.load %arg10[%c0_88, %c0_89] : memref<8x1xf32, #tpu.memory_space<vmem>>, vector<8x1xf32>
    tpu.vector_store %arg10[%c0_88, %c0_89], %190 {strides = array<i32>} : memref<8x1xf32, #tpu.memory_space<vmem>>, vector<8x1xf32>,
    return
  }
}

</mosaic_0001>

<llo_original>
// kernel: sentiment_rnn_forward.1
$region0: #{sentiment_rnn_forward.1}
  #allocation0 [shape = 'u32[]', space=smem, size = 0x4, offset = 0x4, fixed_abs, tag = 'smem constant byte address 0x4 - core index']
  #allocation1 [shape = 'u32[72,128]{1,0:T(1,128)}', space=vmem, size = 0x9000, scoped, tag = 'internal scratch']
  #allocation2 [shape = 'f32[64,1024]{1,0:T(8,128)}', space=vmem, size = 0x40000, scoped, tag = 'scratch operand']
  #allocation3 [shape = 'f32[1,1]{1,0:T(1,128)S(1)}', space=vmem, size = 0x200, scoped, tag = 'scoped memory for sentiment_rnn_forward.1']
  %s0 = inlined_call_operand.vmem [shape: bf16[64,64], index: 0, kind: input, shape index: {}]
  %s1 = inlined_call_operand.vmem [shape: bf16[64,1024], index: 1, kind: input, shape index: {}]
  %s2 = inlined_call_operand.hbm [shape: bf16[256,1024], index: 2, kind: input, shape index: {}]
  %s3 = inlined_call_operand.vmem [shape: f32[1,1024], index: 3, kind: input, shape index: {}]
  %s4 = inlined_call_operand.hbm [shape: bf16[512,1024], index: 4, kind: input, shape index: {}]
  %s5 = inlined_call_operand.vmem [shape: f32[1,1024], index: 5, kind: input, shape index: {}]
  %s6 = inlined_call_operand.vmem [shape: f32[2,8,256], index: 6, kind: input, shape index: {}]
  %s7 = inlined_call_operand.vmem [shape: f32[2,8,256], index: 7, kind: input, shape index: {}]
  %s8 = inlined_call_operand.vmem [shape: f32[1,256], index: 8, kind: input, shape index: {}]
  %s9 = inlined_call_operand.<no memory space> [shape: f32[1,1], index: 9, kind: input, shape index: {}]
  %s10 = inlined_call_operand.vmem [shape: f32[8,1], index: 10, kind: output, shape index: {0}]
  %s11 = inlined_call_operand.vmem [shape: f32[2,8,256], index: 11, kind: output, shape index: {1}]
  %s12 = inlined_call_operand.vmem [shape: f32[2,8,256], index: 12, kind: output, shape index: {2}]
  %13 = xla_tuple %s10, %s11, %s12
  %s14 = sld [smem:[#allocation0]]
  $region81: #{sentiment_rnn_forward.1} parent=0
    _
  %s16 = ssub.s32 1, %s14
  %s17 = scalar_select 0, %s16, %s14
  %v18 = vstv %s9
  %19 = vst [vmem:[#allocation3] sm:$0x1] %v18
  $region1: #{sentiment_rnn_forward.1} parent=0
    #allocation4 [shape = 'u8[524288]{0}', space=vmem, size = 0x80000, scoped, tag = 'input window, operand 2, single buffered']
    #allocation5 [shape = 's32[1]{0}', space=sflag, size = 0x4, scoped, tag = 'scoped memory for sentiment_rnn_forward.1']
    #allocation6 [shape = 'u8[1048576]{0}', space=vmem, size = 0x100000, scoped, tag = 'input window, operand 4, single buffered']
    #allocation7 [shape = 's32[1]{0}', space=sflag, size = 0x4, scoped, tag = 'scoped memory for sentiment_rnn_forward.1']
    %20 = vsyncpa [#allocation5], 0
    %21 = vsyncpa [#allocation7], 0
    // Predicated region
    $region2: #{sentiment_rnn_forward.1} parent=1 // pred_check
      _
    $region3: #{sentiment_rnn_forward.1} parent=1 // pred_check_branch
      %23 = sbr.rel (0) target = $region5
    $region4: #{sentiment_rnn_forward.1} parent=1 // pred_region
      _
    $region5: #{sentiment_rnn_forward.1} parent=1 // pred_fallthru
      _
    // Predicated region
    $region6: #{sentiment_rnn_forward.1} parent=1 // pred_check
      _
    $region7: #{sentiment_rnn_forward.1} parent=1 // pred_check_branch
      %25 = sbr.rel (0) target = $region9
    $region8: #{sentiment_rnn_forward.1} parent=1 // pred_region
      _
    $region9: #{sentiment_rnn_forward.1} parent=1 // pred_fallthru
      _
    // Predicated region
    $region10: #{sentiment_rnn_forward.1} parent=1 // pred_check
      _
    $region11: #{sentiment_rnn_forward.1} parent=1 // pred_check_branch
      %27 = sbr.rel (0) target = $region13
    $region12: #{sentiment_rnn_forward.1} parent=1 // pred_region
      %29 = vsyncadd [#allocation5], 0
      %s30 = sshll.u32 %s2, 4
      %s31 = int_to_ptr.hbm [resolvable:$true] %s30
      %s32 = sshll.u32 [#allocation4], 4
      %s33 = int_to_ptr.vmem [resolvable:$true] %s32
      %38 = dma.hbm_to_vmem [thread:$0]  %s31, 16384, %s33, [#allocation5], 512, 512, 32
    $region13: #{sentiment_rnn_forward.1} parent=1 // pred_fallthru
      _
    // Predicated region
    $region14: #{sentiment_rnn_forward.1} parent=1 // pred_check
      _
    $region15: #{sentiment_rnn_forward.1} parent=1 // pred_check_branch
      %40 = sbr.rel (0) target = $region17
    $region16: #{sentiment_rnn_forward.1} parent=1 // pred_region
      _
    $region17: #{sentiment_rnn_forward.1} parent=1 // pred_fallthru
      _
    // Predicated region
    $region18: #{sentiment_rnn_forward.1} parent=1 // pred_check
      _
    $region19: #{sentiment_rnn_forward.1} parent=1 // pred_check_branch
      %42 = sbr.rel (0) target = $region21
    $region20: #{sentiment_rnn_forward.1} parent=1 // pred_region
      %44 = vsyncadd [#allocation7], 0
      %s45 = sshll.u32 %s4, 4
      %s46 = int_to_ptr.hbm [resolvable:$true] %s45
      %s47 = sshll.u32 [#allocation6], 4
      %s48 = int_to_ptr.vmem [resolvable:$true] %s47
      %53 = dma.hbm_to_vmem [thread:$0]  %s46, 32768, %s48, [#allocation7], 512, 512, 32
    $region21: #{sentiment_rnn_forward.1} parent=1 // pred_fallthru
      _
    // Predicated region
    $region22: #{sentiment_rnn_forward.1} parent=1 // pred_check
      _
    $region23: #{sentiment_rnn_forward.1} parent=1 // pred_check_branch
      %55 = sbr.rel (0) target = $region25
    $region24: #{sentiment_rnn_forward.1} parent=1 // pred_region
      _
    $region25: #{sentiment_rnn_forward.1} parent=1 // pred_fallthru
      _
    // Predicated region
    $region26: #{sentiment_rnn_forward.1} parent=1 // pred_check
      _
    $region27: #{sentiment_rnn_forward.1} parent=1 // pred_check_branch
      %57 = sbr.rel (0) target = $region29
    $region28: #{sentiment_rnn_forward.1} parent=1 // pred_region
      _
    $region29: #{sentiment_rnn_forward.1} parent=1 // pred_fallthru
      _
    // Predicated region
    $region30: #{sentiment_rnn_forward.1} parent=1 // pred_check
      _
    $region31: #{sentiment_rnn_forward.1} parent=1 // pred_check_branch
      %59 = sbr.rel (0) target = $region33
    $region32: #{sentiment_rnn_forward.1} parent=1 // pred_region
      _
    $region33: #{sentiment_rnn_forward.1} parent=1 // pred_fallthru
      _
    // Predicated region
    $region34: #{sentiment_rnn_forward.1} parent=1 // pred_check
      _
    $region35: #{sentiment_rnn_forward.1} parent=1 // pred_check_branch
      %61 = sbr.rel (0) target = $region37
    $region36: #{sentiment_rnn_forward.1} parent=1 // pred_region
      _
    $region37: #{sentiment_rnn_forward.1} parent=1 // pred_fallthru
      _
    // Predicated region
    $region38: #{sentiment_rnn_forward.1} parent=1 // pred_check
      _
    $region39: #{sentiment_rnn_forward.1} parent=1 // pred_check_branch
      %63 = sbr.rel (0) target = $region41
    $region40: #{sentiment_rnn_forward.1} parent=1 // pred_region
      _
    $region41: #{sentiment_rnn_forward.1} parent=1 // pred_fallthru
      _
    // Predicated region
    $region42: #{sentiment_rnn_forward.1} parent=1 // pred_check
      _
    $region43: #{sentiment_rnn_forward.1} parent=1 // pred_check_branch
      %65 = sbr.rel (0) target = $region45
    $region44: #{sentiment_rnn_forward.1} parent=1 // pred_region
      %67 = dma.done [#allocation5], 16384
    $region45: #{sentiment_rnn_forward.1} parent=1 // pred_fallthru
      _
    // Predicated region
    $region46: #{sentiment_rnn_forward.1} parent=1 // pred_check
      _
    $region47: #{sentiment_rnn_forward.1} parent=1 // pred_check_branch
      %69 = sbr.rel (0) target = $region49
    $region48: #{sentiment_rnn_forward.1} parent=1 // pred_region
      %71 = dma.done [#allocation7], 32768
    $region49: #{sentiment_rnn_forward.1} parent=1 // pred_fallthru
      _
    %v73 = vld [vmem:[%s0] sm:$0xf]
    %v74 = vld [vmem:[%s0 + $0x4] sm:$0xf]
    %v75 = vld [vmem:[%s0 + $0x8] sm:$0xf]
    %v76 = vld [vmem:[%s0 + $0xc] sm:$0xf]
    %v77 = vld [vmem:[%s0 + $0x10] sm:$0xf]
    %v78 = vld [vmem:[%s0 + $0x14] sm:$0xf]
    %v79 = vld [vmem:[%s0 + $0x18] sm:$0xf]
    %v80 = vld [vmem:[%s0 + $0x1c] sm:$0xf]
    %v81 = vld [vmem:[%s1] sm:$0xff]
    %v82 = vld [vmem:[%s1 + $0x8] sm:$0xff]
    %v83 = vld [vmem:[%s1 + $0x10] sm:$0xff]
    %v84 = vld [vmem:[%s1 + $0x18] sm:$0xff]
    %v85 = vld [vmem:[%s1 + $0x20] sm:$0xff]
    %v86 = vld [vmem:[%s1 + $0x28] sm:$0xff]
    %v87 = vld [vmem:[%s1 + $0x30] sm:$0xff]
    %v88 = vld [vmem:[%s1 + $0x38] sm:$0xff]
    %v89 = vld [vmem:[%s1 + $0x40] sm:$0xff]
    %v90 = vld [vmem:[%s1 + $0x48] sm:$0xff]
    %v91 = vld [vmem:[%s1 + $0x50] sm:$0xff]
    %v92 = vld [vmem:[%s1 + $0x58] sm:$0xff]
    %v93 = vld [vmem:[%s1 + $0x60] sm:$0xff]
    %v94 = vld [vmem:[%s1 + $0x68] sm:$0xff]
    %v95 = vld [vmem:[%s1 + $0x70] sm:$0xff]
    %v96 = vld [vmem:[%s1 + $0x78] sm:$0xff]
    %v97 = vld [vmem:[%s1 + $0x80] sm:$0xff]
    %v98 = vld [vmem:[%s1 + $0x88] sm:$0xff]
    %v99 = vld [vmem:[%s1 + $0x90] sm:$0xff]
    %v100 = vld [vmem:[%s1 + $0x98] sm:$0xff]
    %v101 = vld [vmem:[%s1 + $0xa0] sm:$0xff]
    %v102 = vld [vmem:[%s1 + $0xa8] sm:$0xff]
    %v103 = vld [vmem:[%s1 + $0xb0] sm:$0xff]
    %v104 = vld [vmem:[%s1 + $0xb8] sm:$0xff]
    %v105 = vld [vmem:[%s1 + $0xc0] sm:$0xff]
    %v106 = vld [vmem:[%s1 + $0xc8] sm:$0xff]
    %v107 = vld [vmem:[%s1 + $0xd0] sm:$0xff]
    %v108 = vld [vmem:[%s1 + $0xd8] sm:$0xff]
    %v109 = vld [vmem:[%s1 + $0xe0] sm:$0xff]
    %v110 = vld [vmem:[%s1 + $0xe8] sm:$0xff]
    %v111 = vld [vmem:[%s1 + $0xf0] sm:$0xff]
    %v112 = vld [vmem:[%s1 + $0xf8] sm:$0xff]
    %v113 = vld [vmem:[%s3] sm:$0xff]
    %v115 = vperm.slane %v113, 0
    %v116 = vperm.slane %v113, 1
    %v117 = vperm.slane %v113, 2
    %v118 = vperm.slane %v113, 3
    %v119 = vperm.slane %v113, 4
    %v120 = vperm.slane %v113, 5
    %v121 = vperm.slane %v113, 6
    %v122 = vperm.slane %v113, 7
    %v139 = vunpack.c.l.b16 %v73
    %v140 = vunpack.c.l.b16 %v74
    %v141 = vunpack.c.l.b16 %v75
    %v142 = vunpack.c.l.b16 %v76
    %v143 = vunpack.c.l.b16 %v77
    %v144 = vunpack.c.l.b16 %v78
    %v145 = vunpack.c.l.b16 %v79
    %v146 = vunpack.c.l.b16 %v80
    %v147 = vpack.c.b16 %v140, %v139
    %v148 = vpack.c.b16 %v142, %v141
    %v149 = vpack.c.b16 %v144, %v143
    %v150 = vpack.c.b16 %v146, %v145
    %v183 = vunpack.c.l.b16 %v81
    %v184 = vunpack.c.h.b16 %v81
    %v185 = vunpack.c.l.b16 %v82
    %v186 = vunpack.c.h.b16 %v82
    %v187 = vunpack.c.l.b16 %v83
    %v188 = vunpack.c.h.b16 %v83
    %v189 = vunpack.c.l.b16 %v84
    %v190 = vunpack.c.h.b16 %v84
    %v191 = vunpack.c.l.b16 %v85
    %v192 = vunpack.c.h.b16 %v85
    %v193 = vunpack.c.l.b16 %v86
    %v194 = vunpack.c.h.b16 %v86
    %v195 = vunpack.c.l.b16 %v87
    %v196 = vunpack.c.h.b16 %v87
    %v197 = vunpack.c.l.b16 %v88
    %v198 = vunpack.c.h.b16 %v88
    %v199 = vunpack.c.l.b16 %v89
    %v200 = vunpack.c.h.b16 %v89
    %v201 = vunpack.c.l.b16 %v90
    %v202 = vunpack.c.h.b16 %v90
    %v203 = vunpack.c.l.b16 %v91
    %v204 = vunpack.c.h.b16 %v91
    %v205 = vunpack.c.l.b16 %v92
    %v206 = vunpack.c.h.b16 %v92
    %v207 = vunpack.c.l.b16 %v93
    %v208 = vunpack.c.h.b16 %v93
    %v209 = vunpack.c.l.b16 %v94
    %v210 = vunpack.c.h.b16 %v94
    %v211 = vunpack.c.l.b16 %v95
    %v212 = vunpack.c.h.b16 %v95
    %v213 = vunpack.c.l.b16 %v96
    %v214 = vunpack.c.h.b16 %v96
    %v215 = vunpack.c.l.b16 %v97
    %v216 = vunpack.c.h.b16 %v97
    %v217 = vunpack.c.l.b16 %v98
    %v218 = vunpack.c.h.b16 %v98
    %v219 = vunpack.c.l.b16 %v99
    %v220 = vunpack.c.h.b16 %v99
    %v221 = vunpack.c.l.b16 %v100
    %v222 = vunpack.c.h.b16 %v100
    %v223 = vunpack.c.l.b16 %v101
    %v224 = vunpack.c.h.b16 %v101
    %v225 = vunpack.c.l.b16 %v102
    %v226 = vunpack.c.h.b16 %v102
    %v227 = vunpack.c.l.b16 %v103
    %v228 = vunpack.c.h.b16 %v103
    %v229 = vunpack.c.l.b16 %v104
    %v230 = vunpack.c.h.b16 %v104
    %v231 = vunpack.c.l.b16 %v105
    %v232 = vunpack.c.h.b16 %v105
    %v233 = vunpack.c.l.b16 %v106
    %v234 = vunpack.c.h.b16 %v106
    %v235 = vunpack.c.l.b16 %v107
    %v236 = vunpack.c.h.b16 %v107
    %v237 = vunpack.c.l.b16 %v108
    %v238 = vunpack.c.h.b16 %v108
    %v239 = vunpack.c.l.b16 %v109
    %v240 = vunpack.c.h.b16 %v109
    %v241 = vunpack.c.l.b16 %v110
    %v242 = vunpack.c.h.b16 %v110
    %v243 = vunpack.c.l.b16 %v111
    %v244 = vunpack.c.h.b16 %v111
    %v245 = vunpack.c.l.b16 %v112
    %v246 = vunpack.c.h.b16 %v112
    %v247 = vpack.c.b16 %v191, %v183
    %v248 = vpack.c.b16 %v192, %v184
    %v249 = vpack.c.b16 %v193, %v185
    %v250 = vpack.c.b16 %v194, %v186
    %v251 = vpack.c.b16 %v195, %v187
    %v252 = vpack.c.b16 %v196, %v188
    %v253 = vpack.c.b16 %v197, %v189
    %v254 = vpack.c.b16 %v198, %v190
    %v255 = vpack.c.b16 %v207, %v199
    %v256 = vpack.c.b16 %v208, %v200
    %v257 = vpack.c.b16 %v209, %v201
    %v258 = vpack.c.b16 %v210, %v202
    %v259 = vpack.c.b16 %v211, %v203
    %v260 = vpack.c.b16 %v212, %v204
    %v261 = vpack.c.b16 %v213, %v205
    %v262 = vpack.c.b16 %v214, %v206
    %v263 = vpack.c.b16 %v223, %v215
    %v264 = vpack.c.b16 %v224, %v216
    %v265 = vpack.c.b16 %v225, %v217
    %v266 = vpack.c.b16 %v226, %v218
    %v267 = vpack.c.b16 %v227, %v219
    %v268 = vpack.c.b16 %v228, %v220
    %v269 = vpack.c.b16 %v229, %v221
    %v270 = vpack.c.b16 %v230, %v222
    %v271 = vpack.c.b16 %v239, %v231
    %v272 = vpack.c.b16 %v240, %v232
    %v273 = vpack.c.b16 %v241, %v233
    %v274 = vpack.c.b16 %v242, %v234
    %v275 = vpack.c.b16 %v243, %v235
    %v276 = vpack.c.b16 %v244, %v236
    %v277 = vpack.c.b16 %v245, %v237
    %v278 = vpack.c.b16 %v246, %v238
    %vm311 = vcmask 523264
    %v313 = vsel %vm311, %v147, 0
    %v316 = vsel %vm311, %v148, 0
    %v319 = vsel %vm311, %v149, 0
    %v322 = vsel %vm311, %v150, 0
    %324 = vmatpush.bf16.msra.mxu0 0
    %325 = vmatpush.bf16.msra.mxu0 0
    %326 = vmatpush.bf16.msra.mxu0 0
    %327 = vmatpush.bf16.msra.mxu0 0
    %328 = vmatpush.bf16.msra.mxu0 %v271
    %329 = vmatpush.bf16.msra.mxu0 %v263
    %330 = vmatpush.bf16.msra.mxu0 %v255
    %331 = vmatpush.bf16.msra.mxu0 %v247
    %332 = vmatmul.bf16.gmra.mxu0 %v313
    %v333 = vpop.f32.mrf.mxu0
    %v334 = vadd.f32 %v115, %v333
    %v335 = vpop.f32.mrf.mxu0
    %v336 = vadd.f32 %v115, %v335
    %337 = vmatmul.bf16.gmra.mxu0 %v316
    %v338 = vpop.f32.mrf.mxu0
    %v339 = vadd.f32 %v115, %v338
    %v340 = vpop.f32.mrf.mxu0
    %v341 = vadd.f32 %v115, %v340
    %342 = vmatmul.bf16.gmra.mxu0 %v319
    %v343 = vpop.f32.mrf.mxu0
    %v344 = vadd.f32 %v115, %v343
    %v345 = vpop.f32.mrf.mxu0
    %v346 = vadd.f32 %v115, %v345
    %347 = vmatmul.bf16.gmra.mxu0 %v322
    %v348 = vpop.f32.mrf.mxu0
    %v349 = vadd.f32 %v115, %v348
    %v350 = vpop.f32.mrf.mxu0
    %v351 = vadd.f32 %v115, %v350
    %352 = vdwg.mxu0
    %353 = vmatpush.bf16.msra.mxu0 0
    %354 = vmatpush.bf16.msra.mxu0 0
    %355 = vmatpush.bf16.msra.mxu0 0
    %356 = vmatpush.bf16.msra.mxu0 0
    %357 = vmatpush.bf16.msra.mxu0 %v272
    %358 = vmatpush.bf16.msra.mxu0 %v264
    %359 = vmatpush.bf16.msra.mxu0 %v256
    %360 = vmatpush.bf16.msra.mxu0 %v248
    %361 = vmatmul.bf16.gmra.mxu0 %v313
    %v362 = vpop.f32.mrf.mxu0
    %v363 = vadd.f32 %v116, %v362
    %v364 = vpop.f32.mrf.mxu0
    %v365 = vadd.f32 %v116, %v364
    %366 = vmatmul.bf16.gmra.mxu0 %v316
    %v367 = vpop.f32.mrf.mxu0
    %v368 = vadd.f32 %v116, %v367
    %v369 = vpop.f32.mrf.mxu0
    %v370 = vadd.f32 %v116, %v369
    %371 = vmatmul.bf16.gmra.mxu0 %v319
    %v372 = vpop.f32.mrf.mxu0
    %v373 = vadd.f32 %v116, %v372
    %v374 = vpop.f32.mrf.mxu0
    %v375 = vadd.f32 %v116, %v374
    %376 = vmatmul.bf16.gmra.mxu0 %v322
    %v377 = vpop.f32.mrf.mxu0
    %v378 = vadd.f32 %v116, %v377
    %v379 = vpop.f32.mrf.mxu0
    %v380 = vadd.f32 %v116, %v379
    %381 = vdwg.mxu0
    %382 = vmatpush.bf16.msra.mxu0 0
    %383 = vmatpush.bf16.msra.mxu0 0
    %384 = vmatpush.bf16.msra.mxu0 0
    %385 = vmatpush.bf16.msra.mxu0 0
    %386 = vmatpush.bf16.msra.mxu0 %v273
    %387 = vmatpush.bf16.msra.mxu0 %v265
    %388 = vmatpush.bf16.msra.mxu0 %v257
    %389 = vmatpush.bf16.msra.mxu0 %v249
    %390 = vmatmul.bf16.gmra.mxu0 %v313
    %v391 = vpop.f32.mrf.mxu0
    %v392 = vadd.f32 %v117, %v391
    %v393 = vpop.f32.mrf.mxu0
    %v394 = vadd.f32 %v117, %v393
    %395 = vmatmul.bf16.gmra.mxu0 %v316
    %v396 = vpop.f32.mrf.mxu0
    %v397 = vadd.f32 %v117, %v396
    %v398 = vpop.f32.mrf.mxu0
    %v399 = vadd.f32 %v117, %v398
    %400 = vmatmul.bf16.gmra.mxu0 %v319
    %v401 = vpop.f32.mrf.mxu0
    %v402 = vadd.f32 %v117, %v401
    %v403 = vpop.f32.mrf.mxu0
    %v404 = vadd.f32 %v117, %v403
    %405 = vmatmul.bf16.gmra.mxu0 %v322
    %v406 = vpop.f32.mrf.mxu0
    %v407 = vadd.f32 %v117, %v406
    %v408 = vpop.f32.mrf.mxu0
    %v409 = vadd.f32 %v117, %v408
    %410 = vdwg.mxu0
    %411 = vmatpush.bf16.msra.mxu0 0
    %412 = vmatpush.bf16.msra.mxu0 0
    %413 = vmatpush.bf16.msra.mxu0 0
    %414 = vmatpush.bf16.msra.mxu0 0
    %415 = vmatpush.bf16.msra.mxu0 %v274
    %416 = vmatpush.bf16.msra.mxu0 %v266
    %417 = vmatpush.bf16.msra.mxu0 %v258
    %418 = vmatpush.bf16.msra.mxu0 %v250
    %419 = vmatmul.bf16.gmra.mxu0 %v313
    %v420 = vpop.f32.mrf.mxu0
    %v421 = vadd.f32 %v118, %v420
    %v422 = vpop.f32.mrf.mxu0
    %v423 = vadd.f32 %v118, %v422
    %424 = vmatmul.bf16.gmra.mxu0 %v316
    %v425 = vpop.f32.mrf.mxu0
    %v426 = vadd.f32 %v118, %v425
    %v427 = vpop.f32.mrf.mxu0
    %v428 = vadd.f32 %v118, %v427
    %429 = vmatmul.bf16.gmra.mxu0 %v319
    %v430 = vpop.f32.mrf.mxu0
    %v431 = vadd.f32 %v118, %v430
    %v432 = vpop.f32.mrf.mxu0
    %v433 = vadd.f32 %v118, %v432
    %434 = vmatmul.bf16.gmra.mxu0 %v322
    %v435 = vpop.f32.mrf.mxu0
    %v436 = vadd.f32 %v118, %v435
    %v437 = vpop.f32.mrf.mxu0
    %v438 = vadd.f32 %v118, %v437
    %439 = vdwg.mxu0
    %440 = vmatpush.bf16.msra.mxu0 0
    %441 = vmatpush.bf16.msra.mxu0 0
    %442 = vmatpush.bf16.msra.mxu0 0
    %443 = vmatpush.bf16.msra.mxu0 0
    %444 = vmatpush.bf16.msra.mxu0 %v275
    %445 = vmatpush.bf16.msra.mxu0 %v267
    %446 = vmatpush.bf16.msra.mxu0 %v259
    %447 = vmatpush.bf16.msra.mxu0 %v251
    %448 = vmatmul.bf16.gmra.mxu0 %v313
    %v449 = vpop.f32.mrf.mxu0
    %v450 = vadd.f32 %v119, %v449
    %v451 = vpop.f32.mrf.mxu0
    %v452 = vadd.f32 %v119, %v451
    %453 = vmatmul.bf16.gmra.mxu0 %v316
    %v454 = vpop.f32.mrf.mxu0
    %v455 = vadd.f32 %v119, %v454
    %v456 = vpop.f32.mrf.mxu0
    %v457 = vadd.f32 %v119, %v456
    %458 = vmatmul.bf16.gmra.mxu0 %v319
    %v459 = vpop.f32.mrf.mxu0
    %v460 = vadd.f32 %v119, %v459
    %v461 = vpop.f32.mrf.mxu0
    %v462 = vadd.f32 %v119, %v461
    %463 = vmatmul.bf16.gmra.mxu0 %v322
    %v464 = vpop.f32.mrf.mxu0
    %v465 = vadd.f32 %v119, %v464
    %v466 = vpop.f32.mrf.mxu0
    %v467 = vadd.f32 %v119, %v466
    %468 = vdwg.mxu0
    %469 = vmatpush.bf16.msra.mxu0 0
    %470 = vmatpush.bf16.msra.mxu0 0
    %471 = vmatpush.bf16.msra.mxu0 0
    %472 = vmatpush.bf16.msra.mxu0 0
    %473 = vmatpush.bf16.msra.mxu0 %v276
    %474 = vmatpush.bf16.msra.mxu0 %v268
    %475 = vmatpush.bf16.msra.mxu0 %v260
    %476 = vmatpush.bf16.msra.mxu0 %v252
    %477 = vmatmul.bf16.gmra.mxu0 %v313
    %v478 = vpop.f32.mrf.mxu0
    %v479 = vadd.f32 %v120, %v478
    %v480 = vpop.f32.mrf.mxu0
    %v481 = vadd.f32 %v120, %v480
    %482 = vmatmul.bf16.gmra.mxu0 %v316
    %v483 = vpop.f32.mrf.mxu0
    %v484 = vadd.f32 %v120, %v483
    %v485 = vpop.f32.mrf.mxu0
    %v486 = vadd.f32 %v120, %v485
    %487 = vmatmul.bf16.gmra.mxu0 %v319
    %v488 = vpop.f32.mrf.mxu0
    %v489 = vadd.f32 %v120, %v488
    %v490 = vpop.f32.mrf.mxu0
    %v491 = vadd.f32 %v120, %v490
    %492 = vmatmul.bf16.gmra.mxu0 %v322
    %v493 = vpop.f32.mrf.mxu0
    %v494 = vadd.f32 %v120, %v493
    %v495 = vpop.f32.mrf.mxu0
    %v496 = vadd.f32 %v120, %v495
    %497 = vdwg.mxu0
    %498 = vmatpush.bf16.msra.mxu0 0
    %499 = vmatpush.bf16.msra.mxu0 0
    %500 = vmatpush.bf16.msra.mxu0 0
    %501 = vmatpush.bf16.msra.mxu0 0
    %502 = vmatpush.bf16.msra.mxu0 %v277
    %503 = vmatpush.bf16.msra.mxu0 %v269
    %504 = vmatpush.bf16.msra.mxu0 %v261
    %505 = vmatpush.bf16.msra.mxu0 %v253
    %506 = vmatmul.bf16.gmra.mxu0 %v313
    %v507 = vpop.f32.mrf.mxu0
    %v508 = vadd.f32 %v121, %v507
    %v509 = vpop.f32.mrf.mxu0
    %v510 = vadd.f32 %v121, %v509
    %511 = vmatmul.bf16.gmra.mxu0 %v316
    %v512 = vpop.f32.mrf.mxu0
    %v513 = vadd.f32 %v121, %v512
    %v514 = vpop.f32.mrf.mxu0
    %v515 = vadd.f32 %v121, %v514
    %516 = vmatmul.bf16.gmra.mxu0 %v319
    %v517 = vpop.f32.mrf.mxu0
    %v518 = vadd.f32 %v121, %v517
    %v519 = vpop.f32.mrf.mxu0
    %v520 = vadd.f32 %v121, %v519
    %521 = vmatmul.bf16.gmra.mxu0 %v322
    %v522 = vpop.f32.mrf.mxu0
    %v523 = vadd.f32 %v121, %v522
    %v524 = vpop.f32.mrf.mxu0
    %v525 = vadd.f32 %v121, %v524
    %526 = vdwg.mxu0
    %527 = vmatpush.bf16.msra.mxu0 0
    %528 = vmatpush.bf16.msra.mxu0 0
    %529 = vmatpush.bf16.msra.mxu0 0
    %530 = vmatpush.bf16.msra.mxu0 0
    %531 = vmatpush.bf16.msra.mxu0 %v278
    %532 = vmatpush.bf16.msra.mxu0 %v270
    %533 = vmatpush.bf16.msra.mxu0 %v262
    %534 = vmatpush.bf16.msra.mxu0 %v254
    %535 = vmatmul.bf16.gmra.mxu0 %v313
    %v536 = vpop.f32.mrf.mxu0
    %v537 = vadd.f32 %v122, %v536
    %v538 = vpop.f32.mrf.mxu0
    %v539 = vadd.f32 %v122, %v538
    %540 = vmatmul.bf16.gmra.mxu0 %v316
    %v541 = vpop.f32.mrf.mxu0
    %v542 = vadd.f32 %v122, %v541
    %v543 = vpop.f32.mrf.mxu0
    %v544 = vadd.f32 %v122, %v543
    %545 = vmatmul.bf16.gmra.mxu0 %v319
    %v546 = vpop.f32.mrf.mxu0
    %v547 = vadd.f32 %v122, %v546
    %v548 = vpop.f32.mrf.mxu0
    %v549 = vadd.f32 %v122, %v548
    %550 = vmatmul.bf16.gmra.mxu0 %v322
    %v551 = vpop.f32.mrf.mxu0
    %v552 = vadd.f32 %v122, %v551
    %v553 = vpop.f32.mrf.mxu0
    %v554 = vadd.f32 %v122, %v553
    %555 = vdwg.mxu0
    %556 = vst [vmem:[#allocation2] sm:$0xff] %v334
    %557 = vst [vmem:[#allocation2 + $0x8] sm:$0xff] %v363
    %558 = vst [vmem:[#allocation2 + $0x10] sm:$0xff] %v392
    %559 = vst [vmem:[#allocation2 + $0x18] sm:$0xff] %v421
    %560 = vst [vmem:[#allocation2 + $0x20] sm:$0xff] %v450
    %561 = vst [vmem:[#allocation2 + $0x28] sm:$0xff] %v479
    %562 = vst [vmem:[#allocation2 + $0x30] sm:$0xff] %v508
    %563 = vst [vmem:[#allocation2 + $0x38] sm:$0xff] %v537
    %564 = vst [vmem:[#allocation2 + $0x40] sm:$0xff] %v336
    %565 = vst [vmem:[#allocation2 + $0x48] sm:$0xff] %v365
    %566 = vst [vmem:[#allocation2 + $0x50] sm:$0xff] %v394
    %567 = vst [vmem:[#allocation2 + $0x58] sm:$0xff] %v423
    %568 = vst [vmem:[#allocation2 + $0x60] sm:$0xff] %v452
    %569 = vst [vmem:[#allocation2 + $0x68] sm:$0xff] %v481
    %570 = vst [vmem:[#allocation2 + $0x70] sm:$0xff] %v510
    %571 = vst [vmem:[#allocation2 + $0x78] sm:$0xff] %v539
    %572 = vst [vmem:[#allocation2 + $0x80] sm:$0xff] %v339
    %573 = vst [vmem:[#allocation2 + $0x88] sm:$0xff] %v368
    %574 = vst [vmem:[#allocation2 + $0x90] sm:$0xff] %v397
    %575 = vst [vmem:[#allocation2 + $0x98] sm:$0xff] %v426
    %576 = vst [vmem:[#allocation2 + $0xa0] sm:$0xff] %v455
    %577 = vst [vmem:[#allocation2 + $0xa8] sm:$0xff] %v484
    %578 = vst [vmem:[#allocation2 + $0xb0] sm:$0xff] %v513
    %579 = vst [vmem:[#allocation2 + $0xb8] sm:$0xff] %v542
    %580 = vst [vmem:[#allocation2 + $0xc0] sm:$0xff] %v341
    %581 = vst [vmem:[#allocation2 + $0xc8] sm:$0xff] %v370
    %582 = vst [vmem:[#allocation2 + $0xd0] sm:$0xff] %v399
    %583 = vst [vmem:[#allocation2 + $0xd8] sm:$0xff] %v428
    %584 = vst [vmem:[#allocation2 + $0xe0] sm:$0xff] %v457
    %585 = vst [vmem:[#allocation2 + $0xe8] sm:$0xff] %v486
    %586 = vst [vmem:[#allocation2 + $0xf0] sm:$0xff] %v515
    %587 = vst [vmem:[#allocation2 + $0xf8] sm:$0xff] %v544
    %588 = vst [vmem:[#allocation2 + $0x100] sm:$0xff] %v344
    %589 = vst [vmem:[#allocation2 + $0x108] sm:$0xff] %v373
    %590 = vst [vmem:[#allocation2 + $0x110] sm:$0xff] %v402
    %591 = vst [vmem:[#allocation2 + $0x118] sm:$0xff] %v431
    %592 = vst [vmem:[#allocation2 + $0x120] sm:$0xff] %v460
    %593 = vst [vmem:[#allocation2 + $0x128] sm:$0xff] %v489
    %594 = vst [vmem:[#allocation2 + $0x130] sm:$0xff] %v518
    %595 = vst [vmem:[#allocation2 + $0x138] sm:$0xff] %v547
    %596 = vst [vmem:[#allocation2 + $0x140] sm:$0xff] %v346
    %597 = vst [vmem:[#allocation2 + $0x148] sm:$0xff] %v375
    %598 = vst [vmem:[#allocation2 + $0x150] sm:$0xff] %v404
    %599 = vst [vmem:[#allocation2 + $0x158] sm:$0xff] %v433
    %600 = vst [vmem:[#allocation2 + $0x160] sm:$0xff] %v462
    %601 = vst [vmem:[#allocation2 + $0x168] sm:$0xff] %v491
    %602 = vst [vmem:[#allocation2 + $0x170] sm:$0xff] %v520
    %603 = vst [vmem:[#allocation2 + $0x178] sm:$0xff] %v549
    %604 = vst [vmem:[#allocation2 + $0x180] sm:$0xff] %v349
    %605 = vst [vmem:[#allocation2 + $0x188] sm:$0xff] %v378
    %606 = vst [vmem:[#allocation2 + $0x190] sm:$0xff] %v407
    %607 = vst [vmem:[#allocation2 + $0x198] sm:$0xff] %v436
    %608 = vst [vmem:[#allocation2 + $0x1a0] sm:$0xff] %v465
    %609 = vst [vmem:[#allocation2 + $0x1a8] sm:$0xff] %v494
    %610 = vst [vmem:[#allocation2 + $0x1b0] sm:$0xff] %v523
    %611 = vst [vmem:[#allocation2 + $0x1b8] sm:$0xff] %v552
    %612 = vst [vmem:[#allocation2 + $0x1c0] sm:$0xff] %v351
    %613 = vst [vmem:[#allocation2 + $0x1c8] sm:$0xff] %v380
    %614 = vst [vmem:[#allocation2 + $0x1d0] sm:$0xff] %v409
    %615 = vst [vmem:[#allocation2 + $0x1d8] sm:$0xff] %v438
    %616 = vst [vmem:[#allocation2 + $0x1e0] sm:$0xff] %v467
    %617 = vst [vmem:[#allocation2 + $0x1e8] sm:$0xff] %v496
    %618 = vst [vmem:[#allocation2 + $0x1f0] sm:$0xff] %v525
    %619 = vst [vmem:[#allocation2 + $0x1f8] sm:$0xff] %v554
    %v620 = vld [vmem:[#allocation4] sm:$0xff]
    %v621 = vld [vmem:[#allocation4 + $0x8] sm:$0xff]
    %v622 = vld [vmem:[#allocation4 + $0x10] sm:$0xff]
    %v623 = vld [vmem:[#allocation4 + $0x18] sm:$0xff]
    %v624 = vld [vmem:[#allocation4 + $0x20] sm:$0xff]
    %v625 = vld [vmem:[#allocation4 + $0x28] sm:$0xff]
    %v626 = vld [vmem:[#allocation4 + $0x30] sm:$0xff]
    %v627 = vld [vmem:[#allocation4 + $0x38] sm:$0xff]
    %v628 = vld [vmem:[#allocation4 + $0x40] sm:$0xff]
    %v629 = vld [vmem:[#allocation4 + $0x48] sm:$0xff]
    %v630 = vld [vmem:[#allocation4 + $0x50] sm:$0xff]
    %v631 = vld [vmem:[#allocation4 + $0x58] sm:$0xff]
    %v632 = vld [vmem:[#allocation4 + $0x60] sm:$0xff]
    %v633 = vld [vmem:[#allocation4 + $0x68] sm:$0xff]
    %v634 = vld [vmem:[#allocation4 + $0x70] sm:$0xff]
    %v635 = vld [vmem:[#allocation4 + $0x78] sm:$0xff]
    %v636 = vld [vmem:[#allocation4 + $0x80] sm:$0xff]
    %v637 = vld [vmem:[#allocation4 + $0x88] sm:$0xff]
    %v638 = vld [vmem:[#allocation4 + $0x90] sm:$0xff]
    %v639 = vld [vmem:[#allocation4 + $0x98] sm:$0xff]
    %v640 = vld [vmem:[#allocation4 + $0xa0] sm:$0xff]
    %v641 = vld [vmem:[#allocation4 + $0xa8] sm:$0xff]
    %v642 = vld [vmem:[#allocation4 + $0xb0] sm:$0xff]
    %v643 = vld [vmem:[#allocation4 + $0xb8] sm:$0xff]
    %v644 = vld [vmem:[#allocation4 + $0xc0] sm:$0xff]
    %v645 = vld [vmem:[#allocation4 + $0xc8] sm:$0xff]
    %v646 = vld [vmem:[#allocation4 + $0xd0] sm:$0xff]
    %v647 = vld [vmem:[#allocation4 + $0xd8] sm:$0xff]
    %v648 = vld [vmem:[#allocation4 + $0xe0] sm:$0xff]
    %v649 = vld [vmem:[#allocation4 + $0xe8] sm:$0xff]
    %v650 = vld [vmem:[#allocation4 + $0xf0] sm:$0xff]
    %v651 = vld [vmem:[#allocation4 + $0xf8] sm:$0xff]
    %v652 = vld [vmem:[#allocation4 + $0x100] sm:$0xff]
    %v653 = vld [vmem:[#allocation4 + $0x108] sm:$0xff]
    %v654 = vld [vmem:[#allocation4 + $0x110] sm:$0xff]
    %v655 = vld [vmem:[#allocation4 + $0x118] sm:$0xff]
    %v656 = vld [vmem:[#allocation4 + $0x120] sm:$0xff]
    %v657 = vld [vmem:[#allocation4 + $0x128] sm:$0xff]
    %v658 = vld [vmem:[#allocation4 + $0x130] sm:$0xff]
    %v659 = vld [vmem:[#allocation4 + $0x138] sm:$0xff]
    %v660 = vld [vmem:[#allocation4 + $0x140] sm:$0xff]
    %v661 = vld [vmem:[#allocation4 + $0x148] sm:$0xff]
    %v662 = vld [vmem:[#allocation4 + $0x150] sm:$0xff]
    %v663 = vld [vmem:[#allocation4 + $0x158] sm:$0xff]
    %v664 = vld [vmem:[#allocation4 + $0x160] sm:$0xff]
    %v665 = vld [vmem:[#allocation4 + $0x168] sm:$0xff]
    %v666 = vld [vmem:[#allocation4 + $0x170] sm:$0xff]
    %v667 = vld [vmem:[#allocation4 + $0x178] sm:$0xff]
    %v668 = vld [vmem:[#allocation4 + $0x180] sm:$0xff]
    %v669 = vld [vmem:[#allocation4 + $0x188] sm:$0xff]
    %v670 = vld [vmem:[#allocation4 + $0x190] sm:$0xff]
    %v671 = vld [vmem:[#allocation4 + $0x198] sm:$0xff]
    %v672 = vld [vmem:[#allocation4 + $0x1a0] sm:$0xff]
    %v673 = vld [vmem:[#allocation4 + $0x1a8] sm:$0xff]
    %v674 = vld [vmem:[#allocation4 + $0x1b0] sm:$0xff]
    %v675 = vld [vmem:[#allocation4 + $0x1b8] sm:$0xff]
    %v676 = vld [vmem:[#allocation4 + $0x1c0] sm:$0xff]
    %v677 = vld [vmem:[#allocation4 + $0x1c8] sm:$0xff]
    %v678 = vld [vmem:[#allocation4 + $0x1d0] sm:$0xff]
    %v679 = vld [vmem:[#allocation4 + $0x1d8] sm:$0xff]
    %v680 = vld [vmem:[#allocation4 + $0x1e0] sm:$0xff]
    %v681 = vld [vmem:[#allocation4 + $0x1e8] sm:$0xff]
    %v682 = vld [vmem:[#allocation4 + $0x1f0] sm:$0xff]
    %v683 = vld [vmem:[#allocation4 + $0x1f8] sm:$0xff]
    %v684 = vld [vmem:[#allocation4 + $0x200] sm:$0xff]
    %v685 = vld [vmem:[#allocation4 + $0x208] sm:$0xff]
    %v686 = vld [vmem:[#allocation4 + $0x210] sm:$0xff]
    %v687 = vld [vmem:[#allocation4 + $0x218] sm:$0xff]
    %v688 = vld [vmem:[#allocation4 + $0x220] sm:$0xff]
    %v689 = vld [vmem:[#allocation4 + $0x228] sm:$0xff]
    %v690 = vld [vmem:[#allocation4 + $0x230] sm:$0xff]
    %v691 = vld [vmem:[#allocation4 + $0x238] sm:$0xff]
    %v692 = vld [vmem:[#allocation4 + $0x240] sm:$0xff]
    %v693 = vld [vmem:[#allocation4 + $0x248] sm:$0xff]
    %v694 = vld [vmem:[#allocation4 + $0x250] sm:$0xff]
    %v695 = vld [vmem:[#allocation4 + $0x258] sm:$0xff]
    %v696 = vld [vmem:[#allocation4 + $0x260] sm:$0xff]
    %v697 = vld [vmem:[#allocation4 + $0x268] sm:$0xff]
    %v698 = vld [vmem:[#allocation4 + $0x270] sm:$0xff]
    %v699 = vld [vmem:[#allocation4 + $0x278] sm:$0xff]
    %v700 = vld [vmem:[#allocation4 + $0x280] sm:$0xff]
    %v701 = vld [vmem:[#allocation4 + $0x288] sm:$0xff]
    %v702 = vld [vmem:[#allocation4 + $0x290] sm:$0xff]
    %v703 = vld [vmem:[#allocation4 + $0x298] sm:$0xff]
    %v704 = vld [vmem:[#allocation4 + $0x2a0] sm:$0xff]
    %v705 = vld [vmem:[#allocation4 + $0x2a8] sm:$0xff]
    %v706 = vld [vmem:[#allocation4 + $0x2b0] sm:$0xff]
    %v707 = vld [vmem:[#allocation4 + $0x2b8] sm:$0xff]
    %v708 = vld [vmem:[#allocation4 + $0x2c0] sm:$0xff]
    %v709 = vld [vmem:[#allocation4 + $0x2c8] sm:$0xff]
    %v710 = vld [vmem:[#allocation4 + $0x2d0] sm:$0xff]
    %v711 = vld [vmem:[#allocation4 + $0x2d8] sm:$0xff]
    %v712 = vld [vmem:[#allocation4 + $0x2e0] sm:$0xff]
    %v713 = vld [vmem:[#allocation4 + $0x2e8] sm:$0xff]
    %v714 = vld [vmem:[#allocation4 + $0x2f0] sm:$0xff]
    %v715 = vld [vmem:[#allocation4 + $0x2f8] sm:$0xff]
    %v716 = vld [vmem:[#allocation4 + $0x300] sm:$0xff]
    %v717 = vld [vmem:[#allocation4 + $0x308] sm:$0xff]
    %v718 = vld [vmem:[#allocation4 + $0x310] sm:$0xff]
    %v719 = vld [vmem:[#allocation4 + $0x318] sm:$0xff]
    %v720 = vld [vmem:[#allocation4 + $0x320] sm:$0xff]
    %v721 = vld [vmem:[#allocation4 + $0x328] sm:$0xff]
    %v722 = vld [vmem:[#allocation4 + $0x330] sm:$0xff]
    %v723 = vld [vmem:[#allocation4 + $0x338] sm:$0xff]
    %v724 = vld [vmem:[#allocation4 + $0x340] sm:$0xff]
    %v725 = vld [vmem:[#allocation4 + $0x348] sm:$0xff]
    %v726 = vld [vmem:[#allocation4 + $0x350] sm:$0xff]
    %v727 = vld [vmem:[#allocation4 + $0x358] sm:$0xff]
    %v728 = vld [vmem:[#allocation4 + $0x360] sm:$0xff]
    %v729 = vld [vmem:[#allocation4 + $0x368] sm:$0xff]
    %v730 = vld [vmem:[#allocation4 + $0x370] sm:$0xff]
    %v731 = vld [vmem:[#allocation4 + $0x378] sm:$0xff]
    %v732 = vld [vmem:[#allocation4 + $0x380] sm:$0xff]
    %v733 = vld [vmem:[#allocation4 + $0x388] sm:$0xff]
    %v734 = vld [vmem:[#allocation4 + $0x390] sm:$0xff]
    %v735 = vld [vmem:[#allocation4 + $0x398] sm:$0xff]
    %v736 = vld [vmem:[#allocation4 + $0x3a0] sm:$0xff]
    %v737 = vld [vmem:[#allocation4 + $0x3a8] sm:$0xff]
    %v738 = vld [vmem:[#allocation4 + $0x3b0] sm:$0xff]
    %v739 = vld [vmem:[#allocation4 + $0x3b8] sm:$0xff]
    %v740 = vld [vmem:[#allocation4 + $0x3c0] sm:$0xff]
    %v741 = vld [vmem:[#allocation4 + $0x3c8] sm:$0xff]
    %v742 = vld [vmem:[#allocation4 + $0x3d0] sm:$0xff]
    %v743 = vld [vmem:[#allocation4 + $0x3d8] sm:$0xff]
    %v744 = vld [vmem:[#allocation4 + $0x3e0] sm:$0xff]
    %v745 = vld [vmem:[#allocation4 + $0x3e8] sm:$0xff]
    %v746 = vld [vmem:[#allocation4 + $0x3f0] sm:$0xff]
    %v747 = vld [vmem:[#allocation4 + $0x3f8] sm:$0xff]
    %v748 = vld [vmem:[#allocation6] sm:$0xff]
    %v749 = vld [vmem:[#allocation6 + $0x8] sm:$0xff]
    %v750 = vld [vmem:[#allocation6 + $0x10] sm:$0xff]
    %v751 = vld [vmem:[#allocation6 + $0x18] sm:$0xff]
    %v752 = vld [vmem:[#allocation6 + $0x20] sm:$0xff]
    %v753 = vld [vmem:[#allocation6 + $0x28] sm:$0xff]
    %v754 = vld [vmem:[#allocation6 + $0x30] sm:$0xff]
    %v755 = vld [vmem:[#allocation6 + $0x38] sm:$0xff]
    %v756 = vld [vmem:[#allocation6 + $0x40] sm:$0xff]
    %v757 = vld [vmem:[#allocation6 + $0x48] sm:$0xff]
    %v758 = vld [vmem:[#allocation6 + $0x50] sm:$0xff]
    %v759 = vld [vmem:[#allocation6 + $0x58] sm:$0xff]
    %v760 = vld [vmem:[#allocation6 + $0x60] sm:$0xff]
    %v761 = vld [vmem:[#allocation6 + $0x68] sm:$0xff]
    %v762 = vld [vmem:[#allocation6 + $0x70] sm:$0xff]
    %v763 = vld [vmem:[#allocation6 + $0x78] sm:$0xff]
    %v764 = vld [vmem:[#allocation6 + $0x80] sm:$0xff]
    %v765 = vld [vmem:[#allocation6 + $0x88] sm:$0xff]
    %v766 = vld [vmem:[#allocation6 + $0x90] sm:$0xff]
    %v767 = vld [vmem:[#allocation6 + $0x98] sm:$0xff]
    %v768 = vld [vmem:[#allocation6 + $0xa0] sm:$0xff]
    %v769 = vld [vmem:[#allocation6 + $0xa8] sm:$0xff]
    %v770 = vld [vmem:[#allocation6 + $0xb0] sm:$0xff]
    %v771 = vld [vmem:[#allocation6 + $0xb8] sm:$0xff]
    %v772 = vld [vmem:[#allocation6 + $0xc0] sm:$0xff]
    %v773 = vld [vmem:[#allocation6 + $0xc8] sm:$0xff]
    %v774 = vld [vmem:[#allocation6 + $0xd0] sm:$0xff]
    %v775 = vld [vmem:[#allocation6 + $0xd8] sm:$0xff]
    %v776 = vld [vmem:[#allocation6 + $0xe0] sm:$0xff]
    %v777 = vld [vmem:[#allocation6 + $0xe8] sm:$0xff]
    %v778 = vld [vmem:[#allocation6 + $0xf0] sm:$0xff]
    %v779 = vld [vmem:[#allocation6 + $0xf8] sm:$0xff]
    %v780 = vld [vmem:[#allocation6 + $0x100] sm:$0xff]
    %v781 = vld [vmem:[#allocation6 + $0x108] sm:$0xff]
    %v782 = vld [vmem:[#allocation6 + $0x110] sm:$0xff]
    %v783 = vld [vmem:[#allocation6 + $0x118] sm:$0xff]
    %v784 = vld [vmem:[#allocation6 + $0x120] sm:$0xff]
    %v785 = vld [vmem:[#allocation6 + $0x128] sm:$0xff]
    %v786 = vld [vmem:[#allocation6 + $0x130] sm:$0xff]
    %v787 = vld [vmem:[#allocation6 + $0x138] sm:$0xff]
    %v788 = vld [vmem:[#allocation6 + $0x140] sm:$0xff]
    %v789 = vld [vmem:[#allocation6 + $0x148] sm:$0xff]
    %v790 = vld [vmem:[#allocation6 + $0x150] sm:$0xff]
    %v791 = vld [vmem:[#allocation6 + $0x158] sm:$0xff]
    %v792 = vld [vmem:[#allocation6 + $0x160] sm:$0xff]
    %v793 = vld [vmem:[#allocation6 + $0x168] sm:$0xff]
    %v794 = vld [vmem:[#allocation6 + $0x170] sm:$0xff]
    %v795 = vld [vmem:[#allocation6 + $0x178] sm:$0xff]
    %v796 = vld [vmem:[#allocation6 + $0x180] sm:$0xff]
    %v797 = vld [vmem:[#allocation6 + $0x188] sm:$0xff]
    %v798 = vld [vmem:[#allocation6 + $0x190] sm:$0xff]
    %v799 = vld [vmem:[#allocation6 + $0x198] sm:$0xff]
    %v800 = vld [vmem:[#allocation6 + $0x1a0] sm:$0xff]
    %v801 = vld [vmem:[#allocation6 + $0x1a8] sm:$0xff]
    %v802 = vld [vmem:[#allocation6 + $0x1b0] sm:$0xff]
    %v803 = vld [vmem:[#allocation6 + $0x1b8] sm:$0xff]
    %v804 = vld [vmem:[#allocation6 + $0x1c0] sm:$0xff]
    %v805 = vld [vmem:[#allocation6 + $0x1c8] sm:$0xff]
    %v806 = vld [vmem:[#allocation6 + $0x1d0] sm:$0xff]
    %v807 = vld [vmem:[#allocation6 + $0x1d8] sm:$0xff]
    %v808 = vld [vmem:[#allocation6 + $0x1e0] sm:$0xff]
    %v809 = vld [vmem:[#allocation6 + $0x1e8] sm:$0xff]
    %v810 = vld [vmem:[#allocation6 + $0x1f0] sm:$0xff]
    %v811 = vld [vmem:[#allocation6 + $0x1f8] sm:$0xff]
    %v812 = vld [vmem:[#allocation6 + $0x200] sm:$0xff]
    %v813 = vld [vmem:[#allocation6 + $0x208] sm:$0xff]
    %v814 = vld [vmem:[#allocation6 + $0x210] sm:$0xff]
    %v815 = vld [vmem:[#allocation6 + $0x218] sm:$0xff]
    %v816 = vld [vmem:[#allocation6 + $0x220] sm:$0xff]
    %v817 = vld [vmem:[#allocation6 + $0x228] sm:$0xff]
    %v818 = vld [vmem:[#allocation6 + $0x230] sm:$0xff]
    %v819 = vld [vmem:[#allocation6 + $0x238] sm:$0xff]
    %v820 = vld [vmem:[#allocation6 + $0x240] sm:$0xff]
    %v821 = vld [vmem:[#allocation6 + $0x248] sm:$0xff]
    %v822 = vld [vmem:[#allocation6 + $0x250] sm:$0xff]
    %v823 = vld [vmem:[#allocation6 + $0x258] sm:$0xff]
    %v824 = vld [vmem:[#allocation6 + $0x260] sm:$0xff]
    %v825 = vld [vmem:[#allocation6 + $0x268] sm:$0xff]
    %v826 = vld [vmem:[#allocation6 + $0x270] sm:$0xff]
    %v827 = vld [vmem:[#allocation6 + $0x278] sm:$0xff]
    %v828 = vld [vmem:[#allocation6 + $0x280] sm:$0xff]
    %v829 = vld [vmem:[#allocation6 + $0x288] sm:$0xff]
    %v830 = vld [vmem:[#allocation6 + $0x290] sm:$0xff]
    %v831 = vld [vmem:[#allocation6 + $0x298] sm:$0xff]
    %v832 = vld [vmem:[#allocation6 + $0x2a0] sm:$0xff]
    %v833 = vld [vmem:[#allocation6 + $0x2a8] sm:$0xff]
    %v834 = vld [vmem:[#allocation6 + $0x2b0] sm:$0xff]
    %v835 = vld [vmem:[#allocation6 + $0x2b8] sm:$0xff]
    %v836 = vld [vmem:[#allocation6 + $0x2c0] sm:$0xff]
    %v837 = vld [vmem:[#allocation6 + $0x2c8] sm:$0xff]
    %v838 = vld [vmem:[#allocation6 + $0x2d0] sm:$0xff]
    %v839 = vld [vmem:[#allocation6 + $0x2d8] sm:$0xff]
    %v840 = vld [vmem:[#allocation6 + $0x2e0] sm:$0xff]
    %v841 = vld [vmem:[#allocation6 + $0x2e8] sm:$0xff]
    %v842 = vld [vmem:[#allocation6 + $0x2f0] sm:$0xff]
    %v843 = vld [vmem:[#allocation6 + $0x2f8] sm:$0xff]
    %v844 = vld [vmem:[#allocation6 + $0x300] sm:$0xff]
    %v845 = vld [vmem:[#allocation6 + $0x308] sm:$0xff]
    %v846 = vld [vmem:[#allocation6 + $0x310] sm:$0xff]
    %v847 = vld [vmem:[#allocation6 + $0x318] sm:$0xff]
    %v848 = vld [vmem:[#allocation6 + $0x320] sm:$0xff]
    %v849 = vld [vmem:[#allocation6 + $0x328] sm:$0xff]
    %v850 = vld [vmem:[#allocation6 + $0x330] sm:$0xff]
    %v851 = vld [vmem:[#allocation6 + $0x338] sm:$0xff]
    %v852 = vld [vmem:[#allocation6 + $0x340] sm:$0xff]
    %v853 = vld [vmem:[#allocation6 + $0x348] sm:$0xff]
    %v854 = vld [vmem:[#allocation6 + $0x350] sm:$0xff]
    %v855 = vld [vmem:[#allocation6 + $0x358] sm:$0xff]
    %v856 = vld [vmem:[#allocation6 + $0x360] sm:$0xff]
    %v857 = vld [vmem:[#allocation6 + $0x368] sm:$0xff]
    %v858 = vld [vmem:[#allocation6 + $0x370] sm:$0xff]
    %v859 = vld [vmem:[#allocation6 + $0x378] sm:$0xff]
    %v860 = vld [vmem:[#allocation6 + $0x380] sm:$0xff]
    %v861 = vld [vmem:[#allocation6 + $0x388] sm:$0xff]
    %v862 = vld [vmem:[#allocation6 + $0x390] sm:$0xff]
    %v863 = vld [vmem:[#allocation6 + $0x398] sm:$0xff]
    %v864 = vld [vmem:[#allocation6 + $0x3a0] sm:$0xff]
    %v865 = vld [vmem:[#allocation6 + $0x3a8] sm:$0xff]
    %v866 = vld [vmem:[#allocation6 + $0x3b0] sm:$0xff]
    %v867 = vld [vmem:[#allocation6 + $0x3b8] sm:$0xff]
    %v868 = vld [vmem:[#allocation6 + $0x3c0] sm:$0xff]
    %v869 = vld [vmem:[#allocation6 + $0x3c8] sm:$0xff]
    %v870 = vld [vmem:[#allocation6 + $0x3d0] sm:$0xff]
    %v871 = vld [vmem:[#allocation6 + $0x3d8] sm:$0xff]
    %v872 = vld [vmem:[#allocation6 + $0x3e0] sm:$0xff]
    %v873 = vld [vmem:[#allocation6 + $0x3e8] sm:$0xff]
    %v874 = vld [vmem:[#allocation6 + $0x3f0] sm:$0xff]
    %v875 = vld [vmem:[#allocation6 + $0x3f8] sm:$0xff]
    %v876 = vld [vmem:[#allocation6 + $0x400] sm:$0xff]
    %v877 = vld [vmem:[#allocation6 + $0x408] sm:$0xff]
    %v878 = vld [vmem:[#allocation6 + $0x410] sm:$0xff]
    %v879 = vld [vmem:[#allocation6 + $0x418] sm:$0xff]
    %v880 = vld [vmem:[#allocation6 + $0x420] sm:$0xff]
    %v881 = vld [vmem:[#allocation6 + $0x428] sm:$0xff]
    %v882 = vld [vmem:[#allocation6 + $0x430] sm:$0xff]
    %v883 = vld [vmem:[#allocation6 + $0x438] sm:$0xff]
    %v884 = vld [vmem:[#allocation6 + $0x440] sm:$0xff]
    %v885 = vld [vmem:[#allocation6 + $0x448] sm:$0xff]
    %v886 = vld [vmem:[#allocation6 + $0x450] sm:$0xff]
    %v887 = vld [vmem:[#allocation6 + $0x458] sm:$0xff]
    %v888 = vld [vmem:[#allocation6 + $0x460] sm:$0xff]
    %v889 = vld [vmem:[#allocation6 + $0x468] sm:$0xff]
    %v890 = vld [vmem:[#allocation6 + $0x470] sm:$0xff]
    %v891 = vld [vmem:[#allocation6 + $0x478] sm:$0xff]
    %v892 = vld [vmem:[#allocation6 + $0x480] sm:$0xff]
    %v893 = vld [vmem:[#allocation6 + $0x488] sm:$0xff]
    %v894 = vld [vmem:[#allocation6 + $0x490] sm:$0xff]
    %v895 = vld [vmem:[#allocation6 + $0x498] sm:$0xff]
    %v896 = vld [vmem:[#allocation6 + $0x4a0] sm:$0xff]
    %v897 = vld [vmem:[#allocation6 + $0x4a8] sm:$0xff]
    %v898 = vld [vmem:[#allocation6 + $0x4b0] sm:$0xff]
    %v899 = vld [vmem:[#allocation6 + $0x4b8] sm:$0xff]
    %v900 = vld [vmem:[#allocation6 + $0x4c0] sm:$0xff]
    %v901 = vld [vmem:[#allocation6 + $0x4c8] sm:$0xff]
    %v902 = vld [vmem:[#allocation6 + $0x4d0] sm:$0xff]
    %v903 = vld [vmem:[#allocation6 + $0x4d8] sm:$0xff]
    %v904 = vld [vmem:[#allocation6 + $0x4e0] sm:$0xff]
    %v905 = vld [vmem:[#allocation6 + $0x4e8] sm:$0xff]
    %v906 = vld [vmem:[#allocation6 + $0x4f0] sm:$0xff]
    %v907 = vld [vmem:[#allocation6 + $0x4f8] sm:$0xff]
    %v908 = vld [vmem:[#allocation6 + $0x500] sm:$0xff]
    %v909 = vld [vmem:[#allocation6 + $0x508] sm:$0xff]
    %v910 = vld [vmem:[#allocation6 + $0x510] sm:$0xff]
    %v911 = vld [vmem:[#allocation6 + $0x518] sm:$0xff]
    %v912 = vld [vmem:[#allocation6 + $0x520] sm:$0xff]
    %v913 = vld [vmem:[#allocation6 + $0x528] sm:$0xff]
    %v914 = vld [vmem:[#allocation6 + $0x530] sm:$0xff]
    %v915 = vld [vmem:[#allocation6 + $0x538] sm:$0xff]
    %v916 = vld [vmem:[#allocation6 + $0x540] sm:$0xff]
    %v917 = vld [vmem:[#allocation6 + $0x548] sm:$0xff]
    %v918 = vld [vmem:[#allocation6 + $0x550] sm:$0xff]
    %v919 = vld [vmem:[#allocation6 + $0x558] sm:$0xff]
    %v920 = vld [vmem:[#allocation6 + $0x560] sm:$0xff]
    %v921 = vld [vmem:[#allocation6 + $0x568] sm:$0xff]
    %v922 = vld [vmem:[#allocation6 + $0x570] sm:$0xff]
    %v923 = vld [vmem:[#allocation6 + $0x578] sm:$0xff]
    %v924 = vld [vmem:[#allocation6 + $0x580] sm:$0xff]
    %v925 = vld [vmem:[#allocation6 + $0x588] sm:$0xff]
    %v926 = vld [vmem:[#allocation6 + $0x590] sm:$0xff]
    %v927 = vld [vmem:[#allocation6 + $0x598] sm:$0xff]
    %v928 = vld [vmem:[#allocation6 + $0x5a0] sm:$0xff]
    %v929 = vld [vmem:[#allocation6 + $0x5a8] sm:$0xff]
    %v930 = vld [vmem:[#allocation6 + $0x5b0] sm:$0xff]
    %v931 = vld [vmem:[#allocation6 + $0x5b8] sm:$0xff]
    %v932 = vld [vmem:[#allocation6 + $0x5c0] sm:$0xff]
    %v933 = vld [vmem:[#allocation6 + $0x5c8] sm:$0xff]
    %v934 = vld [vmem:[#allocation6 + $0x5d0] sm:$0xff]
    %v935 = vld [vmem:[#allocation6 + $0x5d8] sm:$0xff]
    %v936 = vld [vmem:[#allocation6 + $0x5e0] sm:$0xff]
    %v937 = vld [vmem:[#allocation6 + $0x5e8] sm:$0xff]
    %v938 = vld [vmem:[#allocation6 + $0x5f0] sm:$0xff]
    %v939 = vld [vmem:[#allocation6 + $0x5f8] sm:$0xff]
    %v940 = vld [vmem:[#allocation6 + $0x600] sm:$0xff]
    %v941 = vld [vmem:[#allocation6 + $0x608] sm:$0xff]
    %v942 = vld [vmem:[#allocation6 + $0x610] sm:$0xff]
    %v943 = vld [vmem:[#allocation6 + $0x618] sm:$0xff]
    %v944 = vld [vmem:[#allocation6 + $0x620] sm:$0xff]
    %v945 = vld [vmem:[#allocation6 + $0x628] sm:$0xff]
    %v946 = vld [vmem:[#allocation6 + $0x630] sm:$0xff]
    %v947 = vld [vmem:[#allocation6 + $0x638] sm:$0xff]
    %v948 = vld [vmem:[#allocation6 + $0x640] sm:$0xff]
    %v949 = vld [vmem:[#allocation6 + $0x648] sm:$0xff]
    %v950 = vld [vmem:[#allocation6 + $0x650] sm:$0xff]
    %v951 = vld [vmem:[#allocation6 + $0x658] sm:$0xff]
    %v952 = vld [vmem:[#allocation6 + $0x660] sm:$0xff]
    %v953 = vld [vmem:[#allocation6 + $0x668] sm:$0xff]
    %v954 = vld [vmem:[#allocation6 + $0x670] sm:$0xff]
    %v955 = vld [vmem:[#allocation6 + $0x678] sm:$0xff]
    %v956 = vld [vmem:[#allocation6 + $0x680] sm:$0xff]
    %v957 = vld [vmem:[#allocation6 + $0x688] sm:$0xff]
    %v958 = vld [vmem:[#allocation6 + $0x690] sm:$0xff]
    %v959 = vld [vmem:[#allocation6 + $0x698] sm:$0xff]
    %v960 = vld [vmem:[#allocation6 + $0x6a0] sm:$0xff]
    %v961 = vld [vmem:[#allocation6 + $0x6a8] sm:$0xff]
    %v962 = vld [vmem:[#allocation6 + $0x6b0] sm:$0xff]
    %v963 = vld [vmem:[#allocation6 + $0x6b8] sm:$0xff]
    %v964 = vld [vmem:[#allocation6 + $0x6c0] sm:$0xff]
    %v965 = vld [vmem:[#allocation6 + $0x6c8] sm:$0xff]
    %v966 = vld [vmem:[#allocation6 + $0x6d0] sm:$0xff]
    %v967 = vld [vmem:[#allocation6 + $0x6d8] sm:$0xff]
    %v968 = vld [vmem:[#allocation6 + $0x6e0] sm:$0xff]
    %v969 = vld [vmem:[#allocation6 + $0x6e8] sm:$0xff]
    %v970 = vld [vmem:[#allocation6 + $0x6f0] sm:$0xff]
    %v971 = vld [vmem:[#allocation6 + $0x6f8] sm:$0xff]
    %v972 = vld [vmem:[#allocation6 + $0x700] sm:$0xff]
    %v973 = vld [vmem:[#allocation6 + $0x708] sm:$0xff]
    %v974 = vld [vmem:[#allocation6 + $0x710] sm:$0xff]
    %v975 = vld [vmem:[#allocation6 + $0x718] sm:$0xff]
    %v976 = vld [vmem:[#allocation6 + $0x720] sm:$0xff]
    %v977 = vld [vmem:[#allocation6 + $0x728] sm:$0xff]
    %v978 = vld [vmem:[#allocation6 + $0x730] sm:$0xff]
    %v979 = vld [vmem:[#allocation6 + $0x738] sm:$0xff]
    %v980 = vld [vmem:[#allocation6 + $0x740] sm:$0xff]
    %v981 = vld [vmem:[#allocation6 + $0x748] sm:$0xff]
    %v982 = vld [vmem:[#allocation6 + $0x750] sm:$0xff]
    %v983 = vld [vmem:[#allocation6 + $0x758] sm:$0xff]
    %v984 = vld [vmem:[#allocation6 + $0x760] sm:$0xff]
    %v985 = vld [vmem:[#allocation6 + $0x768] sm:$0xff]
    %v986 = vld [vmem:[#allocation6 + $0x770] sm:$0xff]
    %v987 = vld [vmem:[#allocation6 + $0x778] sm:$0xff]
    %v988 = vld [vmem:[#allocation6 + $0x780] sm:$0xff]
    %v989 = vld [vmem:[#allocation6 + $0x788] sm:$0xff]
    %v990 = vld [vmem:[#allocation6 + $0x790] sm:$0xff]
    %v991 = vld [vmem:[#allocation6 + $0x798] sm:$0xff]
    %v992 = vld [vmem:[#allocation6 + $0x7a0] sm:$0xff]
    %v993 = vld [vmem:[#allocation6 + $0x7a8] sm:$0xff]
    %v994 = vld [vmem:[#allocation6 + $0x7b0] sm:$0xff]
    %v995 = vld [vmem:[#allocation6 + $0x7b8] sm:$0xff]
    %v996 = vld [vmem:[#allocation6 + $0x7c0] sm:$0xff]
    %v997 = vld [vmem:[#allocation6 + $0x7c8] sm:$0xff]
    %v998 = vld [vmem:[#allocation6 + $0x7d0] sm:$0xff]
    %v999 = vld [vmem:[#allocation6 + $0x7d8] sm:$0xff]
    %v1000 = vld [vmem:[#allocation6 + $0x7e0] sm:$0xff]
    %v1001 = vld [vmem:[#allocation6 + $0x7e8] sm:$0xff]
    %v1002 = vld [vmem:[#allocation6 + $0x7f0] sm:$0xff]
    %v1003 = vld [vmem:[#allocation6 + $0x7f8] sm:$0xff]
    %v1004 = vld [vmem:[%s5] sm:$0xff]
    %v1006 = vperm.slane %v1004, 0
    %v1007 = vperm.slane %v1004, 1
    %v1008 = vperm.slane %v1004, 2
    %v1009 = vperm.slane %v1004, 3
    %v1010 = vperm.slane %v1004, 4
    %v1011 = vperm.slane %v1004, 5
    %v1012 = vperm.slane %v1004, 6
    %v1013 = vperm.slane %v1004, 7
    %v1022 = vld [vmem:[%s6] sm:$0xff]
    %v1023 = vld [vmem:[%s6 + $0x8] sm:$0xff]
    %v1024 = vpack.c.bf16 %v1022, %v1022
    %v1025 = vpack.c.bf16 %v1023, %v1023
    %s1026 = scalar_lea.vmem %s6, 16
    %v1027 = vld [vmem:[%s1026] sm:$0xff]
    %v1028 = vld [vmem:[%s1026 + $0x8] sm:$0xff]
    %v1029 = vpack.c.bf16 %v1028, %v1027
    %v1030 = vld [vmem:[%s7] sm:$0xff]
    %v1031 = vld [vmem:[%s7 + $0x8] sm:$0xff]
    %v1032 = vld [vmem:[#allocation2] sm:$0xff]
    %v1033 = vld [vmem:[#allocation2 + $0x8] sm:$0xff]
    %v1034 = vld [vmem:[#allocation2 + $0x10] sm:$0xff]
    %v1035 = vld [vmem:[#allocation2 + $0x18] sm:$0xff]
    %v1036 = vld [vmem:[#allocation2 + $0x20] sm:$0xff]
    %v1037 = vld [vmem:[#allocation2 + $0x28] sm:$0xff]
    %v1038 = vld [vmem:[#allocation2 + $0x30] sm:$0xff]
    %v1039 = vld [vmem:[#allocation2 + $0x38] sm:$0xff]
    %v1168 = vunpack.c.l.b16 %v620
    %v1169 = vunpack.c.h.b16 %v620
    %v1170 = vunpack.c.l.b16 %v621
    %v1171 = vunpack.c.h.b16 %v621
    %v1172 = vunpack.c.l.b16 %v622
    %v1173 = vunpack.c.h.b16 %v622
    %v1174 = vunpack.c.l.b16 %v623
    %v1175 = vunpack.c.h.b16 %v623
    %v1176 = vunpack.c.l.b16 %v624
    %v1177 = vunpack.c.h.b16 %v624
    %v1178 = vunpack.c.l.b16 %v625
    %v1179 = vunpack.c.h.b16 %v625
    %v1180 = vunpack.c.l.b16 %v626
    %v1181 = vunpack.c.h.b16 %v626
    %v1182 = vunpack.c.l.b16 %v627
    %v1183 = vunpack.c.h.b16 %v627
    %v1184 = vunpack.c.l.b16 %v628
    %v1185 = vunpack.c.h.b16 %v628
    %v1186 = vunpack.c.l.b16 %v629
    %v1187 = vunpack.c.h.b16 %v629
    %v1188 = vunpack.c.l.b16 %v630
    %v1189 = vunpack.c.h.b16 %v630
    %v1190 = vunpack.c.l.b16 %v631
    %v1191 = vunpack.c.h.b16 %v631
    %v1192 = vunpack.c.l.b16 %v632
    %v1193 = vunpack.c.h.b16 %v632
    %v1194 = vunpack.c.l.b16 %v633
    %v1195 = vunpack.c.h.b16 %v633
    %v1196 = vunpack.c.l.b16 %v634
    %v1197 = vunpack.c.h.b16 %v634
    %v1198 = vunpack.c.l.b16 %v635
    %v1199 = vunpack.c.h.b16 %v635
    %v1200 = vunpack.c.l.b16 %v636
    %v1201 = vunpack.c.h.b16 %v636
    %v1202 = vunpack.c.l.b16 %v637
    %v1203 = vunpack.c.h.b16 %v637
    %v1204 = vunpack.c.l.b16 %v638
    %v1205 = vunpack.c.h.b16 %v638
    %v1206 = vunpack.c.l.b16 %v639
    %v1207 = vunpack.c.h.b16 %v639
    %v1208 = vunpack.c.l.b16 %v640
    %v1209 = vunpack.c.h.b16 %v640
    %v1210 = vunpack.c.l.b16 %v641
    %v1211 = vunpack.c.h.b16 %v641
    %v1212 = vunpack.c.l.b16 %v642
    %v1213 = vunpack.c.h.b16 %v642
    %v1214 = vunpack.c.l.b16 %v643
    %v1215 = vunpack.c.h.b16 %v643
    %v1216 = vunpack.c.l.b16 %v644
    %v1217 = vunpack.c.h.b16 %v644
    %v1218 = vunpack.c.l.b16 %v645
    %v1219 = vunpack.c.h.b16 %v645
    %v1220 = vunpack.c.l.b16 %v646
    %v1221 = vunpack.c.h.b16 %v646
    %v1222 = vunpack.c.l.b16 %v647
    %v1223 = vunpack.c.h.b16 %v647
    %v1224 = vunpack.c.l.b16 %v648
    %v1225 = vunpack.c.h.b16 %v648
    %v1226 = vunpack.c.l.b16 %v649
    %v1227 = vunpack.c.h.b16 %v649
    %v1228 = vunpack.c.l.b16 %v650
    %v1229 = vunpack.c.h.b16 %v650
    %v1230 = vunpack.c.l.b16 %v651
    %v1231 = vunpack.c.h.b16 %v651
    %v1232 = vunpack.c.l.b16 %v652
    %v1233 = vunpack.c.h.b16 %v652
    %v1234 = vunpack.c.l.b16 %v653
    %v1235 = vunpack.c.h.b16 %v653
    %v1236 = vunpack.c.l.b16 %v654
    %v1237 = vunpack.c.h.b16 %v654
    %v1238 = vunpack.c.l.b16 %v655
    %v1239 = vunpack.c.h.b16 %v655
    %v1240 = vunpack.c.l.b16 %v656
    %v1241 = vunpack.c.h.b16 %v656
    %v1242 = vunpack.c.l.b16 %v657
    %v1243 = vunpack.c.h.b16 %v657
    %v1244 = vunpack.c.l.b16 %v658
    %v1245 = vunpack.c.h.b16 %v658
    %v1246 = vunpack.c.l.b16 %v659
    %v1247 = vunpack.c.h.b16 %v659
    %v1248 = vunpack.c.l.b16 %v660
    %v1249 = vunpack.c.h.b16 %v660
    %v1250 = vunpack.c.l.b16 %v661
    %v1251 = vunpack.c.h.b16 %v661
    %v1252 = vunpack.c.l.b16 %v662
    %v1253 = vunpack.c.h.b16 %v662
    %v1254 = vunpack.c.l.b16 %v663
    %v1255 = vunpack.c.h.b16 %v663
    %v1256 = vunpack.c.l.b16 %v664
    %v1257 = vunpack.c.h.b16 %v664
    %v1258 = vunpack.c.l.b16 %v665
    %v1259 = vunpack.c.h.b16 %v665
    %v1260 = vunpack.c.l.b16 %v666
    %v1261 = vunpack.c.h.b16 %v666
    %v1262 = vunpack.c.l.b16 %v667
    %v1263 = vunpack.c.h.b16 %v667
    %v1264 = vunpack.c.l.b16 %v668
    %v1265 = vunpack.c.h.b16 %v668
    %v1266 = vunpack.c.l.b16 %v669
    %v1267 = vunpack.c.h.b16 %v669
    %v1268 = vunpack.c.l.b16 %v670
    %v1269 = vunpack.c.h.b16 %v670
    %v1270 = vunpack.c.l.b16 %v671
    %v1271 = vunpack.c.h.b16 %v671
    %v1272 = vunpack.c.l.b16 %v672
    %v1273 = vunpack.c.h.b16 %v672
    %v1274 = vunpack.c.l.b16 %v673
    %v1275 = vunpack.c.h.b16 %v673
    %v1276 = vunpack.c.l.b16 %v674
    %v1277 = vunpack.c.h.b16 %v674
    %v1278 = vunpack.c.l.b16 %v675
    %v1279 = vunpack.c.h.b16 %v675
    %v1280 = vunpack.c.l.b16 %v676
    %v1281 = vunpack.c.h.b16 %v676
    %v1282 = vunpack.c.l.b16 %v677
    %v1283 = vunpack.c.h.b16 %v677
    %v1284 = vunpack.c.l.b16 %v678
    %v1285 = vunpack.c.h.b16 %v678
    %v1286 = vunpack.c.l.b16 %v679
    %v1287 = vunpack.c.h.b16 %v679
    %v1288 = vunpack.c.l.b16 %v680
    %v1289 = vunpack.c.h.b16 %v680
    %v1290 = vunpack.c.l.b16 %v681
    %v1291 = vunpack.c.h.b16 %v681
    %v1292 = vunpack.c.l.b16 %v682
    %v1293 = vunpack.c.h.b16 %v682
    %v1294 = vunpack.c.l.b16 %v683
    %v1295 = vunpack.c.h.b16 %v683
    %v1296 = vunpack.c.l.b16 %v684
    %v1297 = vunpack.c.h.b16 %v684
    %v1298 = vunpack.c.l.b16 %v685
    %v1299 = vunpack.c.h.b16 %v685
    %v1300 = vunpack.c.l.b16 %v686
    %v1301 = vunpack.c.h.b16 %v686
    %v1302 = vunpack.c.l.b16 %v687
    %v1303 = vunpack.c.h.b16 %v687
    %v1304 = vunpack.c.l.b16 %v688
    %v1305 = vunpack.c.h.b16 %v688
    %v1306 = vunpack.c.l.b16 %v689
    %v1307 = vunpack.c.h.b16 %v689
    %v1308 = vunpack.c.l.b16 %v690
    %v1309 = vunpack.c.h.b16 %v690
    %v1310 = vunpack.c.l.b16 %v691
    %v1311 = vunpack.c.h.b16 %v691
    %v1312 = vunpack.c.l.b16 %v692
    %v1313 = vunpack.c.h.b16 %v692
    %v1314 = vunpack.c.l.b16 %v693
    %v1315 = vunpack.c.h.b16 %v693
    %v1316 = vunpack.c.l.b16 %v694
    %v1317 = vunpack.c.h.b16 %v694
    %v1318 = vunpack.c.l.b16 %v695
    %v1319 = vunpack.c.h.b16 %v695
    %v1320 = vunpack.c.l.b16 %v696
    %v1321 = vunpack.c.h.b16 %v696
    %v1322 = vunpack.c.l.b16 %v697
    %v1323 = vunpack.c.h.b16 %v697
    %v1324 = vunpack.c.l.b16 %v698
    %v1325 = vunpack.c.h.b16 %v698
    %v1326 = vunpack.c.l.b16 %v699
    %v1327 = vunpack.c.h.b16 %v699
    %v1328 = vunpack.c.l.b16 %v700
    %v1329 = vunpack.c.h.b16 %v700
    %v1330 = vunpack.c.l.b16 %v701
    %v1331 = vunpack.c.h.b16 %v701
    %v1332 = vunpack.c.l.b16 %v702
    %v1333 = vunpack.c.h.b16 %v702
    %v1334 = vunpack.c.l.b16 %v703
    %v1335 = vunpack.c.h.b16 %v703
    %v1336 = vunpack.c.l.b16 %v704
    %v1337 = vunpack.c.h.b16 %v704
    %v1338 = vunpack.c.l.b16 %v705
    %v1339 = vunpack.c.h.b16 %v705
    %v1340 = vunpack.c.l.b16 %v706
    %v1341 = vunpack.c.h.b16 %v706
    %v1342 = vunpack.c.l.b16 %v707
    %v1343 = vunpack.c.h.b16 %v707
    %v1344 = vunpack.c.l.b16 %v708
    %v1345 = vunpack.c.h.b16 %v708
    %v1346 = vunpack.c.l.b16 %v709
    %v1347 = vunpack.c.h.b16 %v709
    %v1348 = vunpack.c.l.b16 %v710
    %v1349 = vunpack.c.h.b16 %v710
    %v1350 = vunpack.c.l.b16 %v711
    %v1351 = vunpack.c.h.b16 %v711
    %v1352 = vunpack.c.l.b16 %v712
    %v1353 = vunpack.c.h.b16 %v712
    %v1354 = vunpack.c.l.b16 %v713
    %v1355 = vunpack.c.h.b16 %v713
    %v1356 = vunpack.c.l.b16 %v714
    %v1357 = vunpack.c.h.b16 %v714
    %v1358 = vunpack.c.l.b16 %v715
    %v1359 = vunpack.c.h.b16 %v715
    %v1360 = vunpack.c.l.b16 %v716
    %v1361 = vunpack.c.h.b16 %v716
    %v1362 = vunpack.c.l.b16 %v717
    %v1363 = vunpack.c.h.b16 %v717
    %v1364 = vunpack.c.l.b16 %v718
    %v1365 = vunpack.c.h.b16 %v718
    %v1366 = vunpack.c.l.b16 %v719
    %v1367 = vunpack.c.h.b16 %v719
    %v1368 = vunpack.c.l.b16 %v720
    %v1369 = vunpack.c.h.b16 %v720
    %v1370 = vunpack.c.l.b16 %v721
    %v1371 = vunpack.c.h.b16 %v721
    %v1372 = vunpack.c.l.b16 %v722
    %v1373 = vunpack.c.h.b16 %v722
    %v1374 = vunpack.c.l.b16 %v723
    %v1375 = vunpack.c.h.b16 %v723
    %v1376 = vunpack.c.l.b16 %v724
    %v1377 = vunpack.c.h.b16 %v724
    %v1378 = vunpack.c.l.b16 %v725
    %v1379 = vunpack.c.h.b16 %v725
    %v1380 = vunpack.c.l.b16 %v726
    %v1381 = vunpack.c.h.b16 %v726
    %v1382 = vunpack.c.l.b16 %v727
    %v1383 = vunpack.c.h.b16 %v727
    %v1384 = vunpack.c.l.b16 %v728
    %v1385 = vunpack.c.h.b16 %v728
    %v1386 = vunpack.c.l.b16 %v729
    %v1387 = vunpack.c.h.b16 %v729
    %v1388 = vunpack.c.l.b16 %v730
    %v1389 = vunpack.c.h.b16 %v730
    %v1390 = vunpack.c.l.b16 %v731
    %v1391 = vunpack.c.h.b16 %v731
    %v1392 = vunpack.c.l.b16 %v732
    %v1393 = vunpack.c.h.b16 %v732
    %v1394 = vunpack.c.l.b16 %v733
    %v1395 = vunpack.c.h.b16 %v733
    %v1396 = vunpack.c.l.b16 %v734
    %v1397 = vunpack.c.h.b16 %v734
    %v1398 = vunpack.c.l.b16 %v735
    %v1399 = vunpack.c.h.b16 %v735
    %v1400 = vunpack.c.l.b16 %v736
    %v1401 = vunpack.c.h.b16 %v736
    %v1402 = vunpack.c.l.b16 %v737
    %v1403 = vunpack.c.h.b16 %v737
    %v1404 = vunpack.c.l.b16 %v738
    %v1405 = vunpack.c.h.b16 %v738
    %v1406 = vunpack.c.l.b16 %v739
    %v1407 = vunpack.c.h.b16 %v739
    %v1408 = vunpack.c.l.b16 %v740
    %v1409 = vunpack.c.h.b16 %v740
    %v1410 = vunpack.c.l.b16 %v741
    %v1411 = vunpack.c.h.b16 %v741
    %v1412 = vunpack.c.l.b16 %v742
    %v1413 = vunpack.c.h.b16 %v742
    %v1414 = vunpack.c.l.b16 %v743
    %v1415 = vunpack.c.h.b16 %v743
    %v1416 = vunpack.c.l.b16 %v744
    %v1417 = vunpack.c.h.b16 %v744
    %v1418 = vunpack.c.l.b16 %v745
    %v1419 = vunpack.c.h.b16 %v745
    %v1420 = vunpack.c.l.b16 %v746
    %v1421 = vunpack.c.h.b16 %v746
    %v1422 = vunpack.c.l.b16 %v747
    %v1423 = vunpack.c.h.b16 %v747
    %v1424 = vpack.c.b16 %v1176, %v1168
    %v1425 = vpack.c.b16 %v1177, %v1169
    %v1426 = vpack.c.b16 %v1178, %v1170
    %v1427 = vpack.c.b16 %v1179, %v1171
    %v1428 = vpack.c.b16 %v1180, %v1172
    %v1429 = vpack.c.b16 %v1181, %v1173
    %v1430 = vpack.c.b16 %v1182, %v1174
    %v1431 = vpack.c.b16 %v1183, %v1175
    %v1432 = vpack.c.b16 %v1192, %v1184
    %v1433 = vpack.c.b16 %v1193, %v1185
    %v1434 = vpack.c.b16 %v1194, %v1186
    %v1435 = vpack.c.b16 %v1195, %v1187
    %v1436 = vpack.c.b16 %v1196, %v1188
    %v1437 = vpack.c.b16 %v1197, %v1189
    %v1438 = vpack.c.b16 %v1198, %v1190
    %v1439 = vpack.c.b16 %v1199, %v1191
    %v1440 = vpack.c.b16 %v1208, %v1200
    %v1441 = vpack.c.b16 %v1209, %v1201
    %v1442 = vpack.c.b16 %v1210, %v1202
    %v1443 = vpack.c.b16 %v1211, %v1203
    %v1444 = vpack.c.b16 %v1212, %v1204
    %v1445 = vpack.c.b16 %v1213, %v1205
    %v1446 = vpack.c.b16 %v1214, %v1206
    %v1447 = vpack.c.b16 %v1215, %v1207
    %v1448 = vpack.c.b16 %v1224, %v1216
    %v1449 = vpack.c.b16 %v1225, %v1217
    %v1450 = vpack.c.b16 %v1226, %v1218
    %v1451 = vpack.c.b16 %v1227, %v1219
    %v1452 = vpack.c.b16 %v1228, %v1220
    %v1453 = vpack.c.b16 %v1229, %v1221
    %v1454 = vpack.c.b16 %v1230, %v1222
    %v1455 = vpack.c.b16 %v1231, %v1223
    %v1456 = vpack.c.b16 %v1240, %v1232
    %v1457 = vpack.c.b16 %v1241, %v1233
    %v1458 = vpack.c.b16 %v1242, %v1234
    %v1459 = vpack.c.b16 %v1243, %v1235
    %v1460 = vpack.c.b16 %v1244, %v1236
    %v1461 = vpack.c.b16 %v1245, %v1237
    %v1462 = vpack.c.b16 %v1246, %v1238
    %v1463 = vpack.c.b16 %v1247, %v1239
    %v1464 = vpack.c.b16 %v1256, %v1248
    %v1465 = vpack.c.b16 %v1257, %v1249
    %v1466 = vpack.c.b16 %v1258, %v1250
    %v1467 = vpack.c.b16 %v1259, %v1251
    %v1468 = vpack.c.b16 %v1260, %v1252
    %v1469 = vpack.c.b16 %v1261, %v1253
    %v1470 = vpack.c.b16 %v1262, %v1254
    %v1471 = vpack.c.b16 %v1263, %v1255
    %v1472 = vpack.c.b16 %v1272, %v1264
    %v1473 = vpack.c.b16 %v1273, %v1265
    %v1474 = vpack.c.b16 %v1274, %v1266
    %v1475 = vpack.c.b16 %v1275, %v1267
    %v1476 = vpack.c.b16 %v1276, %v1268
    %v1477 = vpack.c.b16 %v1277, %v1269
    %v1478 = vpack.c.b16 %v1278, %v1270
    %v1479 = vpack.c.b16 %v1279, %v1271
    %v1480 = vpack.c.b16 %v1288, %v1280
    %v1481 = vpack.c.b16 %v1289, %v1281
    %v1482 = vpack.c.b16 %v1290, %v1282
    %v1483 = vpack.c.b16 %v1291, %v1283
    %v1484 = vpack.c.b16 %v1292, %v1284
    %v1485 = vpack.c.b16 %v1293, %v1285
    %v1486 = vpack.c.b16 %v1294, %v1286
    %v1487 = vpack.c.b16 %v1295, %v1287
    %v1488 = vpack.c.b16 %v1304, %v1296
    %v1489 = vpack.c.b16 %v1305, %v1297
    %v1490 = vpack.c.b16 %v1306, %v1298
    %v1491 = vpack.c.b16 %v1307, %v1299
    %v1492 = vpack.c.b16 %v1308, %v1300
    %v1493 = vpack.c.b16 %v1309, %v1301
    %v1494 = vpack.c.b16 %v1310, %v1302
    %v1495 = vpack.c.b16 %v1311, %v1303
    %v1496 = vpack.c.b16 %v1320, %v1312
    %v1497 = vpack.c.b16 %v1321, %v1313
    %v1498 = vpack.c.b16 %v1322, %v1314
    %v1499 = vpack.c.b16 %v1323, %v1315
    %v1500 = vpack.c.b16 %v1324, %v1316
    %v1501 = vpack.c.b16 %v1325, %v1317
    %v1502 = vpack.c.b16 %v1326, %v1318
    %v1503 = vpack.c.b16 %v1327, %v1319
    %v1504 = vpack.c.b16 %v1336, %v1328
    %v1505 = vpack.c.b16 %v1337, %v1329
    %v1506 = vpack.c.b16 %v1338, %v1330
    %v1507 = vpack.c.b16 %v1339, %v1331
    %v1508 = vpack.c.b16 %v1340, %v1332
    %v1509 = vpack.c.b16 %v1341, %v1333
    %v1510 = vpack.c.b16 %v1342, %v1334
    %v1511 = vpack.c.b16 %v1343, %v1335
    %v1512 = vpack.c.b16 %v1352, %v1344
    %v1513 = vpack.c.b16 %v1353, %v1345
    %v1514 = vpack.c.b16 %v1354, %v1346
    %v1515 = vpack.c.b16 %v1355, %v1347
    %v1516 = vpack.c.b16 %v1356, %v1348
    %v1517 = vpack.c.b16 %v1357, %v1349
    %v1518 = vpack.c.b16 %v1358, %v1350
    %v1519 = vpack.c.b16 %v1359, %v1351
    %v1520 = vpack.c.b16 %v1368, %v1360
    %v1521 = vpack.c.b16 %v1369, %v1361
    %v1522 = vpack.c.b16 %v1370, %v1362
    %v1523 = vpack.c.b16 %v1371, %v1363
    %v1524 = vpack.c.b16 %v1372, %v1364
    %v1525 = vpack.c.b16 %v1373, %v1365
    %v1526 = vpack.c.b16 %v1374, %v1366
    %v1527 = vpack.c.b16 %v1375, %v1367
    %v1528 = vpack.c.b16 %v1384, %v1376
    %v1529 = vpack.c.b16 %v1385, %v1377
    %v1530 = vpack.c.b16 %v1386, %v1378
    %v1531 = vpack.c.b16 %v1387, %v1379
    %v1532 = vpack.c.b16 %v1388, %v1380
    %v1533 = vpack.c.b16 %v1389, %v1381
    %v1534 = vpack.c.b16 %v1390, %v1382
    %v1535 = vpack.c.b16 %v1391, %v1383
    %v1536 = vpack.c.b16 %v1400, %v1392
    %v1537 = vpack.c.b16 %v1401, %v1393
    %v1538 = vpack.c.b16 %v1402, %v1394
    %v1539 = vpack.c.b16 %v1403, %v1395
    %v1540 = vpack.c.b16 %v1404, %v1396
    %v1541 = vpack.c.b16 %v1405, %v1397
    %v1542 = vpack.c.b16 %v1406, %v1398
    %v1543 = vpack.c.b16 %v1407, %v1399
    %v1544 = vpack.c.b16 %v1416, %v1408
    %v1545 = vpack.c.b16 %v1417, %v1409
    %v1546 = vpack.c.b16 %v1418, %v1410
    %v1547 = vpack.c.b16 %v1419, %v1411
    %v1548 = vpack.c.b16 %v1420, %v1412
    %v1549 = vpack.c.b16 %v1421, %v1413
    %v1550 = vpack.c.b16 %v1422, %v1414
    %v1551 = vpack.c.b16 %v1423, %v1415
    %1680 = vmatpush.bf16.msra.mxu0 %v1480
    %1681 = vmatpush.bf16.msra.mxu0 %v1472
    %1682 = vmatpush.bf16.msra.mxu0 %v1464
    %1683 = vmatpush.bf16.msra.mxu0 %v1456
    %1684 = vmatpush.bf16.msra.mxu0 %v1448
    %1685 = vmatpush.bf16.msra.mxu0 %v1440
    %1686 = vmatpush.bf16.msra.mxu0 %v1432
    %1687 = vmatpush.bf16.msra.mxu0 %v1424
    %1688 = vmatmul.bf16.gmra.mxu0 %v1024
    %v1689 = vpop.f32.mrf.mxu0
    %v1690 = vadd.f32 0.0, %v1689
    %v1691 = vpop.f32.mrf.mxu0
    %1692 = vdwg.mxu0
    %1693 = vmatpush.bf16.msra.mxu0 %v1544
    %1694 = vmatpush.bf16.msra.mxu0 %v1536
    %1695 = vmatpush.bf16.msra.mxu0 %v1528
    %1696 = vmatpush.bf16.msra.mxu0 %v1520
    %1697 = vmatpush.bf16.msra.mxu0 %v1512
    %1698 = vmatpush.bf16.msra.mxu0 %v1504
    %1699 = vmatpush.bf16.msra.mxu0 %v1496
    %1700 = vmatpush.bf16.msra.mxu0 %v1488
    %1701 = vmatmul.bf16.gmra.mxu0 %v1025
    %v1702 = vpop.f32.mrf.mxu0
    %v1703 = vadd.f32 %v1690, %v1702
    %v1704 = vpop.f32.mrf.mxu0
    %1705 = vdwg.mxu0
    %1706 = vmatpush.bf16.msra.mxu0 %v1481
    %1707 = vmatpush.bf16.msra.mxu0 %v1473
    %1708 = vmatpush.bf16.msra.mxu0 %v1465
    %1709 = vmatpush.bf16.msra.mxu0 %v1457
    %1710 = vmatpush.bf16.msra.mxu0 %v1449
    %1711 = vmatpush.bf16.msra.mxu0 %v1441
    %1712 = vmatpush.bf16.msra.mxu0 %v1433
    %1713 = vmatpush.bf16.msra.mxu0 %v1425
    %1714 = vmatmul.bf16.gmra.mxu0 %v1024
    %v1715 = vpop.f32.mrf.mxu0
    %v1716 = vadd.f32 0.0, %v1715
    %v1717 = vpop.f32.mrf.mxu0
    %1718 = vdwg.mxu0
    %1719 = vmatpush.bf16.msra.mxu0 %v1545
    %1720 = vmatpush.bf16.msra.mxu0 %v1537
    %1721 = vmatpush.bf16.msra.mxu0 %v1529
    %1722 = vmatpush.bf16.msra.mxu0 %v1521
    %1723 = vmatpush.bf16.msra.mxu0 %v1513
    %1724 = vmatpush.bf16.msra.mxu0 %v1505
    %1725 = vmatpush.bf16.msra.mxu0 %v1497
    %1726 = vmatpush.bf16.msra.mxu0 %v1489
    %1727 = vmatmul.bf16.gmra.mxu0 %v1025
    %v1728 = vpop.f32.mrf.mxu0
    %v1729 = vadd.f32 %v1716, %v1728
    %v1730 = vpop.f32.mrf.mxu0
    %1731 = vdwg.mxu0
    %1732 = vmatpush.bf16.msra.mxu0 %v1482
    %1733 = vmatpush.bf16.msra.mxu0 %v1474
    %1734 = vmatpush.bf16.msra.mxu0 %v1466
    %1735 = vmatpush.bf16.msra.mxu0 %v1458
    %1736 = vmatpush.bf16.msra.mxu0 %v1450
    %1737 = vmatpush.bf16.msra.mxu0 %v1442
    %1738 = vmatpush.bf16.msra.mxu0 %v1434
    %1739 = vmatpush.bf16.msra.mxu0 %v1426
    %1740 = vmatmul.bf16.gmra.mxu0 %v1024
    %v1741 = vpop.f32.mrf.mxu0
    %v1742 = vadd.f32 0.0, %v1741
    %v1743 = vpop.f32.mrf.mxu0
    %1744 = vdwg.mxu0
    %1745 = vmatpush.bf16.msra.mxu0 %v1546
    %1746 = vmatpush.bf16.msra.mxu0 %v1538
    %1747 = vmatpush.bf16.msra.mxu0 %v1530
    %1748 = vmatpush.bf16.msra.mxu0 %v1522
    %1749 = vmatpush.bf16.msra.mxu0 %v1514
    %1750 = vmatpush.bf16.msra.mxu0 %v1506
    %1751 = vmatpush.bf16.msra.mxu0 %v1498
    %1752 = vmatpush.bf16.msra.mxu0 %v1490
    %1753 = vmatmul.bf16.gmra.mxu0 %v1025
    %v1754 = vpop.f32.mrf.mxu0
    %v1755 = vadd.f32 %v1742, %v1754
    %v1756 = vpop.f32.mrf.mxu0
    %1757 = vdwg.mxu0
    %1758 = vmatpush.bf16.msra.mxu0 %v1483
    %1759 = vmatpush.bf16.msra.mxu0 %v1475
    %1760 = vmatpush.bf16.msra.mxu0 %v1467
    %1761 = vmatpush.bf16.msra.mxu0 %v1459
    %1762 = vmatpush.bf16.msra.mxu0 %v1451
    %1763 = vmatpush.bf16.msra.mxu0 %v1443
    %1764 = vmatpush.bf16.msra.mxu0 %v1435
    %1765 = vmatpush.bf16.msra.mxu0 %v1427
    %1766 = vmatmul.bf16.gmra.mxu0 %v1024
    %v1767 = vpop.f32.mrf.mxu0
    %v1768 = vadd.f32 0.0, %v1767
    %v1769 = vpop.f32.mrf.mxu0
    %1770 = vdwg.mxu0
    %1771 = vmatpush.bf16.msra.mxu0 %v1547
    %1772 = vmatpush.bf16.msra.mxu0 %v1539
    %1773 = vmatpush.bf16.msra.mxu0 %v1531
    %1774 = vmatpush.bf16.msra.mxu0 %v1523
    %1775 = vmatpush.bf16.msra.mxu0 %v1515
    %1776 = vmatpush.bf16.msra.mxu0 %v1507
    %1777 = vmatpush.bf16.msra.mxu0 %v1499
    %1778 = vmatpush.bf16.msra.mxu0 %v1491
    %1779 = vmatmul.bf16.gmra.mxu0 %v1025
    %v1780 = vpop.f32.mrf.mxu0
    %v1781 = vadd.f32 %v1768, %v1780
    %v1782 = vpop.f32.mrf.mxu0
    %1783 = vdwg.mxu0
    %1784 = vmatpush.bf16.msra.mxu0 %v1484
    %1785 = vmatpush.bf16.msra.mxu0 %v1476
    %1786 = vmatpush.bf16.msra.mxu0 %v1468
    %1787 = vmatpush.bf16.msra.mxu0 %v1460
    %1788 = vmatpush.bf16.msra.mxu0 %v1452
    %1789 = vmatpush.bf16.msra.mxu0 %v1444
    %1790 = vmatpush.bf16.msra.mxu0 %v1436
    %1791 = vmatpush.bf16.msra.mxu0 %v1428
    %1792 = vmatmul.bf16.gmra.mxu0 %v1024
    %v1793 = vpop.f32.mrf.mxu0
    %v1794 = vadd.f32 0.0, %v1793
    %v1795 = vpop.f32.mrf.mxu0
    %1796 = vdwg.mxu0
    %1797 = vmatpush.bf16.msra.mxu0 %v1548
    %1798 = vmatpush.bf16.msra.mxu0 %v1540
    %1799 = vmatpush.bf16.msra.mxu0 %v1532
    %1800 = vmatpush.bf16.msra.mxu0 %v1524
    %1801 = vmatpush.bf16.msra.mxu0 %v1516
    %1802 = vmatpush.bf16.msra.mxu0 %v1508
    %1803 = vmatpush.bf16.msra.mxu0 %v1500
    %1804 = vmatpush.bf16.msra.mxu0 %v1492
    %1805 = vmatmul.bf16.gmra.mxu0 %v1025
    %v1806 = vpop.f32.mrf.mxu0
    %v1807 = vadd.f32 %v1794, %v1806
    %v1808 = vpop.f32.mrf.mxu0
    %1809 = vdwg.mxu0
    %1810 = vmatpush.bf16.msra.mxu0 %v1485
    %1811 = vmatpush.bf16.msra.mxu0 %v1477
    %1812 = vmatpush.bf16.msra.mxu0 %v1469
    %1813 = vmatpush.bf16.msra.mxu0 %v1461
    %1814 = vmatpush.bf16.msra.mxu0 %v1453
    %1815 = vmatpush.bf16.msra.mxu0 %v1445
    %1816 = vmatpush.bf16.msra.mxu0 %v1437
    %1817 = vmatpush.bf16.msra.mxu0 %v1429
    %1818 = vmatmul.bf16.gmra.mxu0 %v1024
    %v1819 = vpop.f32.mrf.mxu0
    %v1820 = vadd.f32 0.0, %v1819
    %v1821 = vpop.f32.mrf.mxu0
    %1822 = vdwg.mxu0
    %1823 = vmatpush.bf16.msra.mxu0 %v1549
    %1824 = vmatpush.bf16.msra.mxu0 %v1541
    %1825 = vmatpush.bf16.msra.mxu0 %v1533
    %1826 = vmatpush.bf16.msra.mxu0 %v1525
    %1827 = vmatpush.bf16.msra.mxu0 %v1517
    %1828 = vmatpush.bf16.msra.mxu0 %v1509
    %1829 = vmatpush.bf16.msra.mxu0 %v1501
    %1830 = vmatpush.bf16.msra.mxu0 %v1493
    %1831 = vmatmul.bf16.gmra.mxu0 %v1025
    %v1832 = vpop.f32.mrf.mxu0
    %v1833 = vadd.f32 %v1820, %v1832
    %v1834 = vpop.f32.mrf.mxu0
    %1835 = vdwg.mxu0
    %1836 = vmatpush.bf16.msra.mxu0 %v1486
    %1837 = vmatpush.bf16.msra.mxu0 %v1478
    %1838 = vmatpush.bf16.msra.mxu0 %v1470
    %1839 = vmatpush.bf16.msra.mxu0 %v1462
    %1840 = vmatpush.bf16.msra.mxu0 %v1454
    %1841 = vmatpush.bf16.msra.mxu0 %v1446
    %1842 = vmatpush.bf16.msra.mxu0 %v1438
    %1843 = vmatpush.bf16.msra.mxu0 %v1430
    %1844 = vmatmul.bf16.gmra.mxu0 %v1024
    %v1845 = vpop.f32.mrf.mxu0
    %v1846 = vadd.f32 0.0, %v1845
    %v1847 = vpop.f32.mrf.mxu0
    %1848 = vdwg.mxu0
    %1849 = vmatpush.bf16.msra.mxu0 %v1550
    %1850 = vmatpush.bf16.msra.mxu0 %v1542
    %1851 = vmatpush.bf16.msra.mxu0 %v1534
    %1852 = vmatpush.bf16.msra.mxu0 %v1526
    %1853 = vmatpush.bf16.msra.mxu0 %v1518
    %1854 = vmatpush.bf16.msra.mxu0 %v1510
    %1855 = vmatpush.bf16.msra.mxu0 %v1502
    %1856 = vmatpush.bf16.msra.mxu0 %v1494
    %1857 = vmatmul.bf16.gmra.mxu0 %v1025
    %v1858 = vpop.f32.mrf.mxu0
    %v1859 = vadd.f32 %v1846, %v1858
    %v1860 = vpop.f32.mrf.mxu0
    %1861 = vdwg.mxu0
    %1862 = vmatpush.bf16.msra.mxu0 %v1487
    %1863 = vmatpush.bf16.msra.mxu0 %v1479
    %1864 = vmatpush.bf16.msra.mxu0 %v1471
    %1865 = vmatpush.bf16.msra.mxu0 %v1463
    %1866 = vmatpush.bf16.msra.mxu0 %v1455
    %1867 = vmatpush.bf16.msra.mxu0 %v1447
    %1868 = vmatpush.bf16.msra.mxu0 %v1439
    %1869 = vmatpush.bf16.msra.mxu0 %v1431
    %1870 = vmatmul.bf16.gmra.mxu0 %v1024
    %v1871 = vpop.f32.mrf.mxu0
    %v1872 = vadd.f32 0.0, %v1871
    %v1873 = vpop.f32.mrf.mxu0
    %1874 = vdwg.mxu0
    %1875 = vmatpush.bf16.msra.mxu0 %v1551
    %1876 = vmatpush.bf16.msra.mxu0 %v1543
    %1877 = vmatpush.bf16.msra.mxu0 %v1535
    %1878 = vmatpush.bf16.msra.mxu0 %v1527
    %1879 = vmatpush.bf16.msra.mxu0 %v1519
    %1880 = vmatpush.bf16.msra.mxu0 %v1511
    %1881 = vmatpush.bf16.msra.mxu0 %v1503
    %1882 = vmatpush.bf16.msra.mxu0 %v1495
    %1883 = vmatmul.bf16.gmra.mxu0 %v1025
    %v1884 = vpop.f32.mrf.mxu0
    %v1885 = vadd.f32 %v1872, %v1884
    %v1886 = vpop.f32.mrf.mxu0
    %1887 = vdwg.mxu0
    %v1888 = vadd.f32 %v1032, %v1703
    %v1889 = vadd.f32 %v1033, %v1729
    %v1890 = vadd.f32 %v1034, %v1755
    %v1891 = vadd.f32 %v1035, %v1781
    %v1892 = vadd.f32 %v1036, %v1807
    %v1893 = vadd.f32 %v1037, %v1833
    %v1894 = vadd.f32 %v1038, %v1859
    %v1895 = vadd.f32 %v1039, %v1885
    %v1896 = vmul.f32 %v1888, 0.5
    %v1897 = vmul.f32 %v1889, 0.5
    %v1898 = vtanh.pop %v1896
    %v1899 = vtanh.pop %v1897
    %v1900 = vmul.f32 %v1898, 0.5
    %v1901 = vmul.f32 %v1899, 0.5
    %v1902 = vadd.f32 %v1900, 0.5
    %v1903 = vadd.f32 %v1901, 0.5
    %v1904 = vmul.f32 %v1890, 0.5
    %v1905 = vmul.f32 %v1891, 0.5
    %v1906 = vtanh.pop %v1904
    %v1907 = vtanh.pop %v1905
    %v1908 = vmul.f32 %v1906, 0.5
    %v1909 = vmul.f32 %v1907, 0.5
    %v1910 = vadd.f32 %v1908, 0.5
    %v1911 = vadd.f32 %v1909, 0.5
    %v1912 = vtanh.pop %v1892
    %v1913 = vtanh.pop %v1893
    %v1914 = vmul.f32 %v1894, 0.5
    %v1915 = vmul.f32 %v1895, 0.5
    %v1916 = vtanh.pop %v1914
    %v1917 = vtanh.pop %v1915
    %v1918 = vmul.f32 %v1916, 0.5
    %v1919 = vmul.f32 %v1917, 0.5
    %v1920 = vadd.f32 %v1918, 0.5
    %v1921 = vadd.f32 %v1919, 0.5
    %v1922 = vmul.f32 %v1910, %v1030
    %v1923 = vmul.f32 %v1911, %v1031
    %v1924 = vmul.f32 %v1902, %v1912
    %v1925 = vmul.f32 %v1903, %v1913
    %v1926 = vadd.f32 %v1922, %v1924
    %v1927 = vadd.f32 %v1923, %v1925
    %v1928 = vtanh.pop %v1926
    %v1929 = vtanh.pop %v1927
    %v1930 = vmul.f32 %v1920, %v1928
    %v1931 = vmul.f32 %v1921, %v1929
    %v1932 = vpack.c.bf16 %v1931, %v1930
    %s1933 = scalar_lea.vmem %s7, 16
    %v1934 = vld [vmem:[%s1933] sm:$0xff]
    %v1935 = vld [vmem:[%s1933 + $0x8] sm:$0xff]
    loop: start=0, step=1, limit=3
    $region50: #{sentiment_rnn_forward.1} parent=1 // loop_pre_header
      _
    $region51: #{sentiment_rnn_forward.1} parent=1 // loop_header
      %s1937 = sphi 0, %s1941
      %p1938 = scmp.ge.s32.totalorder %s1937, 3
      %v1942 = vphi %v1932, %v4697
      %v1943 = vphi %v1926, %v4232
      %v1944 = vphi %v1927, %v4233
      %v1945 = vphi %v1029, %v4698
      %v1946 = vphi %v1934, %v4691
      %v1947 = vphi %v1935, %v4692
    $region52: #{sentiment_rnn_forward.1} parent=1 // loop_header_branch
      %1940 = sbr.rel (%p1938) target = $region56
    $region53: #{sentiment_rnn_forward.1} parent=1 // loop_body
      %s1948 = smul.u32 %s1937, 2
      %s1949 = sadd.s32 %s1948, 1
      %s1950 = smul.u32 %s1949, 8
      %s1951 = sshra.s32 %s1950, 3
      %s1952 = sand.u32 %s1950, 7
      %s1953 = smul.u32 %s1951, 8
      %s1954 = smul.addr %s1953, 8
      %s1955 = scalar_lea.vmem [#allocation2], %s1954
      %v1956 = vld [vmem:[%s1955] sm:$0xff]
      %v1957 = vld [vmem:[%s1955 + $0x8] sm:$0xff]
      %v1958 = vld [vmem:[%s1955 + $0x10] sm:$0xff]
      %v1959 = vld [vmem:[%s1955 + $0x18] sm:$0xff]
      %v1960 = vld [vmem:[%s1955 + $0x20] sm:$0xff]
      %v1961 = vld [vmem:[%s1955 + $0x28] sm:$0xff]
      %v1962 = vld [vmem:[%s1955 + $0x30] sm:$0xff]
      %v1963 = vld [vmem:[%s1955 + $0x38] sm:$0xff]
      %v1965 = vunpack.c.l.b16 %v1942
      %v1966 = vunpack.c.h.b16 %v1942
      %v1967 = vpack.c.b16 %v1965, %v1965
      %v1968 = vpack.c.b16 %v1966, %v1966
      %1971 = vmatpush.bf16.msra.mxu0 %v1480
      %1972 = vmatpush.bf16.msra.mxu0 %v1472
      %1973 = vmatpush.bf16.msra.mxu0 %v1464
      %1974 = vmatpush.bf16.msra.mxu0 %v1456
      %1975 = vmatpush.bf16.msra.mxu0 %v1448
      %1976 = vmatpush.bf16.msra.mxu0 %v1440
      %1977 = vmatpush.bf16.msra.mxu0 %v1432
      %1978 = vmatpush.bf16.msra.mxu0 %v1424
      %1979 = vmatmul.bf16.gmra.mxu0 %v1967
      %v1980 = vpop.f32.mrf.mxu0
      %v1981 = vadd.f32 0.0, %v1980
      %v1982 = vpop.f32.mrf.mxu0
      %1983 = vdwg.mxu0
      %1984 = vmatpush.bf16.msra.mxu0 %v1544
      %1985 = vmatpush.bf16.msra.mxu0 %v1536
      %1986 = vmatpush.bf16.msra.mxu0 %v1528
      %1987 = vmatpush.bf16.msra.mxu0 %v1520
      %1988 = vmatpush.bf16.msra.mxu0 %v1512
      %1989 = vmatpush.bf16.msra.mxu0 %v1504
      %1990 = vmatpush.bf16.msra.mxu0 %v1496
      %1991 = vmatpush.bf16.msra.mxu0 %v1488
      %1992 = vmatmul.bf16.gmra.mxu0 %v1968
      %v1993 = vpop.f32.mrf.mxu0
      %v1994 = vadd.f32 %v1981, %v1993
      %v1995 = vpop.f32.mrf.mxu0
      %1996 = vdwg.mxu0
      %1997 = vmatpush.bf16.msra.mxu0 %v1481
      %1998 = vmatpush.bf16.msra.mxu0 %v1473
      %1999 = vmatpush.bf16.msra.mxu0 %v1465
      %2000 = vmatpush.bf16.msra.mxu0 %v1457
      %2001 = vmatpush.bf16.msra.mxu0 %v1449
      %2002 = vmatpush.bf16.msra.mxu0 %v1441
      %2003 = vmatpush.bf16.msra.mxu0 %v1433
      %2004 = vmatpush.bf16.msra.mxu0 %v1425
      %2005 = vmatmul.bf16.gmra.mxu0 %v1967
      %v2006 = vpop.f32.mrf.mxu0
      %v2007 = vadd.f32 0.0, %v2006
      %v2008 = vpop.f32.mrf.mxu0
      %2009 = vdwg.mxu0
      %2010 = vmatpush.bf16.msra.mxu0 %v1545
      %2011 = vmatpush.bf16.msra.mxu0 %v1537
      %2012 = vmatpush.bf16.msra.mxu0 %v1529
      %2013 = vmatpush.bf16.msra.mxu0 %v1521
      %2014 = vmatpush.bf16.msra.mxu0 %v1513
      %2015 = vmatpush.bf16.msra.mxu0 %v1505
      %2016 = vmatpush.bf16.msra.mxu0 %v1497
      %2017 = vmatpush.bf16.msra.mxu0 %v1489
      %2018 = vmatmul.bf16.gmra.mxu0 %v1968
      %v2019 = vpop.f32.mrf.mxu0
      %v2020 = vadd.f32 %v2007, %v2019
      %v2021 = vpop.f32.mrf.mxu0
      %2022 = vdwg.mxu0
      %2023 = vmatpush.bf16.msra.mxu0 %v1482
      %2024 = vmatpush.bf16.msra.mxu0 %v1474
      %2025 = vmatpush.bf16.msra.mxu0 %v1466
      %2026 = vmatpush.bf16.msra.mxu0 %v1458
      %2027 = vmatpush.bf16.msra.mxu0 %v1450
      %2028 = vmatpush.bf16.msra.mxu0 %v1442
      %2029 = vmatpush.bf16.msra.mxu0 %v1434
      %2030 = vmatpush.bf16.msra.mxu0 %v1426
      %2031 = vmatmul.bf16.gmra.mxu0 %v1967
      %v2032 = vpop.f32.mrf.mxu0
      %v2033 = vadd.f32 0.0, %v2032
      %v2034 = vpop.f32.mrf.mxu0
      %2035 = vdwg.mxu0
      %2036 = vmatpush.bf16.msra.mxu0 %v1546
      %2037 = vmatpush.bf16.msra.mxu0 %v1538
      %2038 = vmatpush.bf16.msra.mxu0 %v1530
      %2039 = vmatpush.bf16.msra.mxu0 %v1522
      %2040 = vmatpush.bf16.msra.mxu0 %v1514
      %2041 = vmatpush.bf16.msra.mxu0 %v1506
      %2042 = vmatpush.bf16.msra.mxu0 %v1498
      %2043 = vmatpush.bf16.msra.mxu0 %v1490
      %2044 = vmatmul.bf16.gmra.mxu0 %v1968
      %v2045 = vpop.f32.mrf.mxu0
      %v2046 = vadd.f32 %v2033, %v2045
      %v2047 = vpop.f32.mrf.mxu0
      %2048 = vdwg.mxu0
      %2049 = vmatpush.bf16.msra.mxu0 %v1483
      %2050 = vmatpush.bf16.msra.mxu0 %v1475
      %2051 = vmatpush.bf16.msra.mxu0 %v1467
      %2052 = vmatpush.bf16.msra.mxu0 %v1459
      %2053 = vmatpush.bf16.msra.mxu0 %v1451
      %2054 = vmatpush.bf16.msra.mxu0 %v1443
      %2055 = vmatpush.bf16.msra.mxu0 %v1435
      %2056 = vmatpush.bf16.msra.mxu0 %v1427
      %2057 = vmatmul.bf16.gmra.mxu0 %v1967
      %v2058 = vpop.f32.mrf.mxu0
      %v2059 = vadd.f32 0.0, %v2058
      %v2060 = vpop.f32.mrf.mxu0
      %2061 = vdwg.mxu0
      %2062 = vmatpush.bf16.msra.mxu0 %v1547
      %2063 = vmatpush.bf16.msra.mxu0 %v1539
      %2064 = vmatpush.bf16.msra.mxu0 %v1531
      %2065 = vmatpush.bf16.msra.mxu0 %v1523
      %2066 = vmatpush.bf16.msra.mxu0 %v1515
      %2067 = vmatpush.bf16.msra.mxu0 %v1507
      %2068 = vmatpush.bf16.msra.mxu0 %v1499
      %2069 = vmatpush.bf16.msra.mxu0 %v1491
      %2070 = vmatmul.bf16.gmra.mxu0 %v1968
      %v2071 = vpop.f32.mrf.mxu0
      %v2072 = vadd.f32 %v2059, %v2071
      %v2073 = vpop.f32.mrf.mxu0
      %2074 = vdwg.mxu0
      %2075 = vmatpush.bf16.msra.mxu0 %v1484
      %2076 = vmatpush.bf16.msra.mxu0 %v1476
      %2077 = vmatpush.bf16.msra.mxu0 %v1468
      %2078 = vmatpush.bf16.msra.mxu0 %v1460
      %2079 = vmatpush.bf16.msra.mxu0 %v1452
      %2080 = vmatpush.bf16.msra.mxu0 %v1444
      %2081 = vmatpush.bf16.msra.mxu0 %v1436
      %2082 = vmatpush.bf16.msra.mxu0 %v1428
      %2083 = vmatmul.bf16.gmra.mxu0 %v1967
      %v2084 = vpop.f32.mrf.mxu0
      %v2085 = vadd.f32 0.0, %v2084
      %v2086 = vpop.f32.mrf.mxu0
      %2087 = vdwg.mxu0
      %2088 = vmatpush.bf16.msra.mxu0 %v1548
      %2089 = vmatpush.bf16.msra.mxu0 %v1540
      %2090 = vmatpush.bf16.msra.mxu0 %v1532
      %2091 = vmatpush.bf16.msra.mxu0 %v1524
      %2092 = vmatpush.bf16.msra.mxu0 %v1516
      %2093 = vmatpush.bf16.msra.mxu0 %v1508
      %2094 = vmatpush.bf16.msra.mxu0 %v1500
      %2095 = vmatpush.bf16.msra.mxu0 %v1492
      %2096 = vmatmul.bf16.gmra.mxu0 %v1968
      %v2097 = vpop.f32.mrf.mxu0
      %v2098 = vadd.f32 %v2085, %v2097
      %v2099 = vpop.f32.mrf.mxu0
      %2100 = vdwg.mxu0
      %2101 = vmatpush.bf16.msra.mxu0 %v1485
      %2102 = vmatpush.bf16.msra.mxu0 %v1477
      %2103 = vmatpush.bf16.msra.mxu0 %v1469
      %2104 = vmatpush.bf16.msra.mxu0 %v1461
      %2105 = vmatpush.bf16.msra.mxu0 %v1453
      %2106 = vmatpush.bf16.msra.mxu0 %v1445
      %2107 = vmatpush.bf16.msra.mxu0 %v1437
      %2108 = vmatpush.bf16.msra.mxu0 %v1429
      %2109 = vmatmul.bf16.gmra.mxu0 %v1967
      %v2110 = vpop.f32.mrf.mxu0
      %v2111 = vadd.f32 0.0, %v2110
      %v2112 = vpop.f32.mrf.mxu0
      %2113 = vdwg.mxu0
      %2114 = vmatpush.bf16.msra.mxu0 %v1549
      %2115 = vmatpush.bf16.msra.mxu0 %v1541
      %2116 = vmatpush.bf16.msra.mxu0 %v1533
      %2117 = vmatpush.bf16.msra.mxu0 %v1525
      %2118 = vmatpush.bf16.msra.mxu0 %v1517
      %2119 = vmatpush.bf16.msra.mxu0 %v1509
      %2120 = vmatpush.bf16.msra.mxu0 %v1501
      %2121 = vmatpush.bf16.msra.mxu0 %v1493
      %2122 = vmatmul.bf16.gmra.mxu0 %v1968
      %v2123 = vpop.f32.mrf.mxu0
      %v2124 = vadd.f32 %v2111, %v2123
      %v2125 = vpop.f32.mrf.mxu0
      %2126 = vdwg.mxu0
      %2127 = vmatpush.bf16.msra.mxu0 %v1486
      %2128 = vmatpush.bf16.msra.mxu0 %v1478
      %2129 = vmatpush.bf16.msra.mxu0 %v1470
      %2130 = vmatpush.bf16.msra.mxu0 %v1462
      %2131 = vmatpush.bf16.msra.mxu0 %v1454
      %2132 = vmatpush.bf16.msra.mxu0 %v1446
      %2133 = vmatpush.bf16.msra.mxu0 %v1438
      %2134 = vmatpush.bf16.msra.mxu0 %v1430
      %2135 = vmatmul.bf16.gmra.mxu0 %v1967
      %v2136 = vpop.f32.mrf.mxu0
      %v2137 = vadd.f32 0.0, %v2136
      %v2138 = vpop.f32.mrf.mxu0
      %2139 = vdwg.mxu0
      %2140 = vmatpush.bf16.msra.mxu0 %v1550
      %2141 = vmatpush.bf16.msra.mxu0 %v1542
      %2142 = vmatpush.bf16.msra.mxu0 %v1534
      %2143 = vmatpush.bf16.msra.mxu0 %v1526
      %2144 = vmatpush.bf16.msra.mxu0 %v1518
      %2145 = vmatpush.bf16.msra.mxu0 %v1510
      %2146 = vmatpush.bf16.msra.mxu0 %v1502
      %2147 = vmatpush.bf16.msra.mxu0 %v1494
      %2148 = vmatmul.bf16.gmra.mxu0 %v1968
      %v2149 = vpop.f32.mrf.mxu0
      %v2150 = vadd.f32 %v2137, %v2149
      %v2151 = vpop.f32.mrf.mxu0
      %2152 = vdwg.mxu0
      %2153 = vmatpush.bf16.msra.mxu0 %v1487
      %2154 = vmatpush.bf16.msra.mxu0 %v1479
      %2155 = vmatpush.bf16.msra.mxu0 %v1471
      %2156 = vmatpush.bf16.msra.mxu0 %v1463
      %2157 = vmatpush.bf16.msra.mxu0 %v1455
      %2158 = vmatpush.bf16.msra.mxu0 %v1447
      %2159 = vmatpush.bf16.msra.mxu0 %v1439
      %2160 = vmatpush.bf16.msra.mxu0 %v1431
      %2161 = vmatmul.bf16.gmra.mxu0 %v1967
      %v2162 = vpop.f32.mrf.mxu0
      %v2163 = vadd.f32 0.0, %v2162
      %v2164 = vpop.f32.mrf.mxu0
      %2165 = vdwg.mxu0
      %2166 = vmatpush.bf16.msra.mxu0 %v1551
      %2167 = vmatpush.bf16.msra.mxu0 %v1543
      %2168 = vmatpush.bf16.msra.mxu0 %v1535
      %2169 = vmatpush.bf16.msra.mxu0 %v1527
      %2170 = vmatpush.bf16.msra.mxu0 %v1519
      %2171 = vmatpush.bf16.msra.mxu0 %v1511
      %2172 = vmatpush.bf16.msra.mxu0 %v1503
      %2173 = vmatpush.bf16.msra.mxu0 %v1495
      %2174 = vmatmul.bf16.gmra.mxu0 %v1968
      %v2175 = vpop.f32.mrf.mxu0
      %v2176 = vadd.f32 %v2163, %v2175
      %v2177 = vpop.f32.mrf.mxu0
      %2178 = vdwg.mxu0
      %v2179 = vadd.f32 %v1956, %v1994
      %v2180 = vadd.f32 %v1957, %v2020
      %v2181 = vadd.f32 %v1958, %v2046
      %v2182 = vadd.f32 %v1959, %v2072
      %v2183 = vadd.f32 %v1960, %v2098
      %v2184 = vadd.f32 %v1961, %v2124
      %v2185 = vadd.f32 %v1962, %v2150
      %v2186 = vadd.f32 %v1963, %v2176
      %v2187 = vmul.f32 %v2179, 0.5
      %v2188 = vmul.f32 %v2180, 0.5
      %v2189 = vtanh.pop %v2187
      %v2190 = vtanh.pop %v2188
      %v2191 = vmul.f32 %v2189, 0.5
      %v2192 = vmul.f32 %v2190, 0.5
      %v2193 = vadd.f32 %v2191, 0.5
      %v2194 = vadd.f32 %v2192, 0.5
      %v2195 = vmul.f32 %v2181, 0.5
      %v2196 = vmul.f32 %v2182, 0.5
      %v2197 = vtanh.pop %v2195
      %v2198 = vtanh.pop %v2196
      %v2199 = vmul.f32 %v2197, 0.5
      %v2200 = vmul.f32 %v2198, 0.5
      %v2201 = vadd.f32 %v2199, 0.5
      %v2202 = vadd.f32 %v2200, 0.5
      %v2203 = vtanh.pop %v2183
      %v2204 = vtanh.pop %v2184
      %v2205 = vmul.f32 %v2185, 0.5
      %v2206 = vmul.f32 %v2186, 0.5
      %v2207 = vtanh.pop %v2205
      %v2208 = vtanh.pop %v2206
      %v2209 = vmul.f32 %v2207, 0.5
      %v2210 = vmul.f32 %v2208, 0.5
      %v2211 = vadd.f32 %v2209, 0.5
      %v2212 = vadd.f32 %v2210, 0.5
      %v2213 = vmul.f32 %v2201, %v1943
      %v2214 = vmul.f32 %v2202, %v1944
      %v2215 = vmul.f32 %v2193, %v2203
      %v2216 = vmul.f32 %v2194, %v2204
      %v2217 = vadd.f32 %v2213, %v2215
      %v2218 = vadd.f32 %v2214, %v2216
      %v2219 = vtanh.pop %v2217
      %v2220 = vtanh.pop %v2218
      %v2221 = vmul.f32 %v2211, %v2219
      %v2222 = vmul.f32 %v2212, %v2220
      %v2224 = vunpack.c.l.b16 %v1945
      %v2225 = vunpack.c.h.b16 %v1945
      %v2226 = vpack.c.b16 %v2224, %v2224
      %v2227 = vpack.c.b16 %v2225, %v2225
      %v2486 = vunpack.c.l.b16 %v748
      %v2487 = vunpack.c.h.b16 %v748
      %v2488 = vunpack.c.l.b16 %v749
      %v2489 = vunpack.c.h.b16 %v749
      %v2490 = vunpack.c.l.b16 %v750
      %v2491 = vunpack.c.h.b16 %v750
      %v2492 = vunpack.c.l.b16 %v751
      %v2493 = vunpack.c.h.b16 %v751
      %v2494 = vunpack.c.l.b16 %v752
      %v2495 = vunpack.c.h.b16 %v752
      %v2496 = vunpack.c.l.b16 %v753
      %v2497 = vunpack.c.h.b16 %v753
      %v2498 = vunpack.c.l.b16 %v754
      %v2499 = vunpack.c.h.b16 %v754
      %v2500 = vunpack.c.l.b16 %v755
      %v2501 = vunpack.c.h.b16 %v755
      %v2502 = vunpack.c.l.b16 %v756
      %v2503 = vunpack.c.h.b16 %v756
      %v2504 = vunpack.c.l.b16 %v757
      %v2505 = vunpack.c.h.b16 %v757
      %v2506 = vunpack.c.l.b16 %v758
      %v2507 = vunpack.c.h.b16 %v758
      %v2508 = vunpack.c.l.b16 %v759
      %v2509 = vunpack.c.h.b16 %v759
      %v2510 = vunpack.c.l.b16 %v760
      %v2511 = vunpack.c.h.b16 %v760
      %v2512 = vunpack.c.l.b16 %v761
      %v2513 = vunpack.c.h.b16 %v761
      %v2514 = vunpack.c.l.b16 %v762
      %v2515 = vunpack.c.h.b16 %v762
      %v2516 = vunpack.c.l.b16 %v763
      %v2517 = vunpack.c.h.b16 %v763
      %v2518 = vunpack.c.l.b16 %v764
      %v2519 = vunpack.c.h.b16 %v764
      %v2520 = vunpack.c.l.b16 %v765
      %v2521 = vunpack.c.h.b16 %v765
      %v2522 = vunpack.c.l.b16 %v766
      %v2523 = vunpack.c.h.b16 %v766
      %v2524 = vunpack.c.l.b16 %v767
      %v2525 = vunpack.c.h.b16 %v767
      %v2526 = vunpack.c.l.b16 %v768
      %v2527 = vunpack.c.h.b16 %v768
      %v2528 = vunpack.c.l.b16 %v769
      %v2529 = vunpack.c.h.b16 %v769
      %v2530 = vunpack.c.l.b16 %v770
      %v2531 = vunpack.c.h.b16 %v770
      %v2532 = vunpack.c.l.b16 %v771
      %v2533 = vunpack.c.h.b16 %v771
      %v2534 = vunpack.c.l.b16 %v772
      %v2535 = vunpack.c.h.b16 %v772
      %v2536 = vunpack.c.l.b16 %v773
      %v2537 = vunpack.c.h.b16 %v773
      %v2538 = vunpack.c.l.b16 %v774
      %v2539 = vunpack.c.h.b16 %v774
      %v2540 = vunpack.c.l.b16 %v775
      %v2541 = vunpack.c.h.b16 %v775
      %v2542 = vunpack.c.l.b16 %v776
      %v2543 = vunpack.c.h.b16 %v776
      %v2544 = vunpack.c.l.b16 %v777
      %v2545 = vunpack.c.h.b16 %v777
      %v2546 = vunpack.c.l.b16 %v778
      %v2547 = vunpack.c.h.b16 %v778
      %v2548 = vunpack.c.l.b16 %v779
      %v2549 = vunpack.c.h.b16 %v779
      %v2550 = vunpack.c.l.b16 %v780
      %v2551 = vunpack.c.h.b16 %v780
      %v2552 = vunpack.c.l.b16 %v781
      %v2553 = vunpack.c.h.b16 %v781
      %v2554 = vunpack.c.l.b16 %v782
      %v2555 = vunpack.c.h.b16 %v782
      %v2556 = vunpack.c.l.b16 %v783
      %v2557 = vunpack.c.h.b16 %v783
      %v2558 = vunpack.c.l.b16 %v784
      %v2559 = vunpack.c.h.b16 %v784
      %v2560 = vunpack.c.l.b16 %v785
      %v2561 = vunpack.c.h.b16 %v785
      %v2562 = vunpack.c.l.b16 %v786
      %v2563 = vunpack.c.h.b16 %v786
      %v2564 = vunpack.c.l.b16 %v787
      %v2565 = vunpack.c.h.b16 %v787
      %v2566 = vunpack.c.l.b16 %v788
      %v2567 = vunpack.c.h.b16 %v788
      %v2568 = vunpack.c.l.b16 %v789
      %v2569 = vunpack.c.h.b16 %v789
      %v2570 = vunpack.c.l.b16 %v790
      %v2571 = vunpack.c.h.b16 %v790
      %v2572 = vunpack.c.l.b16 %v791
      %v2573 = vunpack.c.h.b16 %v791
      %v2574 = vunpack.c.l.b16 %v792
      %v2575 = vunpack.c.h.b16 %v792
      %v2576 = vunpack.c.l.b16 %v793
      %v2577 = vunpack.c.h.b16 %v793
      %v2578 = vunpack.c.l.b16 %v794
      %v2579 = vunpack.c.h.b16 %v794
      %v2580 = vunpack.c.l.b16 %v795
      %v2581 = vunpack.c.h.b16 %v795
      %v2582 = vunpack.c.l.b16 %v796
      %v2583 = vunpack.c.h.b16 %v796
      %v2584 = vunpack.c.l.b16 %v797
      %v2585 = vunpack.c.h.b16 %v797
      %v2586 = vunpack.c.l.b16 %v798
      %v2587 = vunpack.c.h.b16 %v798
      %v2588 = vunpack.c.l.b16 %v799
      %v2589 = vunpack.c.h.b16 %v799
      %v2590 = vunpack.c.l.b16 %v800
      %v2591 = vunpack.c.h.b16 %v800
      %v2592 = vunpack.c.l.b16 %v801
      %v2593 = vunpack.c.h.b16 %v801
      %v2594 = vunpack.c.l.b16 %v802
      %v2595 = vunpack.c.h.b16 %v802
      %v2596 = vunpack.c.l.b16 %v803
      %v2597 = vunpack.c.h.b16 %v803
      %v2598 = vunpack.c.l.b16 %v804
      %v2599 = vunpack.c.h.b16 %v804
      %v2600 = vunpack.c.l.b16 %v805
      %v2601 = vunpack.c.h.b16 %v805
      %v2602 = vunpack.c.l.b16 %v806
      %v2603 = vunpack.c.h.b16 %v806
      %v2604 = vunpack.c.l.b16 %v807
      %v2605 = vunpack.c.h.b16 %v807
      %v2606 = vunpack.c.l.b16 %v808
      %v2607 = vunpack.c.h.b16 %v808
      %v2608 = vunpack.c.l.b16 %v809
      %v2609 = vunpack.c.h.b16 %v809
      %v2610 = vunpack.c.l.b16 %v810
      %v2611 = vunpack.c.h.b16 %v810
      %v2612 = vunpack.c.l.b16 %v811
      %v2613 = vunpack.c.h.b16 %v811
      %v2614 = vunpack.c.l.b16 %v812
      %v2615 = vunpack.c.h.b16 %v812
      %v2616 = vunpack.c.l.b16 %v813
      %v2617 = vunpack.c.h.b16 %v813
      %v2618 = vunpack.c.l.b16 %v814
      %v2619 = vunpack.c.h.b16 %v814
      %v2620 = vunpack.c.l.b16 %v815
      %v2621 = vunpack.c.h.b16 %v815
      %v2622 = vunpack.c.l.b16 %v816
      %v2623 = vunpack.c.h.b16 %v816
      %v2624 = vunpack.c.l.b16 %v817
      %v2625 = vunpack.c.h.b16 %v817
      %v2626 = vunpack.c.l.b16 %v818
      %v2627 = vunpack.c.h.b16 %v818
      %v2628 = vunpack.c.l.b16 %v819
      %v2629 = vunpack.c.h.b16 %v819
      %v2630 = vunpack.c.l.b16 %v820
      %v2631 = vunpack.c.h.b16 %v820
      %v2632 = vunpack.c.l.b16 %v821
      %v2633 = vunpack.c.h.b16 %v821
      %v2634 = vunpack.c.l.b16 %v822
      %v2635 = vunpack.c.h.b16 %v822
      %v2636 = vunpack.c.l.b16 %v823
      %v2637 = vunpack.c.h.b16 %v823
      %v2638 = vunpack.c.l.b16 %v824
      %v2639 = vunpack.c.h.b16 %v824
      %v2640 = vunpack.c.l.b16 %v825
      %v2641 = vunpack.c.h.b16 %v825
      %v2642 = vunpack.c.l.b16 %v826
      %v2643 = vunpack.c.h.b16 %v826
      %v2644 = vunpack.c.l.b16 %v827
      %v2645 = vunpack.c.h.b16 %v827
      %v2646 = vunpack.c.l.b16 %v828
      %v2647 = vunpack.c.h.b16 %v828
      %v2648 = vunpack.c.l.b16 %v829
      %v2649 = vunpack.c.h.b16 %v829
      %v2650 = vunpack.c.l.b16 %v830
      %v2651 = vunpack.c.h.b16 %v830
      %v2652 = vunpack.c.l.b16 %v831
      %v2653 = vunpack.c.h.b16 %v831
      %v2654 = vunpack.c.l.b16 %v832
      %v2655 = vunpack.c.h.b16 %v832
      %v2656 = vunpack.c.l.b16 %v833
      %v2657 = vunpack.c.h.b16 %v833
      %v2658 = vunpack.c.l.b16 %v834
      %v2659 = vunpack.c.h.b16 %v834
      %v2660 = vunpack.c.l.b16 %v835
      %v2661 = vunpack.c.h.b16 %v835
      %v2662 = vunpack.c.l.b16 %v836
      %v2663 = vunpack.c.h.b16 %v836
      %v2664 = vunpack.c.l.b16 %v837
      %v2665 = vunpack.c.h.b16 %v837
      %v2666 = vunpack.c.l.b16 %v838
      %v2667 = vunpack.c.h.b16 %v838
      %v2668 = vunpack.c.l.b16 %v839
      %v2669 = vunpack.c.h.b16 %v839
      %v2670 = vunpack.c.l.b16 %v840
      %v2671 = vunpack.c.h.b16 %v840
      %v2672 = vunpack.c.l.b16 %v841
      %v2673 = vunpack.c.h.b16 %v841
      %v2674 = vunpack.c.l.b16 %v842
      %v2675 = vunpack.c.h.b16 %v842
      %v2676 = vunpack.c.l.b16 %v843
      %v2677 = vunpack.c.h.b16 %v843
      %v2678 = vunpack.c.l.b16 %v844
      %v2679 = vunpack.c.h.b16 %v844
      %v2680 = vunpack.c.l.b16 %v845
      %v2681 = vunpack.c.h.b16 %v845
      %v2682 = vunpack.c.l.b16 %v846
      %v2683 = vunpack.c.h.b16 %v846
      %v2684 = vunpack.c.l.b16 %v847
      %v2685 = vunpack.c.h.b16 %v847
      %v2686 = vunpack.c.l.b16 %v848
      %v2687 = vunpack.c.h.b16 %v848
      %v2688 = vunpack.c.l.b16 %v849
      %v2689 = vunpack.c.h.b16 %v849
      %v2690 = vunpack.c.l.b16 %v850
      %v2691 = vunpack.c.h.b16 %v850
      %v2692 = vunpack.c.l.b16 %v851
      %v2693 = vunpack.c.h.b16 %v851
      %v2694 = vunpack.c.l.b16 %v852
      %v2695 = vunpack.c.h.b16 %v852
      %v2696 = vunpack.c.l.b16 %v853
      %v2697 = vunpack.c.h.b16 %v853
      %v2698 = vunpack.c.l.b16 %v854
      %v2699 = vunpack.c.h.b16 %v854
      %v2700 = vunpack.c.l.b16 %v855
      %v2701 = vunpack.c.h.b16 %v855
      %v2702 = vunpack.c.l.b16 %v856
      %v2703 = vunpack.c.h.b16 %v856
      %v2704 = vunpack.c.l.b16 %v857
      %v2705 = vunpack.c.h.b16 %v857
      %v2706 = vunpack.c.l.b16 %v858
      %v2707 = vunpack.c.h.b16 %v858
      %v2708 = vunpack.c.l.b16 %v859
      %v2709 = vunpack.c.h.b16 %v859
      %v2710 = vunpack.c.l.b16 %v860
      %v2711 = vunpack.c.h.b16 %v860
      %v2712 = vunpack.c.l.b16 %v861
      %v2713 = vunpack.c.h.b16 %v861
      %v2714 = vunpack.c.l.b16 %v862
      %v2715 = vunpack.c.h.b16 %v862
      %v2716 = vunpack.c.l.b16 %v863
      %v2717 = vunpack.c.h.b16 %v863
      %v2718 = vunpack.c.l.b16 %v864
      %v2719 = vunpack.c.h.b16 %v864
      %v2720 = vunpack.c.l.b16 %v865
      %v2721 = vunpack.c.h.b16 %v865
      %v2722 = vunpack.c.l.b16 %v866
      %v2723 = vunpack.c.h.b16 %v866
      %v2724 = vunpack.c.l.b16 %v867
      %v2725 = vunpack.c.h.b16 %v867
      %v2726 = vunpack.c.l.b16 %v868
      %v2727 = vunpack.c.h.b16 %v868
      %v2728 = vunpack.c.l.b16 %v869
      %v2729 = vunpack.c.h.b16 %v869
      %v2730 = vunpack.c.l.b16 %v870
      %v2731 = vunpack.c.h.b16 %v870
      %v2732 = vunpack.c.l.b16 %v871
      %v2733 = vunpack.c.h.b16 %v871
      %v2734 = vunpack.c.l.b16 %v872
      %v2735 = vunpack.c.h.b16 %v872
      %v2736 = vunpack.c.l.b16 %v873
      %v2737 = vunpack.c.h.b16 %v873
      %v2738 = vunpack.c.l.b16 %v874
      %v2739 = vunpack.c.h.b16 %v874
      %v2740 = vunpack.c.l.b16 %v875
      %v2741 = vunpack.c.h.b16 %v875
      %v2742 = vunpack.c.l.b16 %v876
      %v2743 = vunpack.c.h.b16 %v876
      %v2744 = vunpack.c.l.b16 %v877
      %v2745 = vunpack.c.h.b16 %v877
      %v2746 = vunpack.c.l.b16 %v878
      %v2747 = vunpack.c.h.b16 %v878
      %v2748 = vunpack.c.l.b16 %v879
      %v2749 = vunpack.c.h.b16 %v879
      %v2750 = vunpack.c.l.b16 %v880
      %v2751 = vunpack.c.h.b16 %v880
      %v2752 = vunpack.c.l.b16 %v881
      %v2753 = vunpack.c.h.b16 %v881
      %v2754 = vunpack.c.l.b16 %v882
      %v2755 = vunpack.c.h.b16 %v882
      %v2756 = vunpack.c.l.b16 %v883
      %v2757 = vunpack.c.h.b16 %v883
      %v2758 = vunpack.c.l.b16 %v884
      %v2759 = vunpack.c.h.b16 %v884
      %v2760 = vunpack.c.l.b16 %v885
      %v2761 = vunpack.c.h.b16 %v885
      %v2762 = vunpack.c.l.b16 %v886
      %v2763 = vunpack.c.h.b16 %v886
      %v2764 = vunpack.c.l.b16 %v887
      %v2765 = vunpack.c.h.b16 %v887
      %v2766 = vunpack.c.l.b16 %v888
      %v2767 = vunpack.c.h.b16 %v888
      %v2768 = vunpack.c.l.b16 %v889
      %v2769 = vunpack.c.h.b16 %v889
      %v2770 = vunpack.c.l.b16 %v890
      %v2771 = vunpack.c.h.b16 %v890
      %v2772 = vunpack.c.l.b16 %v891
      %v2773 = vunpack.c.h.b16 %v891
      %v2774 = vunpack.c.l.b16 %v892
      %v2775 = vunpack.c.h.b16 %v892
      %v2776 = vunpack.c.l.b16 %v893
      %v2777 = vunpack.c.h.b16 %v893
      %v2778 = vunpack.c.l.b16 %v894
      %v2779 = vunpack.c.h.b16 %v894
      %v2780 = vunpack.c.l.b16 %v895
      %v2781 = vunpack.c.h.b16 %v895
      %v2782 = vunpack.c.l.b16 %v896
      %v2783 = vunpack.c.h.b16 %v896
      %v2784 = vunpack.c.l.b16 %v897
      %v2785 = vunpack.c.h.b16 %v897
      %v2786 = vunpack.c.l.b16 %v898
      %v2787 = vunpack.c.h.b16 %v898
      %v2788 = vunpack.c.l.b16 %v899
      %v2789 = vunpack.c.h.b16 %v899
      %v2790 = vunpack.c.l.b16 %v900
      %v2791 = vunpack.c.h.b16 %v900
      %v2792 = vunpack.c.l.b16 %v901
      %v2793 = vunpack.c.h.b16 %v901
      %v2794 = vunpack.c.l.b16 %v902
      %v2795 = vunpack.c.h.b16 %v902
      %v2796 = vunpack.c.l.b16 %v903
      %v2797 = vunpack.c.h.b16 %v903
      %v2798 = vunpack.c.l.b16 %v904
      %v2799 = vunpack.c.h.b16 %v904
      %v2800 = vunpack.c.l.b16 %v905
      %v2801 = vunpack.c.h.b16 %v905
      %v2802 = vunpack.c.l.b16 %v906
      %v2803 = vunpack.c.h.b16 %v906
      %v2804 = vunpack.c.l.b16 %v907
      %v2805 = vunpack.c.h.b16 %v907
      %v2806 = vunpack.c.l.b16 %v908
      %v2807 = vunpack.c.h.b16 %v908
      %v2808 = vunpack.c.l.b16 %v909
      %v2809 = vunpack.c.h.b16 %v909
      %v2810 = vunpack.c.l.b16 %v910
      %v2811 = vunpack.c.h.b16 %v910
      %v2812 = vunpack.c.l.b16 %v911
      %v2813 = vunpack.c.h.b16 %v911
      %v2814 = vunpack.c.l.b16 %v912
      %v2815 = vunpack.c.h.b16 %v912
      %v2816 = vunpack.c.l.b16 %v913
      %v2817 = vunpack.c.h.b16 %v913
      %v2818 = vunpack.c.l.b16 %v914
      %v2819 = vunpack.c.h.b16 %v914
      %v2820 = vunpack.c.l.b16 %v915
      %v2821 = vunpack.c.h.b16 %v915
      %v2822 = vunpack.c.l.b16 %v916
      %v2823 = vunpack.c.h.b16 %v916
      %v2824 = vunpack.c.l.b16 %v917
      %v2825 = vunpack.c.h.b16 %v917
      %v2826 = vunpack.c.l.b16 %v918
      %v2827 = vunpack.c.h.b16 %v918
      %v2828 = vunpack.c.l.b16 %v919
      %v2829 = vunpack.c.h.b16 %v919
      %v2830 = vunpack.c.l.b16 %v920
      %v2831 = vunpack.c.h.b16 %v920
      %v2832 = vunpack.c.l.b16 %v921
      %v2833 = vunpack.c.h.b16 %v921
      %v2834 = vunpack.c.l.b16 %v922
      %v2835 = vunpack.c.h.b16 %v922
      %v2836 = vunpack.c.l.b16 %v923
      %v2837 = vunpack.c.h.b16 %v923
      %v2838 = vunpack.c.l.b16 %v924
      %v2839 = vunpack.c.h.b16 %v924
      %v2840 = vunpack.c.l.b16 %v925
      %v2841 = vunpack.c.h.b16 %v925
      %v2842 = vunpack.c.l.b16 %v926
      %v2843 = vunpack.c.h.b16 %v926
      %v2844 = vunpack.c.l.b16 %v927
      %v2845 = vunpack.c.h.b16 %v927
      %v2846 = vunpack.c.l.b16 %v928
      %v2847 = vunpack.c.h.b16 %v928
      %v2848 = vunpack.c.l.b16 %v929
      %v2849 = vunpack.c.h.b16 %v929
      %v2850 = vunpack.c.l.b16 %v930
      %v2851 = vunpack.c.h.b16 %v930
      %v2852 = vunpack.c.l.b16 %v931
      %v2853 = vunpack.c.h.b16 %v931
      %v2854 = vunpack.c.l.b16 %v932
      %v2855 = vunpack.c.h.b16 %v932
      %v2856 = vunpack.c.l.b16 %v933
      %v2857 = vunpack.c.h.b16 %v933
      %v2858 = vunpack.c.l.b16 %v934
      %v2859 = vunpack.c.h.b16 %v934
      %v2860 = vunpack.c.l.b16 %v935
      %v2861 = vunpack.c.h.b16 %v935
      %v2862 = vunpack.c.l.b16 %v936
      %v2863 = vunpack.c.h.b16 %v936
      %v2864 = vunpack.c.l.b16 %v937
      %v2865 = vunpack.c.h.b16 %v937
      %v2866 = vunpack.c.l.b16 %v938
      %v2867 = vunpack.c.h.b16 %v938
      %v2868 = vunpack.c.l.b16 %v939
      %v2869 = vunpack.c.h.b16 %v939
      %v2870 = vunpack.c.l.b16 %v940
      %v2871 = vunpack.c.h.b16 %v940
      %v2872 = vunpack.c.l.b16 %v941
      %v2873 = vunpack.c.h.b16 %v941
      %v2874 = vunpack.c.l.b16 %v942
      %v2875 = vunpack.c.h.b16 %v942
      %v2876 = vunpack.c.l.b16 %v943
      %v2877 = vunpack.c.h.b16 %v943
      %v2878 = vunpack.c.l.b16 %v944
      %v2879 = vunpack.c.h.b16 %v944
      %v2880 = vunpack.c.l.b16 %v945
      %v2881 = vunpack.c.h.b16 %v945
      %v2882 = vunpack.c.l.b16 %v946
      %v2883 = vunpack.c.h.b16 %v946
      %v2884 = vunpack.c.l.b16 %v947
      %v2885 = vunpack.c.h.b16 %v947
      %v2886 = vunpack.c.l.b16 %v948
      %v2887 = vunpack.c.h.b16 %v948
      %v2888 = vunpack.c.l.b16 %v949
      %v2889 = vunpack.c.h.b16 %v949
      %v2890 = vunpack.c.l.b16 %v950
      %v2891 = vunpack.c.h.b16 %v950
      %v2892 = vunpack.c.l.b16 %v951
      %v2893 = vunpack.c.h.b16 %v951
      %v2894 = vunpack.c.l.b16 %v952
      %v2895 = vunpack.c.h.b16 %v952
      %v2896 = vunpack.c.l.b16 %v953
      %v2897 = vunpack.c.h.b16 %v953
      %v2898 = vunpack.c.l.b16 %v954
      %v2899 = vunpack.c.h.b16 %v954
      %v2900 = vunpack.c.l.b16 %v955
      %v2901 = vunpack.c.h.b16 %v955
      %v2902 = vunpack.c.l.b16 %v956
      %v2903 = vunpack.c.h.b16 %v956
      %v2904 = vunpack.c.l.b16 %v957
      %v2905 = vunpack.c.h.b16 %v957
      %v2906 = vunpack.c.l.b16 %v958
      %v2907 = vunpack.c.h.b16 %v958
      %v2908 = vunpack.c.l.b16 %v959
      %v2909 = vunpack.c.h.b16 %v959
      %v2910 = vunpack.c.l.b16 %v960
      %v2911 = vunpack.c.h.b16 %v960
      %v2912 = vunpack.c.l.b16 %v961
      %v2913 = vunpack.c.h.b16 %v961
      %v2914 = vunpack.c.l.b16 %v962
      %v2915 = vunpack.c.h.b16 %v962
      %v2916 = vunpack.c.l.b16 %v963
      %v2917 = vunpack.c.h.b16 %v963
      %v2918 = vunpack.c.l.b16 %v964
      %v2919 = vunpack.c.h.b16 %v964
      %v2920 = vunpack.c.l.b16 %v965
      %v2921 = vunpack.c.h.b16 %v965
      %v2922 = vunpack.c.l.b16 %v966
      %v2923 = vunpack.c.h.b16 %v966
      %v2924 = vunpack.c.l.b16 %v967
      %v2925 = vunpack.c.h.b16 %v967
      %v2926 = vunpack.c.l.b16 %v968
      %v2927 = vunpack.c.h.b16 %v968
      %v2928 = vunpack.c.l.b16 %v969
      %v2929 = vunpack.c.h.b16 %v969
      %v2930 = vunpack.c.l.b16 %v970
      %v2931 = vunpack.c.h.b16 %v970
      %v2932 = vunpack.c.l.b16 %v971
      %v2933 = vunpack.c.h.b16 %v971
      %v2934 = vunpack.c.l.b16 %v972
      %v2935 = vunpack.c.h.b16 %v972
      %v2936 = vunpack.c.l.b16 %v973
      %v2937 = vunpack.c.h.b16 %v973
      %v2938 = vunpack.c.l.b16 %v974
      %v2939 = vunpack.c.h.b16 %v974
      %v2940 = vunpack.c.l.b16 %v975
      %v2941 = vunpack.c.h.b16 %v975
      %v2942 = vunpack.c.l.b16 %v976
      %v2943 = vunpack.c.h.b16 %v976
      %v2944 = vunpack.c.l.b16 %v977
      %v2945 = vunpack.c.h.b16 %v977
      %v2946 = vunpack.c.l.b16 %v978
      %v2947 = vunpack.c.h.b16 %v978
      %v2948 = vunpack.c.l.b16 %v979
      %v2949 = vunpack.c.h.b16 %v979
      %v2950 = vunpack.c.l.b16 %v980
      %v2951 = vunpack.c.h.b16 %v980
      %v2952 = vunpack.c.l.b16 %v981
      %v2953 = vunpack.c.h.b16 %v981
      %v2954 = vunpack.c.l.b16 %v982
      %v2955 = vunpack.c.h.b16 %v982
      %v2956 = vunpack.c.l.b16 %v983
      %v2957 = vunpack.c.h.b16 %v983
      %v2958 = vunpack.c.l.b16 %v984
      %v2959 = vunpack.c.h.b16 %v984
      %v2960 = vunpack.c.l.b16 %v985
      %v2961 = vunpack.c.h.b16 %v985
      %v2962 = vunpack.c.l.b16 %v986
      %v2963 = vunpack.c.h.b16 %v986
      %v2964 = vunpack.c.l.b16 %v987
      %v2965 = vunpack.c.h.b16 %v987
      %v2966 = vunpack.c.l.b16 %v988
      %v2967 = vunpack.c.h.b16 %v988
      %v2968 = vunpack.c.l.b16 %v989
      %v2969 = vunpack.c.h.b16 %v989
      %v2970 = vunpack.c.l.b16 %v990
      %v2971 = vunpack.c.h.b16 %v990
      %v2972 = vunpack.c.l.b16 %v991
      %v2973 = vunpack.c.h.b16 %v991
      %v2974 = vunpack.c.l.b16 %v992
      %v2975 = vunpack.c.h.b16 %v992
      %v2976 = vunpack.c.l.b16 %v993
      %v2977 = vunpack.c.h.b16 %v993
      %v2978 = vunpack.c.l.b16 %v994
      %v2979 = vunpack.c.h.b16 %v994
      %v2980 = vunpack.c.l.b16 %v995
      %v2981 = vunpack.c.h.b16 %v995
      %v2982 = vunpack.c.l.b16 %v996
      %v2983 = vunpack.c.h.b16 %v996
      %v2984 = vunpack.c.l.b16 %v997
      %v2985 = vunpack.c.h.b16 %v997
      %v2986 = vunpack.c.l.b16 %v998
      %v2987 = vunpack.c.h.b16 %v998
      %v2988 = vunpack.c.l.b16 %v999
      %v2989 = vunpack.c.h.b16 %v999
      %v2990 = vunpack.c.l.b16 %v1000
      %v2991 = vunpack.c.h.b16 %v1000
      %v2992 = vunpack.c.l.b16 %v1001
      %v2993 = vunpack.c.h.b16 %v1001
      %v2994 = vunpack.c.l.b16 %v1002
      %v2995 = vunpack.c.h.b16 %v1002
      %v2996 = vunpack.c.l.b16 %v1003
      %v2997 = vunpack.c.h.b16 %v1003
      %v2998 = vpack.c.b16 %v2494, %v2486
      %v2999 = vpack.c.b16 %v2495, %v2487
      %v3000 = vpack.c.b16 %v2496, %v2488
      %v3001 = vpack.c.b16 %v2497, %v2489
      %v3002 = vpack.c.b16 %v2498, %v2490
      %v3003 = vpack.c.b16 %v2499, %v2491
      %v3004 = vpack.c.b16 %v2500, %v2492
      %v3005 = vpack.c.b16 %v2501, %v2493
      %v3006 = vpack.c.b16 %v2510, %v2502
      %v3007 = vpack.c.b16 %v2511, %v2503
      %v3008 = vpack.c.b16 %v2512, %v2504
      %v3009 = vpack.c.b16 %v2513, %v2505
      %v3010 = vpack.c.b16 %v2514, %v2506
      %v3011 = vpack.c.b16 %v2515, %v2507
      %v3012 = vpack.c.b16 %v2516, %v2508
      %v3013 = vpack.c.b16 %v2517, %v2509
      %v3014 = vpack.c.b16 %v2526, %v2518
      %v3015 = vpack.c.b16 %v2527, %v2519
      %v3016 = vpack.c.b16 %v2528, %v2520
      %v3017 = vpack.c.b16 %v2529, %v2521
      %v3018 = vpack.c.b16 %v2530, %v2522
      %v3019 = vpack.c.b16 %v2531, %v2523
      %v3020 = vpack.c.b16 %v2532, %v2524
      %v3021 = vpack.c.b16 %v2533, %v2525
      %v3022 = vpack.c.b16 %v2542, %v2534
      %v3023 = vpack.c.b16 %v2543, %v2535
      %v3024 = vpack.c.b16 %v2544, %v2536
      %v3025 = vpack.c.b16 %v2545, %v2537
      %v3026 = vpack.c.b16 %v2546, %v2538
      %v3027 = vpack.c.b16 %v2547, %v2539
      %v3028 = vpack.c.b16 %v2548, %v2540
      %v3029 = vpack.c.b16 %v2549, %v2541
      %v3030 = vpack.c.b16 %v2558, %v2550
      %v3031 = vpack.c.b16 %v2559, %v2551
      %v3032 = vpack.c.b16 %v2560, %v2552
      %v3033 = vpack.c.b16 %v2561, %v2553
      %v3034 = vpack.c.b16 %v2562, %v2554
      %v3035 = vpack.c.b16 %v2563, %v2555
      %v3036 = vpack.c.b16 %v2564, %v2556
      %v3037 = vpack.c.b16 %v2565, %v2557
      %v3038 = vpack.c.b16 %v2574, %v2566
      %v3039 = vpack.c.b16 %v2575, %v2567
      %v3040 = vpack.c.b16 %v2576, %v2568
      %v3041 = vpack.c.b16 %v2577, %v2569
      %v3042 = vpack.c.b16 %v2578, %v2570
      %v3043 = vpack.c.b16 %v2579, %v2571
      %v3044 = vpack.c.b16 %v2580, %v2572
      %v3045 = vpack.c.b16 %v2581, %v2573
      %v3046 = vpack.c.b16 %v2590, %v2582
      %v3047 = vpack.c.b16 %v2591, %v2583
      %v3048 = vpack.c.b16 %v2592, %v2584
      %v3049 = vpack.c.b16 %v2593, %v2585
      %v3050 = vpack.c.b16 %v2594, %v2586
      %v3051 = vpack.c.b16 %v2595, %v2587
      %v3052 = vpack.c.b16 %v2596, %v2588
      %v3053 = vpack.c.b16 %v2597, %v2589
      %v3054 = vpack.c.b16 %v2606, %v2598
      %v3055 = vpack.c.b16 %v2607, %v2599
      %v3056 = vpack.c.b16 %v2608, %v2600
      %v3057 = vpack.c.b16 %v2609, %v2601
      %v3058 = vpack.c.b16 %v2610, %v2602
      %v3059 = vpack.c.b16 %v2611, %v2603
      %v3060 = vpack.c.b16 %v2612, %v2604
      %v3061 = vpack.c.b16 %v2613, %v2605
      %v3062 = vpack.c.b16 %v2622, %v2614
      %v3063 = vpack.c.b16 %v2623, %v2615
      %v3064 = vpack.c.b16 %v2624, %v2616
      %v3065 = vpack.c.b16 %v2625, %v2617
      %v3066 = vpack.c.b16 %v2626, %v2618
      %v3067 = vpack.c.b16 %v2627, %v2619
      %v3068 = vpack.c.b16 %v2628, %v2620
      %v3069 = vpack.c.b16 %v2629, %v2621
      %v3070 = vpack.c.b16 %v2638, %v2630
      %v3071 = vpack.c.b16 %v2639, %v2631
      %v3072 = vpack.c.b16 %v2640, %v2632
      %v3073 = vpack.c.b16 %v2641, %v2633
      %v3074 = vpack.c.b16 %v2642, %v2634
      %v3075 = vpack.c.b16 %v2643, %v2635
      %v3076 = vpack.c.b16 %v2644, %v2636
      %v3077 = vpack.c.b16 %v2645, %v2637
      %v3078 = vpack.c.b16 %v2654, %v2646
      %v3079 = vpack.c.b16 %v2655, %v2647
      %v3080 = vpack.c.b16 %v2656, %v2648
      %v3081 = vpack.c.b16 %v2657, %v2649
      %v3082 = vpack.c.b16 %v2658, %v2650
      %v3083 = vpack.c.b16 %v2659, %v2651
      %v3084 = vpack.c.b16 %v2660, %v2652
      %v3085 = vpack.c.b16 %v2661, %v2653
      %v3086 = vpack.c.b16 %v2670, %v2662
      %v3087 = vpack.c.b16 %v2671, %v2663
      %v3088 = vpack.c.b16 %v2672, %v2664
      %v3089 = vpack.c.b16 %v2673, %v2665
      %v3090 = vpack.c.b16 %v2674, %v2666
      %v3091 = vpack.c.b16 %v2675, %v2667
      %v3092 = vpack.c.b16 %v2676, %v2668
      %v3093 = vpack.c.b16 %v2677, %v2669
      %v3094 = vpack.c.b16 %v2686, %v2678
      %v3095 = vpack.c.b16 %v2687, %v2679
      %v3096 = vpack.c.b16 %v2688, %v2680
      %v3097 = vpack.c.b16 %v2689, %v2681
      %v3098 = vpack.c.b16 %v2690, %v2682
      %v3099 = vpack.c.b16 %v2691, %v2683
      %v3100 = vpack.c.b16 %v2692, %v2684
      %v3101 = vpack.c.b16 %v2693, %v2685
      %v3102 = vpack.c.b16 %v2702, %v2694
      %v3103 = vpack.c.b16 %v2703, %v2695
      %v3104 = vpack.c.b16 %v2704, %v2696
      %v3105 = vpack.c.b16 %v2705, %v2697
      %v3106 = vpack.c.b16 %v2706, %v2698
      %v3107 = vpack.c.b16 %v2707, %v2699
      %v3108 = vpack.c.b16 %v2708, %v2700
      %v3109 = vpack.c.b16 %v2709, %v2701
      %v3110 = vpack.c.b16 %v2718, %v2710
      %v3111 = vpack.c.b16 %v2719, %v2711
      %v3112 = vpack.c.b16 %v2720, %v2712
      %v3113 = vpack.c.b16 %v2721, %v2713
      %v3114 = vpack.c.b16 %v2722, %v2714
      %v3115 = vpack.c.b16 %v2723, %v2715
      %v3116 = vpack.c.b16 %v2724, %v2716
      %v3117 = vpack.c.b16 %v2725, %v2717
      %v3118 = vpack.c.b16 %v2734, %v2726
      %v3119 = vpack.c.b16 %v2735, %v2727
      %v3120 = vpack.c.b16 %v2736, %v2728
      %v3121 = vpack.c.b16 %v2737, %v2729
      %v3122 = vpack.c.b16 %v2738, %v2730
      %v3123 = vpack.c.b16 %v2739, %v2731
      %v3124 = vpack.c.b16 %v2740, %v2732
      %v3125 = vpack.c.b16 %v2741, %v2733
      %v3126 = vpack.c.b16 %v2750, %v2742
      %v3127 = vpack.c.b16 %v2751, %v2743
      %v3128 = vpack.c.b16 %v2752, %v2744
      %v3129 = vpack.c.b16 %v2753, %v2745
      %v3130 = vpack.c.b16 %v2754, %v2746
      %v3131 = vpack.c.b16 %v2755, %v2747
      %v3132 = vpack.c.b16 %v2756, %v2748
      %v3133 = vpack.c.b16 %v2757, %v2749
      %v3134 = vpack.c.b16 %v2766, %v2758
      %v3135 = vpack.c.b16 %v2767, %v2759
      %v3136 = vpack.c.b16 %v2768, %v2760
      %v3137 = vpack.c.b16 %v2769, %v2761
      %v3138 = vpack.c.b16 %v2770, %v2762
      %v3139 = vpack.c.b16 %v2771, %v2763
      %v3140 = vpack.c.b16 %v2772, %v2764
      %v3141 = vpack.c.b16 %v2773, %v2765
      %v3142 = vpack.c.b16 %v2782, %v2774
      %v3143 = vpack.c.b16 %v2783, %v2775
      %v3144 = vpack.c.b16 %v2784, %v2776
      %v3145 = vpack.c.b16 %v2785, %v2777
      %v3146 = vpack.c.b16 %v2786, %v2778
      %v3147 = vpack.c.b16 %v2787, %v2779
      %v3148 = vpack.c.b16 %v2788, %v2780
      %v3149 = vpack.c.b16 %v2789, %v2781
      %v3150 = vpack.c.b16 %v2798, %v2790
      %v3151 = vpack.c.b16 %v2799, %v2791
      %v3152 = vpack.c.b16 %v2800, %v2792
      %v3153 = vpack.c.b16 %v2801, %v2793
      %v3154 = vpack.c.b16 %v2802, %v2794
      %v3155 = vpack.c.b16 %v2803, %v2795
      %v3156 = vpack.c.b16 %v2804, %v2796
      %v3157 = vpack.c.b16 %v2805, %v2797
      %v3158 = vpack.c.b16 %v2814, %v2806
      %v3159 = vpack.c.b16 %v2815, %v2807
      %v3160 = vpack.c.b16 %v2816, %v2808
      %v3161 = vpack.c.b16 %v2817, %v2809
      %v3162 = vpack.c.b16 %v2818, %v2810
      %v3163 = vpack.c.b16 %v2819, %v2811
      %v3164 = vpack.c.b16 %v2820, %v2812
      %v3165 = vpack.c.b16 %v2821, %v2813
      %v3166 = vpack.c.b16 %v2830, %v2822
      %v3167 = vpack.c.b16 %v2831, %v2823
      %v3168 = vpack.c.b16 %v2832, %v2824
      %v3169 = vpack.c.b16 %v2833, %v2825
      %v3170 = vpack.c.b16 %v2834, %v2826
      %v3171 = vpack.c.b16 %v2835, %v2827
      %v3172 = vpack.c.b16 %v2836, %v2828
      %v3173 = vpack.c.b16 %v2837, %v2829
      %v3174 = vpack.c.b16 %v2846, %v2838
      %v3175 = vpack.c.b16 %v2847, %v2839
      %v3176 = vpack.c.b16 %v2848, %v2840
      %v3177 = vpack.c.b16 %v2849, %v2841
      %v3178 = vpack.c.b16 %v2850, %v2842
      %v3179 = vpack.c.b16 %v2851, %v2843
      %v3180 = vpack.c.b16 %v2852, %v2844
      %v3181 = vpack.c.b16 %v2853, %v2845
      %v3182 = vpack.c.b16 %v2862, %v2854
      %v3183 = vpack.c.b16 %v2863, %v2855
      %v3184 = vpack.c.b16 %v2864, %v2856
      %v3185 = vpack.c.b16 %v2865, %v2857
      %v3186 = vpack.c.b16 %v2866, %v2858
      %v3187 = vpack.c.b16 %v2867, %v2859
      %v3188 = vpack.c.b16 %v2868, %v2860
      %v3189 = vpack.c.b16 %v2869, %v2861
      %v3190 = vpack.c.b16 %v2878, %v2870
      %v3191 = vpack.c.b16 %v2879, %v2871
      %v3192 = vpack.c.b16 %v2880, %v2872
      %v3193 = vpack.c.b16 %v2881, %v2873
      %v3194 = vpack.c.b16 %v2882, %v2874
      %v3195 = vpack.c.b16 %v2883, %v2875
      %v3196 = vpack.c.b16 %v2884, %v2876
      %v3197 = vpack.c.b16 %v2885, %v2877
      %v3198 = vpack.c.b16 %v2894, %v2886
      %v3199 = vpack.c.b16 %v2895, %v2887
      %v3200 = vpack.c.b16 %v2896, %v2888
      %v3201 = vpack.c.b16 %v2897, %v2889
      %v3202 = vpack.c.b16 %v2898, %v2890
      %v3203 = vpack.c.b16 %v2899, %v2891
      %v3204 = vpack.c.b16 %v2900, %v2892
      %v3205 = vpack.c.b16 %v2901, %v2893
      %v3206 = vpack.c.b16 %v2910, %v2902
      %v3207 = vpack.c.b16 %v2911, %v2903
      %v3208 = vpack.c.b16 %v2912, %v2904
      %v3209 = vpack.c.b16 %v2913, %v2905
      %v3210 = vpack.c.b16 %v2914, %v2906
      %v3211 = vpack.c.b16 %v2915, %v2907
      %v3212 = vpack.c.b16 %v2916, %v2908
      %v3213 = vpack.c.b16 %v2917, %v2909
      %v3214 = vpack.c.b16 %v2926, %v2918
      %v3215 = vpack.c.b16 %v2927, %v2919
      %v3216 = vpack.c.b16 %v2928, %v2920
      %v3217 = vpack.c.b16 %v2929, %v2921
      %v3218 = vpack.c.b16 %v2930, %v2922
      %v3219 = vpack.c.b16 %v2931, %v2923
      %v3220 = vpack.c.b16 %v2932, %v2924
      %v3221 = vpack.c.b16 %v2933, %v2925
      %v3222 = vpack.c.b16 %v2942, %v2934
      %v3223 = vpack.c.b16 %v2943, %v2935
      %v3224 = vpack.c.b16 %v2944, %v2936
      %v3225 = vpack.c.b16 %v2945, %v2937
      %v3226 = vpack.c.b16 %v2946, %v2938
      %v3227 = vpack.c.b16 %v2947, %v2939
      %v3228 = vpack.c.b16 %v2948, %v2940
      %v3229 = vpack.c.b16 %v2949, %v2941
      %v3230 = vpack.c.b16 %v2958, %v2950
      %v3231 = vpack.c.b16 %v2959, %v2951
      %v3232 = vpack.c.b16 %v2960, %v2952
      %v3233 = vpack.c.b16 %v2961, %v2953
      %v3234 = vpack.c.b16 %v2962, %v2954
      %v3235 = vpack.c.b16 %v2963, %v2955
      %v3236 = vpack.c.b16 %v2964, %v2956
      %v3237 = vpack.c.b16 %v2965, %v2957
      %v3238 = vpack.c.b16 %v2974, %v2966
      %v3239 = vpack.c.b16 %v2975, %v2967
      %v3240 = vpack.c.b16 %v2976, %v2968
      %v3241 = vpack.c.b16 %v2977, %v2969
      %v3242 = vpack.c.b16 %v2978, %v2970
      %v3243 = vpack.c.b16 %v2979, %v2971
      %v3244 = vpack.c.b16 %v2980, %v2972
      %v3245 = vpack.c.b16 %v2981, %v2973
      %v3246 = vpack.c.b16 %v2990, %v2982
      %v3247 = vpack.c.b16 %v2991, %v2983
      %v3248 = vpack.c.b16 %v2992, %v2984
      %v3249 = vpack.c.b16 %v2993, %v2985
      %v3250 = vpack.c.b16 %v2994, %v2986
      %v3251 = vpack.c.b16 %v2995, %v2987
      %v3252 = vpack.c.b16 %v2996, %v2988
      %v3253 = vpack.c.b16 %v2997, %v2989
      %3510 = vmatpush.bf16.msra.mxu0 %v3054
      %3511 = vmatpush.bf16.msra.mxu0 %v3046
      %3512 = vmatpush.bf16.msra.mxu0 %v3038
      %3513 = vmatpush.bf16.msra.mxu0 %v3030
      %3514 = vmatpush.bf16.msra.mxu0 %v3022
      %3515 = vmatpush.bf16.msra.mxu0 %v3014
      %3516 = vmatpush.bf16.msra.mxu0 %v3006
      %3517 = vmatpush.bf16.msra.mxu0 %v2998
      %3518 = vmatmul.bf16.gmra.mxu0 %v1967
      %v3519 = vpop.f32.mrf.mxu0
      %v3520 = vadd.f32 %v1006, %v3519
      %v3521 = vpop.f32.mrf.mxu0
      %3522 = vdwg.mxu0
      %3523 = vmatpush.bf16.msra.mxu0 %v3118
      %3524 = vmatpush.bf16.msra.mxu0 %v3110
      %3525 = vmatpush.bf16.msra.mxu0 %v3102
      %3526 = vmatpush.bf16.msra.mxu0 %v3094
      %3527 = vmatpush.bf16.msra.mxu0 %v3086
      %3528 = vmatpush.bf16.msra.mxu0 %v3078
      %3529 = vmatpush.bf16.msra.mxu0 %v3070
      %3530 = vmatpush.bf16.msra.mxu0 %v3062
      %3531 = vmatmul.bf16.gmra.mxu0 %v1968
      %v3532 = vpop.f32.mrf.mxu0
      %v3533 = vadd.f32 %v3520, %v3532
      %v3534 = vpop.f32.mrf.mxu0
      %3535 = vdwg.mxu0
      %3536 = vmatpush.bf16.msra.mxu0 %v3182
      %3537 = vmatpush.bf16.msra.mxu0 %v3174
      %3538 = vmatpush.bf16.msra.mxu0 %v3166
      %3539 = vmatpush.bf16.msra.mxu0 %v3158
      %3540 = vmatpush.bf16.msra.mxu0 %v3150
      %3541 = vmatpush.bf16.msra.mxu0 %v3142
      %3542 = vmatpush.bf16.msra.mxu0 %v3134
      %3543 = vmatpush.bf16.msra.mxu0 %v3126
      %3544 = vmatmul.bf16.gmra.mxu0 %v2226
      %v3545 = vpop.f32.mrf.mxu0
      %v3546 = vadd.f32 %v3533, %v3545
      %v3547 = vpop.f32.mrf.mxu0
      %3548 = vdwg.mxu0
      %3549 = vmatpush.bf16.msra.mxu0 %v3246
      %3550 = vmatpush.bf16.msra.mxu0 %v3238
      %3551 = vmatpush.bf16.msra.mxu0 %v3230
      %3552 = vmatpush.bf16.msra.mxu0 %v3222
      %3553 = vmatpush.bf16.msra.mxu0 %v3214
      %3554 = vmatpush.bf16.msra.mxu0 %v3206
      %3555 = vmatpush.bf16.msra.mxu0 %v3198
      %3556 = vmatpush.bf16.msra.mxu0 %v3190
      %3557 = vmatmul.bf16.gmra.mxu0 %v2227
      %v3558 = vpop.f32.mrf.mxu0
      %v3559 = vadd.f32 %v3546, %v3558
      %v3560 = vpop.f32.mrf.mxu0
      %3561 = vdwg.mxu0
      %3562 = vmatpush.bf16.msra.mxu0 %v3055
      %3563 = vmatpush.bf16.msra.mxu0 %v3047
      %3564 = vmatpush.bf16.msra.mxu0 %v3039
      %3565 = vmatpush.bf16.msra.mxu0 %v3031
      %3566 = vmatpush.bf16.msra.mxu0 %v3023
      %3567 = vmatpush.bf16.msra.mxu0 %v3015
      %3568 = vmatpush.bf16.msra.mxu0 %v3007
      %3569 = vmatpush.bf16.msra.mxu0 %v2999
      %3570 = vmatmul.bf16.gmra.mxu0 %v1967
      %v3571 = vpop.f32.mrf.mxu0
      %v3572 = vadd.f32 %v1007, %v3571
      %v3573 = vpop.f32.mrf.mxu0
      %3574 = vdwg.mxu0
      %3575 = vmatpush.bf16.msra.mxu0 %v3119
      %3576 = vmatpush.bf16.msra.mxu0 %v3111
      %3577 = vmatpush.bf16.msra.mxu0 %v3103
      %3578 = vmatpush.bf16.msra.mxu0 %v3095
      %3579 = vmatpush.bf16.msra.mxu0 %v3087
      %3580 = vmatpush.bf16.msra.mxu0 %v3079
      %3581 = vmatpush.bf16.msra.mxu0 %v3071
      %3582 = vmatpush.bf16.msra.mxu0 %v3063
      %3583 = vmatmul.bf16.gmra.mxu0 %v1968
      %v3584 = vpop.f32.mrf.mxu0
      %v3585 = vadd.f32 %v3572, %v3584
      %v3586 = vpop.f32.mrf.mxu0
      %3587 = vdwg.mxu0
      %3588 = vmatpush.bf16.msra.mxu0 %v3183
      %3589 = vmatpush.bf16.msra.mxu0 %v3175
      %3590 = vmatpush.bf16.msra.mxu0 %v3167
      %3591 = vmatpush.bf16.msra.mxu0 %v3159
      %3592 = vmatpush.bf16.msra.mxu0 %v3151
      %3593 = vmatpush.bf16.msra.mxu0 %v3143
      %3594 = vmatpush.bf16.msra.mxu0 %v3135
      %3595 = vmatpush.bf16.msra.mxu0 %v3127
      %3596 = vmatmul.bf16.gmra.mxu0 %v2226
      %v3597 = vpop.f32.mrf.mxu0
      %v3598 = vadd.f32 %v3585, %v3597
      %v3599 = vpop.f32.mrf.mxu0
      %3600 = vdwg.mxu0
      %3601 = vmatpush.bf16.msra.mxu0 %v3247
      %3602 = vmatpush.bf16.msra.mxu0 %v3239
      %3603 = vmatpush.bf16.msra.mxu0 %v3231
      %3604 = vmatpush.bf16.msra.mxu0 %v3223
      %3605 = vmatpush.bf16.msra.mxu0 %v3215
      %3606 = vmatpush.bf16.msra.mxu0 %v3207
      %3607 = vmatpush.bf16.msra.mxu0 %v3199
      %3608 = vmatpush.bf16.msra.mxu0 %v3191
      %3609 = vmatmul.bf16.gmra.mxu0 %v2227
      %v3610 = vpop.f32.mrf.mxu0
      %v3611 = vadd.f32 %v3598, %v3610
      %v3612 = vpop.f32.mrf.mxu0
      %3613 = vdwg.mxu0
      %3614 = vmatpush.bf16.msra.mxu0 %v3056
      %3615 = vmatpush.bf16.msra.mxu0 %v3048
      %3616 = vmatpush.bf16.msra.mxu0 %v3040
      %3617 = vmatpush.bf16.msra.mxu0 %v3032
      %3618 = vmatpush.bf16.msra.mxu0 %v3024
      %3619 = vmatpush.bf16.msra.mxu0 %v3016
      %3620 = vmatpush.bf16.msra.mxu0 %v3008
      %3621 = vmatpush.bf16.msra.mxu0 %v3000
      %3622 = vmatmul.bf16.gmra.mxu0 %v1967
      %v3623 = vpop.f32.mrf.mxu0
      %v3624 = vadd.f32 %v1008, %v3623
      %v3625 = vpop.f32.mrf.mxu0
      %3626 = vdwg.mxu0
      %3627 = vmatpush.bf16.msra.mxu0 %v3120
      %3628 = vmatpush.bf16.msra.mxu0 %v3112
      %3629 = vmatpush.bf16.msra.mxu0 %v3104
      %3630 = vmatpush.bf16.msra.mxu0 %v3096
      %3631 = vmatpush.bf16.msra.mxu0 %v3088
      %3632 = vmatpush.bf16.msra.mxu0 %v3080
      %3633 = vmatpush.bf16.msra.mxu0 %v3072
      %3634 = vmatpush.bf16.msra.mxu0 %v3064
      %3635 = vmatmul.bf16.gmra.mxu0 %v1968
      %v3636 = vpop.f32.mrf.mxu0
      %v3637 = vadd.f32 %v3624, %v3636
      %v3638 = vpop.f32.mrf.mxu0
      %3639 = vdwg.mxu0
      %3640 = vmatpush.bf16.msra.mxu0 %v3184
      %3641 = vmatpush.bf16.msra.mxu0 %v3176
      %3642 = vmatpush.bf16.msra.mxu0 %v3168
      %3643 = vmatpush.bf16.msra.mxu0 %v3160
      %3644 = vmatpush.bf16.msra.mxu0 %v3152
      %3645 = vmatpush.bf16.msra.mxu0 %v3144
      %3646 = vmatpush.bf16.msra.mxu0 %v3136
      %3647 = vmatpush.bf16.msra.mxu0 %v3128
      %3648 = vmatmul.bf16.gmra.mxu0 %v2226
      %v3649 = vpop.f32.mrf.mxu0
      %v3650 = vadd.f32 %v3637, %v3649
      %v3651 = vpop.f32.mrf.mxu0
      %3652 = vdwg.mxu0
      %3653 = vmatpush.bf16.msra.mxu0 %v3248
      %3654 = vmatpush.bf16.msra.mxu0 %v3240
      %3655 = vmatpush.bf16.msra.mxu0 %v3232
      %3656 = vmatpush.bf16.msra.mxu0 %v3224
      %3657 = vmatpush.bf16.msra.mxu0 %v3216
      %3658 = vmatpush.bf16.msra.mxu0 %v3208
      %3659 = vmatpush.bf16.msra.mxu0 %v3200
      %3660 = vmatpush.bf16.msra.mxu0 %v3192
      %3661 = vmatmul.bf16.gmra.mxu0 %v2227
      %v3662 = vpop.f32.mrf.mxu0
      %v3663 = vadd.f32 %v3650, %v3662
      %v3664 = vpop.f32.mrf.mxu0
      %3665 = vdwg.mxu0
      %3666 = vmatpush.bf16.msra.mxu0 %v3057
      %3667 = vmatpush.bf16.msra.mxu0 %v3049
      %3668 = vmatpush.bf16.msra.mxu0 %v3041
      %3669 = vmatpush.bf16.msra.mxu0 %v3033
      %3670 = vmatpush.bf16.msra.mxu0 %v3025
      %3671 = vmatpush.bf16.msra.mxu0 %v3017
      %3672 = vmatpush.bf16.msra.mxu0 %v3009
      %3673 = vmatpush.bf16.msra.mxu0 %v3001
      %3674 = vmatmul.bf16.gmra.mxu0 %v1967
      %v3675 = vpop.f32.mrf.mxu0
      %v3676 = vadd.f32 %v1009, %v3675
      %v3677 = vpop.f32.mrf.mxu0
      %3678 = vdwg.mxu0
      %3679 = vmatpush.bf16.msra.mxu0 %v3121
      %3680 = vmatpush.bf16.msra.mxu0 %v3113
      %3681 = vmatpush.bf16.msra.mxu0 %v3105
      %3682 = vmatpush.bf16.msra.mxu0 %v3097
      %3683 = vmatpush.bf16.msra.mxu0 %v3089
      %3684 = vmatpush.bf16.msra.mxu0 %v3081
      %3685 = vmatpush.bf16.msra.mxu0 %v3073
      %3686 = vmatpush.bf16.msra.mxu0 %v3065
      %3687 = vmatmul.bf16.gmra.mxu0 %v1968
      %v3688 = vpop.f32.mrf.mxu0
      %v3689 = vadd.f32 %v3676, %v3688
      %v3690 = vpop.f32.mrf.mxu0
      %3691 = vdwg.mxu0
      %3692 = vmatpush.bf16.msra.mxu0 %v3185
      %3693 = vmatpush.bf16.msra.mxu0 %v3177
      %3694 = vmatpush.bf16.msra.mxu0 %v3169
      %3695 = vmatpush.bf16.msra.mxu0 %v3161
      %3696 = vmatpush.bf16.msra.mxu0 %v3153
      %3697 = vmatpush.bf16.msra.mxu0 %v3145
      %3698 = vmatpush.bf16.msra.mxu0 %v3137
      %3699 = vmatpush.bf16.msra.mxu0 %v3129
      %3700 = vmatmul.bf16.gmra.mxu0 %v2226
      %v3701 = vpop.f32.mrf.mxu0
      %v3702 = vadd.f32 %v3689, %v3701
      %v3703 = vpop.f32.mrf.mxu0
      %3704 = vdwg.mxu0
      %3705 = vmatpush.bf16.msra.mxu0 %v3249
      %3706 = vmatpush.bf16.msra.mxu0 %v3241
      %3707 = vmatpush.bf16.msra.mxu0 %v3233
      %3708 = vmatpush.bf16.msra.mxu0 %v3225
      %3709 = vmatpush.bf16.msra.mxu0 %v3217
      %3710 = vmatpush.bf16.msra.mxu0 %v3209
      %3711 = vmatpush.bf16.msra.mxu0 %v3201
      %3712 = vmatpush.bf16.msra.mxu0 %v3193
      %3713 = vmatmul.bf16.gmra.mxu0 %v2227
      %v3714 = vpop.f32.mrf.mxu0
      %v3715 = vadd.f32 %v3702, %v3714
      %v3716 = vpop.f32.mrf.mxu0
      %3717 = vdwg.mxu0
      %3718 = vmatpush.bf16.msra.mxu0 %v3058
      %3719 = vmatpush.bf16.msra.mxu0 %v3050
      %3720 = vmatpush.bf16.msra.mxu0 %v3042
      %3721 = vmatpush.bf16.msra.mxu0 %v3034
      %3722 = vmatpush.bf16.msra.mxu0 %v3026
      %3723 = vmatpush.bf16.msra.mxu0 %v3018
      %3724 = vmatpush.bf16.msra.mxu0 %v3010
      %3725 = vmatpush.bf16.msra.mxu0 %v3002
      %3726 = vmatmul.bf16.gmra.mxu0 %v1967
      %v3727 = vpop.f32.mrf.mxu0
      %v3728 = vadd.f32 %v1010, %v3727
      %v3729 = vpop.f32.mrf.mxu0
      %3730 = vdwg.mxu0
      %3731 = vmatpush.bf16.msra.mxu0 %v3122
      %3732 = vmatpush.bf16.msra.mxu0 %v3114
      %3733 = vmatpush.bf16.msra.mxu0 %v3106
      %3734 = vmatpush.bf16.msra.mxu0 %v3098
      %3735 = vmatpush.bf16.msra.mxu0 %v3090
      %3736 = vmatpush.bf16.msra.mxu0 %v3082
      %3737 = vmatpush.bf16.msra.mxu0 %v3074
      %3738 = vmatpush.bf16.msra.mxu0 %v3066
      %3739 = vmatmul.bf16.gmra.mxu0 %v1968
      %v3740 = vpop.f32.mrf.mxu0
      %v3741 = vadd.f32 %v3728, %v3740
      %v3742 = vpop.f32.mrf.mxu0
      %3743 = vdwg.mxu0
      %3744 = vmatpush.bf16.msra.mxu0 %v3186
      %3745 = vmatpush.bf16.msra.mxu0 %v3178
      %3746 = vmatpush.bf16.msra.mxu0 %v3170
      %3747 = vmatpush.bf16.msra.mxu0 %v3162
      %3748 = vmatpush.bf16.msra.mxu0 %v3154
      %3749 = vmatpush.bf16.msra.mxu0 %v3146
      %3750 = vmatpush.bf16.msra.mxu0 %v3138
      %3751 = vmatpush.bf16.msra.mxu0 %v3130
      %3752 = vmatmul.bf16.gmra.mxu0 %v2226
      %v3753 = vpop.f32.mrf.mxu0
      %v3754 = vadd.f32 %v3741, %v3753
      %v3755 = vpop.f32.mrf.mxu0
      %3756 = vdwg.mxu0
      %3757 = vmatpush.bf16.msra.mxu0 %v3250
      %3758 = vmatpush.bf16.msra.mxu0 %v3242
      %3759 = vmatpush.bf16.msra.mxu0 %v3234
      %3760 = vmatpush.bf16.msra.mxu0 %v3226
      %3761 = vmatpush.bf16.msra.mxu0 %v3218
      %3762 = vmatpush.bf16.msra.mxu0 %v3210
      %3763 = vmatpush.bf16.msra.mxu0 %v3202
      %3764 = vmatpush.bf16.msra.mxu0 %v3194
      %3765 = vmatmul.bf16.gmra.mxu0 %v2227
      %v3766 = vpop.f32.mrf.mxu0
      %v3767 = vadd.f32 %v3754, %v3766
      %v3768 = vpop.f32.mrf.mxu0
      %3769 = vdwg.mxu0
      %3770 = vmatpush.bf16.msra.mxu0 %v3059
      %3771 = vmatpush.bf16.msra.mxu0 %v3051
      %3772 = vmatpush.bf16.msra.mxu0 %v3043
      %3773 = vmatpush.bf16.msra.mxu0 %v3035
      %3774 = vmatpush.bf16.msra.mxu0 %v3027
      %3775 = vmatpush.bf16.msra.mxu0 %v3019
      %3776 = vmatpush.bf16.msra.mxu0 %v3011
      %3777 = vmatpush.bf16.msra.mxu0 %v3003
      %3778 = vmatmul.bf16.gmra.mxu0 %v1967
      %v3779 = vpop.f32.mrf.mxu0
      %v3780 = vadd.f32 %v1011, %v3779
      %v3781 = vpop.f32.mrf.mxu0
      %3782 = vdwg.mxu0
      %3783 = vmatpush.bf16.msra.mxu0 %v3123
      %3784 = vmatpush.bf16.msra.mxu0 %v3115
      %3785 = vmatpush.bf16.msra.mxu0 %v3107
      %3786 = vmatpush.bf16.msra.mxu0 %v3099
      %3787 = vmatpush.bf16.msra.mxu0 %v3091
      %3788 = vmatpush.bf16.msra.mxu0 %v3083
      %3789 = vmatpush.bf16.msra.mxu0 %v3075
      %3790 = vmatpush.bf16.msra.mxu0 %v3067
      %3791 = vmatmul.bf16.gmra.mxu0 %v1968
      %v3792 = vpop.f32.mrf.mxu0
      %v3793 = vadd.f32 %v3780, %v3792
      %v3794 = vpop.f32.mrf.mxu0
      %3795 = vdwg.mxu0
      %3796 = vmatpush.bf16.msra.mxu0 %v3187
      %3797 = vmatpush.bf16.msra.mxu0 %v3179
      %3798 = vmatpush.bf16.msra.mxu0 %v3171
      %3799 = vmatpush.bf16.msra.mxu0 %v3163
      %3800 = vmatpush.bf16.msra.mxu0 %v3155
      %3801 = vmatpush.bf16.msra.mxu0 %v3147
      %3802 = vmatpush.bf16.msra.mxu0 %v3139
      %3803 = vmatpush.bf16.msra.mxu0 %v3131
      %3804 = vmatmul.bf16.gmra.mxu0 %v2226
      %v3805 = vpop.f32.mrf.mxu0
      %v3806 = vadd.f32 %v3793, %v3805
      %v3807 = vpop.f32.mrf.mxu0
      %3808 = vdwg.mxu0
      %3809 = vmatpush.bf16.msra.mxu0 %v3251
      %3810 = vmatpush.bf16.msra.mxu0 %v3243
      %3811 = vmatpush.bf16.msra.mxu0 %v3235
      %3812 = vmatpush.bf16.msra.mxu0 %v3227
      %3813 = vmatpush.bf16.msra.mxu0 %v3219
      %3814 = vmatpush.bf16.msra.mxu0 %v3211
      %3815 = vmatpush.bf16.msra.mxu0 %v3203
      %3816 = vmatpush.bf16.msra.mxu0 %v3195
      %3817 = vmatmul.bf16.gmra.mxu0 %v2227
      %v3818 = vpop.f32.mrf.mxu0
      %v3819 = vadd.f32 %v3806, %v3818
      %v3820 = vpop.f32.mrf.mxu0
      %3821 = vdwg.mxu0
      %3822 = vmatpush.bf16.msra.mxu0 %v3060
      %3823 = vmatpush.bf16.msra.mxu0 %v3052
      %3824 = vmatpush.bf16.msra.mxu0 %v3044
      %3825 = vmatpush.bf16.msra.mxu0 %v3036
      %3826 = vmatpush.bf16.msra.mxu0 %v3028
      %3827 = vmatpush.bf16.msra.mxu0 %v3020
      %3828 = vmatpush.bf16.msra.mxu0 %v3012
      %3829 = vmatpush.bf16.msra.mxu0 %v3004
      %3830 = vmatmul.bf16.gmra.mxu0 %v1967
      %v3831 = vpop.f32.mrf.mxu0
      %v3832 = vadd.f32 %v1012, %v3831
      %v3833 = vpop.f32.mrf.mxu0
      %3834 = vdwg.mxu0
      %3835 = vmatpush.bf16.msra.mxu0 %v3124
      %3836 = vmatpush.bf16.msra.mxu0 %v3116
      %3837 = vmatpush.bf16.msra.mxu0 %v3108
      %3838 = vmatpush.bf16.msra.mxu0 %v3100
      %3839 = vmatpush.bf16.msra.mxu0 %v3092
      %3840 = vmatpush.bf16.msra.mxu0 %v3084
      %3841 = vmatpush.bf16.msra.mxu0 %v3076
      %3842 = vmatpush.bf16.msra.mxu0 %v3068
      %3843 = vmatmul.bf16.gmra.mxu0 %v1968
      %v3844 = vpop.f32.mrf.mxu0
      %v3845 = vadd.f32 %v3832, %v3844
      %v3846 = vpop.f32.mrf.mxu0
      %3847 = vdwg.mxu0
      %3848 = vmatpush.bf16.msra.mxu0 %v3188
      %3849 = vmatpush.bf16.msra.mxu0 %v3180
      %3850 = vmatpush.bf16.msra.mxu0 %v3172
      %3851 = vmatpush.bf16.msra.mxu0 %v3164
      %3852 = vmatpush.bf16.msra.mxu0 %v3156
      %3853 = vmatpush.bf16.msra.mxu0 %v3148
      %3854 = vmatpush.bf16.msra.mxu0 %v3140
      %3855 = vmatpush.bf16.msra.mxu0 %v3132
      %3856 = vmatmul.bf16.gmra.mxu0 %v2226
      %v3857 = vpop.f32.mrf.mxu0
      %v3858 = vadd.f32 %v3845, %v3857
      %v3859 = vpop.f32.mrf.mxu0
      %3860 = vdwg.mxu0
      %3861 = vmatpush.bf16.msra.mxu0 %v3252
      %3862 = vmatpush.bf16.msra.mxu0 %v3244
      %3863 = vmatpush.bf16.msra.mxu0 %v3236
      %3864 = vmatpush.bf16.msra.mxu0 %v3228
      %3865 = vmatpush.bf16.msra.mxu0 %v3220
      %3866 = vmatpush.bf16.msra.mxu0 %v3212
      %3867 = vmatpush.bf16.msra.mxu0 %v3204
      %3868 = vmatpush.bf16.msra.mxu0 %v3196
      %3869 = vmatmul.bf16.gmra.mxu0 %v2227
      %v3870 = vpop.f32.mrf.mxu0
      %v3871 = vadd.f32 %v3858, %v3870
      %v3872 = vpop.f32.mrf.mxu0
      %3873 = vdwg.mxu0
      %3874 = vmatpush.bf16.msra.mxu0 %v3061
      %3875 = vmatpush.bf16.msra.mxu0 %v3053
      %3876 = vmatpush.bf16.msra.mxu0 %v3045
      %3877 = vmatpush.bf16.msra.mxu0 %v3037
      %3878 = vmatpush.bf16.msra.mxu0 %v3029
      %3879 = vmatpush.bf16.msra.mxu0 %v3021
      %3880 = vmatpush.bf16.msra.mxu0 %v3013
      %3881 = vmatpush.bf16.msra.mxu0 %v3005
      %3882 = vmatmul.bf16.gmra.mxu0 %v1967
      %v3883 = vpop.f32.mrf.mxu0
      %v3884 = vadd.f32 %v1013, %v3883
      %v3885 = vpop.f32.mrf.mxu0
      %3886 = vdwg.mxu0
      %3887 = vmatpush.bf16.msra.mxu0 %v3125
      %3888 = vmatpush.bf16.msra.mxu0 %v3117
      %3889 = vmatpush.bf16.msra.mxu0 %v3109
      %3890 = vmatpush.bf16.msra.mxu0 %v3101
      %3891 = vmatpush.bf16.msra.mxu0 %v3093
      %3892 = vmatpush.bf16.msra.mxu0 %v3085
      %3893 = vmatpush.bf16.msra.mxu0 %v3077
      %3894 = vmatpush.bf16.msra.mxu0 %v3069
      %3895 = vmatmul.bf16.gmra.mxu0 %v1968
      %v3896 = vpop.f32.mrf.mxu0
      %v3897 = vadd.f32 %v3884, %v3896
      %v3898 = vpop.f32.mrf.mxu0
      %3899 = vdwg.mxu0
      %3900 = vmatpush.bf16.msra.mxu0 %v3189
      %3901 = vmatpush.bf16.msra.mxu0 %v3181
      %3902 = vmatpush.bf16.msra.mxu0 %v3173
      %3903 = vmatpush.bf16.msra.mxu0 %v3165
      %3904 = vmatpush.bf16.msra.mxu0 %v3157
      %3905 = vmatpush.bf16.msra.mxu0 %v3149
      %3906 = vmatpush.bf16.msra.mxu0 %v3141
      %3907 = vmatpush.bf16.msra.mxu0 %v3133
      %3908 = vmatmul.bf16.gmra.mxu0 %v2226
      %v3909 = vpop.f32.mrf.mxu0
      %v3910 = vadd.f32 %v3897, %v3909
      %v3911 = vpop.f32.mrf.mxu0
      %3912 = vdwg.mxu0
      %3913 = vmatpush.bf16.msra.mxu0 %v3253
      %3914 = vmatpush.bf16.msra.mxu0 %v3245
      %3915 = vmatpush.bf16.msra.mxu0 %v3237
      %3916 = vmatpush.bf16.msra.mxu0 %v3229
      %3917 = vmatpush.bf16.msra.mxu0 %v3221
      %3918 = vmatpush.bf16.msra.mxu0 %v3213
      %3919 = vmatpush.bf16.msra.mxu0 %v3205
      %3920 = vmatpush.bf16.msra.mxu0 %v3197
      %3921 = vmatmul.bf16.gmra.mxu0 %v2227
      %v3922 = vpop.f32.mrf.mxu0
      %v3923 = vadd.f32 %v3910, %v3922
      %v3924 = vpop.f32.mrf.mxu0
      %3925 = vdwg.mxu0
      %v3926 = vmul.f32 %v3559, 0.5
      %v3927 = vmul.f32 %v3611, 0.5
      %v3928 = vtanh.pop %v3926
      %v3929 = vtanh.pop %v3927
      %v3930 = vmul.f32 %v3928, 0.5
      %v3931 = vmul.f32 %v3929, 0.5
      %v3932 = vadd.f32 %v3930, 0.5
      %v3933 = vadd.f32 %v3931, 0.5
      %v3934 = vmul.f32 %v3663, 0.5
      %v3935 = vmul.f32 %v3715, 0.5
      %v3936 = vtanh.pop %v3934
      %v3937 = vtanh.pop %v3935
      %v3938 = vmul.f32 %v3936, 0.5
      %v3939 = vmul.f32 %v3937, 0.5
      %v3940 = vadd.f32 %v3938, 0.5
      %v3941 = vadd.f32 %v3939, 0.5
      %v3942 = vtanh.pop %v3767
      %v3943 = vtanh.pop %v3819
      %v3944 = vmul.f32 %v3871, 0.5
      %v3945 = vmul.f32 %v3923, 0.5
      %v3946 = vtanh.pop %v3944
      %v3947 = vtanh.pop %v3945
      %v3948 = vmul.f32 %v3946, 0.5
      %v3949 = vmul.f32 %v3947, 0.5
      %v3950 = vadd.f32 %v3948, 0.5
      %v3951 = vadd.f32 %v3949, 0.5
      %v3952 = vmul.f32 %v3940, %v1946
      %v3953 = vmul.f32 %v3941, %v1947
      %v3954 = vmul.f32 %v3932, %v3942
      %v3955 = vmul.f32 %v3933, %v3943
      %v3956 = vadd.f32 %v3952, %v3954
      %v3957 = vadd.f32 %v3953, %v3955
      %v3958 = vtanh.pop %v3956
      %v3959 = vtanh.pop %v3957
      %v3960 = vmul.f32 %v3950, %v3958
      %v3961 = vmul.f32 %v3951, %v3959
      %v3962 = vpack.c.bf16 %v2222, %v2221
      %v3963 = vpack.c.bf16 %v3961, %v3960
      %s3964 = sadd.s32 %s1948, 2
      %s3965 = smul.u32 %s3964, 8
      %s3966 = sshra.s32 %s3965, 3
      %s3967 = sand.u32 %s3965, 7
      %s3968 = smul.u32 %s3966, 8
      %s3969 = smul.addr %s3968, 8
      %s3970 = scalar_lea.vmem [#allocation2], %s3969
      %v3971 = vld [vmem:[%s3970] sm:$0xff]
      %v3972 = vld [vmem:[%s3970 + $0x8] sm:$0xff]
      %v3973 = vld [vmem:[%s3970 + $0x10] sm:$0xff]
      %v3974 = vld [vmem:[%s3970 + $0x18] sm:$0xff]
      %v3975 = vld [vmem:[%s3970 + $0x20] sm:$0xff]
      %v3976 = vld [vmem:[%s3970 + $0x28] sm:$0xff]
      %v3977 = vld [vmem:[%s3970 + $0x30] sm:$0xff]
      %v3978 = vld [vmem:[%s3970 + $0x38] sm:$0xff]
      %v3980 = vunpack.c.l.b16 %v3962
      %v3981 = vunpack.c.h.b16 %v3962
      %v3982 = vpack.c.b16 %v3980, %v3980
      %v3983 = vpack.c.b16 %v3981, %v3981
      %3986 = vmatpush.bf16.msra.mxu0 %v1480
      %3987 = vmatpush.bf16.msra.mxu0 %v1472
      %3988 = vmatpush.bf16.msra.mxu0 %v1464
      %3989 = vmatpush.bf16.msra.mxu0 %v1456
      %3990 = vmatpush.bf16.msra.mxu0 %v1448
      %3991 = vmatpush.bf16.msra.mxu0 %v1440
      %3992 = vmatpush.bf16.msra.mxu0 %v1432
      %3993 = vmatpush.bf16.msra.mxu0 %v1424
      %3994 = vmatmul.bf16.gmra.mxu0 %v3982
      %v3995 = vpop.f32.mrf.mxu0
      %v3996 = vadd.f32 0.0, %v3995
      %v3997 = vpop.f32.mrf.mxu0
      %3998 = vdwg.mxu0
      %3999 = vmatpush.bf16.msra.mxu0 %v1544
      %4000 = vmatpush.bf16.msra.mxu0 %v1536
      %4001 = vmatpush.bf16.msra.mxu0 %v1528
      %4002 = vmatpush.bf16.msra.mxu0 %v1520
      %4003 = vmatpush.bf16.msra.mxu0 %v1512
      %4004 = vmatpush.bf16.msra.mxu0 %v1504
      %4005 = vmatpush.bf16.msra.mxu0 %v1496
      %4006 = vmatpush.bf16.msra.mxu0 %v1488
      %4007 = vmatmul.bf16.gmra.mxu0 %v3983
      %v4008 = vpop.f32.mrf.mxu0
      %v4009 = vadd.f32 %v3996, %v4008
      %v4010 = vpop.f32.mrf.mxu0
      %4011 = vdwg.mxu0
      %4012 = vmatpush.bf16.msra.mxu0 %v1481
      %4013 = vmatpush.bf16.msra.mxu0 %v1473
      %4014 = vmatpush.bf16.msra.mxu0 %v1465
      %4015 = vmatpush.bf16.msra.mxu0 %v1457
      %4016 = vmatpush.bf16.msra.mxu0 %v1449
      %4017 = vmatpush.bf16.msra.mxu0 %v1441
      %4018 = vmatpush.bf16.msra.mxu0 %v1433
      %4019 = vmatpush.bf16.msra.mxu0 %v1425
      %4020 = vmatmul.bf16.gmra.mxu0 %v3982
      %v4021 = vpop.f32.mrf.mxu0
      %v4022 = vadd.f32 0.0, %v4021
      %v4023 = vpop.f32.mrf.mxu0
      %4024 = vdwg.mxu0
      %4025 = vmatpush.bf16.msra.mxu0 %v1545
      %4026 = vmatpush.bf16.msra.mxu0 %v1537
      %4027 = vmatpush.bf16.msra.mxu0 %v1529
      %4028 = vmatpush.bf16.msra.mxu0 %v1521
      %4029 = vmatpush.bf16.msra.mxu0 %v1513
      %4030 = vmatpush.bf16.msra.mxu0 %v1505
      %4031 = vmatpush.bf16.msra.mxu0 %v1497
      %4032 = vmatpush.bf16.msra.mxu0 %v1489
      %4033 = vmatmul.bf16.gmra.mxu0 %v3983
      %v4034 = vpop.f32.mrf.mxu0
      %v4035 = vadd.f32 %v4022, %v4034
      %v4036 = vpop.f32.mrf.mxu0
      %4037 = vdwg.mxu0
      %4038 = vmatpush.bf16.msra.mxu0 %v1482
      %4039 = vmatpush.bf16.msra.mxu0 %v1474
      %4040 = vmatpush.bf16.msra.mxu0 %v1466
      %4041 = vmatpush.bf16.msra.mxu0 %v1458
      %4042 = vmatpush.bf16.msra.mxu0 %v1450
      %4043 = vmatpush.bf16.msra.mxu0 %v1442
      %4044 = vmatpush.bf16.msra.mxu0 %v1434
      %4045 = vmatpush.bf16.msra.mxu0 %v1426
      %4046 = vmatmul.bf16.gmra.mxu0 %v3982
      %v4047 = vpop.f32.mrf.mxu0
      %v4048 = vadd.f32 0.0, %v4047
      %v4049 = vpop.f32.mrf.mxu0
      %4050 = vdwg.mxu0
      %4051 = vmatpush.bf16.msra.mxu0 %v1546
      %4052 = vmatpush.bf16.msra.mxu0 %v1538
      %4053 = vmatpush.bf16.msra.mxu0 %v1530
      %4054 = vmatpush.bf16.msra.mxu0 %v1522
      %4055 = vmatpush.bf16.msra.mxu0 %v1514
      %4056 = vmatpush.bf16.msra.mxu0 %v1506
      %4057 = vmatpush.bf16.msra.mxu0 %v1498
      %4058 = vmatpush.bf16.msra.mxu0 %v1490
      %4059 = vmatmul.bf16.gmra.mxu0 %v3983
      %v4060 = vpop.f32.mrf.mxu0
      %v4061 = vadd.f32 %v4048, %v4060
      %v4062 = vpop.f32.mrf.mxu0
      %4063 = vdwg.mxu0
      %4064 = vmatpush.bf16.msra.mxu0 %v1483
      %4065 = vmatpush.bf16.msra.mxu0 %v1475
      %4066 = vmatpush.bf16.msra.mxu0 %v1467
      %4067 = vmatpush.bf16.msra.mxu0 %v1459
      %4068 = vmatpush.bf16.msra.mxu0 %v1451
      %4069 = vmatpush.bf16.msra.mxu0 %v1443
      %4070 = vmatpush.bf16.msra.mxu0 %v1435
      %4071 = vmatpush.bf16.msra.mxu0 %v1427
      %4072 = vmatmul.bf16.gmra.mxu0 %v3982
      %v4073 = vpop.f32.mrf.mxu0
      %v4074 = vadd.f32 0.0, %v4073
      %v4075 = vpop.f32.mrf.mxu0
      %4076 = vdwg.mxu0
      %4077 = vmatpush.bf16.msra.mxu0 %v1547
      %4078 = vmatpush.bf16.msra.mxu0 %v1539
      %4079 = vmatpush.bf16.msra.mxu0 %v1531
      %4080 = vmatpush.bf16.msra.mxu0 %v1523
      %4081 = vmatpush.bf16.msra.mxu0 %v1515
      %4082 = vmatpush.bf16.msra.mxu0 %v1507
      %4083 = vmatpush.bf16.msra.mxu0 %v1499
      %4084 = vmatpush.bf16.msra.mxu0 %v1491
      %4085 = vmatmul.bf16.gmra.mxu0 %v3983
      %v4086 = vpop.f32.mrf.mxu0
      %v4087 = vadd.f32 %v4074, %v4086
      %v4088 = vpop.f32.mrf.mxu0
      %4089 = vdwg.mxu0
      %4090 = vmatpush.bf16.msra.mxu0 %v1484
      %4091 = vmatpush.bf16.msra.mxu0 %v1476
      %4092 = vmatpush.bf16.msra.mxu0 %v1468
      %4093 = vmatpush.bf16.msra.mxu0 %v1460
      %4094 = vmatpush.bf16.msra.mxu0 %v1452
      %4095 = vmatpush.bf16.msra.mxu0 %v1444
      %4096 = vmatpush.bf16.msra.mxu0 %v1436
      %4097 = vmatpush.bf16.msra.mxu0 %v1428
      %4098 = vmatmul.bf16.gmra.mxu0 %v3982
      %v4099 = vpop.f32.mrf.mxu0
      %v4100 = vadd.f32 0.0, %v4099
      %v4101 = vpop.f32.mrf.mxu0
      %4102 = vdwg.mxu0
      %4103 = vmatpush.bf16.msra.mxu0 %v1548
      %4104 = vmatpush.bf16.msra.mxu0 %v1540
      %4105 = vmatpush.bf16.msra.mxu0 %v1532
      %4106 = vmatpush.bf16.msra.mxu0 %v1524
      %4107 = vmatpush.bf16.msra.mxu0 %v1516
      %4108 = vmatpush.bf16.msra.mxu0 %v1508
      %4109 = vmatpush.bf16.msra.mxu0 %v1500
      %4110 = vmatpush.bf16.msra.mxu0 %v1492
      %4111 = vmatmul.bf16.gmra.mxu0 %v3983
      %v4112 = vpop.f32.mrf.mxu0
      %v4113 = vadd.f32 %v4100, %v4112
      %v4114 = vpop.f32.mrf.mxu0
      %4115 = vdwg.mxu0
      %4116 = vmatpush.bf16.msra.mxu0 %v1485
      %4117 = vmatpush.bf16.msra.mxu0 %v1477
      %4118 = vmatpush.bf16.msra.mxu0 %v1469
      %4119 = vmatpush.bf16.msra.mxu0 %v1461
      %4120 = vmatpush.bf16.msra.mxu0 %v1453
      %4121 = vmatpush.bf16.msra.mxu0 %v1445
      %4122 = vmatpush.bf16.msra.mxu0 %v1437
      %4123 = vmatpush.bf16.msra.mxu0 %v1429
      %4124 = vmatmul.bf16.gmra.mxu0 %v3982
      %v4125 = vpop.f32.mrf.mxu0
      %v4126 = vadd.f32 0.0, %v4125
      %v4127 = vpop.f32.mrf.mxu0
      %4128 = vdwg.mxu0
      %4129 = vmatpush.bf16.msra.mxu0 %v1549
      %4130 = vmatpush.bf16.msra.mxu0 %v1541
      %4131 = vmatpush.bf16.msra.mxu0 %v1533
      %4132 = vmatpush.bf16.msra.mxu0 %v1525
      %4133 = vmatpush.bf16.msra.mxu0 %v1517
      %4134 = vmatpush.bf16.msra.mxu0 %v1509
      %4135 = vmatpush.bf16.msra.mxu0 %v1501
      %4136 = vmatpush.bf16.msra.mxu0 %v1493
      %4137 = vmatmul.bf16.gmra.mxu0 %v3983
      %v4138 = vpop.f32.mrf.mxu0
      %v4139 = vadd.f32 %v4126, %v4138
      %v4140 = vpop.f32.mrf.mxu0
      %4141 = vdwg.mxu0
      %4142 = vmatpush.bf16.msra.mxu0 %v1486
      %4143 = vmatpush.bf16.msra.mxu0 %v1478
      %4144 = vmatpush.bf16.msra.mxu0 %v1470
      %4145 = vmatpush.bf16.msra.mxu0 %v1462
      %4146 = vmatpush.bf16.msra.mxu0 %v1454
      %4147 = vmatpush.bf16.msra.mxu0 %v1446
      %4148 = vmatpush.bf16.msra.mxu0 %v1438
      %4149 = vmatpush.bf16.msra.mxu0 %v1430
      %4150 = vmatmul.bf16.gmra.mxu0 %v3982
      %v4151 = vpop.f32.mrf.mxu0
      %v4152 = vadd.f32 0.0, %v4151
      %v4153 = vpop.f32.mrf.mxu0
      %4154 = vdwg.mxu0
      %4155 = vmatpush.bf16.msra.mxu0 %v1550
      %4156 = vmatpush.bf16.msra.mxu0 %v1542
      %4157 = vmatpush.bf16.msra.mxu0 %v1534
      %4158 = vmatpush.bf16.msra.mxu0 %v1526
      %4159 = vmatpush.bf16.msra.mxu0 %v1518
      %4160 = vmatpush.bf16.msra.mxu0 %v1510
      %4161 = vmatpush.bf16.msra.mxu0 %v1502
      %4162 = vmatpush.bf16.msra.mxu0 %v1494
      %4163 = vmatmul.bf16.gmra.mxu0 %v3983
      %v4164 = vpop.f32.mrf.mxu0
      %v4165 = vadd.f32 %v4152, %v4164
      %v4166 = vpop.f32.mrf.mxu0
      %4167 = vdwg.mxu0
      %4168 = vmatpush.bf16.msra.mxu0 %v1487
      %4169 = vmatpush.bf16.msra.mxu0 %v1479
      %4170 = vmatpush.bf16.msra.mxu0 %v1471
      %4171 = vmatpush.bf16.msra.mxu0 %v1463
      %4172 = vmatpush.bf16.msra.mxu0 %v1455
      %4173 = vmatpush.bf16.msra.mxu0 %v1447
      %4174 = vmatpush.bf16.msra.mxu0 %v1439
      %4175 = vmatpush.bf16.msra.mxu0 %v1431
      %4176 = vmatmul.bf16.gmra.mxu0 %v3982
      %v4177 = vpop.f32.mrf.mxu0
      %v4178 = vadd.f32 0.0, %v4177
      %v4179 = vpop.f32.mrf.mxu0
      %4180 = vdwg.mxu0
      %4181 = vmatpush.bf16.msra.mxu0 %v1551
      %4182 = vmatpush.bf16.msra.mxu0 %v1543
      %4183 = vmatpush.bf16.msra.mxu0 %v1535
      %4184 = vmatpush.bf16.msra.mxu0 %v1527
      %4185 = vmatpush.bf16.msra.mxu0 %v1519
      %4186 = vmatpush.bf16.msra.mxu0 %v1511
      %4187 = vmatpush.bf16.msra.mxu0 %v1503
      %4188 = vmatpush.bf16.msra.mxu0 %v1495
      %4189 = vmatmul.bf16.gmra.mxu0 %v3983
      %v4190 = vpop.f32.mrf.mxu0
      %v4191 = vadd.f32 %v4178, %v4190
      %v4192 = vpop.f32.mrf.mxu0
      %4193 = vdwg.mxu0
      %v4194 = vadd.f32 %v3971, %v4009
      %v4195 = vadd.f32 %v3972, %v4035
      %v4196 = vadd.f32 %v3973, %v4061
      %v4197 = vadd.f32 %v3974, %v4087
      %v4198 = vadd.f32 %v3975, %v4113
      %v4199 = vadd.f32 %v3976, %v4139
      %v4200 = vadd.f32 %v3977, %v4165
      %v4201 = vadd.f32 %v3978, %v4191
      %v4202 = vmul.f32 %v4194, 0.5
      %v4203 = vmul.f32 %v4195, 0.5
      %v4204 = vtanh.pop %v4202
      %v4205 = vtanh.pop %v4203
      %v4206 = vmul.f32 %v4204, 0.5
      %v4207 = vmul.f32 %v4205, 0.5
      %v4208 = vadd.f32 %v4206, 0.5
      %v4209 = vadd.f32 %v4207, 0.5
      %v4210 = vmul.f32 %v4196, 0.5
      %v4211 = vmul.f32 %v4197, 0.5
      %v4212 = vtanh.pop %v4210
      %v4213 = vtanh.pop %v4211
      %v4214 = vmul.f32 %v4212, 0.5
      %v4215 = vmul.f32 %v4213, 0.5
      %v4216 = vadd.f32 %v4214, 0.5
      %v4217 = vadd.f32 %v4215, 0.5
      %v4218 = vtanh.pop %v4198
      %v4219 = vtanh.pop %v4199
      %v4220 = vmul.f32 %v4200, 0.5
      %v4221 = vmul.f32 %v4201, 0.5
      %v4222 = vtanh.pop %v4220
      %v4223 = vtanh.pop %v4221
      %v4224 = vmul.f32 %v4222, 0.5
      %v4225 = vmul.f32 %v4223, 0.5
      %v4226 = vadd.f32 %v4224, 0.5
      %v4227 = vadd.f32 %v4225, 0.5
      %v4228 = vmul.f32 %v4216, %v2217
      %v4229 = vmul.f32 %v4217, %v2218
      %v4230 = vmul.f32 %v4208, %v4218
      %v4231 = vmul.f32 %v4209, %v4219
      %v4232 = vadd.f32 %v4228, %v4230
      %v4233 = vadd.f32 %v4229, %v4231
      %v4234 = vtanh.pop %v4232
      %v4235 = vtanh.pop %v4233
      %v4236 = vmul.f32 %v4226, %v4234
      %v4237 = vmul.f32 %v4227, %v4235
      %v4239 = vunpack.c.l.b16 %v3963
      %v4240 = vunpack.c.h.b16 %v3963
      %v4241 = vpack.c.b16 %v4239, %v4239
      %v4242 = vpack.c.b16 %v4240, %v4240
      %4245 = vmatpush.bf16.msra.mxu0 %v3054
      %4246 = vmatpush.bf16.msra.mxu0 %v3046
      %4247 = vmatpush.bf16.msra.mxu0 %v3038
      %4248 = vmatpush.bf16.msra.mxu0 %v3030
      %4249 = vmatpush.bf16.msra.mxu0 %v3022
      %4250 = vmatpush.bf16.msra.mxu0 %v3014
      %4251 = vmatpush.bf16.msra.mxu0 %v3006
      %4252 = vmatpush.bf16.msra.mxu0 %v2998
      %4253 = vmatmul.bf16.gmra.mxu0 %v3982
      %v4254 = vpop.f32.mrf.mxu0
      %v4255 = vadd.f32 %v1006, %v4254
      %v4256 = vpop.f32.mrf.mxu0
      %4257 = vdwg.mxu0
      %4258 = vmatpush.bf16.msra.mxu0 %v3118
      %4259 = vmatpush.bf16.msra.mxu0 %v3110
      %4260 = vmatpush.bf16.msra.mxu0 %v3102
      %4261 = vmatpush.bf16.msra.mxu0 %v3094
      %4262 = vmatpush.bf16.msra.mxu0 %v3086
      %4263 = vmatpush.bf16.msra.mxu0 %v3078
      %4264 = vmatpush.bf16.msra.mxu0 %v3070
      %4265 = vmatpush.bf16.msra.mxu0 %v3062
      %4266 = vmatmul.bf16.gmra.mxu0 %v3983
      %v4267 = vpop.f32.mrf.mxu0
      %v4268 = vadd.f32 %v4255, %v4267
      %v4269 = vpop.f32.mrf.mxu0
      %4270 = vdwg.mxu0
      %4271 = vmatpush.bf16.msra.mxu0 %v3182
      %4272 = vmatpush.bf16.msra.mxu0 %v3174
      %4273 = vmatpush.bf16.msra.mxu0 %v3166
      %4274 = vmatpush.bf16.msra.mxu0 %v3158
      %4275 = vmatpush.bf16.msra.mxu0 %v3150
      %4276 = vmatpush.bf16.msra.mxu0 %v3142
      %4277 = vmatpush.bf16.msra.mxu0 %v3134
      %4278 = vmatpush.bf16.msra.mxu0 %v3126
      %4279 = vmatmul.bf16.gmra.mxu0 %v4241
      %v4280 = vpop.f32.mrf.mxu0
      %v4281 = vadd.f32 %v4268, %v4280
      %v4282 = vpop.f32.mrf.mxu0
      %4283 = vdwg.mxu0
      %4284 = vmatpush.bf16.msra.mxu0 %v3246
      %4285 = vmatpush.bf16.msra.mxu0 %v3238
      %4286 = vmatpush.bf16.msra.mxu0 %v3230
      %4287 = vmatpush.bf16.msra.mxu0 %v3222
      %4288 = vmatpush.bf16.msra.mxu0 %v3214
      %4289 = vmatpush.bf16.msra.mxu0 %v3206
      %4290 = vmatpush.bf16.msra.mxu0 %v3198
      %4291 = vmatpush.bf16.msra.mxu0 %v3190
      %4292 = vmatmul.bf16.gmra.mxu0 %v4242
      %v4293 = vpop.f32.mrf.mxu0
      %v4294 = vadd.f32 %v4281, %v4293
      %v4295 = vpop.f32.mrf.mxu0
      %4296 = vdwg.mxu0
      %4297 = vmatpush.bf16.msra.mxu0 %v3055
      %4298 = vmatpush.bf16.msra.mxu0 %v3047
      %4299 = vmatpush.bf16.msra.mxu0 %v3039
      %4300 = vmatpush.bf16.msra.mxu0 %v3031
      %4301 = vmatpush.bf16.msra.mxu0 %v3023
      %4302 = vmatpush.bf16.msra.mxu0 %v3015
      %4303 = vmatpush.bf16.msra.mxu0 %v3007
      %4304 = vmatpush.bf16.msra.mxu0 %v2999
      %4305 = vmatmul.bf16.gmra.mxu0 %v3982
      %v4306 = vpop.f32.mrf.mxu0
      %v4307 = vadd.f32 %v1007, %v4306
      %v4308 = vpop.f32.mrf.mxu0
      %4309 = vdwg.mxu0
      %4310 = vmatpush.bf16.msra.mxu0 %v3119
      %4311 = vmatpush.bf16.msra.mxu0 %v3111
      %4312 = vmatpush.bf16.msra.mxu0 %v3103
      %4313 = vmatpush.bf16.msra.mxu0 %v3095
      %4314 = vmatpush.bf16.msra.mxu0 %v3087
      %4315 = vmatpush.bf16.msra.mxu0 %v3079
      %4316 = vmatpush.bf16.msra.mxu0 %v3071
      %4317 = vmatpush.bf16.msra.mxu0 %v3063
      %4318 = vmatmul.bf16.gmra.mxu0 %v3983
      %v4319 = vpop.f32.mrf.mxu0
      %v4320 = vadd.f32 %v4307, %v4319
      %v4321 = vpop.f32.mrf.mxu0
      %4322 = vdwg.mxu0
      %4323 = vmatpush.bf16.msra.mxu0 %v3183
      %4324 = vmatpush.bf16.msra.mxu0 %v3175
      %4325 = vmatpush.bf16.msra.mxu0 %v3167
      %4326 = vmatpush.bf16.msra.mxu0 %v3159
      %4327 = vmatpush.bf16.msra.mxu0 %v3151
      %4328 = vmatpush.bf16.msra.mxu0 %v3143
      %4329 = vmatpush.bf16.msra.mxu0 %v3135
      %4330 = vmatpush.bf16.msra.mxu0 %v3127
      %4331 = vmatmul.bf16.gmra.mxu0 %v4241
      %v4332 = vpop.f32.mrf.mxu0
      %v4333 = vadd.f32 %v4320, %v4332
      %v4334 = vpop.f32.mrf.mxu0
      %4335 = vdwg.mxu0
      %4336 = vmatpush.bf16.msra.mxu0 %v3247
      %4337 = vmatpush.bf16.msra.mxu0 %v3239
      %4338 = vmatpush.bf16.msra.mxu0 %v3231
      %4339 = vmatpush.bf16.msra.mxu0 %v3223
      %4340 = vmatpush.bf16.msra.mxu0 %v3215
      %4341 = vmatpush.bf16.msra.mxu0 %v3207
      %4342 = vmatpush.bf16.msra.mxu0 %v3199
      %4343 = vmatpush.bf16.msra.mxu0 %v3191
      %4344 = vmatmul.bf16.gmra.mxu0 %v4242
      %v4345 = vpop.f32.mrf.mxu0
      %v4346 = vadd.f32 %v4333, %v4345
      %v4347 = vpop.f32.mrf.mxu0
      %4348 = vdwg.mxu0
      %4349 = vmatpush.bf16.msra.mxu0 %v3056
      %4350 = vmatpush.bf16.msra.mxu0 %v3048
      %4351 = vmatpush.bf16.msra.mxu0 %v3040
      %4352 = vmatpush.bf16.msra.mxu0 %v3032
      %4353 = vmatpush.bf16.msra.mxu0 %v3024
      %4354 = vmatpush.bf16.msra.mxu0 %v3016
      %4355 = vmatpush.bf16.msra.mxu0 %v3008
      %4356 = vmatpush.bf16.msra.mxu0 %v3000
      %4357 = vmatmul.bf16.gmra.mxu0 %v3982
      %v4358 = vpop.f32.mrf.mxu0
      %v4359 = vadd.f32 %v1008, %v4358
      %v4360 = vpop.f32.mrf.mxu0
      %4361 = vdwg.mxu0
      %4362 = vmatpush.bf16.msra.mxu0 %v3120
      %4363 = vmatpush.bf16.msra.mxu0 %v3112
      %4364 = vmatpush.bf16.msra.mxu0 %v3104
      %4365 = vmatpush.bf16.msra.mxu0 %v3096
      %4366 = vmatpush.bf16.msra.mxu0 %v3088
      %4367 = vmatpush.bf16.msra.mxu0 %v3080
      %4368 = vmatpush.bf16.msra.mxu0 %v3072
      %4369 = vmatpush.bf16.msra.mxu0 %v3064
      %4370 = vmatmul.bf16.gmra.mxu0 %v3983
      %v4371 = vpop.f32.mrf.mxu0
      %v4372 = vadd.f32 %v4359, %v4371
      %v4373 = vpop.f32.mrf.mxu0
      %4374 = vdwg.mxu0
      %4375 = vmatpush.bf16.msra.mxu0 %v3184
      %4376 = vmatpush.bf16.msra.mxu0 %v3176
      %4377 = vmatpush.bf16.msra.mxu0 %v3168
      %4378 = vmatpush.bf16.msra.mxu0 %v3160
      %4379 = vmatpush.bf16.msra.mxu0 %v3152
      %4380 = vmatpush.bf16.msra.mxu0 %v3144
      %4381 = vmatpush.bf16.msra.mxu0 %v3136
      %4382 = vmatpush.bf16.msra.mxu0 %v3128
      %4383 = vmatmul.bf16.gmra.mxu0 %v4241
      %v4384 = vpop.f32.mrf.mxu0
      %v4385 = vadd.f32 %v4372, %v4384
      %v4386 = vpop.f32.mrf.mxu0
      %4387 = vdwg.mxu0
      %4388 = vmatpush.bf16.msra.mxu0 %v3248
      %4389 = vmatpush.bf16.msra.mxu0 %v3240
      %4390 = vmatpush.bf16.msra.mxu0 %v3232
      %4391 = vmatpush.bf16.msra.mxu0 %v3224
      %4392 = vmatpush.bf16.msra.mxu0 %v3216
      %4393 = vmatpush.bf16.msra.mxu0 %v3208
      %4394 = vmatpush.bf16.msra.mxu0 %v3200
      %4395 = vmatpush.bf16.msra.mxu0 %v3192
      %4396 = vmatmul.bf16.gmra.mxu0 %v4242
      %v4397 = vpop.f32.mrf.mxu0
      %v4398 = vadd.f32 %v4385, %v4397
      %v4399 = vpop.f32.mrf.mxu0
      %4400 = vdwg.mxu0
      %4401 = vmatpush.bf16.msra.mxu0 %v3057
      %4402 = vmatpush.bf16.msra.mxu0 %v3049
      %4403 = vmatpush.bf16.msra.mxu0 %v3041
      %4404 = vmatpush.bf16.msra.mxu0 %v3033
      %4405 = vmatpush.bf16.msra.mxu0 %v3025
      %4406 = vmatpush.bf16.msra.mxu0 %v3017
      %4407 = vmatpush.bf16.msra.mxu0 %v3009
      %4408 = vmatpush.bf16.msra.mxu0 %v3001
      %4409 = vmatmul.bf16.gmra.mxu0 %v3982
      %v4410 = vpop.f32.mrf.mxu0
      %v4411 = vadd.f32 %v1009, %v4410
      %v4412 = vpop.f32.mrf.mxu0
      %4413 = vdwg.mxu0
      %4414 = vmatpush.bf16.msra.mxu0 %v3121
      %4415 = vmatpush.bf16.msra.mxu0 %v3113
      %4416 = vmatpush.bf16.msra.mxu0 %v3105
      %4417 = vmatpush.bf16.msra.mxu0 %v3097
      %4418 = vmatpush.bf16.msra.mxu0 %v3089
      %4419 = vmatpush.bf16.msra.mxu0 %v3081
      %4420 = vmatpush.bf16.msra.mxu0 %v3073
      %4421 = vmatpush.bf16.msra.mxu0 %v3065
      %4422 = vmatmul.bf16.gmra.mxu0 %v3983
      %v4423 = vpop.f32.mrf.mxu0
      %v4424 = vadd.f32 %v4411, %v4423
      %v4425 = vpop.f32.mrf.mxu0
      %4426 = vdwg.mxu0
      %4427 = vmatpush.bf16.msra.mxu0 %v3185
      %4428 = vmatpush.bf16.msra.mxu0 %v3177
      %4429 = vmatpush.bf16.msra.mxu0 %v3169
      %4430 = vmatpush.bf16.msra.mxu0 %v3161
      %4431 = vmatpush.bf16.msra.mxu0 %v3153
      %4432 = vmatpush.bf16.msra.mxu0 %v3145
      %4433 = vmatpush.bf16.msra.mxu0 %v3137
      %4434 = vmatpush.bf16.msra.mxu0 %v3129
      %4435 = vmatmul.bf16.gmra.mxu0 %v4241
      %v4436 = vpop.f32.mrf.mxu0
      %v4437 = vadd.f32 %v4424, %v4436
      %v4438 = vpop.f32.mrf.mxu0
      %4439 = vdwg.mxu0
      %4440 = vmatpush.bf16.msra.mxu0 %v3249
      %4441 = vmatpush.bf16.msra.mxu0 %v3241
      %4442 = vmatpush.bf16.msra.mxu0 %v3233
      %4443 = vmatpush.bf16.msra.mxu0 %v3225
      %4444 = vmatpush.bf16.msra.mxu0 %v3217
      %4445 = vmatpush.bf16.msra.mxu0 %v3209
      %4446 = vmatpush.bf16.msra.mxu0 %v3201
      %4447 = vmatpush.bf16.msra.mxu0 %v3193
      %4448 = vmatmul.bf16.gmra.mxu0 %v4242
      %v4449 = vpop.f32.mrf.mxu0
      %v4450 = vadd.f32 %v4437, %v4449
      %v4451 = vpop.f32.mrf.mxu0
      %4452 = vdwg.mxu0
      %4453 = vmatpush.bf16.msra.mxu0 %v3058
      %4454 = vmatpush.bf16.msra.mxu0 %v3050
      %4455 = vmatpush.bf16.msra.mxu0 %v3042
      %4456 = vmatpush.bf16.msra.mxu0 %v3034
      %4457 = vmatpush.bf16.msra.mxu0 %v3026
      %4458 = vmatpush.bf16.msra.mxu0 %v3018
      %4459 = vmatpush.bf16.msra.mxu0 %v3010
      %4460 = vmatpush.bf16.msra.mxu0 %v3002
      %4461 = vmatmul.bf16.gmra.mxu0 %v3982
      %v4462 = vpop.f32.mrf.mxu0
      %v4463 = vadd.f32 %v1010, %v4462
      %v4464 = vpop.f32.mrf.mxu0
      %4465 = vdwg.mxu0
      %4466 = vmatpush.bf16.msra.mxu0 %v3122
      %4467 = vmatpush.bf16.msra.mxu0 %v3114
      %4468 = vmatpush.bf16.msra.mxu0 %v3106
      %4469 = vmatpush.bf16.msra.mxu0 %v3098
      %4470 = vmatpush.bf16.msra.mxu0 %v3090
      %4471 = vmatpush.bf16.msra.mxu0 %v3082
      %4472 = vmatpush.bf16.msra.mxu0 %v3074
      %4473 = vmatpush.bf16.msra.mxu0 %v3066
      %4474 = vmatmul.bf16.gmra.mxu0 %v3983
      %v4475 = vpop.f32.mrf.mxu0
      %v4476 = vadd.f32 %v4463, %v4475
      %v4477 = vpop.f32.mrf.mxu0
      %4478 = vdwg.mxu0
      %4479 = vmatpush.bf16.msra.mxu0 %v3186
      %4480 = vmatpush.bf16.msra.mxu0 %v3178
      %4481 = vmatpush.bf16.msra.mxu0 %v3170
      %4482 = vmatpush.bf16.msra.mxu0 %v3162
      %4483 = vmatpush.bf16.msra.mxu0 %v3154
      %4484 = vmatpush.bf16.msra.mxu0 %v3146
      %4485 = vmatpush.bf16.msra.mxu0 %v3138
      %4486 = vmatpush.bf16.msra.mxu0 %v3130
      %4487 = vmatmul.bf16.gmra.mxu0 %v4241
      %v4488 = vpop.f32.mrf.mxu0
      %v4489 = vadd.f32 %v4476, %v4488
      %v4490 = vpop.f32.mrf.mxu0
      %4491 = vdwg.mxu0
      %4492 = vmatpush.bf16.msra.mxu0 %v3250
      %4493 = vmatpush.bf16.msra.mxu0 %v3242
      %4494 = vmatpush.bf16.msra.mxu0 %v3234
      %4495 = vmatpush.bf16.msra.mxu0 %v3226
      %4496 = vmatpush.bf16.msra.mxu0 %v3218
      %4497 = vmatpush.bf16.msra.mxu0 %v3210
      %4498 = vmatpush.bf16.msra.mxu0 %v3202
      %4499 = vmatpush.bf16.msra.mxu0 %v3194
      %4500 = vmatmul.bf16.gmra.mxu0 %v4242
      %v4501 = vpop.f32.mrf.mxu0
      %v4502 = vadd.f32 %v4489, %v4501
      %v4503 = vpop.f32.mrf.mxu0
      %4504 = vdwg.mxu0
      %4505 = vmatpush.bf16.msra.mxu0 %v3059
      %4506 = vmatpush.bf16.msra.mxu0 %v3051
      %4507 = vmatpush.bf16.msra.mxu0 %v3043
      %4508 = vmatpush.bf16.msra.mxu0 %v3035
      %4509 = vmatpush.bf16.msra.mxu0 %v3027
      %4510 = vmatpush.bf16.msra.mxu0 %v3019
      %4511 = vmatpush.bf16.msra.mxu0 %v3011
      %4512 = vmatpush.bf16.msra.mxu0 %v3003
      %4513 = vmatmul.bf16.gmra.mxu0 %v3982
      %v4514 = vpop.f32.mrf.mxu0
      %v4515 = vadd.f32 %v1011, %v4514
      %v4516 = vpop.f32.mrf.mxu0
      %4517 = vdwg.mxu0
      %4518 = vmatpush.bf16.msra.mxu0 %v3123
      %4519 = vmatpush.bf16.msra.mxu0 %v3115
      %4520 = vmatpush.bf16.msra.mxu0 %v3107
      %4521 = vmatpush.bf16.msra.mxu0 %v3099
      %4522 = vmatpush.bf16.msra.mxu0 %v3091
      %4523 = vmatpush.bf16.msra.mxu0 %v3083
      %4524 = vmatpush.bf16.msra.mxu0 %v3075
      %4525 = vmatpush.bf16.msra.mxu0 %v3067
      %4526 = vmatmul.bf16.gmra.mxu0 %v3983
      %v4527 = vpop.f32.mrf.mxu0
      %v4528 = vadd.f32 %v4515, %v4527
      %v4529 = vpop.f32.mrf.mxu0
      %4530 = vdwg.mxu0
      %4531 = vmatpush.bf16.msra.mxu0 %v3187
      %4532 = vmatpush.bf16.msra.mxu0 %v3179
      %4533 = vmatpush.bf16.msra.mxu0 %v3171
      %4534 = vmatpush.bf16.msra.mxu0 %v3163
      %4535 = vmatpush.bf16.msra.mxu0 %v3155
      %4536 = vmatpush.bf16.msra.mxu0 %v3147
      %4537 = vmatpush.bf16.msra.mxu0 %v3139
      %4538 = vmatpush.bf16.msra.mxu0 %v3131
      %4539 = vmatmul.bf16.gmra.mxu0 %v4241
      %v4540 = vpop.f32.mrf.mxu0
      %v4541 = vadd.f32 %v4528, %v4540
      %v4542 = vpop.f32.mrf.mxu0
      %4543 = vdwg.mxu0
      %4544 = vmatpush.bf16.msra.mxu0 %v3251
      %4545 = vmatpush.bf16.msra.mxu0 %v3243
      %4546 = vmatpush.bf16.msra.mxu0 %v3235
      %4547 = vmatpush.bf16.msra.mxu0 %v3227
      %4548 = vmatpush.bf16.msra.mxu0 %v3219
      %4549 = vmatpush.bf16.msra.mxu0 %v3211
      %4550 = vmatpush.bf16.msra.mxu0 %v3203
      %4551 = vmatpush.bf16.msra.mxu0 %v3195
      %4552 = vmatmul.bf16.gmra.mxu0 %v4242
      %v4553 = vpop.f32.mrf.mxu0
      %v4554 = vadd.f32 %v4541, %v4553
      %v4555 = vpop.f32.mrf.mxu0
      %4556 = vdwg.mxu0
      %4557 = vmatpush.bf16.msra.mxu0 %v3060
      %4558 = vmatpush.bf16.msra.mxu0 %v3052
      %4559 = vmatpush.bf16.msra.mxu0 %v3044
      %4560 = vmatpush.bf16.msra.mxu0 %v3036
      %4561 = vmatpush.bf16.msra.mxu0 %v3028
      %4562 = vmatpush.bf16.msra.mxu0 %v3020
      %4563 = vmatpush.bf16.msra.mxu0 %v3012
      %4564 = vmatpush.bf16.msra.mxu0 %v3004
      %4565 = vmatmul.bf16.gmra.mxu0 %v3982
      %v4566 = vpop.f32.mrf.mxu0
      %v4567 = vadd.f32 %v1012, %v4566
      %v4568 = vpop.f32.mrf.mxu0
      %4569 = vdwg.mxu0
      %4570 = vmatpush.bf16.msra.mxu0 %v3124
      %4571 = vmatpush.bf16.msra.mxu0 %v3116
      %4572 = vmatpush.bf16.msra.mxu0 %v3108
      %4573 = vmatpush.bf16.msra.mxu0 %v3100
      %4574 = vmatpush.bf16.msra.mxu0 %v3092
      %4575 = vmatpush.bf16.msra.mxu0 %v3084
      %4576 = vmatpush.bf16.msra.mxu0 %v3076
      %4577 = vmatpush.bf16.msra.mxu0 %v3068
      %4578 = vmatmul.bf16.gmra.mxu0 %v3983
      %v4579 = vpop.f32.mrf.mxu0
      %v4580 = vadd.f32 %v4567, %v4579
      %v4581 = vpop.f32.mrf.mxu0
      %4582 = vdwg.mxu0
      %4583 = vmatpush.bf16.msra.mxu0 %v3188
      %4584 = vmatpush.bf16.msra.mxu0 %v3180
      %4585 = vmatpush.bf16.msra.mxu0 %v3172
      %4586 = vmatpush.bf16.msra.mxu0 %v3164
      %4587 = vmatpush.bf16.msra.mxu0 %v3156
      %4588 = vmatpush.bf16.msra.mxu0 %v3148
      %4589 = vmatpush.bf16.msra.mxu0 %v3140
      %4590 = vmatpush.bf16.msra.mxu0 %v3132
      %4591 = vmatmul.bf16.gmra.mxu0 %v4241
      %v4592 = vpop.f32.mrf.mxu0
      %v4593 = vadd.f32 %v4580, %v4592
      %v4594 = vpop.f32.mrf.mxu0
      %4595 = vdwg.mxu0
      %4596 = vmatpush.bf16.msra.mxu0 %v3252
      %4597 = vmatpush.bf16.msra.mxu0 %v3244
      %4598 = vmatpush.bf16.msra.mxu0 %v3236
      %4599 = vmatpush.bf16.msra.mxu0 %v3228
      %4600 = vmatpush.bf16.msra.mxu0 %v3220
      %4601 = vmatpush.bf16.msra.mxu0 %v3212
      %4602 = vmatpush.bf16.msra.mxu0 %v3204
      %4603 = vmatpush.bf16.msra.mxu0 %v3196
      %4604 = vmatmul.bf16.gmra.mxu0 %v4242
      %v4605 = vpop.f32.mrf.mxu0
      %v4606 = vadd.f32 %v4593, %v4605
      %v4607 = vpop.f32.mrf.mxu0
      %4608 = vdwg.mxu0
      %4609 = vmatpush.bf16.msra.mxu0 %v3061
      %4610 = vmatpush.bf16.msra.mxu0 %v3053
      %4611 = vmatpush.bf16.msra.mxu0 %v3045
      %4612 = vmatpush.bf16.msra.mxu0 %v3037
      %4613 = vmatpush.bf16.msra.mxu0 %v3029
      %4614 = vmatpush.bf16.msra.mxu0 %v3021
      %4615 = vmatpush.bf16.msra.mxu0 %v3013
      %4616 = vmatpush.bf16.msra.mxu0 %v3005
      %4617 = vmatmul.bf16.gmra.mxu0 %v3982
      %v4618 = vpop.f32.mrf.mxu0
      %v4619 = vadd.f32 %v1013, %v4618
      %v4620 = vpop.f32.mrf.mxu0
      %4621 = vdwg.mxu0
      %4622 = vmatpush.bf16.msra.mxu0 %v3125
      %4623 = vmatpush.bf16.msra.mxu0 %v3117
      %4624 = vmatpush.bf16.msra.mxu0 %v3109
      %4625 = vmatpush.bf16.msra.mxu0 %v3101
      %4626 = vmatpush.bf16.msra.mxu0 %v3093
      %4627 = vmatpush.bf16.msra.mxu0 %v3085
      %4628 = vmatpush.bf16.msra.mxu0 %v3077
      %4629 = vmatpush.bf16.msra.mxu0 %v3069
      %4630 = vmatmul.bf16.gmra.mxu0 %v3983
      %v4631 = vpop.f32.mrf.mxu0
      %v4632 = vadd.f32 %v4619, %v4631
      %v4633 = vpop.f32.mrf.mxu0
      %4634 = vdwg.mxu0
      %4635 = vmatpush.bf16.msra.mxu0 %v3189
      %4636 = vmatpush.bf16.msra.mxu0 %v3181
      %4637 = vmatpush.bf16.msra.mxu0 %v3173
      %4638 = vmatpush.bf16.msra.mxu0 %v3165
      %4639 = vmatpush.bf16.msra.mxu0 %v3157
      %4640 = vmatpush.bf16.msra.mxu0 %v3149
      %4641 = vmatpush.bf16.msra.mxu0 %v3141
      %4642 = vmatpush.bf16.msra.mxu0 %v3133
      %4643 = vmatmul.bf16.gmra.mxu0 %v4241
      %v4644 = vpop.f32.mrf.mxu0
      %v4645 = vadd.f32 %v4632, %v4644
      %v4646 = vpop.f32.mrf.mxu0
      %4647 = vdwg.mxu0
      %4648 = vmatpush.bf16.msra.mxu0 %v3253
      %4649 = vmatpush.bf16.msra.mxu0 %v3245
      %4650 = vmatpush.bf16.msra.mxu0 %v3237
      %4651 = vmatpush.bf16.msra.mxu0 %v3229
      %4652 = vmatpush.bf16.msra.mxu0 %v3221
      %4653 = vmatpush.bf16.msra.mxu0 %v3213
      %4654 = vmatpush.bf16.msra.mxu0 %v3205
      %4655 = vmatpush.bf16.msra.mxu0 %v3197
      %4656 = vmatmul.bf16.gmra.mxu0 %v4242
      %v4657 = vpop.f32.mrf.mxu0
      %v4658 = vadd.f32 %v4645, %v4657
      %v4659 = vpop.f32.mrf.mxu0
      %4660 = vdwg.mxu0
      %v4661 = vmul.f32 %v4294, 0.5
      %v4662 = vmul.f32 %v4346, 0.5
      %v4663 = vtanh.pop %v4661
      %v4664 = vtanh.pop %v4662
      %v4665 = vmul.f32 %v4663, 0.5
      %v4666 = vmul.f32 %v4664, 0.5
      %v4667 = vadd.f32 %v4665, 0.5
      %v4668 = vadd.f32 %v4666, 0.5
      %v4669 = vmul.f32 %v4398, 0.5
      %v4670 = vmul.f32 %v4450, 0.5
      %v4671 = vtanh.pop %v4669
      %v4672 = vtanh.pop %v4670
      %v4673 = vmul.f32 %v4671, 0.5
      %v4674 = vmul.f32 %v4672, 0.5
      %v4675 = vadd.f32 %v4673, 0.5
      %v4676 = vadd.f32 %v4674, 0.5
      %v4677 = vtanh.pop %v4502
      %v4678 = vtanh.pop %v4554
      %v4679 = vmul.f32 %v4606, 0.5
      %v4680 = vmul.f32 %v4658, 0.5
      %v4681 = vtanh.pop %v4679
      %v4682 = vtanh.pop %v4680
      %v4683 = vmul.f32 %v4681, 0.5
      %v4684 = vmul.f32 %v4682, 0.5
      %v4685 = vadd.f32 %v4683, 0.5
      %v4686 = vadd.f32 %v4684, 0.5
      %v4687 = vmul.f32 %v4675, %v3956
      %v4688 = vmul.f32 %v4676, %v3957
      %v4689 = vmul.f32 %v4667, %v4677
      %v4690 = vmul.f32 %v4668, %v4678
      %v4691 = vadd.f32 %v4687, %v4689
      %v4692 = vadd.f32 %v4688, %v4690
      %v4693 = vtanh.pop %v4691
      %v4694 = vtanh.pop %v4692
      %v4695 = vmul.f32 %v4685, %v4693
      %v4696 = vmul.f32 %v4686, %v4694
      %v4697 = vpack.c.bf16 %v4237, %v4236
      %v4698 = vpack.c.bf16 %v4696, %v4695
    $region54: #{sentiment_rnn_forward.1} parent=1 // loop_footer
      %s1941 = sadd.s32 1, %s1937
    $region55: #{sentiment_rnn_forward.1} parent=1 // loop_footer_branch
      %1936 = sbr.rel target = $region51
    $region56: #{sentiment_rnn_forward.1} parent=1 // loop_exit
      _
    %v4699 = vld [vmem:[#allocation2 + $0x1c0] sm:$0xff]
    %v4700 = vld [vmem:[#allocation2 + $0x1c8] sm:$0xff]
    %v4701 = vld [vmem:[#allocation2 + $0x1d0] sm:$0xff]
    %v4702 = vld [vmem:[#allocation2 + $0x1d8] sm:$0xff]
    %v4703 = vld [vmem:[#allocation2 + $0x1e0] sm:$0xff]
    %v4704 = vld [vmem:[#allocation2 + $0x1e8] sm:$0xff]
    %v4705 = vld [vmem:[#allocation2 + $0x1f0] sm:$0xff]
    %v4706 = vld [vmem:[#allocation2 + $0x1f8] sm:$0xff]
    %v4708 = vunpack.c.l.b16 %v1942
    %v4709 = vunpack.c.h.b16 %v1942
    %v4710 = vpack.c.b16 %v4708, %v4708
    %v4711 = vpack.c.b16 %v4709, %v4709
    %4714 = vmatpush.bf16.msra.mxu0 %v1480
    %4715 = vmatpush.bf16.msra.mxu0 %v1472
    %4716 = vmatpush.bf16.msra.mxu0 %v1464
    %4717 = vmatpush.bf16.msra.mxu0 %v1456
    %4718 = vmatpush.bf16.msra.mxu0 %v1448
    %4719 = vmatpush.bf16.msra.mxu0 %v1440
    %4720 = vmatpush.bf16.msra.mxu0 %v1432
    %4721 = vmatpush.bf16.msra.mxu0 %v1424
    %4722 = vmatmul.bf16.gmra.mxu0 %v4710
    %v4723 = vpop.f32.mrf.mxu0
    %v4724 = vadd.f32 0.0, %v4723
    %v4725 = vpop.f32.mrf.mxu0
    %4726 = vdwg.mxu0
    %4727 = vmatpush.bf16.msra.mxu0 %v1544
    %4728 = vmatpush.bf16.msra.mxu0 %v1536
    %4729 = vmatpush.bf16.msra.mxu0 %v1528
    %4730 = vmatpush.bf16.msra.mxu0 %v1520
    %4731 = vmatpush.bf16.msra.mxu0 %v1512
    %4732 = vmatpush.bf16.msra.mxu0 %v1504
    %4733 = vmatpush.bf16.msra.mxu0 %v1496
    %4734 = vmatpush.bf16.msra.mxu0 %v1488
    %4735 = vmatmul.bf16.gmra.mxu0 %v4711
    %v4736 = vpop.f32.mrf.mxu0
    %v4737 = vadd.f32 %v4724, %v4736
    %v4738 = vpop.f32.mrf.mxu0
    %4739 = vdwg.mxu0
    %4740 = vmatpush.bf16.msra.mxu0 %v1481
    %4741 = vmatpush.bf16.msra.mxu0 %v1473
    %4742 = vmatpush.bf16.msra.mxu0 %v1465
    %4743 = vmatpush.bf16.msra.mxu0 %v1457
    %4744 = vmatpush.bf16.msra.mxu0 %v1449
    %4745 = vmatpush.bf16.msra.mxu0 %v1441
    %4746 = vmatpush.bf16.msra.mxu0 %v1433
    %4747 = vmatpush.bf16.msra.mxu0 %v1425
    %4748 = vmatmul.bf16.gmra.mxu0 %v4710
    %v4749 = vpop.f32.mrf.mxu0
    %v4750 = vadd.f32 0.0, %v4749
    %v4751 = vpop.f32.mrf.mxu0
    %4752 = vdwg.mxu0
    %4753 = vmatpush.bf16.msra.mxu0 %v1545
    %4754 = vmatpush.bf16.msra.mxu0 %v1537
    %4755 = vmatpush.bf16.msra.mxu0 %v1529
    %4756 = vmatpush.bf16.msra.mxu0 %v1521
    %4757 = vmatpush.bf16.msra.mxu0 %v1513
    %4758 = vmatpush.bf16.msra.mxu0 %v1505
    %4759 = vmatpush.bf16.msra.mxu0 %v1497
    %4760 = vmatpush.bf16.msra.mxu0 %v1489
    %4761 = vmatmul.bf16.gmra.mxu0 %v4711
    %v4762 = vpop.f32.mrf.mxu0
    %v4763 = vadd.f32 %v4750, %v4762
    %v4764 = vpop.f32.mrf.mxu0
    %4765 = vdwg.mxu0
    %4766 = vmatpush.bf16.msra.mxu0 %v1482
    %4767 = vmatpush.bf16.msra.mxu0 %v1474
    %4768 = vmatpush.bf16.msra.mxu0 %v1466
    %4769 = vmatpush.bf16.msra.mxu0 %v1458
    %4770 = vmatpush.bf16.msra.mxu0 %v1450
    %4771 = vmatpush.bf16.msra.mxu0 %v1442
    %4772 = vmatpush.bf16.msra.mxu0 %v1434
    %4773 = vmatpush.bf16.msra.mxu0 %v1426
    %4774 = vmatmul.bf16.gmra.mxu0 %v4710
    %v4775 = vpop.f32.mrf.mxu0
    %v4776 = vadd.f32 0.0, %v4775
    %v4777 = vpop.f32.mrf.mxu0
    %4778 = vdwg.mxu0
    %4779 = vmatpush.bf16.msra.mxu0 %v1546
    %4780 = vmatpush.bf16.msra.mxu0 %v1538
    %4781 = vmatpush.bf16.msra.mxu0 %v1530
    %4782 = vmatpush.bf16.msra.mxu0 %v1522
    %4783 = vmatpush.bf16.msra.mxu0 %v1514
    %4784 = vmatpush.bf16.msra.mxu0 %v1506
    %4785 = vmatpush.bf16.msra.mxu0 %v1498
    %4786 = vmatpush.bf16.msra.mxu0 %v1490
    %4787 = vmatmul.bf16.gmra.mxu0 %v4711
    %v4788 = vpop.f32.mrf.mxu0
    %v4789 = vadd.f32 %v4776, %v4788
    %v4790 = vpop.f32.mrf.mxu0
    %4791 = vdwg.mxu0
    %4792 = vmatpush.bf16.msra.mxu0 %v1483
    %4793 = vmatpush.bf16.msra.mxu0 %v1475
    %4794 = vmatpush.bf16.msra.mxu0 %v1467
    %4795 = vmatpush.bf16.msra.mxu0 %v1459
    %4796 = vmatpush.bf16.msra.mxu0 %v1451
    %4797 = vmatpush.bf16.msra.mxu0 %v1443
    %4798 = vmatpush.bf16.msra.mxu0 %v1435
    %4799 = vmatpush.bf16.msra.mxu0 %v1427
    %4800 = vmatmul.bf16.gmra.mxu0 %v4710
    %v4801 = vpop.f32.mrf.mxu0
    %v4802 = vadd.f32 0.0, %v4801
    %v4803 = vpop.f32.mrf.mxu0
    %4804 = vdwg.mxu0
    %4805 = vmatpush.bf16.msra.mxu0 %v1547
    %4806 = vmatpush.bf16.msra.mxu0 %v1539
    %4807 = vmatpush.bf16.msra.mxu0 %v1531
    %4808 = vmatpush.bf16.msra.mxu0 %v1523
    %4809 = vmatpush.bf16.msra.mxu0 %v1515
    %4810 = vmatpush.bf16.msra.mxu0 %v1507
    %4811 = vmatpush.bf16.msra.mxu0 %v1499
    %4812 = vmatpush.bf16.msra.mxu0 %v1491
    %4813 = vmatmul.bf16.gmra.mxu0 %v4711
    %v4814 = vpop.f32.mrf.mxu0
    %v4815 = vadd.f32 %v4802, %v4814
    %v4816 = vpop.f32.mrf.mxu0
    %4817 = vdwg.mxu0
    %4818 = vmatpush.bf16.msra.mxu0 %v1484
    %4819 = vmatpush.bf16.msra.mxu0 %v1476
    %4820 = vmatpush.bf16.msra.mxu0 %v1468
    %4821 = vmatpush.bf16.msra.mxu0 %v1460
    %4822 = vmatpush.bf16.msra.mxu0 %v1452
    %4823 = vmatpush.bf16.msra.mxu0 %v1444
    %4824 = vmatpush.bf16.msra.mxu0 %v1436
    %4825 = vmatpush.bf16.msra.mxu0 %v1428
    %4826 = vmatmul.bf16.gmra.mxu0 %v4710
    %v4827 = vpop.f32.mrf.mxu0
    %v4828 = vadd.f32 0.0, %v4827
    %v4829 = vpop.f32.mrf.mxu0
    %4830 = vdwg.mxu0
    %4831 = vmatpush.bf16.msra.mxu0 %v1548
    %4832 = vmatpush.bf16.msra.mxu0 %v1540
    %4833 = vmatpush.bf16.msra.mxu0 %v1532
    %4834 = vmatpush.bf16.msra.mxu0 %v1524
    %4835 = vmatpush.bf16.msra.mxu0 %v1516
    %4836 = vmatpush.bf16.msra.mxu0 %v1508
    %4837 = vmatpush.bf16.msra.mxu0 %v1500
    %4838 = vmatpush.bf16.msra.mxu0 %v1492
    %4839 = vmatmul.bf16.gmra.mxu0 %v4711
    %v4840 = vpop.f32.mrf.mxu0
    %v4841 = vadd.f32 %v4828, %v4840
    %v4842 = vpop.f32.mrf.mxu0
    %4843 = vdwg.mxu0
    %4844 = vmatpush.bf16.msra.mxu0 %v1485
    %4845 = vmatpush.bf16.msra.mxu0 %v1477
    %4846 = vmatpush.bf16.msra.mxu0 %v1469
    %4847 = vmatpush.bf16.msra.mxu0 %v1461
    %4848 = vmatpush.bf16.msra.mxu0 %v1453
    %4849 = vmatpush.bf16.msra.mxu0 %v1445
    %4850 = vmatpush.bf16.msra.mxu0 %v1437
    %4851 = vmatpush.bf16.msra.mxu0 %v1429
    %4852 = vmatmul.bf16.gmra.mxu0 %v4710
    %v4853 = vpop.f32.mrf.mxu0
    %v4854 = vadd.f32 0.0, %v4853
    %v4855 = vpop.f32.mrf.mxu0
    %4856 = vdwg.mxu0
    %4857 = vmatpush.bf16.msra.mxu0 %v1549
    %4858 = vmatpush.bf16.msra.mxu0 %v1541
    %4859 = vmatpush.bf16.msra.mxu0 %v1533
    %4860 = vmatpush.bf16.msra.mxu0 %v1525
    %4861 = vmatpush.bf16.msra.mxu0 %v1517
    %4862 = vmatpush.bf16.msra.mxu0 %v1509
    %4863 = vmatpush.bf16.msra.mxu0 %v1501
    %4864 = vmatpush.bf16.msra.mxu0 %v1493
    %4865 = vmatmul.bf16.gmra.mxu0 %v4711
    %v4866 = vpop.f32.mrf.mxu0
    %v4867 = vadd.f32 %v4854, %v4866
    %v4868 = vpop.f32.mrf.mxu0
    %4869 = vdwg.mxu0
    %4870 = vmatpush.bf16.msra.mxu0 %v1486
    %4871 = vmatpush.bf16.msra.mxu0 %v1478
    %4872 = vmatpush.bf16.msra.mxu0 %v1470
    %4873 = vmatpush.bf16.msra.mxu0 %v1462
    %4874 = vmatpush.bf16.msra.mxu0 %v1454
    %4875 = vmatpush.bf16.msra.mxu0 %v1446
    %4876 = vmatpush.bf16.msra.mxu0 %v1438
    %4877 = vmatpush.bf16.msra.mxu0 %v1430
    %4878 = vmatmul.bf16.gmra.mxu0 %v4710
    %v4879 = vpop.f32.mrf.mxu0
    %v4880 = vadd.f32 0.0, %v4879
    %v4881 = vpop.f32.mrf.mxu0
    %4882 = vdwg.mxu0
    %4883 = vmatpush.bf16.msra.mxu0 %v1550
    %4884 = vmatpush.bf16.msra.mxu0 %v1542
    %4885 = vmatpush.bf16.msra.mxu0 %v1534
    %4886 = vmatpush.bf16.msra.mxu0 %v1526
    %4887 = vmatpush.bf16.msra.mxu0 %v1518
    %4888 = vmatpush.bf16.msra.mxu0 %v1510
    %4889 = vmatpush.bf16.msra.mxu0 %v1502
    %4890 = vmatpush.bf16.msra.mxu0 %v1494
    %4891 = vmatmul.bf16.gmra.mxu0 %v4711
    %v4892 = vpop.f32.mrf.mxu0
    %v4893 = vadd.f32 %v4880, %v4892
    %v4894 = vpop.f32.mrf.mxu0
    %4895 = vdwg.mxu0
    %4896 = vmatpush.bf16.msra.mxu0 %v1487
    %4897 = vmatpush.bf16.msra.mxu0 %v1479
    %4898 = vmatpush.bf16.msra.mxu0 %v1471
    %4899 = vmatpush.bf16.msra.mxu0 %v1463
    %4900 = vmatpush.bf16.msra.mxu0 %v1455
    %4901 = vmatpush.bf16.msra.mxu0 %v1447
    %4902 = vmatpush.bf16.msra.mxu0 %v1439
    %4903 = vmatpush.bf16.msra.mxu0 %v1431
    %4904 = vmatmul.bf16.gmra.mxu0 %v4710
    %v4905 = vpop.f32.mrf.mxu0
    %v4906 = vadd.f32 0.0, %v4905
    %v4907 = vpop.f32.mrf.mxu0
    %4908 = vdwg.mxu0
    %4909 = vmatpush.bf16.msra.mxu0 %v1551
    %4910 = vmatpush.bf16.msra.mxu0 %v1543
    %4911 = vmatpush.bf16.msra.mxu0 %v1535
    %4912 = vmatpush.bf16.msra.mxu0 %v1527
    %4913 = vmatpush.bf16.msra.mxu0 %v1519
    %4914 = vmatpush.bf16.msra.mxu0 %v1511
    %4915 = vmatpush.bf16.msra.mxu0 %v1503
    %4916 = vmatpush.bf16.msra.mxu0 %v1495
    %4917 = vmatmul.bf16.gmra.mxu0 %v4711
    %v4918 = vpop.f32.mrf.mxu0
    %v4919 = vadd.f32 %v4906, %v4918
    %v4920 = vpop.f32.mrf.mxu0
    %4921 = vdwg.mxu0
    %v4922 = vadd.f32 %v4699, %v4737
    %v4923 = vadd.f32 %v4700, %v4763
    %v4924 = vadd.f32 %v4701, %v4789
    %v4925 = vadd.f32 %v4702, %v4815
    %v4926 = vadd.f32 %v4703, %v4841
    %v4927 = vadd.f32 %v4704, %v4867
    %v4928 = vadd.f32 %v4705, %v4893
    %v4929 = vadd.f32 %v4706, %v4919
    %v4930 = vmul.f32 %v4922, 0.5
    %v4931 = vmul.f32 %v4923, 0.5
    %v4932 = vtanh.pop %v4930
    %v4933 = vtanh.pop %v4931
    %v4934 = vmul.f32 %v4932, 0.5
    %v4935 = vmul.f32 %v4933, 0.5
    %v4936 = vadd.f32 %v4934, 0.5
    %v4937 = vadd.f32 %v4935, 0.5
    %v4938 = vmul.f32 %v4924, 0.5
    %v4939 = vmul.f32 %v4925, 0.5
    %v4940 = vtanh.pop %v4938
    %v4941 = vtanh.pop %v4939
    %v4942 = vmul.f32 %v4940, 0.5
    %v4943 = vmul.f32 %v4941, 0.5
    %v4944 = vadd.f32 %v4942, 0.5
    %v4945 = vadd.f32 %v4943, 0.5
    %v4946 = vtanh.pop %v4926
    %v4947 = vtanh.pop %v4927
    %v4948 = vmul.f32 %v4928, 0.5
    %v4949 = vmul.f32 %v4929, 0.5
    %v4950 = vtanh.pop %v4948
    %v4951 = vtanh.pop %v4949
    %v4952 = vmul.f32 %v4950, 0.5
    %v4953 = vmul.f32 %v4951, 0.5
    %v4954 = vadd.f32 %v4952, 0.5
    %v4955 = vadd.f32 %v4953, 0.5
    %v4956 = vmul.f32 %v4944, %v1943
    %v4957 = vmul.f32 %v4945, %v1944
    %v4958 = vmul.f32 %v4936, %v4946
    %v4959 = vmul.f32 %v4937, %v4947
    %v4960 = vadd.f32 %v4956, %v4958
    %v4961 = vadd.f32 %v4957, %v4959
    %v4962 = vtanh.pop %v4960
    %v4963 = vtanh.pop %v4961
    %v4964 = vmul.f32 %v4954, %v4962
    %v4965 = vmul.f32 %v4955, %v4963
    %v4967 = vunpack.c.l.b16 %v1945
    %v4968 = vunpack.c.h.b16 %v1945
    %v4969 = vpack.c.b16 %v4967, %v4967
    %v4970 = vpack.c.b16 %v4968, %v4968
    %v5229 = vunpack.c.l.b16 %v748
    %v5230 = vunpack.c.h.b16 %v748
    %v5231 = vunpack.c.l.b16 %v749
    %v5232 = vunpack.c.h.b16 %v749
    %v5233 = vunpack.c.l.b16 %v750
    %v5234 = vunpack.c.h.b16 %v750
    %v5235 = vunpack.c.l.b16 %v751
    %v5236 = vunpack.c.h.b16 %v751
    %v5237 = vunpack.c.l.b16 %v752
    %v5238 = vunpack.c.h.b16 %v752
    %v5239 = vunpack.c.l.b16 %v753
    %v5240 = vunpack.c.h.b16 %v753
    %v5241 = vunpack.c.l.b16 %v754
    %v5242 = vunpack.c.h.b16 %v754
    %v5243 = vunpack.c.l.b16 %v755
    %v5244 = vunpack.c.h.b16 %v755
    %v5245 = vunpack.c.l.b16 %v756
    %v5246 = vunpack.c.h.b16 %v756
    %v5247 = vunpack.c.l.b16 %v757
    %v5248 = vunpack.c.h.b16 %v757
    %v5249 = vunpack.c.l.b16 %v758
    %v5250 = vunpack.c.h.b16 %v758
    %v5251 = vunpack.c.l.b16 %v759
    %v5252 = vunpack.c.h.b16 %v759
    %v5253 = vunpack.c.l.b16 %v760
    %v5254 = vunpack.c.h.b16 %v760
    %v5255 = vunpack.c.l.b16 %v761
    %v5256 = vunpack.c.h.b16 %v761
    %v5257 = vunpack.c.l.b16 %v762
    %v5258 = vunpack.c.h.b16 %v762
    %v5259 = vunpack.c.l.b16 %v763
    %v5260 = vunpack.c.h.b16 %v763
    %v5261 = vunpack.c.l.b16 %v764
    %v5262 = vunpack.c.h.b16 %v764
    %v5263 = vunpack.c.l.b16 %v765
    %v5264 = vunpack.c.h.b16 %v765
    %v5265 = vunpack.c.l.b16 %v766
    %v5266 = vunpack.c.h.b16 %v766
    %v5267 = vunpack.c.l.b16 %v767
    %v5268 = vunpack.c.h.b16 %v767
    %v5269 = vunpack.c.l.b16 %v768
    %v5270 = vunpack.c.h.b16 %v768
    %v5271 = vunpack.c.l.b16 %v769
    %v5272 = vunpack.c.h.b16 %v769
    %v5273 = vunpack.c.l.b16 %v770
    %v5274 = vunpack.c.h.b16 %v770
    %v5275 = vunpack.c.l.b16 %v771
    %v5276 = vunpack.c.h.b16 %v771
    %v5277 = vunpack.c.l.b16 %v772
    %v5278 = vunpack.c.h.b16 %v772
    %v5279 = vunpack.c.l.b16 %v773
    %v5280 = vunpack.c.h.b16 %v773
    %v5281 = vunpack.c.l.b16 %v774
    %v5282 = vunpack.c.h.b16 %v774
    %v5283 = vunpack.c.l.b16 %v775
    %v5284 = vunpack.c.h.b16 %v775
    %v5285 = vunpack.c.l.b16 %v776
    %v5286 = vunpack.c.h.b16 %v776
    %v5287 = vunpack.c.l.b16 %v777
    %v5288 = vunpack.c.h.b16 %v777
    %v5289 = vunpack.c.l.b16 %v778
    %v5290 = vunpack.c.h.b16 %v778
    %v5291 = vunpack.c.l.b16 %v779
    %v5292 = vunpack.c.h.b16 %v779
    %v5293 = vunpack.c.l.b16 %v780
    %v5294 = vunpack.c.h.b16 %v780
    %v5295 = vunpack.c.l.b16 %v781
    %v5296 = vunpack.c.h.b16 %v781
    %v5297 = vunpack.c.l.b16 %v782
    %v5298 = vunpack.c.h.b16 %v782
    %v5299 = vunpack.c.l.b16 %v783
    %v5300 = vunpack.c.h.b16 %v783
    %v5301 = vunpack.c.l.b16 %v784
    %v5302 = vunpack.c.h.b16 %v784
    %v5303 = vunpack.c.l.b16 %v785
    %v5304 = vunpack.c.h.b16 %v785
    %v5305 = vunpack.c.l.b16 %v786
    %v5306 = vunpack.c.h.b16 %v786
    %v5307 = vunpack.c.l.b16 %v787
    %v5308 = vunpack.c.h.b16 %v787
    %v5309 = vunpack.c.l.b16 %v788
    %v5310 = vunpack.c.h.b16 %v788
    %v5311 = vunpack.c.l.b16 %v789
    %v5312 = vunpack.c.h.b16 %v789
    %v5313 = vunpack.c.l.b16 %v790
    %v5314 = vunpack.c.h.b16 %v790
    %v5315 = vunpack.c.l.b16 %v791
    %v5316 = vunpack.c.h.b16 %v791
    %v5317 = vunpack.c.l.b16 %v792
    %v5318 = vunpack.c.h.b16 %v792
    %v5319 = vunpack.c.l.b16 %v793
    %v5320 = vunpack.c.h.b16 %v793
    %v5321 = vunpack.c.l.b16 %v794
    %v5322 = vunpack.c.h.b16 %v794
    %v5323 = vunpack.c.l.b16 %v795
    %v5324 = vunpack.c.h.b16 %v795
    %v5325 = vunpack.c.l.b16 %v796
    %v5326 = vunpack.c.h.b16 %v796
    %v5327 = vunpack.c.l.b16 %v797
    %v5328 = vunpack.c.h.b16 %v797
    %v5329 = vunpack.c.l.b16 %v798
    %v5330 = vunpack.c.h.b16 %v798
    %v5331 = vunpack.c.l.b16 %v799
    %v5332 = vunpack.c.h.b16 %v799
    %v5333 = vunpack.c.l.b16 %v800
    %v5334 = vunpack.c.h.b16 %v800
    %v5335 = vunpack.c.l.b16 %v801
    %v5336 = vunpack.c.h.b16 %v801
    %v5337 = vunpack.c.l.b16 %v802
    %v5338 = vunpack.c.h.b16 %v802
    %v5339 = vunpack.c.l.b16 %v803
    %v5340 = vunpack.c.h.b16 %v803
    %v5341 = vunpack.c.l.b16 %v804
    %v5342 = vunpack.c.h.b16 %v804
    %v5343 = vunpack.c.l.b16 %v805
    %v5344 = vunpack.c.h.b16 %v805
    %v5345 = vunpack.c.l.b16 %v806
    %v5346 = vunpack.c.h.b16 %v806
    %v5347 = vunpack.c.l.b16 %v807
    %v5348 = vunpack.c.h.b16 %v807
    %v5349 = vunpack.c.l.b16 %v808
    %v5350 = vunpack.c.h.b16 %v808
    %v5351 = vunpack.c.l.b16 %v809
    %v5352 = vunpack.c.h.b16 %v809
    %v5353 = vunpack.c.l.b16 %v810
    %v5354 = vunpack.c.h.b16 %v810
    %v5355 = vunpack.c.l.b16 %v811
    %v5356 = vunpack.c.h.b16 %v811
    %v5357 = vunpack.c.l.b16 %v812
    %v5358 = vunpack.c.h.b16 %v812
    %v5359 = vunpack.c.l.b16 %v813
    %v5360 = vunpack.c.h.b16 %v813
    %v5361 = vunpack.c.l.b16 %v814
    %v5362 = vunpack.c.h.b16 %v814
    %v5363 = vunpack.c.l.b16 %v815
    %v5364 = vunpack.c.h.b16 %v815
    %v5365 = vunpack.c.l.b16 %v816
    %v5366 = vunpack.c.h.b16 %v816
    %v5367 = vunpack.c.l.b16 %v817
    %v5368 = vunpack.c.h.b16 %v817
    %v5369 = vunpack.c.l.b16 %v818
    %v5370 = vunpack.c.h.b16 %v818
    %v5371 = vunpack.c.l.b16 %v819
    %v5372 = vunpack.c.h.b16 %v819
    %v5373 = vunpack.c.l.b16 %v820
    %v5374 = vunpack.c.h.b16 %v820
    %v5375 = vunpack.c.l.b16 %v821
    %v5376 = vunpack.c.h.b16 %v821
    %v5377 = vunpack.c.l.b16 %v822
    %v5378 = vunpack.c.h.b16 %v822
    %v5379 = vunpack.c.l.b16 %v823
    %v5380 = vunpack.c.h.b16 %v823
    %v5381 = vunpack.c.l.b16 %v824
    %v5382 = vunpack.c.h.b16 %v824
    %v5383 = vunpack.c.l.b16 %v825
    %v5384 = vunpack.c.h.b16 %v825
    %v5385 = vunpack.c.l.b16 %v826
    %v5386 = vunpack.c.h.b16 %v826
    %v5387 = vunpack.c.l.b16 %v827
    %v5388 = vunpack.c.h.b16 %v827
    %v5389 = vunpack.c.l.b16 %v828
    %v5390 = vunpack.c.h.b16 %v828
    %v5391 = vunpack.c.l.b16 %v829
    %v5392 = vunpack.c.h.b16 %v829
    %v5393 = vunpack.c.l.b16 %v830
    %v5394 = vunpack.c.h.b16 %v830
    %v5395 = vunpack.c.l.b16 %v831
    %v5396 = vunpack.c.h.b16 %v831
    %v5397 = vunpack.c.l.b16 %v832
    %v5398 = vunpack.c.h.b16 %v832
    %v5399 = vunpack.c.l.b16 %v833
    %v5400 = vunpack.c.h.b16 %v833
    %v5401 = vunpack.c.l.b16 %v834
    %v5402 = vunpack.c.h.b16 %v834
    %v5403 = vunpack.c.l.b16 %v835
    %v5404 = vunpack.c.h.b16 %v835
    %v5405 = vunpack.c.l.b16 %v836
    %v5406 = vunpack.c.h.b16 %v836
    %v5407 = vunpack.c.l.b16 %v837
    %v5408 = vunpack.c.h.b16 %v837
    %v5409 = vunpack.c.l.b16 %v838
    %v5410 = vunpack.c.h.b16 %v838
    %v5411 = vunpack.c.l.b16 %v839
    %v5412 = vunpack.c.h.b16 %v839
    %v5413 = vunpack.c.l.b16 %v840
    %v5414 = vunpack.c.h.b16 %v840
    %v5415 = vunpack.c.l.b16 %v841
    %v5416 = vunpack.c.h.b16 %v841
    %v5417 = vunpack.c.l.b16 %v842
    %v5418 = vunpack.c.h.b16 %v842
    %v5419 = vunpack.c.l.b16 %v843
    %v5420 = vunpack.c.h.b16 %v843
    %v5421 = vunpack.c.l.b16 %v844
    %v5422 = vunpack.c.h.b16 %v844
    %v5423 = vunpack.c.l.b16 %v845
    %v5424 = vunpack.c.h.b16 %v845
    %v5425 = vunpack.c.l.b16 %v846
    %v5426 = vunpack.c.h.b16 %v846
    %v5427 = vunpack.c.l.b16 %v847
    %v5428 = vunpack.c.h.b16 %v847
    %v5429 = vunpack.c.l.b16 %v848
    %v5430 = vunpack.c.h.b16 %v848
    %v5431 = vunpack.c.l.b16 %v849
    %v5432 = vunpack.c.h.b16 %v849
    %v5433 = vunpack.c.l.b16 %v850
    %v5434 = vunpack.c.h.b16 %v850
    %v5435 = vunpack.c.l.b16 %v851
    %v5436 = vunpack.c.h.b16 %v851
    %v5437 = vunpack.c.l.b16 %v852
    %v5438 = vunpack.c.h.b16 %v852
    %v5439 = vunpack.c.l.b16 %v853
    %v5440 = vunpack.c.h.b16 %v853
    %v5441 = vunpack.c.l.b16 %v854
    %v5442 = vunpack.c.h.b16 %v854
    %v5443 = vunpack.c.l.b16 %v855
    %v5444 = vunpack.c.h.b16 %v855
    %v5445 = vunpack.c.l.b16 %v856
    %v5446 = vunpack.c.h.b16 %v856
    %v5447 = vunpack.c.l.b16 %v857
    %v5448 = vunpack.c.h.b16 %v857
    %v5449 = vunpack.c.l.b16 %v858
    %v5450 = vunpack.c.h.b16 %v858
    %v5451 = vunpack.c.l.b16 %v859
    %v5452 = vunpack.c.h.b16 %v859
    %v5453 = vunpack.c.l.b16 %v860
    %v5454 = vunpack.c.h.b16 %v860
    %v5455 = vunpack.c.l.b16 %v861
    %v5456 = vunpack.c.h.b16 %v861
    %v5457 = vunpack.c.l.b16 %v862
    %v5458 = vunpack.c.h.b16 %v862
    %v5459 = vunpack.c.l.b16 %v863
    %v5460 = vunpack.c.h.b16 %v863
    %v5461 = vunpack.c.l.b16 %v864
    %v5462 = vunpack.c.h.b16 %v864
    %v5463 = vunpack.c.l.b16 %v865
    %v5464 = vunpack.c.h.b16 %v865
    %v5465 = vunpack.c.l.b16 %v866
    %v5466 = vunpack.c.h.b16 %v866
    %v5467 = vunpack.c.l.b16 %v867
    %v5468 = vunpack.c.h.b16 %v867
    %v5469 = vunpack.c.l.b16 %v868
    %v5470 = vunpack.c.h.b16 %v868
    %v5471 = vunpack.c.l.b16 %v869
    %v5472 = vunpack.c.h.b16 %v869
    %v5473 = vunpack.c.l.b16 %v870
    %v5474 = vunpack.c.h.b16 %v870
    %v5475 = vunpack.c.l.b16 %v871
    %v5476 = vunpack.c.h.b16 %v871
    %v5477 = vunpack.c.l.b16 %v872
    %v5478 = vunpack.c.h.b16 %v872
    %v5479 = vunpack.c.l.b16 %v873
    %v5480 = vunpack.c.h.b16 %v873
    %v5481 = vunpack.c.l.b16 %v874
    %v5482 = vunpack.c.h.b16 %v874
    %v5483 = vunpack.c.l.b16 %v875
    %v5484 = vunpack.c.h.b16 %v875
    %v5485 = vunpack.c.l.b16 %v876
    %v5486 = vunpack.c.h.b16 %v876
    %v5487 = vunpack.c.l.b16 %v877
    %v5488 = vunpack.c.h.b16 %v877
    %v5489 = vunpack.c.l.b16 %v878
    %v5490 = vunpack.c.h.b16 %v878
    %v5491 = vunpack.c.l.b16 %v879
    %v5492 = vunpack.c.h.b16 %v879
    %v5493 = vunpack.c.l.b16 %v880
    %v5494 = vunpack.c.h.b16 %v880
    %v5495 = vunpack.c.l.b16 %v881
    %v5496 = vunpack.c.h.b16 %v881
    %v5497 = vunpack.c.l.b16 %v882
    %v5498 = vunpack.c.h.b16 %v882
    %v5499 = vunpack.c.l.b16 %v883
    %v5500 = vunpack.c.h.b16 %v883
    %v5501 = vunpack.c.l.b16 %v884
    %v5502 = vunpack.c.h.b16 %v884
    %v5503 = vunpack.c.l.b16 %v885
    %v5504 = vunpack.c.h.b16 %v885
    %v5505 = vunpack.c.l.b16 %v886
    %v5506 = vunpack.c.h.b16 %v886
    %v5507 = vunpack.c.l.b16 %v887
    %v5508 = vunpack.c.h.b16 %v887
    %v5509 = vunpack.c.l.b16 %v888
    %v5510 = vunpack.c.h.b16 %v888
    %v5511 = vunpack.c.l.b16 %v889
    %v5512 = vunpack.c.h.b16 %v889
    %v5513 = vunpack.c.l.b16 %v890
    %v5514 = vunpack.c.h.b16 %v890
    %v5515 = vunpack.c.l.b16 %v891
    %v5516 = vunpack.c.h.b16 %v891
    %v5517 = vunpack.c.l.b16 %v892
    %v5518 = vunpack.c.h.b16 %v892
    %v5519 = vunpack.c.l.b16 %v893
    %v5520 = vunpack.c.h.b16 %v893
    %v5521 = vunpack.c.l.b16 %v894
    %v5522 = vunpack.c.h.b16 %v894
    %v5523 = vunpack.c.l.b16 %v895
    %v5524 = vunpack.c.h.b16 %v895
    %v5525 = vunpack.c.l.b16 %v896
    %v5526 = vunpack.c.h.b16 %v896
    %v5527 = vunpack.c.l.b16 %v897
    %v5528 = vunpack.c.h.b16 %v897
    %v5529 = vunpack.c.l.b16 %v898
    %v5530 = vunpack.c.h.b16 %v898
    %v5531 = vunpack.c.l.b16 %v899
    %v5532 = vunpack.c.h.b16 %v899
    %v5533 = vunpack.c.l.b16 %v900
    %v5534 = vunpack.c.h.b16 %v900
    %v5535 = vunpack.c.l.b16 %v901
    %v5536 = vunpack.c.h.b16 %v901
    %v5537 = vunpack.c.l.b16 %v902
    %v5538 = vunpack.c.h.b16 %v902
    %v5539 = vunpack.c.l.b16 %v903
    %v5540 = vunpack.c.h.b16 %v903
    %v5541 = vunpack.c.l.b16 %v904
    %v5542 = vunpack.c.h.b16 %v904
    %v5543 = vunpack.c.l.b16 %v905
    %v5544 = vunpack.c.h.b16 %v905
    %v5545 = vunpack.c.l.b16 %v906
    %v5546 = vunpack.c.h.b16 %v906
    %v5547 = vunpack.c.l.b16 %v907
    %v5548 = vunpack.c.h.b16 %v907
    %v5549 = vunpack.c.l.b16 %v908
    %v5550 = vunpack.c.h.b16 %v908
    %v5551 = vunpack.c.l.b16 %v909
    %v5552 = vunpack.c.h.b16 %v909
    %v5553 = vunpack.c.l.b16 %v910
    %v5554 = vunpack.c.h.b16 %v910
    %v5555 = vunpack.c.l.b16 %v911
    %v5556 = vunpack.c.h.b16 %v911
    %v5557 = vunpack.c.l.b16 %v912
    %v5558 = vunpack.c.h.b16 %v912
    %v5559 = vunpack.c.l.b16 %v913
    %v5560 = vunpack.c.h.b16 %v913
    %v5561 = vunpack.c.l.b16 %v914
    %v5562 = vunpack.c.h.b16 %v914
    %v5563 = vunpack.c.l.b16 %v915
    %v5564 = vunpack.c.h.b16 %v915
    %v5565 = vunpack.c.l.b16 %v916
    %v5566 = vunpack.c.h.b16 %v916
    %v5567 = vunpack.c.l.b16 %v917
    %v5568 = vunpack.c.h.b16 %v917
    %v5569 = vunpack.c.l.b16 %v918
    %v5570 = vunpack.c.h.b16 %v918
    %v5571 = vunpack.c.l.b16 %v919
    %v5572 = vunpack.c.h.b16 %v919
    %v5573 = vunpack.c.l.b16 %v920
    %v5574 = vunpack.c.h.b16 %v920
    %v5575 = vunpack.c.l.b16 %v921
    %v5576 = vunpack.c.h.b16 %v921
    %v5577 = vunpack.c.l.b16 %v922
    %v5578 = vunpack.c.h.b16 %v922
    %v5579 = vunpack.c.l.b16 %v923
    %v5580 = vunpack.c.h.b16 %v923
    %v5581 = vunpack.c.l.b16 %v924
    %v5582 = vunpack.c.h.b16 %v924
    %v5583 = vunpack.c.l.b16 %v925
    %v5584 = vunpack.c.h.b16 %v925
    %v5585 = vunpack.c.l.b16 %v926
    %v5586 = vunpack.c.h.b16 %v926
    %v5587 = vunpack.c.l.b16 %v927
    %v5588 = vunpack.c.h.b16 %v927
    %v5589 = vunpack.c.l.b16 %v928
    %v5590 = vunpack.c.h.b16 %v928
    %v5591 = vunpack.c.l.b16 %v929
    %v5592 = vunpack.c.h.b16 %v929
    %v5593 = vunpack.c.l.b16 %v930
    %v5594 = vunpack.c.h.b16 %v930
    %v5595 = vunpack.c.l.b16 %v931
    %v5596 = vunpack.c.h.b16 %v931
    %v5597 = vunpack.c.l.b16 %v932
    %v5598 = vunpack.c.h.b16 %v932
    %v5599 = vunpack.c.l.b16 %v933
    %v5600 = vunpack.c.h.b16 %v933
    %v5601 = vunpack.c.l.b16 %v934
    %v5602 = vunpack.c.h.b16 %v934
    %v5603 = vunpack.c.l.b16 %v935
    %v5604 = vunpack.c.h.b16 %v935
    %v5605 = vunpack.c.l.b16 %v936
    %v5606 = vunpack.c.h.b16 %v936
    %v5607 = vunpack.c.l.b16 %v937
    %v5608 = vunpack.c.h.b16 %v937
    %v5609 = vunpack.c.l.b16 %v938
    %v5610 = vunpack.c.h.b16 %v938
    %v5611 = vunpack.c.l.b16 %v939
    %v5612 = vunpack.c.h.b16 %v939
    %v5613 = vunpack.c.l.b16 %v940
    %v5614 = vunpack.c.h.b16 %v940
    %v5615 = vunpack.c.l.b16 %v941
    %v5616 = vunpack.c.h.b16 %v941
    %v5617 = vunpack.c.l.b16 %v942
    %v5618 = vunpack.c.h.b16 %v942
    %v5619 = vunpack.c.l.b16 %v943
    %v5620 = vunpack.c.h.b16 %v943
    %v5621 = vunpack.c.l.b16 %v944
    %v5622 = vunpack.c.h.b16 %v944
    %v5623 = vunpack.c.l.b16 %v945
    %v5624 = vunpack.c.h.b16 %v945
    %v5625 = vunpack.c.l.b16 %v946
    %v5626 = vunpack.c.h.b16 %v946
    %v5627 = vunpack.c.l.b16 %v947
    %v5628 = vunpack.c.h.b16 %v947
    %v5629 = vunpack.c.l.b16 %v948
    %v5630 = vunpack.c.h.b16 %v948
    %v5631 = vunpack.c.l.b16 %v949
    %v5632 = vunpack.c.h.b16 %v949
    %v5633 = vunpack.c.l.b16 %v950
    %v5634 = vunpack.c.h.b16 %v950
    %v5635 = vunpack.c.l.b16 %v951
    %v5636 = vunpack.c.h.b16 %v951
    %v5637 = vunpack.c.l.b16 %v952
    %v5638 = vunpack.c.h.b16 %v952
    %v5639 = vunpack.c.l.b16 %v953
    %v5640 = vunpack.c.h.b16 %v953
    %v5641 = vunpack.c.l.b16 %v954
    %v5642 = vunpack.c.h.b16 %v954
    %v5643 = vunpack.c.l.b16 %v955
    %v5644 = vunpack.c.h.b16 %v955
    %v5645 = vunpack.c.l.b16 %v956
    %v5646 = vunpack.c.h.b16 %v956
    %v5647 = vunpack.c.l.b16 %v957
    %v5648 = vunpack.c.h.b16 %v957
    %v5649 = vunpack.c.l.b16 %v958
    %v5650 = vunpack.c.h.b16 %v958
    %v5651 = vunpack.c.l.b16 %v959
    %v5652 = vunpack.c.h.b16 %v959
    %v5653 = vunpack.c.l.b16 %v960
    %v5654 = vunpack.c.h.b16 %v960
    %v5655 = vunpack.c.l.b16 %v961
    %v5656 = vunpack.c.h.b16 %v961
    %v5657 = vunpack.c.l.b16 %v962
    %v5658 = vunpack.c.h.b16 %v962
    %v5659 = vunpack.c.l.b16 %v963
    %v5660 = vunpack.c.h.b16 %v963
    %v5661 = vunpack.c.l.b16 %v964
    %v5662 = vunpack.c.h.b16 %v964
    %v5663 = vunpack.c.l.b16 %v965
    %v5664 = vunpack.c.h.b16 %v965
    %v5665 = vunpack.c.l.b16 %v966
    %v5666 = vunpack.c.h.b16 %v966
    %v5667 = vunpack.c.l.b16 %v967
    %v5668 = vunpack.c.h.b16 %v967
    %v5669 = vunpack.c.l.b16 %v968
    %v5670 = vunpack.c.h.b16 %v968
    %v5671 = vunpack.c.l.b16 %v969
    %v5672 = vunpack.c.h.b16 %v969
    %v5673 = vunpack.c.l.b16 %v970
    %v5674 = vunpack.c.h.b16 %v970
    %v5675 = vunpack.c.l.b16 %v971
    %v5676 = vunpack.c.h.b16 %v971
    %v5677 = vunpack.c.l.b16 %v972
    %v5678 = vunpack.c.h.b16 %v972
    %v5679 = vunpack.c.l.b16 %v973
    %v5680 = vunpack.c.h.b16 %v973
    %v5681 = vunpack.c.l.b16 %v974
    %v5682 = vunpack.c.h.b16 %v974
    %v5683 = vunpack.c.l.b16 %v975
    %v5684 = vunpack.c.h.b16 %v975
    %v5685 = vunpack.c.l.b16 %v976
    %v5686 = vunpack.c.h.b16 %v976
    %v5687 = vunpack.c.l.b16 %v977
    %v5688 = vunpack.c.h.b16 %v977
    %v5689 = vunpack.c.l.b16 %v978
    %v5690 = vunpack.c.h.b16 %v978
    %v5691 = vunpack.c.l.b16 %v979
    %v5692 = vunpack.c.h.b16 %v979
    %v5693 = vunpack.c.l.b16 %v980
    %v5694 = vunpack.c.h.b16 %v980
    %v5695 = vunpack.c.l.b16 %v981
    %v5696 = vunpack.c.h.b16 %v981
    %v5697 = vunpack.c.l.b16 %v982
    %v5698 = vunpack.c.h.b16 %v982
    %v5699 = vunpack.c.l.b16 %v983
    %v5700 = vunpack.c.h.b16 %v983
    %v5701 = vunpack.c.l.b16 %v984
    %v5702 = vunpack.c.h.b16 %v984
    %v5703 = vunpack.c.l.b16 %v985
    %v5704 = vunpack.c.h.b16 %v985
    %v5705 = vunpack.c.l.b16 %v986
    %v5706 = vunpack.c.h.b16 %v986
    %v5707 = vunpack.c.l.b16 %v987
    %v5708 = vunpack.c.h.b16 %v987
    %v5709 = vunpack.c.l.b16 %v988
    %v5710 = vunpack.c.h.b16 %v988
    %v5711 = vunpack.c.l.b16 %v989
    %v5712 = vunpack.c.h.b16 %v989
    %v5713 = vunpack.c.l.b16 %v990
    %v5714 = vunpack.c.h.b16 %v990
    %v5715 = vunpack.c.l.b16 %v991
    %v5716 = vunpack.c.h.b16 %v991
    %v5717 = vunpack.c.l.b16 %v992
    %v5718 = vunpack.c.h.b16 %v992
    %v5719 = vunpack.c.l.b16 %v993
    %v5720 = vunpack.c.h.b16 %v993
    %v5721 = vunpack.c.l.b16 %v994
    %v5722 = vunpack.c.h.b16 %v994
    %v5723 = vunpack.c.l.b16 %v995
    %v5724 = vunpack.c.h.b16 %v995
    %v5725 = vunpack.c.l.b16 %v996
    %v5726 = vunpack.c.h.b16 %v996
    %v5727 = vunpack.c.l.b16 %v997
    %v5728 = vunpack.c.h.b16 %v997
    %v5729 = vunpack.c.l.b16 %v998
    %v5730 = vunpack.c.h.b16 %v998
    %v5731 = vunpack.c.l.b16 %v999
    %v5732 = vunpack.c.h.b16 %v999
    %v5733 = vunpack.c.l.b16 %v1000
    %v5734 = vunpack.c.h.b16 %v1000
    %v5735 = vunpack.c.l.b16 %v1001
    %v5736 = vunpack.c.h.b16 %v1001
    %v5737 = vunpack.c.l.b16 %v1002
    %v5738 = vunpack.c.h.b16 %v1002
    %v5739 = vunpack.c.l.b16 %v1003
    %v5740 = vunpack.c.h.b16 %v1003
    %v5741 = vpack.c.b16 %v5237, %v5229
    %v5742 = vpack.c.b16 %v5238, %v5230
    %v5743 = vpack.c.b16 %v5239, %v5231
    %v5744 = vpack.c.b16 %v5240, %v5232
    %v5745 = vpack.c.b16 %v5241, %v5233
    %v5746 = vpack.c.b16 %v5242, %v5234
    %v5747 = vpack.c.b16 %v5243, %v5235
    %v5748 = vpack.c.b16 %v5244, %v5236
    %v5749 = vpack.c.b16 %v5253, %v5245
    %v5750 = vpack.c.b16 %v5254, %v5246
    %v5751 = vpack.c.b16 %v5255, %v5247
    %v5752 = vpack.c.b16 %v5256, %v5248
    %v5753 = vpack.c.b16 %v5257, %v5249
    %v5754 = vpack.c.b16 %v5258, %v5250
    %v5755 = vpack.c.b16 %v5259, %v5251
    %v5756 = vpack.c.b16 %v5260, %v5252
    %v5757 = vpack.c.b16 %v5269, %v5261
    %v5758 = vpack.c.b16 %v5270, %v5262
    %v5759 = vpack.c.b16 %v5271, %v5263
    %v5760 = vpack.c.b16 %v5272, %v5264
    %v5761 = vpack.c.b16 %v5273, %v5265
    %v5762 = vpack.c.b16 %v5274, %v5266
    %v5763 = vpack.c.b16 %v5275, %v5267
    %v5764 = vpack.c.b16 %v5276, %v5268
    %v5765 = vpack.c.b16 %v5285, %v5277
    %v5766 = vpack.c.b16 %v5286, %v5278
    %v5767 = vpack.c.b16 %v5287, %v5279
    %v5768 = vpack.c.b16 %v5288, %v5280
    %v5769 = vpack.c.b16 %v5289, %v5281
    %v5770 = vpack.c.b16 %v5290, %v5282
    %v5771 = vpack.c.b16 %v5291, %v5283
    %v5772 = vpack.c.b16 %v5292, %v5284
    %v5773 = vpack.c.b16 %v5301, %v5293
    %v5774 = vpack.c.b16 %v5302, %v5294
    %v5775 = vpack.c.b16 %v5303, %v5295
    %v5776 = vpack.c.b16 %v5304, %v5296
    %v5777 = vpack.c.b16 %v5305, %v5297
    %v5778 = vpack.c.b16 %v5306, %v5298
    %v5779 = vpack.c.b16 %v5307, %v5299
    %v5780 = vpack.c.b16 %v5308, %v5300
    %v5781 = vpack.c.b16 %v5317, %v5309
    %v5782 = vpack.c.b16 %v5318, %v5310
    %v5783 = vpack.c.b16 %v5319, %v5311
    %v5784 = vpack.c.b16 %v5320, %v5312
    %v5785 = vpack.c.b16 %v5321, %v5313
    %v5786 = vpack.c.b16 %v5322, %v5314
    %v5787 = vpack.c.b16 %v5323, %v5315
    %v5788 = vpack.c.b16 %v5324, %v5316
    %v5789 = vpack.c.b16 %v5333, %v5325
    %v5790 = vpack.c.b16 %v5334, %v5326
    %v5791 = vpack.c.b16 %v5335, %v5327
    %v5792 = vpack.c.b16 %v5336, %v5328
    %v5793 = vpack.c.b16 %v5337, %v5329
    %v5794 = vpack.c.b16 %v5338, %v5330
    %v5795 = vpack.c.b16 %v5339, %v5331
    %v5796 = vpack.c.b16 %v5340, %v5332
    %v5797 = vpack.c.b16 %v5349, %v5341
    %v5798 = vpack.c.b16 %v5350, %v5342
    %v5799 = vpack.c.b16 %v5351, %v5343
    %v5800 = vpack.c.b16 %v5352, %v5344
    %v5801 = vpack.c.b16 %v5353, %v5345
    %v5802 = vpack.c.b16 %v5354, %v5346
    %v5803 = vpack.c.b16 %v5355, %v5347
    %v5804 = vpack.c.b16 %v5356, %v5348
    %v5805 = vpack.c.b16 %v5365, %v5357
    %v5806 = vpack.c.b16 %v5366, %v5358
    %v5807 = vpack.c.b16 %v5367, %v5359
    %v5808 = vpack.c.b16 %v5368, %v5360
    %v5809 = vpack.c.b16 %v5369, %v5361
    %v5810 = vpack.c.b16 %v5370, %v5362
    %v5811 = vpack.c.b16 %v5371, %v5363
    %v5812 = vpack.c.b16 %v5372, %v5364
    %v5813 = vpack.c.b16 %v5381, %v5373
    %v5814 = vpack.c.b16 %v5382, %v5374
    %v5815 = vpack.c.b16 %v5383, %v5375
    %v5816 = vpack.c.b16 %v5384, %v5376
    %v5817 = vpack.c.b16 %v5385, %v5377
    %v5818 = vpack.c.b16 %v5386, %v5378
    %v5819 = vpack.c.b16 %v5387, %v5379
    %v5820 = vpack.c.b16 %v5388, %v5380
    %v5821 = vpack.c.b16 %v5397, %v5389
    %v5822 = vpack.c.b16 %v5398, %v5390
    %v5823 = vpack.c.b16 %v5399, %v5391
    %v5824 = vpack.c.b16 %v5400, %v5392
    %v5825 = vpack.c.b16 %v5401, %v5393
    %v5826 = vpack.c.b16 %v5402, %v5394
    %v5827 = vpack.c.b16 %v5403, %v5395
    %v5828 = vpack.c.b16 %v5404, %v5396
    %v5829 = vpack.c.b16 %v5413, %v5405
    %v5830 = vpack.c.b16 %v5414, %v5406
    %v5831 = vpack.c.b16 %v5415, %v5407
    %v5832 = vpack.c.b16 %v5416, %v5408
    %v5833 = vpack.c.b16 %v5417, %v5409
    %v5834 = vpack.c.b16 %v5418, %v5410
    %v5835 = vpack.c.b16 %v5419, %v5411
    %v5836 = vpack.c.b16 %v5420, %v5412
    %v5837 = vpack.c.b16 %v5429, %v5421
    %v5838 = vpack.c.b16 %v5430, %v5422
    %v5839 = vpack.c.b16 %v5431, %v5423
    %v5840 = vpack.c.b16 %v5432, %v5424
    %v5841 = vpack.c.b16 %v5433, %v5425
    %v5842 = vpack.c.b16 %v5434, %v5426
    %v5843 = vpack.c.b16 %v5435, %v5427
    %v5844 = vpack.c.b16 %v5436, %v5428
    %v5845 = vpack.c.b16 %v5445, %v5437
    %v5846 = vpack.c.b16 %v5446, %v5438
    %v5847 = vpack.c.b16 %v5447, %v5439
    %v5848 = vpack.c.b16 %v5448, %v5440
    %v5849 = vpack.c.b16 %v5449, %v5441
    %v5850 = vpack.c.b16 %v5450, %v5442
    %v5851 = vpack.c.b16 %v5451, %v5443
    %v5852 = vpack.c.b16 %v5452, %v5444
    %v5853 = vpack.c.b16 %v5461, %v5453
    %v5854 = vpack.c.b16 %v5462, %v5454
    %v5855 = vpack.c.b16 %v5463, %v5455
    %v5856 = vpack.c.b16 %v5464, %v5456
    %v5857 = vpack.c.b16 %v5465, %v5457
    %v5858 = vpack.c.b16 %v5466, %v5458
    %v5859 = vpack.c.b16 %v5467, %v5459
    %v5860 = vpack.c.b16 %v5468, %v5460
    %v5861 = vpack.c.b16 %v5477, %v5469
    %v5862 = vpack.c.b16 %v5478, %v5470
    %v5863 = vpack.c.b16 %v5479, %v5471
    %v5864 = vpack.c.b16 %v5480, %v5472
    %v5865 = vpack.c.b16 %v5481, %v5473
    %v5866 = vpack.c.b16 %v5482, %v5474
    %v5867 = vpack.c.b16 %v5483, %v5475
    %v5868 = vpack.c.b16 %v5484, %v5476
    %v5869 = vpack.c.b16 %v5493, %v5485
    %v5870 = vpack.c.b16 %v5494, %v5486
    %v5871 = vpack.c.b16 %v5495, %v5487
    %v5872 = vpack.c.b16 %v5496, %v5488
    %v5873 = vpack.c.b16 %v5497, %v5489
    %v5874 = vpack.c.b16 %v5498, %v5490
    %v5875 = vpack.c.b16 %v5499, %v5491
    %v5876 = vpack.c.b16 %v5500, %v5492
    %v5877 = vpack.c.b16 %v5509, %v5501
    %v5878 = vpack.c.b16 %v5510, %v5502
    %v5879 = vpack.c.b16 %v5511, %v5503
    %v5880 = vpack.c.b16 %v5512, %v5504
    %v5881 = vpack.c.b16 %v5513, %v5505
    %v5882 = vpack.c.b16 %v5514, %v5506
    %v5883 = vpack.c.b16 %v5515, %v5507
    %v5884 = vpack.c.b16 %v5516, %v5508
    %v5885 = vpack.c.b16 %v5525, %v5517
    %v5886 = vpack.c.b16 %v5526, %v5518
    %v5887 = vpack.c.b16 %v5527, %v5519
    %v5888 = vpack.c.b16 %v5528, %v5520
    %v5889 = vpack.c.b16 %v5529, %v5521
    %v5890 = vpack.c.b16 %v5530, %v5522
    %v5891 = vpack.c.b16 %v5531, %v5523
    %v5892 = vpack.c.b16 %v5532, %v5524
    %v5893 = vpack.c.b16 %v5541, %v5533
    %v5894 = vpack.c.b16 %v5542, %v5534
    %v5895 = vpack.c.b16 %v5543, %v5535
    %v5896 = vpack.c.b16 %v5544, %v5536
    %v5897 = vpack.c.b16 %v5545, %v5537
    %v5898 = vpack.c.b16 %v5546, %v5538
    %v5899 = vpack.c.b16 %v5547, %v5539
    %v5900 = vpack.c.b16 %v5548, %v5540
    %v5901 = vpack.c.b16 %v5557, %v5549
    %v5902 = vpack.c.b16 %v5558, %v5550
    %v5903 = vpack.c.b16 %v5559, %v5551
    %v5904 = vpack.c.b16 %v5560, %v5552
    %v5905 = vpack.c.b16 %v5561, %v5553
    %v5906 = vpack.c.b16 %v5562, %v5554
    %v5907 = vpack.c.b16 %v5563, %v5555
    %v5908 = vpack.c.b16 %v5564, %v5556
    %v5909 = vpack.c.b16 %v5573, %v5565
    %v5910 = vpack.c.b16 %v5574, %v5566
    %v5911 = vpack.c.b16 %v5575, %v5567
    %v5912 = vpack.c.b16 %v5576, %v5568
    %v5913 = vpack.c.b16 %v5577, %v5569
    %v5914 = vpack.c.b16 %v5578, %v5570
    %v5915 = vpack.c.b16 %v5579, %v5571
    %v5916 = vpack.c.b16 %v5580, %v5572
    %v5917 = vpack.c.b16 %v5589, %v5581
    %v5918 = vpack.c.b16 %v5590, %v5582
    %v5919 = vpack.c.b16 %v5591, %v5583
    %v5920 = vpack.c.b16 %v5592, %v5584
    %v5921 = vpack.c.b16 %v5593, %v5585
    %v5922 = vpack.c.b16 %v5594, %v5586
    %v5923 = vpack.c.b16 %v5595, %v5587
    %v5924 = vpack.c.b16 %v5596, %v5588
    %v5925 = vpack.c.b16 %v5605, %v5597
    %v5926 = vpack.c.b16 %v5606, %v5598
    %v5927 = vpack.c.b16 %v5607, %v5599
    %v5928 = vpack.c.b16 %v5608, %v5600
    %v5929 = vpack.c.b16 %v5609, %v5601
    %v5930 = vpack.c.b16 %v5610, %v5602
    %v5931 = vpack.c.b16 %v5611, %v5603
    %v5932 = vpack.c.b16 %v5612, %v5604
    %v5933 = vpack.c.b16 %v5621, %v5613
    %v5934 = vpack.c.b16 %v5622, %v5614
    %v5935 = vpack.c.b16 %v5623, %v5615
    %v5936 = vpack.c.b16 %v5624, %v5616
    %v5937 = vpack.c.b16 %v5625, %v5617
    %v5938 = vpack.c.b16 %v5626, %v5618
    %v5939 = vpack.c.b16 %v5627, %v5619
    %v5940 = vpack.c.b16 %v5628, %v5620
    %v5941 = vpack.c.b16 %v5637, %v5629
    %v5942 = vpack.c.b16 %v5638, %v5630
    %v5943 = vpack.c.b16 %v5639, %v5631
    %v5944 = vpack.c.b16 %v5640, %v5632
    %v5945 = vpack.c.b16 %v5641, %v5633
    %v5946 = vpack.c.b16 %v5642, %v5634
    %v5947 = vpack.c.b16 %v5643, %v5635
    %v5948 = vpack.c.b16 %v5644, %v5636
    %v5949 = vpack.c.b16 %v5653, %v5645
    %v5950 = vpack.c.b16 %v5654, %v5646
    %v5951 = vpack.c.b16 %v5655, %v5647
    %v5952 = vpack.c.b16 %v5656, %v5648
    %v5953 = vpack.c.b16 %v5657, %v5649
    %v5954 = vpack.c.b16 %v5658, %v5650
    %v5955 = vpack.c.b16 %v5659, %v5651
    %v5956 = vpack.c.b16 %v5660, %v5652
    %v5957 = vpack.c.b16 %v5669, %v5661
    %v5958 = vpack.c.b16 %v5670, %v5662
    %v5959 = vpack.c.b16 %v5671, %v5663
    %v5960 = vpack.c.b16 %v5672, %v5664
    %v5961 = vpack.c.b16 %v5673, %v5665
    %v5962 = vpack.c.b16 %v5674, %v5666
    %v5963 = vpack.c.b16 %v5675, %v5667
    %v5964 = vpack.c.b16 %v5676, %v5668
    %v5965 = vpack.c.b16 %v5685, %v5677
    %v5966 = vpack.c.b16 %v5686, %v5678
    %v5967 = vpack.c.b16 %v5687, %v5679
    %v5968 = vpack.c.b16 %v5688, %v5680
    %v5969 = vpack.c.b16 %v5689, %v5681
    %v5970 = vpack.c.b16 %v5690, %v5682
    %v5971 = vpack.c.b16 %v5691, %v5683
    %v5972 = vpack.c.b16 %v5692, %v5684
    %v5973 = vpack.c.b16 %v5701, %v5693
    %v5974 = vpack.c.b16 %v5702, %v5694
    %v5975 = vpack.c.b16 %v5703, %v5695
    %v5976 = vpack.c.b16 %v5704, %v5696
    %v5977 = vpack.c.b16 %v5705, %v5697
    %v5978 = vpack.c.b16 %v5706, %v5698
    %v5979 = vpack.c.b16 %v5707, %v5699
    %v5980 = vpack.c.b16 %v5708, %v5700
    %v5981 = vpack.c.b16 %v5717, %v5709
    %v5982 = vpack.c.b16 %v5718, %v5710
    %v5983 = vpack.c.b16 %v5719, %v5711
    %v5984 = vpack.c.b16 %v5720, %v5712
    %v5985 = vpack.c.b16 %v5721, %v5713
    %v5986 = vpack.c.b16 %v5722, %v5714
    %v5987 = vpack.c.b16 %v5723, %v5715
    %v5988 = vpack.c.b16 %v5724, %v5716
    %v5989 = vpack.c.b16 %v5733, %v5725
    %v5990 = vpack.c.b16 %v5734, %v5726
    %v5991 = vpack.c.b16 %v5735, %v5727
    %v5992 = vpack.c.b16 %v5736, %v5728
    %v5993 = vpack.c.b16 %v5737, %v5729
    %v5994 = vpack.c.b16 %v5738, %v5730
    %v5995 = vpack.c.b16 %v5739, %v5731
    %v5996 = vpack.c.b16 %v5740, %v5732
    %6253 = vmatpush.bf16.msra.mxu0 %v5797
    %6254 = vmatpush.bf16.msra.mxu0 %v5789
    %6255 = vmatpush.bf16.msra.mxu0 %v5781
    %6256 = vmatpush.bf16.msra.mxu0 %v5773
    %6257 = vmatpush.bf16.msra.mxu0 %v5765
    %6258 = vmatpush.bf16.msra.mxu0 %v5757
    %6259 = vmatpush.bf16.msra.mxu0 %v5749
    %6260 = vmatpush.bf16.msra.mxu0 %v5741
    %6261 = vmatmul.bf16.gmra.mxu0 %v4710
    %v6262 = vpop.f32.mrf.mxu0
    %v6263 = vadd.f32 %v1006, %v6262
    %v6264 = vpop.f32.mrf.mxu0
    %6265 = vdwg.mxu0
    %6266 = vmatpush.bf16.msra.mxu0 %v5861
    %6267 = vmatpush.bf16.msra.mxu0 %v5853
    %6268 = vmatpush.bf16.msra.mxu0 %v5845
    %6269 = vmatpush.bf16.msra.mxu0 %v5837
    %6270 = vmatpush.bf16.msra.mxu0 %v5829
    %6271 = vmatpush.bf16.msra.mxu0 %v5821
    %6272 = vmatpush.bf16.msra.mxu0 %v5813
    %6273 = vmatpush.bf16.msra.mxu0 %v5805
    %6274 = vmatmul.bf16.gmra.mxu0 %v4711
    %v6275 = vpop.f32.mrf.mxu0
    %v6276 = vadd.f32 %v6263, %v6275
    %v6277 = vpop.f32.mrf.mxu0
    %6278 = vdwg.mxu0
    %6279 = vmatpush.bf16.msra.mxu0 %v5925
    %6280 = vmatpush.bf16.msra.mxu0 %v5917
    %6281 = vmatpush.bf16.msra.mxu0 %v5909
    %6282 = vmatpush.bf16.msra.mxu0 %v5901
    %6283 = vmatpush.bf16.msra.mxu0 %v5893
    %6284 = vmatpush.bf16.msra.mxu0 %v5885
    %6285 = vmatpush.bf16.msra.mxu0 %v5877
    %6286 = vmatpush.bf16.msra.mxu0 %v5869
    %6287 = vmatmul.bf16.gmra.mxu0 %v4969
    %v6288 = vpop.f32.mrf.mxu0
    %v6289 = vadd.f32 %v6276, %v6288
    %v6290 = vpop.f32.mrf.mxu0
    %6291 = vdwg.mxu0
    %6292 = vmatpush.bf16.msra.mxu0 %v5989
    %6293 = vmatpush.bf16.msra.mxu0 %v5981
    %6294 = vmatpush.bf16.msra.mxu0 %v5973
    %6295 = vmatpush.bf16.msra.mxu0 %v5965
    %6296 = vmatpush.bf16.msra.mxu0 %v5957
    %6297 = vmatpush.bf16.msra.mxu0 %v5949
    %6298 = vmatpush.bf16.msra.mxu0 %v5941
    %6299 = vmatpush.bf16.msra.mxu0 %v5933
    %6300 = vmatmul.bf16.gmra.mxu0 %v4970
    %v6301 = vpop.f32.mrf.mxu0
    %v6302 = vadd.f32 %v6289, %v6301
    %v6303 = vpop.f32.mrf.mxu0
    %6304 = vdwg.mxu0
    %6305 = vmatpush.bf16.msra.mxu0 %v5798
    %6306 = vmatpush.bf16.msra.mxu0 %v5790
    %6307 = vmatpush.bf16.msra.mxu0 %v5782
    %6308 = vmatpush.bf16.msra.mxu0 %v5774
    %6309 = vmatpush.bf16.msra.mxu0 %v5766
    %6310 = vmatpush.bf16.msra.mxu0 %v5758
    %6311 = vmatpush.bf16.msra.mxu0 %v5750
    %6312 = vmatpush.bf16.msra.mxu0 %v5742
    %6313 = vmatmul.bf16.gmra.mxu0 %v4710
    %v6314 = vpop.f32.mrf.mxu0
    %v6315 = vadd.f32 %v1007, %v6314
    %v6316 = vpop.f32.mrf.mxu0
    %6317 = vdwg.mxu0
    %6318 = vmatpush.bf16.msra.mxu0 %v5862
    %6319 = vmatpush.bf16.msra.mxu0 %v5854
    %6320 = vmatpush.bf16.msra.mxu0 %v5846
    %6321 = vmatpush.bf16.msra.mxu0 %v5838
    %6322 = vmatpush.bf16.msra.mxu0 %v5830
    %6323 = vmatpush.bf16.msra.mxu0 %v5822
    %6324 = vmatpush.bf16.msra.mxu0 %v5814
    %6325 = vmatpush.bf16.msra.mxu0 %v5806
    %6326 = vmatmul.bf16.gmra.mxu0 %v4711
    %v6327 = vpop.f32.mrf.mxu0
    %v6328 = vadd.f32 %v6315, %v6327
    %v6329 = vpop.f32.mrf.mxu0
    %6330 = vdwg.mxu0
    %6331 = vmatpush.bf16.msra.mxu0 %v5926
    %6332 = vmatpush.bf16.msra.mxu0 %v5918
    %6333 = vmatpush.bf16.msra.mxu0 %v5910
    %6334 = vmatpush.bf16.msra.mxu0 %v5902
    %6335 = vmatpush.bf16.msra.mxu0 %v5894
    %6336 = vmatpush.bf16.msra.mxu0 %v5886
    %6337 = vmatpush.bf16.msra.mxu0 %v5878
    %6338 = vmatpush.bf16.msra.mxu0 %v5870
    %6339 = vmatmul.bf16.gmra.mxu0 %v4969
    %v6340 = vpop.f32.mrf.mxu0
    %v6341 = vadd.f32 %v6328, %v6340
    %v6342 = vpop.f32.mrf.mxu0
    %6343 = vdwg.mxu0
    %6344 = vmatpush.bf16.msra.mxu0 %v5990
    %6345 = vmatpush.bf16.msra.mxu0 %v5982
    %6346 = vmatpush.bf16.msra.mxu0 %v5974
    %6347 = vmatpush.bf16.msra.mxu0 %v5966
    %6348 = vmatpush.bf16.msra.mxu0 %v5958
    %6349 = vmatpush.bf16.msra.mxu0 %v5950
    %6350 = vmatpush.bf16.msra.mxu0 %v5942
    %6351 = vmatpush.bf16.msra.mxu0 %v5934
    %6352 = vmatmul.bf16.gmra.mxu0 %v4970
    %v6353 = vpop.f32.mrf.mxu0
    %v6354 = vadd.f32 %v6341, %v6353
    %v6355 = vpop.f32.mrf.mxu0
    %6356 = vdwg.mxu0
    %6357 = vmatpush.bf16.msra.mxu0 %v5799
    %6358 = vmatpush.bf16.msra.mxu0 %v5791
    %6359 = vmatpush.bf16.msra.mxu0 %v5783
    %6360 = vmatpush.bf16.msra.mxu0 %v5775
    %6361 = vmatpush.bf16.msra.mxu0 %v5767
    %6362 = vmatpush.bf16.msra.mxu0 %v5759
    %6363 = vmatpush.bf16.msra.mxu0 %v5751
    %6364 = vmatpush.bf16.msra.mxu0 %v5743
    %6365 = vmatmul.bf16.gmra.mxu0 %v4710
    %v6366 = vpop.f32.mrf.mxu0
    %v6367 = vadd.f32 %v1008, %v6366
    %v6368 = vpop.f32.mrf.mxu0
    %6369 = vdwg.mxu0
    %6370 = vmatpush.bf16.msra.mxu0 %v5863
    %6371 = vmatpush.bf16.msra.mxu0 %v5855
    %6372 = vmatpush.bf16.msra.mxu0 %v5847
    %6373 = vmatpush.bf16.msra.mxu0 %v5839
    %6374 = vmatpush.bf16.msra.mxu0 %v5831
    %6375 = vmatpush.bf16.msra.mxu0 %v5823
    %6376 = vmatpush.bf16.msra.mxu0 %v5815
    %6377 = vmatpush.bf16.msra.mxu0 %v5807
    %6378 = vmatmul.bf16.gmra.mxu0 %v4711
    %v6379 = vpop.f32.mrf.mxu0
    %v6380 = vadd.f32 %v6367, %v6379
    %v6381 = vpop.f32.mrf.mxu0
    %6382 = vdwg.mxu0
    %6383 = vmatpush.bf16.msra.mxu0 %v5927
    %6384 = vmatpush.bf16.msra.mxu0 %v5919
    %6385 = vmatpush.bf16.msra.mxu0 %v5911
    %6386 = vmatpush.bf16.msra.mxu0 %v5903
    %6387 = vmatpush.bf16.msra.mxu0 %v5895
    %6388 = vmatpush.bf16.msra.mxu0 %v5887
    %6389 = vmatpush.bf16.msra.mxu0 %v5879
    %6390 = vmatpush.bf16.msra.mxu0 %v5871
    %6391 = vmatmul.bf16.gmra.mxu0 %v4969
    %v6392 = vpop.f32.mrf.mxu0
    %v6393 = vadd.f32 %v6380, %v6392
    %v6394 = vpop.f32.mrf.mxu0
    %6395 = vdwg.mxu0
    %6396 = vmatpush.bf16.msra.mxu0 %v5991
    %6397 = vmatpush.bf16.msra.mxu0 %v5983
    %6398 = vmatpush.bf16.msra.mxu0 %v5975
    %6399 = vmatpush.bf16.msra.mxu0 %v5967
    %6400 = vmatpush.bf16.msra.mxu0 %v5959
    %6401 = vmatpush.bf16.msra.mxu0 %v5951
    %6402 = vmatpush.bf16.msra.mxu0 %v5943
    %6403 = vmatpush.bf16.msra.mxu0 %v5935
    %6404 = vmatmul.bf16.gmra.mxu0 %v4970
    %v6405 = vpop.f32.mrf.mxu0
    %v6406 = vadd.f32 %v6393, %v6405
    %v6407 = vpop.f32.mrf.mxu0
    %6408 = vdwg.mxu0
    %6409 = vmatpush.bf16.msra.mxu0 %v5800
    %6410 = vmatpush.bf16.msra.mxu0 %v5792
    %6411 = vmatpush.bf16.msra.mxu0 %v5784
    %6412 = vmatpush.bf16.msra.mxu0 %v5776
    %6413 = vmatpush.bf16.msra.mxu0 %v5768
    %6414 = vmatpush.bf16.msra.mxu0 %v5760
    %6415 = vmatpush.bf16.msra.mxu0 %v5752
    %6416 = vmatpush.bf16.msra.mxu0 %v5744
    %6417 = vmatmul.bf16.gmra.mxu0 %v4710
    %v6418 = vpop.f32.mrf.mxu0
    %v6419 = vadd.f32 %v1009, %v6418
    %v6420 = vpop.f32.mrf.mxu0
    %6421 = vdwg.mxu0
    %6422 = vmatpush.bf16.msra.mxu0 %v5864
    %6423 = vmatpush.bf16.msra.mxu0 %v5856
    %6424 = vmatpush.bf16.msra.mxu0 %v5848
    %6425 = vmatpush.bf16.msra.mxu0 %v5840
    %6426 = vmatpush.bf16.msra.mxu0 %v5832
    %6427 = vmatpush.bf16.msra.mxu0 %v5824
    %6428 = vmatpush.bf16.msra.mxu0 %v5816
    %6429 = vmatpush.bf16.msra.mxu0 %v5808
    %6430 = vmatmul.bf16.gmra.mxu0 %v4711
    %v6431 = vpop.f32.mrf.mxu0
    %v6432 = vadd.f32 %v6419, %v6431
    %v6433 = vpop.f32.mrf.mxu0
    %6434 = vdwg.mxu0
    %6435 = vmatpush.bf16.msra.mxu0 %v5928
    %6436 = vmatpush.bf16.msra.mxu0 %v5920
    %6437 = vmatpush.bf16.msra.mxu0 %v5912
    %6438 = vmatpush.bf16.msra.mxu0 %v5904
    %6439 = vmatpush.bf16.msra.mxu0 %v5896
    %6440 = vmatpush.bf16.msra.mxu0 %v5888
    %6441 = vmatpush.bf16.msra.mxu0 %v5880
    %6442 = vmatpush.bf16.msra.mxu0 %v5872
    %6443 = vmatmul.bf16.gmra.mxu0 %v4969
    %v6444 = vpop.f32.mrf.mxu0
    %v6445 = vadd.f32 %v6432, %v6444
    %v6446 = vpop.f32.mrf.mxu0
    %6447 = vdwg.mxu0
    %6448 = vmatpush.bf16.msra.mxu0 %v5992
    %6449 = vmatpush.bf16.msra.mxu0 %v5984
    %6450 = vmatpush.bf16.msra.mxu0 %v5976
    %6451 = vmatpush.bf16.msra.mxu0 %v5968
    %6452 = vmatpush.bf16.msra.mxu0 %v5960
    %6453 = vmatpush.bf16.msra.mxu0 %v5952
    %6454 = vmatpush.bf16.msra.mxu0 %v5944
    %6455 = vmatpush.bf16.msra.mxu0 %v5936
    %6456 = vmatmul.bf16.gmra.mxu0 %v4970
    %v6457 = vpop.f32.mrf.mxu0
    %v6458 = vadd.f32 %v6445, %v6457
    %v6459 = vpop.f32.mrf.mxu0
    %6460 = vdwg.mxu0
    %6461 = vmatpush.bf16.msra.mxu0 %v5801
    %6462 = vmatpush.bf16.msra.mxu0 %v5793
    %6463 = vmatpush.bf16.msra.mxu0 %v5785
    %6464 = vmatpush.bf16.msra.mxu0 %v5777
    %6465 = vmatpush.bf16.msra.mxu0 %v5769
    %6466 = vmatpush.bf16.msra.mxu0 %v5761
    %6467 = vmatpush.bf16.msra.mxu0 %v5753
    %6468 = vmatpush.bf16.msra.mxu0 %v5745
    %6469 = vmatmul.bf16.gmra.mxu0 %v4710
    %v6470 = vpop.f32.mrf.mxu0
    %v6471 = vadd.f32 %v1010, %v6470
    %v6472 = vpop.f32.mrf.mxu0
    %6473 = vdwg.mxu0
    %6474 = vmatpush.bf16.msra.mxu0 %v5865
    %6475 = vmatpush.bf16.msra.mxu0 %v5857
    %6476 = vmatpush.bf16.msra.mxu0 %v5849
    %6477 = vmatpush.bf16.msra.mxu0 %v5841
    %6478 = vmatpush.bf16.msra.mxu0 %v5833
    %6479 = vmatpush.bf16.msra.mxu0 %v5825
    %6480 = vmatpush.bf16.msra.mxu0 %v5817
    %6481 = vmatpush.bf16.msra.mxu0 %v5809
    %6482 = vmatmul.bf16.gmra.mxu0 %v4711
    %v6483 = vpop.f32.mrf.mxu0
    %v6484 = vadd.f32 %v6471, %v6483
    %v6485 = vpop.f32.mrf.mxu0
    %6486 = vdwg.mxu0
    %6487 = vmatpush.bf16.msra.mxu0 %v5929
    %6488 = vmatpush.bf16.msra.mxu0 %v5921
    %6489 = vmatpush.bf16.msra.mxu0 %v5913
    %6490 = vmatpush.bf16.msra.mxu0 %v5905
    %6491 = vmatpush.bf16.msra.mxu0 %v5897
    %6492 = vmatpush.bf16.msra.mxu0 %v5889
    %6493 = vmatpush.bf16.msra.mxu0 %v5881
    %6494 = vmatpush.bf16.msra.mxu0 %v5873
    %6495 = vmatmul.bf16.gmra.mxu0 %v4969
    %v6496 = vpop.f32.mrf.mxu0
    %v6497 = vadd.f32 %v6484, %v6496
    %v6498 = vpop.f32.mrf.mxu0
    %6499 = vdwg.mxu0
    %6500 = vmatpush.bf16.msra.mxu0 %v5993
    %6501 = vmatpush.bf16.msra.mxu0 %v5985
    %6502 = vmatpush.bf16.msra.mxu0 %v5977
    %6503 = vmatpush.bf16.msra.mxu0 %v5969
    %6504 = vmatpush.bf16.msra.mxu0 %v5961
    %6505 = vmatpush.bf16.msra.mxu0 %v5953
    %6506 = vmatpush.bf16.msra.mxu0 %v5945
    %6507 = vmatpush.bf16.msra.mxu0 %v5937
    %6508 = vmatmul.bf16.gmra.mxu0 %v4970
    %v6509 = vpop.f32.mrf.mxu0
    %v6510 = vadd.f32 %v6497, %v6509
    %v6511 = vpop.f32.mrf.mxu0
    %6512 = vdwg.mxu0
    %6513 = vmatpush.bf16.msra.mxu0 %v5802
    %6514 = vmatpush.bf16.msra.mxu0 %v5794
    %6515 = vmatpush.bf16.msra.mxu0 %v5786
    %6516 = vmatpush.bf16.msra.mxu0 %v5778
    %6517 = vmatpush.bf16.msra.mxu0 %v5770
    %6518 = vmatpush.bf16.msra.mxu0 %v5762
    %6519 = vmatpush.bf16.msra.mxu0 %v5754
    %6520 = vmatpush.bf16.msra.mxu0 %v5746
    %6521 = vmatmul.bf16.gmra.mxu0 %v4710
    %v6522 = vpop.f32.mrf.mxu0
    %v6523 = vadd.f32 %v1011, %v6522
    %v6524 = vpop.f32.mrf.mxu0
    %6525 = vdwg.mxu0
    %6526 = vmatpush.bf16.msra.mxu0 %v5866
    %6527 = vmatpush.bf16.msra.mxu0 %v5858
    %6528 = vmatpush.bf16.msra.mxu0 %v5850
    %6529 = vmatpush.bf16.msra.mxu0 %v5842
    %6530 = vmatpush.bf16.msra.mxu0 %v5834
    %6531 = vmatpush.bf16.msra.mxu0 %v5826
    %6532 = vmatpush.bf16.msra.mxu0 %v5818
    %6533 = vmatpush.bf16.msra.mxu0 %v5810
    %6534 = vmatmul.bf16.gmra.mxu0 %v4711
    %v6535 = vpop.f32.mrf.mxu0
    %v6536 = vadd.f32 %v6523, %v6535
    %v6537 = vpop.f32.mrf.mxu0
    %6538 = vdwg.mxu0
    %6539 = vmatpush.bf16.msra.mxu0 %v5930
    %6540 = vmatpush.bf16.msra.mxu0 %v5922
    %6541 = vmatpush.bf16.msra.mxu0 %v5914
    %6542 = vmatpush.bf16.msra.mxu0 %v5906
    %6543 = vmatpush.bf16.msra.mxu0 %v5898
    %6544 = vmatpush.bf16.msra.mxu0 %v5890
    %6545 = vmatpush.bf16.msra.mxu0 %v5882
    %6546 = vmatpush.bf16.msra.mxu0 %v5874
    %6547 = vmatmul.bf16.gmra.mxu0 %v4969
    %v6548 = vpop.f32.mrf.mxu0
    %v6549 = vadd.f32 %v6536, %v6548
    %v6550 = vpop.f32.mrf.mxu0
    %6551 = vdwg.mxu0
    %6552 = vmatpush.bf16.msra.mxu0 %v5994
    %6553 = vmatpush.bf16.msra.mxu0 %v5986
    %6554 = vmatpush.bf16.msra.mxu0 %v5978
    %6555 = vmatpush.bf16.msra.mxu0 %v5970
    %6556 = vmatpush.bf16.msra.mxu0 %v5962
    %6557 = vmatpush.bf16.msra.mxu0 %v5954
    %6558 = vmatpush.bf16.msra.mxu0 %v5946
    %6559 = vmatpush.bf16.msra.mxu0 %v5938
    %6560 = vmatmul.bf16.gmra.mxu0 %v4970
    %v6561 = vpop.f32.mrf.mxu0
    %v6562 = vadd.f32 %v6549, %v6561
    %v6563 = vpop.f32.mrf.mxu0
    %6564 = vdwg.mxu0
    %6565 = vmatpush.bf16.msra.mxu0 %v5803
    %6566 = vmatpush.bf16.msra.mxu0 %v5795
    %6567 = vmatpush.bf16.msra.mxu0 %v5787
    %6568 = vmatpush.bf16.msra.mxu0 %v5779
    %6569 = vmatpush.bf16.msra.mxu0 %v5771
    %6570 = vmatpush.bf16.msra.mxu0 %v5763
    %6571 = vmatpush.bf16.msra.mxu0 %v5755
    %6572 = vmatpush.bf16.msra.mxu0 %v5747
    %6573 = vmatmul.bf16.gmra.mxu0 %v4710
    %v6574 = vpop.f32.mrf.mxu0
    %v6575 = vadd.f32 %v1012, %v6574
    %v6576 = vpop.f32.mrf.mxu0
    %6577 = vdwg.mxu0
    %6578 = vmatpush.bf16.msra.mxu0 %v5867
    %6579 = vmatpush.bf16.msra.mxu0 %v5859
    %6580 = vmatpush.bf16.msra.mxu0 %v5851
    %6581 = vmatpush.bf16.msra.mxu0 %v5843
    %6582 = vmatpush.bf16.msra.mxu0 %v5835
    %6583 = vmatpush.bf16.msra.mxu0 %v5827
    %6584 = vmatpush.bf16.msra.mxu0 %v5819
    %6585 = vmatpush.bf16.msra.mxu0 %v5811
    %6586 = vmatmul.bf16.gmra.mxu0 %v4711
    %v6587 = vpop.f32.mrf.mxu0
    %v6588 = vadd.f32 %v6575, %v6587
    %v6589 = vpop.f32.mrf.mxu0
    %6590 = vdwg.mxu0
    %6591 = vmatpush.bf16.msra.mxu0 %v5931
    %6592 = vmatpush.bf16.msra.mxu0 %v5923
    %6593 = vmatpush.bf16.msra.mxu0 %v5915
    %6594 = vmatpush.bf16.msra.mxu0 %v5907
    %6595 = vmatpush.bf16.msra.mxu0 %v5899
    %6596 = vmatpush.bf16.msra.mxu0 %v5891
    %6597 = vmatpush.bf16.msra.mxu0 %v5883
    %6598 = vmatpush.bf16.msra.mxu0 %v5875
    %6599 = vmatmul.bf16.gmra.mxu0 %v4969
    %v6600 = vpop.f32.mrf.mxu0
    %v6601 = vadd.f32 %v6588, %v6600
    %v6602 = vpop.f32.mrf.mxu0
    %6603 = vdwg.mxu0
    %6604 = vmatpush.bf16.msra.mxu0 %v5995
    %6605 = vmatpush.bf16.msra.mxu0 %v5987
    %6606 = vmatpush.bf16.msra.mxu0 %v5979
    %6607 = vmatpush.bf16.msra.mxu0 %v5971
    %6608 = vmatpush.bf16.msra.mxu0 %v5963
    %6609 = vmatpush.bf16.msra.mxu0 %v5955
    %6610 = vmatpush.bf16.msra.mxu0 %v5947
    %6611 = vmatpush.bf16.msra.mxu0 %v5939
    %6612 = vmatmul.bf16.gmra.mxu0 %v4970
    %v6613 = vpop.f32.mrf.mxu0
    %v6614 = vadd.f32 %v6601, %v6613
    %v6615 = vpop.f32.mrf.mxu0
    %6616 = vdwg.mxu0
    %6617 = vmatpush.bf16.msra.mxu0 %v5804
    %6618 = vmatpush.bf16.msra.mxu0 %v5796
    %6619 = vmatpush.bf16.msra.mxu0 %v5788
    %6620 = vmatpush.bf16.msra.mxu0 %v5780
    %6621 = vmatpush.bf16.msra.mxu0 %v5772
    %6622 = vmatpush.bf16.msra.mxu0 %v5764
    %6623 = vmatpush.bf16.msra.mxu0 %v5756
    %6624 = vmatpush.bf16.msra.mxu0 %v5748
    %6625 = vmatmul.bf16.gmra.mxu0 %v4710
    %v6626 = vpop.f32.mrf.mxu0
    %v6627 = vadd.f32 %v1013, %v6626
    %v6628 = vpop.f32.mrf.mxu0
    %6629 = vdwg.mxu0
    %6630 = vmatpush.bf16.msra.mxu0 %v5868
    %6631 = vmatpush.bf16.msra.mxu0 %v5860
    %6632 = vmatpush.bf16.msra.mxu0 %v5852
    %6633 = vmatpush.bf16.msra.mxu0 %v5844
    %6634 = vmatpush.bf16.msra.mxu0 %v5836
    %6635 = vmatpush.bf16.msra.mxu0 %v5828
    %6636 = vmatpush.bf16.msra.mxu0 %v5820
    %6637 = vmatpush.bf16.msra.mxu0 %v5812
    %6638 = vmatmul.bf16.gmra.mxu0 %v4711
    %v6639 = vpop.f32.mrf.mxu0
    %v6640 = vadd.f32 %v6627, %v6639
    %v6641 = vpop.f32.mrf.mxu0
    %6642 = vdwg.mxu0
    %6643 = vmatpush.bf16.msra.mxu0 %v5932
    %6644 = vmatpush.bf16.msra.mxu0 %v5924
    %6645 = vmatpush.bf16.msra.mxu0 %v5916
    %6646 = vmatpush.bf16.msra.mxu0 %v5908
    %6647 = vmatpush.bf16.msra.mxu0 %v5900
    %6648 = vmatpush.bf16.msra.mxu0 %v5892
    %6649 = vmatpush.bf16.msra.mxu0 %v5884
    %6650 = vmatpush.bf16.msra.mxu0 %v5876
    %6651 = vmatmul.bf16.gmra.mxu0 %v4969
    %v6652 = vpop.f32.mrf.mxu0
    %v6653 = vadd.f32 %v6640, %v6652
    %v6654 = vpop.f32.mrf.mxu0
    %6655 = vdwg.mxu0
    %6656 = vmatpush.bf16.msra.mxu0 %v5996
    %6657 = vmatpush.bf16.msra.mxu0 %v5988
    %6658 = vmatpush.bf16.msra.mxu0 %v5980
    %6659 = vmatpush.bf16.msra.mxu0 %v5972
    %6660 = vmatpush.bf16.msra.mxu0 %v5964
    %6661 = vmatpush.bf16.msra.mxu0 %v5956
    %6662 = vmatpush.bf16.msra.mxu0 %v5948
    %6663 = vmatpush.bf16.msra.mxu0 %v5940
    %6664 = vmatmul.bf16.gmra.mxu0 %v4970
    %v6665 = vpop.f32.mrf.mxu0
    %v6666 = vadd.f32 %v6653, %v6665
    %v6667 = vpop.f32.mrf.mxu0
    %6668 = vdwg.mxu0
    %v6669 = vmul.f32 %v6302, 0.5
    %v6670 = vmul.f32 %v6354, 0.5
    %v6671 = vtanh.pop %v6669
    %v6672 = vtanh.pop %v6670
    %v6673 = vmul.f32 %v6671, 0.5
    %v6674 = vmul.f32 %v6672, 0.5
    %v6675 = vadd.f32 %v6673, 0.5
    %v6676 = vadd.f32 %v6674, 0.5
    %v6677 = vmul.f32 %v6406, 0.5
    %v6678 = vmul.f32 %v6458, 0.5
    %v6679 = vtanh.pop %v6677
    %v6680 = vtanh.pop %v6678
    %v6681 = vmul.f32 %v6679, 0.5
    %v6682 = vmul.f32 %v6680, 0.5
    %v6683 = vadd.f32 %v6681, 0.5
    %v6684 = vadd.f32 %v6682, 0.5
    %v6685 = vtanh.pop %v6510
    %v6686 = vtanh.pop %v6562
    %v6687 = vmul.f32 %v6614, 0.5
    %v6688 = vmul.f32 %v6666, 0.5
    %v6689 = vtanh.pop %v6687
    %v6690 = vtanh.pop %v6688
    %v6691 = vmul.f32 %v6689, 0.5
    %v6692 = vmul.f32 %v6690, 0.5
    %v6693 = vadd.f32 %v6691, 0.5
    %v6694 = vadd.f32 %v6692, 0.5
    %v6695 = vmul.f32 %v6683, %v1946
    %v6696 = vmul.f32 %v6684, %v1947
    %v6697 = vmul.f32 %v6675, %v6685
    %v6698 = vmul.f32 %v6676, %v6686
    %v6699 = vadd.f32 %v6695, %v6697
    %v6700 = vadd.f32 %v6696, %v6698
    %v6701 = vtanh.pop %v6699
    %v6702 = vtanh.pop %v6700
    %v6703 = vmul.f32 %v6693, %v6701
    %v6704 = vmul.f32 %v6694, %v6702
    %v6705 = vpack.c.bf16 %v4965, %v4964
    %v6706 = vpack.c.bf16 %v6704, %v6703
    %v6708 = vunpack.c.l.b16 %v6705
    %v6709 = vunpack.c.h.b16 %v6705
    %v6710 = vpack.c.b16 %v6708, %v6708
    %v6711 = vpack.c.b16 %v6709, %v6709
    %v6715 = vunpack.c.l.b16 %v6706
    %v6716 = vunpack.c.h.b16 %v6706
    %v6717 = vpack.c.b16 %v6715, %v6715
    %v6718 = vpack.c.b16 %v6716, %v6716
    %6721 = vmatpush.bf16.msra.mxu0 %v5797
    %6722 = vmatpush.bf16.msra.mxu0 %v5789
    %6723 = vmatpush.bf16.msra.mxu0 %v5781
    %6724 = vmatpush.bf16.msra.mxu0 %v5773
    %6725 = vmatpush.bf16.msra.mxu0 %v5765
    %6726 = vmatpush.bf16.msra.mxu0 %v5757
    %6727 = vmatpush.bf16.msra.mxu0 %v5749
    %6728 = vmatpush.bf16.msra.mxu0 %v5741
    %6729 = vmatmul.bf16.gmra.mxu0 %v6710
    %v6730 = vpop.f32.mrf.mxu0
    %v6731 = vadd.f32 %v1006, %v6730
    %v6732 = vpop.f32.mrf.mxu0
    %6733 = vdwg.mxu0
    %6734 = vmatpush.bf16.msra.mxu0 %v5861
    %6735 = vmatpush.bf16.msra.mxu0 %v5853
    %6736 = vmatpush.bf16.msra.mxu0 %v5845
    %6737 = vmatpush.bf16.msra.mxu0 %v5837
    %6738 = vmatpush.bf16.msra.mxu0 %v5829
    %6739 = vmatpush.bf16.msra.mxu0 %v5821
    %6740 = vmatpush.bf16.msra.mxu0 %v5813
    %6741 = vmatpush.bf16.msra.mxu0 %v5805
    %6742 = vmatmul.bf16.gmra.mxu0 %v6711
    %v6743 = vpop.f32.mrf.mxu0
    %v6744 = vadd.f32 %v6731, %v6743
    %v6745 = vpop.f32.mrf.mxu0
    %6746 = vdwg.mxu0
    %6747 = vmatpush.bf16.msra.mxu0 %v5925
    %6748 = vmatpush.bf16.msra.mxu0 %v5917
    %6749 = vmatpush.bf16.msra.mxu0 %v5909
    %6750 = vmatpush.bf16.msra.mxu0 %v5901
    %6751 = vmatpush.bf16.msra.mxu0 %v5893
    %6752 = vmatpush.bf16.msra.mxu0 %v5885
    %6753 = vmatpush.bf16.msra.mxu0 %v5877
    %6754 = vmatpush.bf16.msra.mxu0 %v5869
    %6755 = vmatmul.bf16.gmra.mxu0 %v6717
    %v6756 = vpop.f32.mrf.mxu0
    %v6757 = vadd.f32 %v6744, %v6756
    %v6758 = vpop.f32.mrf.mxu0
    %6759 = vdwg.mxu0
    %6760 = vmatpush.bf16.msra.mxu0 %v5989
    %6761 = vmatpush.bf16.msra.mxu0 %v5981
    %6762 = vmatpush.bf16.msra.mxu0 %v5973
    %6763 = vmatpush.bf16.msra.mxu0 %v5965
    %6764 = vmatpush.bf16.msra.mxu0 %v5957
    %6765 = vmatpush.bf16.msra.mxu0 %v5949
    %6766 = vmatpush.bf16.msra.mxu0 %v5941
    %6767 = vmatpush.bf16.msra.mxu0 %v5933
    %6768 = vmatmul.bf16.gmra.mxu0 %v6718
    %v6769 = vpop.f32.mrf.mxu0
    %v6770 = vadd.f32 %v6757, %v6769
    %v6771 = vpop.f32.mrf.mxu0
    %6772 = vdwg.mxu0
    %6773 = vmatpush.bf16.msra.mxu0 %v5798
    %6774 = vmatpush.bf16.msra.mxu0 %v5790
    %6775 = vmatpush.bf16.msra.mxu0 %v5782
    %6776 = vmatpush.bf16.msra.mxu0 %v5774
    %6777 = vmatpush.bf16.msra.mxu0 %v5766
    %6778 = vmatpush.bf16.msra.mxu0 %v5758
    %6779 = vmatpush.bf16.msra.mxu0 %v5750
    %6780 = vmatpush.bf16.msra.mxu0 %v5742
    %6781 = vmatmul.bf16.gmra.mxu0 %v6710
    %v6782 = vpop.f32.mrf.mxu0
    %v6783 = vadd.f32 %v1007, %v6782
    %v6784 = vpop.f32.mrf.mxu0
    %6785 = vdwg.mxu0
    %6786 = vmatpush.bf16.msra.mxu0 %v5862
    %6787 = vmatpush.bf16.msra.mxu0 %v5854
    %6788 = vmatpush.bf16.msra.mxu0 %v5846
    %6789 = vmatpush.bf16.msra.mxu0 %v5838
    %6790 = vmatpush.bf16.msra.mxu0 %v5830
    %6791 = vmatpush.bf16.msra.mxu0 %v5822
    %6792 = vmatpush.bf16.msra.mxu0 %v5814
    %6793 = vmatpush.bf16.msra.mxu0 %v5806
    %6794 = vmatmul.bf16.gmra.mxu0 %v6711
    %v6795 = vpop.f32.mrf.mxu0
    %v6796 = vadd.f32 %v6783, %v6795
    %v6797 = vpop.f32.mrf.mxu0
    %6798 = vdwg.mxu0
    %6799 = vmatpush.bf16.msra.mxu0 %v5926
    %6800 = vmatpush.bf16.msra.mxu0 %v5918
    %6801 = vmatpush.bf16.msra.mxu0 %v5910
    %6802 = vmatpush.bf16.msra.mxu0 %v5902
    %6803 = vmatpush.bf16.msra.mxu0 %v5894
    %6804 = vmatpush.bf16.msra.mxu0 %v5886
    %6805 = vmatpush.bf16.msra.mxu0 %v5878
    %6806 = vmatpush.bf16.msra.mxu0 %v5870
    %6807 = vmatmul.bf16.gmra.mxu0 %v6717
    %v6808 = vpop.f32.mrf.mxu0
    %v6809 = vadd.f32 %v6796, %v6808
    %v6810 = vpop.f32.mrf.mxu0
    %6811 = vdwg.mxu0
    %6812 = vmatpush.bf16.msra.mxu0 %v5990
    %6813 = vmatpush.bf16.msra.mxu0 %v5982
    %6814 = vmatpush.bf16.msra.mxu0 %v5974
    %6815 = vmatpush.bf16.msra.mxu0 %v5966
    %6816 = vmatpush.bf16.msra.mxu0 %v5958
    %6817 = vmatpush.bf16.msra.mxu0 %v5950
    %6818 = vmatpush.bf16.msra.mxu0 %v5942
    %6819 = vmatpush.bf16.msra.mxu0 %v5934
    %6820 = vmatmul.bf16.gmra.mxu0 %v6718
    %v6821 = vpop.f32.mrf.mxu0
    %v6822 = vadd.f32 %v6809, %v6821
    %v6823 = vpop.f32.mrf.mxu0
    %6824 = vdwg.mxu0
    %6825 = vmatpush.bf16.msra.mxu0 %v5799
    %6826 = vmatpush.bf16.msra.mxu0 %v5791
    %6827 = vmatpush.bf16.msra.mxu0 %v5783
    %6828 = vmatpush.bf16.msra.mxu0 %v5775
    %6829 = vmatpush.bf16.msra.mxu0 %v5767
    %6830 = vmatpush.bf16.msra.mxu0 %v5759
    %6831 = vmatpush.bf16.msra.mxu0 %v5751
    %6832 = vmatpush.bf16.msra.mxu0 %v5743
    %6833 = vmatmul.bf16.gmra.mxu0 %v6710
    %v6834 = vpop.f32.mrf.mxu0
    %v6835 = vadd.f32 %v1008, %v6834
    %v6836 = vpop.f32.mrf.mxu0
    %6837 = vdwg.mxu0
    %6838 = vmatpush.bf16.msra.mxu0 %v5863
    %6839 = vmatpush.bf16.msra.mxu0 %v5855
    %6840 = vmatpush.bf16.msra.mxu0 %v5847
    %6841 = vmatpush.bf16.msra.mxu0 %v5839
    %6842 = vmatpush.bf16.msra.mxu0 %v5831
    %6843 = vmatpush.bf16.msra.mxu0 %v5823
    %6844 = vmatpush.bf16.msra.mxu0 %v5815
    %6845 = vmatpush.bf16.msra.mxu0 %v5807
    %6846 = vmatmul.bf16.gmra.mxu0 %v6711
    %v6847 = vpop.f32.mrf.mxu0
    %v6848 = vadd.f32 %v6835, %v6847
    %v6849 = vpop.f32.mrf.mxu0
    %6850 = vdwg.mxu0
    %6851 = vmatpush.bf16.msra.mxu0 %v5927
    %6852 = vmatpush.bf16.msra.mxu0 %v5919
    %6853 = vmatpush.bf16.msra.mxu0 %v5911
    %6854 = vmatpush.bf16.msra.mxu0 %v5903
    %6855 = vmatpush.bf16.msra.mxu0 %v5895
    %6856 = vmatpush.bf16.msra.mxu0 %v5887
    %6857 = vmatpush.bf16.msra.mxu0 %v5879
    %6858 = vmatpush.bf16.msra.mxu0 %v5871
    %6859 = vmatmul.bf16.gmra.mxu0 %v6717
    %v6860 = vpop.f32.mrf.mxu0
    %v6861 = vadd.f32 %v6848, %v6860
    %v6862 = vpop.f32.mrf.mxu0
    %6863 = vdwg.mxu0
    %6864 = vmatpush.bf16.msra.mxu0 %v5991
    %6865 = vmatpush.bf16.msra.mxu0 %v5983
    %6866 = vmatpush.bf16.msra.mxu0 %v5975
    %6867 = vmatpush.bf16.msra.mxu0 %v5967
    %6868 = vmatpush.bf16.msra.mxu0 %v5959
    %6869 = vmatpush.bf16.msra.mxu0 %v5951
    %6870 = vmatpush.bf16.msra.mxu0 %v5943
    %6871 = vmatpush.bf16.msra.mxu0 %v5935
    %6872 = vmatmul.bf16.gmra.mxu0 %v6718
    %v6873 = vpop.f32.mrf.mxu0
    %v6874 = vadd.f32 %v6861, %v6873
    %v6875 = vpop.f32.mrf.mxu0
    %6876 = vdwg.mxu0
    %6877 = vmatpush.bf16.msra.mxu0 %v5800
    %6878 = vmatpush.bf16.msra.mxu0 %v5792
    %6879 = vmatpush.bf16.msra.mxu0 %v5784
    %6880 = vmatpush.bf16.msra.mxu0 %v5776
    %6881 = vmatpush.bf16.msra.mxu0 %v5768
    %6882 = vmatpush.bf16.msra.mxu0 %v5760
    %6883 = vmatpush.bf16.msra.mxu0 %v5752
    %6884 = vmatpush.bf16.msra.mxu0 %v5744
    %6885 = vmatmul.bf16.gmra.mxu0 %v6710
    %v6886 = vpop.f32.mrf.mxu0
    %v6887 = vadd.f32 %v1009, %v6886
    %v6888 = vpop.f32.mrf.mxu0
    %6889 = vdwg.mxu0
    %6890 = vmatpush.bf16.msra.mxu0 %v5864
    %6891 = vmatpush.bf16.msra.mxu0 %v5856
    %6892 = vmatpush.bf16.msra.mxu0 %v5848
    %6893 = vmatpush.bf16.msra.mxu0 %v5840
    %6894 = vmatpush.bf16.msra.mxu0 %v5832
    %6895 = vmatpush.bf16.msra.mxu0 %v5824
    %6896 = vmatpush.bf16.msra.mxu0 %v5816
    %6897 = vmatpush.bf16.msra.mxu0 %v5808
    %6898 = vmatmul.bf16.gmra.mxu0 %v6711
    %v6899 = vpop.f32.mrf.mxu0
    %v6900 = vadd.f32 %v6887, %v6899
    %v6901 = vpop.f32.mrf.mxu0
    %6902 = vdwg.mxu0
    %6903 = vmatpush.bf16.msra.mxu0 %v5928
    %6904 = vmatpush.bf16.msra.mxu0 %v5920
    %6905 = vmatpush.bf16.msra.mxu0 %v5912
    %6906 = vmatpush.bf16.msra.mxu0 %v5904
    %6907 = vmatpush.bf16.msra.mxu0 %v5896
    %6908 = vmatpush.bf16.msra.mxu0 %v5888
    %6909 = vmatpush.bf16.msra.mxu0 %v5880
    %6910 = vmatpush.bf16.msra.mxu0 %v5872
    %6911 = vmatmul.bf16.gmra.mxu0 %v6717
    %v6912 = vpop.f32.mrf.mxu0
    %v6913 = vadd.f32 %v6900, %v6912
    %v6914 = vpop.f32.mrf.mxu0
    %6915 = vdwg.mxu0
    %6916 = vmatpush.bf16.msra.mxu0 %v5992
    %6917 = vmatpush.bf16.msra.mxu0 %v5984
    %6918 = vmatpush.bf16.msra.mxu0 %v5976
    %6919 = vmatpush.bf16.msra.mxu0 %v5968
    %6920 = vmatpush.bf16.msra.mxu0 %v5960
    %6921 = vmatpush.bf16.msra.mxu0 %v5952
    %6922 = vmatpush.bf16.msra.mxu0 %v5944
    %6923 = vmatpush.bf16.msra.mxu0 %v5936
    %6924 = vmatmul.bf16.gmra.mxu0 %v6718
    %v6925 = vpop.f32.mrf.mxu0
    %v6926 = vadd.f32 %v6913, %v6925
    %v6927 = vpop.f32.mrf.mxu0
    %6928 = vdwg.mxu0
    %6929 = vmatpush.bf16.msra.mxu0 %v5801
    %6930 = vmatpush.bf16.msra.mxu0 %v5793
    %6931 = vmatpush.bf16.msra.mxu0 %v5785
    %6932 = vmatpush.bf16.msra.mxu0 %v5777
    %6933 = vmatpush.bf16.msra.mxu0 %v5769
    %6934 = vmatpush.bf16.msra.mxu0 %v5761
    %6935 = vmatpush.bf16.msra.mxu0 %v5753
    %6936 = vmatpush.bf16.msra.mxu0 %v5745
    %6937 = vmatmul.bf16.gmra.mxu0 %v6710
    %v6938 = vpop.f32.mrf.mxu0
    %v6939 = vadd.f32 %v1010, %v6938
    %v6940 = vpop.f32.mrf.mxu0
    %6941 = vdwg.mxu0
    %6942 = vmatpush.bf16.msra.mxu0 %v5865
    %6943 = vmatpush.bf16.msra.mxu0 %v5857
    %6944 = vmatpush.bf16.msra.mxu0 %v5849
    %6945 = vmatpush.bf16.msra.mxu0 %v5841
    %6946 = vmatpush.bf16.msra.mxu0 %v5833
    %6947 = vmatpush.bf16.msra.mxu0 %v5825
    %6948 = vmatpush.bf16.msra.mxu0 %v5817
    %6949 = vmatpush.bf16.msra.mxu0 %v5809
    %6950 = vmatmul.bf16.gmra.mxu0 %v6711
    %v6951 = vpop.f32.mrf.mxu0
    %v6952 = vadd.f32 %v6939, %v6951
    %v6953 = vpop.f32.mrf.mxu0
    %6954 = vdwg.mxu0
    %6955 = vmatpush.bf16.msra.mxu0 %v5929
    %6956 = vmatpush.bf16.msra.mxu0 %v5921
    %6957 = vmatpush.bf16.msra.mxu0 %v5913
    %6958 = vmatpush.bf16.msra.mxu0 %v5905
    %6959 = vmatpush.bf16.msra.mxu0 %v5897
    %6960 = vmatpush.bf16.msra.mxu0 %v5889
    %6961 = vmatpush.bf16.msra.mxu0 %v5881
    %6962 = vmatpush.bf16.msra.mxu0 %v5873
    %6963 = vmatmul.bf16.gmra.mxu0 %v6717
    %v6964 = vpop.f32.mrf.mxu0
    %v6965 = vadd.f32 %v6952, %v6964
    %v6966 = vpop.f32.mrf.mxu0
    %6967 = vdwg.mxu0
    %6968 = vmatpush.bf16.msra.mxu0 %v5993
    %6969 = vmatpush.bf16.msra.mxu0 %v5985
    %6970 = vmatpush.bf16.msra.mxu0 %v5977
    %6971 = vmatpush.bf16.msra.mxu0 %v5969
    %6972 = vmatpush.bf16.msra.mxu0 %v5961
    %6973 = vmatpush.bf16.msra.mxu0 %v5953
    %6974 = vmatpush.bf16.msra.mxu0 %v5945
    %6975 = vmatpush.bf16.msra.mxu0 %v5937
    %6976 = vmatmul.bf16.gmra.mxu0 %v6718
    %v6977 = vpop.f32.mrf.mxu0
    %v6978 = vadd.f32 %v6965, %v6977
    %v6979 = vpop.f32.mrf.mxu0
    %6980 = vdwg.mxu0
    %6981 = vmatpush.bf16.msra.mxu0 %v5802
    %6982 = vmatpush.bf16.msra.mxu0 %v5794
    %6983 = vmatpush.bf16.msra.mxu0 %v5786
    %6984 = vmatpush.bf16.msra.mxu0 %v5778
    %6985 = vmatpush.bf16.msra.mxu0 %v5770
    %6986 = vmatpush.bf16.msra.mxu0 %v5762
    %6987 = vmatpush.bf16.msra.mxu0 %v5754
    %6988 = vmatpush.bf16.msra.mxu0 %v5746
    %6989 = vmatmul.bf16.gmra.mxu0 %v6710
    %v6990 = vpop.f32.mrf.mxu0
    %v6991 = vadd.f32 %v1011, %v6990
    %v6992 = vpop.f32.mrf.mxu0
    %6993 = vdwg.mxu0
    %6994 = vmatpush.bf16.msra.mxu0 %v5866
    %6995 = vmatpush.bf16.msra.mxu0 %v5858
    %6996 = vmatpush.bf16.msra.mxu0 %v5850
    %6997 = vmatpush.bf16.msra.mxu0 %v5842
    %6998 = vmatpush.bf16.msra.mxu0 %v5834
    %6999 = vmatpush.bf16.msra.mxu0 %v5826
    %7000 = vmatpush.bf16.msra.mxu0 %v5818
    %7001 = vmatpush.bf16.msra.mxu0 %v5810
    %7002 = vmatmul.bf16.gmra.mxu0 %v6711
    %v7003 = vpop.f32.mrf.mxu0
    %v7004 = vadd.f32 %v6991, %v7003
    %v7005 = vpop.f32.mrf.mxu0
    %7006 = vdwg.mxu0
    %7007 = vmatpush.bf16.msra.mxu0 %v5930
    %7008 = vmatpush.bf16.msra.mxu0 %v5922
    %7009 = vmatpush.bf16.msra.mxu0 %v5914
    %7010 = vmatpush.bf16.msra.mxu0 %v5906
    %7011 = vmatpush.bf16.msra.mxu0 %v5898
    %7012 = vmatpush.bf16.msra.mxu0 %v5890
    %7013 = vmatpush.bf16.msra.mxu0 %v5882
    %7014 = vmatpush.bf16.msra.mxu0 %v5874
    %7015 = vmatmul.bf16.gmra.mxu0 %v6717
    %v7016 = vpop.f32.mrf.mxu0
    %v7017 = vadd.f32 %v7004, %v7016
    %v7018 = vpop.f32.mrf.mxu0
    %7019 = vdwg.mxu0
    %7020 = vmatpush.bf16.msra.mxu0 %v5994
    %7021 = vmatpush.bf16.msra.mxu0 %v5986
    %7022 = vmatpush.bf16.msra.mxu0 %v5978
    %7023 = vmatpush.bf16.msra.mxu0 %v5970
    %7024 = vmatpush.bf16.msra.mxu0 %v5962
    %7025 = vmatpush.bf16.msra.mxu0 %v5954
    %7026 = vmatpush.bf16.msra.mxu0 %v5946
    %7027 = vmatpush.bf16.msra.mxu0 %v5938
    %7028 = vmatmul.bf16.gmra.mxu0 %v6718
    %v7029 = vpop.f32.mrf.mxu0
    %v7030 = vadd.f32 %v7017, %v7029
    %v7031 = vpop.f32.mrf.mxu0
    %7032 = vdwg.mxu0
    %7033 = vmatpush.bf16.msra.mxu0 %v5803
    %7034 = vmatpush.bf16.msra.mxu0 %v5795
    %7035 = vmatpush.bf16.msra.mxu0 %v5787
    %7036 = vmatpush.bf16.msra.mxu0 %v5779
    %7037 = vmatpush.bf16.msra.mxu0 %v5771
    %7038 = vmatpush.bf16.msra.mxu0 %v5763
    %7039 = vmatpush.bf16.msra.mxu0 %v5755
    %7040 = vmatpush.bf16.msra.mxu0 %v5747
    %7041 = vmatmul.bf16.gmra.mxu0 %v6710
    %v7042 = vpop.f32.mrf.mxu0
    %v7043 = vadd.f32 %v1012, %v7042
    %v7044 = vpop.f32.mrf.mxu0
    %7045 = vdwg.mxu0
    %7046 = vmatpush.bf16.msra.mxu0 %v5867
    %7047 = vmatpush.bf16.msra.mxu0 %v5859
    %7048 = vmatpush.bf16.msra.mxu0 %v5851
    %7049 = vmatpush.bf16.msra.mxu0 %v5843
    %7050 = vmatpush.bf16.msra.mxu0 %v5835
    %7051 = vmatpush.bf16.msra.mxu0 %v5827
    %7052 = vmatpush.bf16.msra.mxu0 %v5819
    %7053 = vmatpush.bf16.msra.mxu0 %v5811
    %7054 = vmatmul.bf16.gmra.mxu0 %v6711
    %v7055 = vpop.f32.mrf.mxu0
    %v7056 = vadd.f32 %v7043, %v7055
    %v7057 = vpop.f32.mrf.mxu0
    %7058 = vdwg.mxu0
    %7059 = vmatpush.bf16.msra.mxu0 %v5931
    %7060 = vmatpush.bf16.msra.mxu0 %v5923
    %7061 = vmatpush.bf16.msra.mxu0 %v5915
    %7062 = vmatpush.bf16.msra.mxu0 %v5907
    %7063 = vmatpush.bf16.msra.mxu0 %v5899
    %7064 = vmatpush.bf16.msra.mxu0 %v5891
    %7065 = vmatpush.bf16.msra.mxu0 %v5883
    %7066 = vmatpush.bf16.msra.mxu0 %v5875
    %7067 = vmatmul.bf16.gmra.mxu0 %v6717
    %v7068 = vpop.f32.mrf.mxu0
    %v7069 = vadd.f32 %v7056, %v7068
    %v7070 = vpop.f32.mrf.mxu0
    %7071 = vdwg.mxu0
    %7072 = vmatpush.bf16.msra.mxu0 %v5995
    %7073 = vmatpush.bf16.msra.mxu0 %v5987
    %7074 = vmatpush.bf16.msra.mxu0 %v5979
    %7075 = vmatpush.bf16.msra.mxu0 %v5971
    %7076 = vmatpush.bf16.msra.mxu0 %v5963
    %7077 = vmatpush.bf16.msra.mxu0 %v5955
    %7078 = vmatpush.bf16.msra.mxu0 %v5947
    %7079 = vmatpush.bf16.msra.mxu0 %v5939
    %7080 = vmatmul.bf16.gmra.mxu0 %v6718
    %v7081 = vpop.f32.mrf.mxu0
    %v7082 = vadd.f32 %v7069, %v7081
    %v7083 = vpop.f32.mrf.mxu0
    %7084 = vdwg.mxu0
    %7085 = vmatpush.bf16.msra.mxu0 %v5804
    %7086 = vmatpush.bf16.msra.mxu0 %v5796
    %7087 = vmatpush.bf16.msra.mxu0 %v5788
    %7088 = vmatpush.bf16.msra.mxu0 %v5780
    %7089 = vmatpush.bf16.msra.mxu0 %v5772
    %7090 = vmatpush.bf16.msra.mxu0 %v5764
    %7091 = vmatpush.bf16.msra.mxu0 %v5756
    %7092 = vmatpush.bf16.msra.mxu0 %v5748
    %7093 = vmatmul.bf16.gmra.mxu0 %v6710
    %v7094 = vpop.f32.mrf.mxu0
    %v7095 = vadd.f32 %v1013, %v7094
    %v7096 = vpop.f32.mrf.mxu0
    %7097 = vdwg.mxu0
    %7098 = vmatpush.bf16.msra.mxu0 %v5868
    %7099 = vmatpush.bf16.msra.mxu0 %v5860
    %7100 = vmatpush.bf16.msra.mxu0 %v5852
    %7101 = vmatpush.bf16.msra.mxu0 %v5844
    %7102 = vmatpush.bf16.msra.mxu0 %v5836
    %7103 = vmatpush.bf16.msra.mxu0 %v5828
    %7104 = vmatpush.bf16.msra.mxu0 %v5820
    %7105 = vmatpush.bf16.msra.mxu0 %v5812
    %7106 = vmatmul.bf16.gmra.mxu0 %v6711
    %v7107 = vpop.f32.mrf.mxu0
    %v7108 = vadd.f32 %v7095, %v7107
    %v7109 = vpop.f32.mrf.mxu0
    %7110 = vdwg.mxu0
    %7111 = vmatpush.bf16.msra.mxu0 %v5932
    %7112 = vmatpush.bf16.msra.mxu0 %v5924
    %7113 = vmatpush.bf16.msra.mxu0 %v5916
    %7114 = vmatpush.bf16.msra.mxu0 %v5908
    %7115 = vmatpush.bf16.msra.mxu0 %v5900
    %7116 = vmatpush.bf16.msra.mxu0 %v5892
    %7117 = vmatpush.bf16.msra.mxu0 %v5884
    %7118 = vmatpush.bf16.msra.mxu0 %v5876
    %7119 = vmatmul.bf16.gmra.mxu0 %v6717
    %v7120 = vpop.f32.mrf.mxu0
    %v7121 = vadd.f32 %v7108, %v7120
    %v7122 = vpop.f32.mrf.mxu0
    %7123 = vdwg.mxu0
    %7124 = vmatpush.bf16.msra.mxu0 %v5996
    %7125 = vmatpush.bf16.msra.mxu0 %v5988
    %7126 = vmatpush.bf16.msra.mxu0 %v5980
    %7127 = vmatpush.bf16.msra.mxu0 %v5972
    %7128 = vmatpush.bf16.msra.mxu0 %v5964
    %7129 = vmatpush.bf16.msra.mxu0 %v5956
    %7130 = vmatpush.bf16.msra.mxu0 %v5948
    %7131 = vmatpush.bf16.msra.mxu0 %v5940
    %7132 = vmatmul.bf16.gmra.mxu0 %v6718
    %v7133 = vpop.f32.mrf.mxu0
    %v7134 = vadd.f32 %v7121, %v7133
    %v7135 = vpop.f32.mrf.mxu0
    %7136 = vdwg.mxu0
    %v7137 = vmul.f32 %v6770, 0.5
    %v7138 = vmul.f32 %v6822, 0.5
    %v7139 = vtanh.pop %v7137
    %v7140 = vtanh.pop %v7138
    %v7141 = vmul.f32 %v7139, 0.5
    %v7142 = vmul.f32 %v7140, 0.5
    %v7143 = vadd.f32 %v7141, 0.5
    %v7144 = vadd.f32 %v7142, 0.5
    %v7145 = vmul.f32 %v6874, 0.5
    %v7146 = vmul.f32 %v6926, 0.5
    %v7147 = vtanh.pop %v7145
    %v7148 = vtanh.pop %v7146
    %v7149 = vmul.f32 %v7147, 0.5
    %v7150 = vmul.f32 %v7148, 0.5
    %v7151 = vadd.f32 %v7149, 0.5
    %v7152 = vadd.f32 %v7150, 0.5
    %v7153 = vtanh.pop %v6978
    %v7154 = vtanh.pop %v7030
    %v7155 = vmul.f32 %v7082, 0.5
    %v7156 = vmul.f32 %v7134, 0.5
    %v7157 = vtanh.pop %v7155
    %v7158 = vtanh.pop %v7156
    %v7159 = vmul.f32 %v7157, 0.5
    %v7160 = vmul.f32 %v7158, 0.5
    %v7161 = vadd.f32 %v7159, 0.5
    %v7162 = vadd.f32 %v7160, 0.5
    %v7163 = vmul.f32 %v7151, %v6699
    %v7164 = vmul.f32 %v7152, %v6700
    %v7165 = vmul.f32 %v7143, %v7153
    %v7166 = vmul.f32 %v7144, %v7154
    %v7167 = vadd.f32 %v7163, %v7165
    %v7168 = vadd.f32 %v7164, %v7166
    %v7169 = vtanh.pop %v7167
    %v7170 = vtanh.pop %v7168
    %v7171 = vmul.f32 %v7161, %v7169
    %v7172 = vmul.f32 %v7162, %v7170
    %v7173 = vunpack.c.l.bf16 %v6705
    %v7174 = vunpack.c.h.bf16 %v6705
    %7175 = vst [vmem:[%s11] sm:$0xff] %v7173
    %7176 = vst [vmem:[%s11 + $0x8] sm:$0xff] %v7174
    %7177 = vst [vmem:[%s12] sm:$0xff] %v4960
    %7178 = vst [vmem:[%s12 + $0x8] sm:$0xff] %v4961
    %s7179 = scalar_lea.vmem %s11, 16
    %7180 = vst [vmem:[%s7179] sm:$0xff] %v7171
    %7181 = vst [vmem:[%s7179 + $0x8] sm:$0xff] %v7172
    %s7182 = scalar_lea.vmem %s12, 16
    %7183 = vst [vmem:[%s7182] sm:$0xff] %v7167
    %7184 = vst [vmem:[%s7182 + $0x8] sm:$0xff] %v7168
    %v7185 = vld [vmem:[%s8] sm:$0x3]
    %v7187 = vperm.slane %v7185, 0
    %v7188 = vperm.slane %v7185, 1
    %v7191 = vmul.f32 %v7171, %v7187
    %v7192 = vmul.f32 %v7172, %v7188
    %v7193 = vadd.f32 %v7191, %v7192
    %7194 = vadd.xlane.f32.xlu0 %v7193
    %v7195 = vpop.xlane.xlu0 %7194
    %v7196 = vld [vmem:[#allocation3] sm:$0x1]
    %v7198 = vperm.slane %v7196, 0
    %v7200 = vadd.f32 %v7195, %v7198
    %v7201 = vmul.f32 %v7200, 0.5
    %v7202 = vtanh.pop %v7201
    %v7203 = vmul.f32 %v7202, 0.5
    %v7204 = vadd.f32 %v7203, 0.5
    %vm7205 = vcmask 7168
    %7206 = vst.msk [vmem:[%s10] sm:$0xff] %vm7205, %v7204
    // Predicated region
    $region57: #{sentiment_rnn_forward.1} parent=1 // pred_check
      _
    $region58: #{sentiment_rnn_forward.1} parent=1 // pred_check_branch
      %7208 = sbr.rel (0) target = $region60
    $region59: #{sentiment_rnn_forward.1} parent=1 // pred_region
      _
    $region60: #{sentiment_rnn_forward.1} parent=1 // pred_fallthru
      _
    // Predicated region
    $region61: #{sentiment_rnn_forward.1} parent=1 // pred_check
      _
    $region62: #{sentiment_rnn_forward.1} parent=1 // pred_check_branch
      %7210 = sbr.rel (0) target = $region64
    $region63: #{sentiment_rnn_forward.1} parent=1 // pred_region
      _
    $region64: #{sentiment_rnn_forward.1} parent=1 // pred_fallthru
      _
    // Predicated region
    $region65: #{sentiment_rnn_forward.1} parent=1 // pred_check
      _
    $region66: #{sentiment_rnn_forward.1} parent=1 // pred_check_branch
      %7212 = sbr.rel (0) target = $region68
    $region67: #{sentiment_rnn_forward.1} parent=1 // pred_region
      _
    $region68: #{sentiment_rnn_forward.1} parent=1 // pred_fallthru
      _
    // Predicated region
    $region69: #{sentiment_rnn_forward.1} parent=1 // pred_check
      _
    $region70: #{sentiment_rnn_forward.1} parent=1 // pred_check_branch
      %7214 = sbr.rel (0) target = $region72
    $region71: #{sentiment_rnn_forward.1} parent=1 // pred_region
      _
    $region72: #{sentiment_rnn_forward.1} parent=1 // pred_fallthru
      _
    // Predicated region
    $region73: #{sentiment_rnn_forward.1} parent=1 // pred_check
      _
    $region74: #{sentiment_rnn_forward.1} parent=1 // pred_check_branch
      %7216 = sbr.rel (0) target = $region76
    $region75: #{sentiment_rnn_forward.1} parent=1 // pred_region
      _
    $region76: #{sentiment_rnn_forward.1} parent=1 // pred_fallthru
      _
    // Predicated region
    $region77: #{sentiment_rnn_forward.1} parent=1 // pred_check
      _
    $region78: #{sentiment_rnn_forward.1} parent=1 // pred_check_branch
      %7218 = sbr.rel (0) target = $region80
    $region79: #{sentiment_rnn_forward.1} parent=1 // pred_region
      _
    $region80: #{sentiment_rnn_forward.1} parent=1 // pred_fallthru
      _
    %7219 = vsyncpa [#allocation5], 1
    %7220 = vsyncpa [#allocation7], 1

</llo_original>
